<compile_context>
chip_gen: v6e
topology: v6e:2x2x1
jax: 0.10.0
libtpu: 0.0.40
codegen_flags: <defaults>
</compile_context>

<pallas_src>
import math
import functools

import jax
import jax.numpy as jnp
from jax.experimental import pallas as pl
from jax.experimental.pallas import tpu as pltpu

LANES = 128  # TPU lane width; channel dims are padded to a multiple of this.


def _round_up_lanes(c: int) -> int:
    return max(LANES, ((c + LANES - 1) // LANES) * LANES)


def _cout_tile(c: int) -> int:
    # 256-wide output tiles fill the 2x256^2 MXU on v6e/v7x; 128 otherwise.
    return 256 if c % 256 == 0 else LANES


def _vmem_limit_bytes(est: int) -> int:
    # Explicit scoped-VMEM limit: never below the 32 MiB default, never above
    # v7x's 64 MiB physical VMEM.
    return int(min(max(est + (8 << 20), 32 << 20), 64 << 20))


# ----------------------------------------------------------------------------
# Kernel 1: im2col conv (+ optional fused BN/ReLU prologue, + optional fused
#           1x1 shortcut conv) + per-tile BN partial statistics
# ----------------------------------------------------------------------------
def _conv_block_kernel(*refs, kernel_size, stride, pad, fuse_bn, with_shortcut):
    it = iter(refs)
    x_ref = next(it)
    scale_ref = shift_ref = None
    if fuse_bn:
        scale_ref, shift_ref = next(it), next(it)
    w_ref = next(it)
    ws_ref = next(it) if with_shortcut else None
    y_ref, s_ref = next(it), next(it)
    ys_ref = ss_ref = None
    if with_shortcut:
        ys_ref, ss_ref = next(it), next(it)
    patch_ref = next(it)

    K = kernel_size
    _, Hp, Wp, Cin = x_ref.shape
    _, OH, OW, _ = y_ref.shape
    j = pl.program_id(1)

    # The im2col patch depends only on the batch index (outer "parallel" axis);
    # the output-channel axis j is innermost and "arbitrary", so build the
    # patch once per batch tile into persistent VMEM scratch and reuse it for
    # every output-channel block (the input block is also VMEM-resident across
    # j since its block index does not change).
    @pl.when(j == 0)
    def _build_patch():
        if fuse_bn:
            # Fused BN affine (+ReLU) over the *input* channels of this conv.
            # The zero halo ring must stay exactly zero after the affine
            # (relu(shift) != 0 in general), so mask it back out.
            row = jax.lax.broadcasted_iota(jnp.int32, (Hp, Wp, Cin), 0)
            col = jax.lax.broadcasted_iota(jnp.int32, (Hp, Wp, Cin), 1)
            interior = ((row >= pad) & (row < Hp - pad) &
                        (col >= pad) & (col < Wp - pad))
            h = jnp.maximum(
                x_ref[0].astype(jnp.float32) * scale_ref[0] + shift_ref[0],
                0.0)
            xv = jnp.where(interior, h, 0.0).astype(jnp.bfloat16)
        else:
            xv = x_ref[0] if stride == 1 else None

        # im2col: K*K shifted views concatenated on the lane axis, so the conv
        # is ONE MXU contraction of depth K*K*Cin per output-channel block.
        taps = []
        for kh in range(K):
            for kw in range(K):
                if stride == 1:
                    taps.append(xv[kh:kh + OH, kw:kw + OW, :])
                elif xv is None:
                    # stride > 1 only occurs on conv1 (no fused BN prologue in
                    # BasicBlock): read the strided window at the ref level so
                    # the load unit does the striding, not VPU copies.
                    taps.append(x_ref[0, pl.ds(kh, OH, stride),
                                      pl.ds(kw, OW, stride), :])
                else:
                    # Generic fallback (fused prologue + stride); unused by
                    # BasicBlock.
                    taps.append(jax.lax.slice(
                        xv, (kh, kw, 0),
                        (kh + (OH - 1) * stride + 1,
                         kw + (OW - 1) * stride + 1, Cin),
                        (stride, stride, 1)))
        patch_ref[...] = jnp.concatenate(
            taps, axis=-1).reshape(OH * OW, K * K * Cin)

    patch = patch_ref[...]
    acc = jnp.dot(patch, w_ref[...], preferred_element_type=jnp.float32)
    # Activations go back to HBM in bf16; stats stay f32.
    y_ref[0] = acc.reshape(OH, OW, y_ref.shape[-1]).astype(y_ref.dtype)
    # BN partial statistics fused with the conv epilogue (per-tile sum, sumsq).
    # TODO(synk): if a bundle dump shows this VALU-bound at large tiles, move
    # the sumsq to a ones-row MXU matmul.
    s_ref[0] = jnp.stack(
        [jnp.sum(acc, axis=0), jnp.sum(acc * acc, axis=0)], axis=0)

    if with_shortcut:
        # The 1x1 shortcut conv (padding=0, same stride) is exactly the centre
        # tap of the 3x3 patch -> reuse those columns; x is read from HBM once
        # for both convs.
        center = (K // 2) * K + (K // 2)
        xs = patch[:, center * Cin:(center + 1) * Cin]
        accs = jnp.dot(xs, ws_ref[...], preferred_element_type=jnp.float32)
        ys_ref[0] = accs.reshape(OH, OW, ys_ref.shape[-1]).astype(ys_ref.dtype)
        ss_ref[0] = jnp.stack(
            [jnp.sum(accs, axis=0), jnp.sum(accs * accs, axis=0)], axis=0)


def conv_block(x_hp, w, ws=None, scale=None, shift=None, *,
               kernel_size, stride, pad):
    """Tiled im2col conv on a halo-padded bf16 NHWC input.

    Optionally fuses a per-input-channel BN affine + ReLU prologue
    (scale/shift) and a 1x1 shortcut conv (ws) that shares the same input
    read.  Returns bf16 conv output(s) plus f32 per-batch-tile (sum, sumsq)
    BN statistics.
    """
    N, Hp, Wp, Cin = x_hp.shape
    KKC, C1 = w.shape
    K = kernel_size
    assert KKC == K * K * Cin
    OH = (Hp - K) // stride + 1
    OW = (Wp - K) // stride + 1
    fuse_bn = scale is not None
    with_shortcut = ws is not None
    tile = _cout_tile(C1)
    nj = C1 // tile

    args = [x_hp]
    # Grid order (N outer / channel-blocks inner) keeps the (large) input
    # plane and the patch scratch VMEM-resident across the inner axis; only
    # the (small) weight block is re-fetched per step.
    in_specs = [pl.BlockSpec((1, Hp, Wp, Cin), lambda n, j: (n, 0, 0, 0))]
    if fuse_bn:
        assert scale.shape == (1, Cin) and shift.shape == (1, Cin)
        args += [scale, shift]
        in_specs += [pl.BlockSpec((1, Cin), lambda n, j: (0, 0)),
                     pl.BlockSpec((1, Cin), lambda n, j: (0, 0))]
    args.append(w)
    in_specs.append(pl.BlockSpec((KKC, tile), lambda n, j: (0, j)))
    if with_shortcut:
        assert ws.shape == (Cin, C1)  # BasicBlock: conv1 / shortcut share Cout
        args.append(ws)
        in_specs.append(pl.BlockSpec((Cin, tile), lambda n, j: (0, j)))

    out_shape = [jax.ShapeDtypeStruct((N, OH, OW, C1), jnp.bfloat16),
                 jax.ShapeDtypeStruct((N, 2, C1), jnp.float32)]
    out_specs = [pl.BlockSpec((1, OH, OW, tile), lambda n, j: (n, 0, 0, j)),
                 pl.BlockSpec((1, 2, tile), lambda n, j: (n, 0, j))]
    if with_shortcut:
        out_shape += [jax.ShapeDtypeStruct((N, OH, OW, C1), jnp.bfloat16),
                      jax.ShapeDtypeStruct((N, 2, C1), jnp.float32)]
        out_specs += [pl.BlockSpec((1, OH, OW, tile),
                                   lambda n, j: (n, 0, 0, j)),
                      pl.BlockSpec((1, 2, tile), lambda n, j: (n, 0, j))]

    # Rough VMEM budget: double-buffered blocks + the persistent patch scratch.
    # TODO(synk): for very large planes (v7x, 64 MiB VMEM) add an OH-tiled grid
    # axis / kh-grouped accumulation instead of the monolithic patch.
    n_out = 2 if with_shortcut else 1
    est = (2 * Hp * Wp * Cin * x_hp.dtype.itemsize
           + 2 * (KKC + (Cin if with_shortcut else 0)) * tile * 2
           + 2 * n_out * (OH * OW * tile * 2 + 2 * tile * 4)
           + OH * OW * KKC * 2
           + (4 * Cin * 4 if fuse_bn else 0))

    kernel = functools.partial(
        _conv_block_kernel, kernel_size=K, stride=stride, pad=pad,
        fuse_bn=fuse_bn, with_shortcut=with_shortcut)

    return pl.pallas_call(
        kernel,
        out_shape=tuple(out_shape),
        grid=(N, nj),
        in_specs=in_specs,
        out_specs=tuple(out_specs),
        scratch_shapes=[pltpu.VMEM((OH * OW, K * K * Cin), jnp.bfloat16)],
        compiler_params=pltpu.CompilerParams(
            # Batch axis splits across TensorCores; the channel-block axis must
            # stay sequential per batch tile (patch-scratch reuse at j == 0).
            dimension_semantics=("parallel", "arbitrary"),
            vmem_limit_bytes=_vmem_limit_bytes(est)),
    )(*args)


# ----------------------------------------------------------------------------
# Kernel 2: BN(main) + [BN(shortcut) | f32 identity residual] + add + ReLU
# ----------------------------------------------------------------------------
def _bn_add_relu_kernel(*refs, identity):
    if identity:
        y_ref, scale_ref, shift_ref, r_ref, o_ref = refs
        rscale_ref = rshift_ref = None
    else:
        (y_ref, scale_ref, shift_ref, r_ref,
         rscale_ref, rshift_ref, o_ref) = refs
    v = y_ref[0].astype(jnp.float32) * scale_ref[0] + shift_ref[0]
    r = r_ref[0].astype(jnp.float32)
    if not identity:
        r = r * rscale_ref[0] + rshift_ref[0]
    o_ref[0] = jnp.maximum(v + r, 0.0).astype(o_ref.dtype)


def bn_add_relu(y, scale, shift, r, rscale=None, rshift=None, *, out_dtype):
    N, OH, OW, C = y.shape
    assert r.shape == (N, OH, OW, C)
    identity = rscale is None
    tile = _cout_tile(C)

    in_specs = [pl.BlockSpec((1, OH, OW, tile), lambda n, j: (n, 0, 0, j)),
                pl.BlockSpec((1, tile), lambda n, j: (0, j)),
                pl.BlockSpec((1, tile), lambda n, j: (0, j)),
                pl.BlockSpec((1, OH, OW, tile), lambda n, j: (n, 0, 0, j))]
    args = [y, scale, shift, r]
    if not identity:
        in_specs += [pl.BlockSpec((1, tile), lambda n, j: (0, j)),
                     pl.BlockSpec((1, tile), lambda n, j: (0, j))]
        args += [rscale, rshift]

    est = 2 * OH * OW * tile * (y.dtype.itemsize + r.dtype.itemsize
                                + jnp.dtype(out_dtype).itemsize)

    return pl.pallas_call(
        functools.partial(_bn_add_relu_kernel, identity=identity),
        out_shape=jax.ShapeDtypeStruct((N, OH, OW, C), out_dtype),
        grid=(N, C // tile),
        in_specs=in_specs,
        out_specs=pl.BlockSpec((1, OH, OW, tile), lambda n, j: (n, 0, 0, j)),
        compiler_params=pltpu.CompilerParams(
            dimension_semantics=("parallel", "parallel"),
            vmem_limit_bytes=_vmem_limit_bytes(est)),
    )(*args)


# ----------------------------------------------------------------------------
# Cross-tile BN reduction (tiny per-channel glue, plain JAX)
# ----------------------------------------------------------------------------
def bn_scale_shift(stats, gamma_p, beta_p, count, eps):
    """Reduce per-tile (sum, sumsq) into per-channel BN scale / shift.

    Training-mode BatchNorm forward: batch mean, biased variance.
    gamma_p is zero on lane-padded channels, so those map to exact zero.
    """
    s = jnp.sum(stats, axis=0)                   # (2, Cp)
    mean = s[0] / count
    var = jnp.maximum(s[1] / count - mean * mean, 0.0)
    scale = gamma_p * jax.lax.rsqrt(var + eps)
    shift = beta_p - mean * scale
    return scale[None, :], shift[None, :]        # (1, Cp) each


# ----------------------------------------------------------------------------
# DO-Conv weight composition (parameter glue, matches DOConv2d init/forward)
# ----------------------------------------------------------------------------
def make_doconv_weight(key, in_channels, out_channels, kernel_size):
    """Composed DoW weight in HWIO layout [KH, KW, Cin, Cout]."""
    M = N = kernel_size
    D_mul = M * N
    fan_in = in_channels * D_mul
    bound = 1.0 / math.sqrt(fan_in)              # kaiming_uniform_(a=sqrt(5))
    W = jax.random.uniform(key, (out_channels, in_channels, D_mul),
                           jnp.float32, minval=-bound, maxval=bound)
    if M * N > 1:
        D = jnp.zeros((in_channels, M * N, D_mul), jnp.float32)   # init zero
        D_diag = jnp.tile(jnp.eye(M * N, dtype=jnp.float32)[None],
                          (in_channels, 1, D_mul // (M * N)))
        DoW = jnp.einsum('ims,ois->oim', D + D_diag, W).reshape(
            out_channels, in_channels, M, N)
    else:
        DoW = W.reshape(out_channels, in_channels, M, N)
    return jnp.transpose(DoW, (2, 3, 1, 0))      # OIHW -> HWIO


def pack_conv_weight(w_hwio, cin_p, cout_p):
    """Zero-pad channels to lane multiples, reshape to im2col form, bf16."""
    KH, KW, Cin, Cout = w_hwio.shape
    w = jnp.pad(w_hwio, ((0, 0), (0, 0), (0, cin_p - Cin), (0, cout_p - Cout)))
    return w.reshape(KH * KW * cin_p, cout_p).astype(jnp.bfloat16)


def pad_channels(v, cp):
    return jnp.pad(v, (0, cp - v.shape[0]))


# ----------------------------------------------------------------------------
# BasicBlock
# ----------------------------------------------------------------------------
class BasicBlockPallas:
    expansion = 1

    def __init__(self, in_channels, out_channels, stride=1, *, key, eps=1e-5):
        k1, k2, k3 = jax.random.split(key, 3)
        oc = out_channels * BasicBlockPallas.expansion
        self.in_channels = in_channels
        self.stride = stride
        self.eps = eps
        self.out_channels = oc
        self.cin_p = _round_up_lanes(in_channels)
        self.cmid_p = _round_up_lanes(out_channels)
        self.cout_p = _round_up_lanes(oc)

        # residual_function: DOConv3x3(stride) -> BN -> ReLU -> DOConv3x3 -> BN
        self.w1_hwio = make_doconv_weight(k1, in_channels, out_channels, 3)
        self.w1 = pack_conv_weight(self.w1_hwio, self.cin_p, self.cmid_p)
        self.gamma1 = pad_channels(jnp.ones((out_channels,), jnp.float32),
                                   self.cmid_p)
        self.beta1 = jnp.zeros((self.cmid_p,), jnp.float32)

        self.w2_hwio = make_doconv_weight(k2, out_channels, oc, 3)
        self.w2 = pack_conv_weight(self.w2_hwio, self.cmid_p, self.cout_p)
        self.gamma2 = pad_channels(jnp.ones((oc,), jnp.float32), self.cout_p)
        self.beta2 = jnp.zeros((self.cout_p,), jnp.float32)

        # shortcut: DOConv1x1(stride) -> BN (only if the shape changes)
        self.has_shortcut = (stride != 1) or (in_channels != oc)
        if self.has_shortcut:
            self.ws_hwio = make_doconv_weight(k3, in_channels, oc, 1)
            self.ws = pack_conv_weight(self.ws_hwio, self.cin_p, self.cout_p)
            self.gammas = pad_channels(jnp.ones((oc,), jnp.float32),
                                       self.cout_p)
            self.betas = jnp.zeros((self.cout_p,), jnp.float32)

        self._forward = jax.jit(self._forward_impl)

    def _forward_impl(self, x_nchw):
        # NCHW (PyTorch convention) -> NHWC (kernel layout).
        # TODO(synk): keep whole networks in NHWC with lane-padded channels so
        # the per-block transposes and the channel slice are paid once/model.
        x = jnp.transpose(x_nchw, (0, 2, 3, 1))
        N, H, W, Cin = x.shape

        # One prep op for conv1: 3x3 halo + lane channel pad, bf16 MXU operand.
        # TODO(synk): move this halo pad (and conv2's) into the kernel's patch
        # build to save the remaining padded-copy HBM round trip.
        x_hp = jnp.pad(
            x, ((0, 0), (1, 1), (1, 1), (0, self.cin_p - Cin))
        ).astype(jnp.bfloat16)

        # conv1 (+ fused 1x1 shortcut conv) + partial BN stats; outputs bf16.
        if self.has_shortcut:
            y1, s1, ys, ss = conv_block(x_hp, self.w1, self.ws,
                                        kernel_size=3, stride=self.stride,
                                        pad=1)
        else:
            y1, s1 = conv_block(x_hp, self.w1,
                                kernel_size=3, stride=self.stride, pad=1)

        OH, OW = y1.shape[1], y1.shape[2]
        count = N * OH * OW
        scale1, shift1 = bn_scale_shift(s1, self.gamma1, self.beta1,
                                        count, self.eps)

        # conv2 with BN1 + ReLU fused into its prologue: no separate BN/ReLU
        # pass over `h`, no f32 intermediate, y1 stays bf16.
        y1_hp = jnp.pad(y1, ((0, 0), (1, 1), (1, 1), (0, 0)))
        y2, s2 = conv_block(y1_hp, self.w2, scale=scale1, shift=shift1,
                            kernel_size=3, stride=1, pad=1)
        scale2, shift2 = bn_scale_shift(s2, self.gamma2, self.beta2,
                                        count, self.eps)

        if self.has_shortcut:
            rscale, rshift = bn_scale_shift(ss, self.gammas, self.betas,
                                            count, self.eps)
            out = bn_add_relu(y2, scale2, shift2, ys, rscale, rshift,
                              out_dtype=x_nchw.dtype)
        else:
            # Identity residual: un-padded f32 x (lane channel pad only) is
            # added in full precision, no in-kernel crop / halo DMA.
            x_cp = jnp.pad(x, ((0, 0), (0, 0), (0, 0),
                               (0, self.cin_p - Cin)))
            out = bn_add_relu(y2, scale2, shift2, x_cp,
                              out_dtype=x_nchw.dtype)

        out = out[..., :self.out_channels]       # drop lane padding
        return jnp.transpose(out, (0, 3, 1, 2))  # NHWC -> NCHW

    def __call__(self, x_nchw):
        return self._forward(x_nchw)


# ----------------------------------------------------------------------------
# Pure-JAX reference (train-mode BasicBlock forward) for correctness checking
# ----------------------------------------------------------------------------
def reference_block(block, x_nchw):
    eps = block.eps
    x = jnp.transpose(x_nchw, (0, 2, 3, 1)).astype(jnp.float32)

    def conv(v, w_hwio, stride, pad):
        return jax.lax.conv_general_dilated(
            v.astype(jnp.bfloat16), w_hwio.astype(jnp.bfloat16),
            window_strides=(stride, stride),
            padding=((pad, pad), (pad, pad)),
            dimension_numbers=("NHWC", "HWIO", "NHWC"),
            preferred_element_type=jnp.float32)

    def bn(v):
        mean = jnp.mean(v, axis=(0, 1, 2), keepdims=True)
        var = jnp.mean(jnp.square(v - mean), axis=(0, 1, 2), keepdims=True)
        return (v - mean) * jax.lax.rsqrt(var + eps)

    y1 = conv(x, block.w1_hwio, block.stride, 1)
    h = jnp.maximum(bn(y1), 0.0)
    y2 = conv(h, block.w2_hwio, 1, 1)
    main = bn(y2)
    if block.has_shortcut:
        r = bn(conv(x, block.ws_hwio, block.stride, 0))
    else:
        r = x
    out = jnp.maximum(main + r, 0.0)
    return jnp.transpose(out, (0, 3, 1, 2)).astype(x_nchw.dtype)


if __name__ == "__main__":
    key = jax.random.PRNGKey(0)
    kx, kb1, kb2 = jax.random.split(key, 3)

    # Small shapes consistent with the CIFAR ResNet basic block.
    N, Cin, H, W = 2, 4, 16, 16
    Cout = 8
    x = jax.random.normal(kx, (N, Cin, H, W), jnp.float32)

    # Projection-shortcut path (1x1 DOConv + BN on the shortcut).
    block1 = BasicBlockPallas(Cin, Cout, stride=1, key=kb1)
    y1 = jax.block_until_ready(block1(x))
    assert y1.shape == (N, Cout * BasicBlockPallas.expansion, H, W), y1.shape
    assert bool(jnp.all(y1 >= 0.0)) and bool(jnp.all(jnp.isfinite(y1)))
    ref1 = reference_block(block1, x)
    err1 = float(jnp.max(jnp.abs(y1 - ref1)))
    assert err1 < 0.2, f"block1 mismatch vs reference: max|diff|={err1}"

    # Identity-shortcut path.
    block2 = BasicBlockPallas(Cout, Cout, stride=1, key=kb2)
    y2 = jax.block_until_ready(block2(y1))
    assert y2.shape == (N, Cout, H, W), y2.shape
    assert bool(jnp.all(y2 >= 0.0)) and bool(jnp.all(jnp.isfinite(y2)))
    ref2 = reference_block(block2, y1)
    err2 = float(jnp.max(jnp.abs(y2 - ref2)))
    assert err2 < 0.2, f"block2 mismatch vs reference: max|diff|={err2}"

    print("KERNEL_OK")
</pallas_src>

<mosaic_0001>
module attributes {stable_mosaic.version = 11 : i64} {
  func.func @_conv_block_kernel(%arg0: i32, %arg1: i32, %arg2: memref<1x18x18x128xbf16, #tpu.memory_space<vmem>>, %arg3: memref<1152x128xbf16, #tpu.memory_space<vmem>>, %arg4: memref<128x128xbf16, #tpu.memory_space<vmem>>, %arg5: memref<1x16x16x128xbf16, #tpu.memory_space<vmem>>, %arg6: memref<1x2x128xf32, #tpu.memory_space<vmem>>, %arg7: memref<1x16x16x128xbf16, #tpu.memory_space<vmem>>, %arg8: memref<1x2x128xf32, #tpu.memory_space<vmem>>, %arg9: memref<256x1152xbf16, #tpu.memory_space<vmem>>) attributes {dimension_semantics = [#tpu.dimension_semantics<parallel>, #tpu.dimension_semantics<arbitrary>], iteration_bounds = array<i64: 2, 1>, scalar_prefetch = 0 : i64, scratch_operands = 1 : i64, tpu.core_type = #tpu.core_type<tc>, window_params = [{transform_indices = @transform_0, window_bounds = array<i64: 1, 18, 18, 128>}, {transform_indices = @transform_1, window_bounds = array<i64: 1152, 128>}, {transform_indices = @transform_2, window_bounds = array<i64: 128, 128>}, {transform_indices = @transform_3, window_bounds = array<i64: 1, 16, 16, 128>}, {transform_indices = @transform_4, window_bounds = array<i64: 1, 2, 128>}, {transform_indices = @transform_5, window_bounds = array<i64: 1, 16, 16, 128>}, {transform_indices = @transform_6, window_bounds = array<i64: 1, 2, 128>}]} {
    %c0_i32 = arith.constant 0 : i32
    %0 = arith.cmpi eq, %arg1, %c0_i32 : i32
    %1 = arith.extui %0 : i1 to i32
    %c0_i32_0 = arith.constant 0 : i32
    %2 = arith.cmpi ne, %1, %c0_i32_0 : i32
    scf.if %2 {
      %c0_25 = arith.constant 0 : index
      %c0_26 = arith.constant 0 : index
      %c0_27 = arith.constant 0 : index
      %c0_28 = arith.constant 0 : index
      %37 = vector.load %arg2[%c0_25, %c0_26, %c0_27, %c0_28] : memref<1x18x18x128xbf16, #tpu.memory_space<vmem>>, vector<1x18x18x128xbf16>
      %38 = vector.shape_cast %37 : vector<1x18x18x128xbf16> to vector<18x18x128xbf16>
      %39 = vector.extract_strided_slice %38 {offsets = [0, 0, 0], sizes = [16, 16, 128], strides = [1, 1, 1]} : vector<18x18x128xbf16> to vector<16x16x128xbf16>
      %40 = vector.extract_strided_slice %38 {offsets = [0, 1, 0], sizes = [16, 16, 128], strides = [1, 1, 1]} : vector<18x18x128xbf16> to vector<16x16x128xbf16>
      %41 = vector.extract_strided_slice %38 {offsets = [0, 2, 0], sizes = [16, 16, 128], strides = [1, 1, 1]} : vector<18x18x128xbf16> to vector<16x16x128xbf16>
      %42 = vector.extract_strided_slice %38 {offsets = [1, 0, 0], sizes = [16, 16, 128], strides = [1, 1, 1]} : vector<18x18x128xbf16> to vector<16x16x128xbf16>
      %43 = vector.extract_strided_slice %38 {offsets = [1, 1, 0], sizes = [16, 16, 128], strides = [1, 1, 1]} : vector<18x18x128xbf16> to vector<16x16x128xbf16>
      %44 = vector.extract_strided_slice %38 {offsets = [1, 2, 0], sizes = [16, 16, 128], strides = [1, 1, 1]} : vector<18x18x128xbf16> to vector<16x16x128xbf16>
      %45 = vector.extract_strided_slice %38 {offsets = [2, 0, 0], sizes = [16, 16, 128], strides = [1, 1, 1]} : vector<18x18x128xbf16> to vector<16x16x128xbf16>
      %46 = vector.extract_strided_slice %38 {offsets = [2, 1, 0], sizes = [16, 16, 128], strides = [1, 1, 1]} : vector<18x18x128xbf16> to vector<16x16x128xbf16>
      %47 = vector.extract_strided_slice %38 {offsets = [2, 2, 0], sizes = [16, 16, 128], strides = [1, 1, 1]} : vector<18x18x128xbf16> to vector<16x16x128xbf16>
      %48 = tpu.concatenate %39, %40, %41, %42, %43, %44, %45, %46, %47 in 2 : vector<16x16x128xbf16>, vector<16x16x128xbf16>, vector<16x16x128xbf16>, vector<16x16x128xbf16>, vector<16x16x128xbf16>, vector<16x16x128xbf16>, vector<16x16x128xbf16>, vector<16x16x128xbf16>, vector<16x16x128xbf16> -> vector<16x16x1152xbf16>
      %49 = vector.shape_cast %48 : vector<16x16x1152xbf16> to vector<256x1152xbf16>
      %c0_29 = arith.constant 0 : index
      %c0_30 = arith.constant 0 : index
      %50 = vector.load %arg9[%c0_29, %c0_30] : memref<256x1152xbf16, #tpu.memory_space<vmem>>, vector<256x1152xbf16>
      tpu.vector_store %arg9[%c0_29, %c0_30], %49 {strides = array<i32>} : memref<256x1152xbf16, #tpu.memory_space<vmem>>, vector<256x1152xbf16>,
    } else {
    }
    %c0 = arith.constant 0 : index
    %c0_1 = arith.constant 0 : index
    %3 = vector.load %arg9[%c0, %c0_1] : memref<256x1152xbf16, #tpu.memory_space<vmem>>, vector<256x1152xbf16>
    %c0_2 = arith.constant 0 : index
    %c0_3 = arith.constant 0 : index
    %4 = vector.load %arg3[%c0_2, %c0_3] : memref<1152x128xbf16, #tpu.memory_space<vmem>>, vector<1152x128xbf16>
    %cst = arith.constant dense<0.000000e+00> : vector<256x128xf32>
    %5 = tpu.matmul %3, %4, %cst {dimension_numbers = #tpu.dot_dimension_numbers<[1], [0], [0], [1], [0, 0, 1, 1], [], []>} : vector<256x1152xbf16>, vector<1152x128xbf16>, vector<256x128xf32> -> vector<256x128xf32>
    %6 = vector.shape_cast %5 : vector<256x128xf32> to vector<16x16x128xf32>
    %7 = arith.truncf %6 : vector<16x16x128xf32> to vector<16x16x128xbf16>
    %c0_4 = arith.constant 0 : index
    %c0_5 = arith.constant 0 : index
    %c0_6 = arith.constant 0 : index
    %c0_7 = arith.constant 0 : index
    %8 = vector.load %arg5[%c0_4, %c0_5, %c0_6, %c0_7] : memref<1x16x16x128xbf16, #tpu.memory_space<vmem>>, vector<1x16x16x128xbf16>
    %9 = vector.shape_cast %8 : vector<1x16x16x128xbf16> to vector<16x16x128xbf16>
    %10 = vector.shape_cast %7 : vector<16x16x128xbf16> to vector<1x16x16x128xbf16>
    tpu.vector_store %arg5[%c0_4, %c0_5, %c0_6, %c0_7], %10 {strides = array<i32>} : memref<1x16x16x128xbf16, #tpu.memory_space<vmem>>, vector<1x16x16x128xbf16>,
    %cst_8 = arith.constant dense<0.000000e+00> : vector<128xf32>
    %11 = vector.multi_reduction <add>, %5, %cst_8 [0] : vector<256x128xf32> to vector<128xf32>
    %12 = arith.mulf %5, %5 : vector<256x128xf32>
    %cst_9 = arith.constant dense<0.000000e+00> : vector<128xf32>
    %13 = vector.multi_reduction <add>, %12, %cst_9 [0] : vector<256x128xf32> to vector<128xf32>
    %14 = vector.shape_cast %11 : vector<128xf32> to vector<1x128xf32>
    %15 = vector.shape_cast %13 : vector<128xf32> to vector<1x128xf32>
    %16 = tpu.concatenate %14, %15 in 0 : vector<1x128xf32>, vector<1x128xf32> -> vector<2x128xf32>
    %c0_10 = arith.constant 0 : index
    %c0_11 = arith.constant 0 : index
    %c0_12 = arith.constant 0 : index
    %17 = vector.load %arg6[%c0_10, %c0_11, %c0_12] : memref<1x2x128xf32, #tpu.memory_space<vmem>>, vector<1x2x128xf32>
    %18 = vector.shape_cast %17 : vector<1x2x128xf32> to vector<2x128xf32>
    %19 = vector.shape_cast %16 : vector<2x128xf32> to vector<1x2x128xf32>
    tpu.vector_store %arg6[%c0_10, %c0_11, %c0_12], %19 {strides = array<i32>} : memref<1x2x128xf32, #tpu.memory_space<vmem>>, vector<1x2x128xf32>,
    %20 = vector.extract_strided_slice %3 {offsets = [0, 512], sizes = [256, 128], strides = [1, 1]} : vector<256x1152xbf16> to vector<256x128xbf16>
    %c0_13 = arith.constant 0 : index
    %c0_14 = arith.constant 0 : index
    %21 = vector.load %arg4[%c0_13, %c0_14] : memref<128x128xbf16, #tpu.memory_space<vmem>>, vector<128x128xbf16>
    %cst_15 = arith.constant dense<0.000000e+00> : vector<256x128xf32>
    %22 = tpu.matmul %20, %21, %cst_15 {dimension_numbers = #tpu.dot_dimension_numbers<[1], [0], [0], [1], [0, 0, 1, 1], [], []>} : vector<256x128xbf16>, vector<128x128xbf16>, vector<256x128xf32> -> vector<256x128xf32>
    %23 = vector.shape_cast %22 : vector<256x128xf32> to vector<16x16x128xf32>
    %24 = arith.truncf %23 : vector<16x16x128xf32> to vector<16x16x128xbf16>
    %c0_16 = arith.constant 0 : index
    %c0_17 = arith.constant 0 : index
    %c0_18 = arith.constant 0 : index
    %c0_19 = arith.constant 0 : index
    %25 = vector.load %arg7[%c0_16, %c0_17, %c0_18, %c0_19] : memref<1x16x16x128xbf16, #tpu.memory_space<vmem>>, vector<1x16x16x128xbf16>
    %26 = vector.shape_cast %25 : vector<1x16x16x128xbf16> to vector<16x16x128xbf16>
    %27 = vector.shape_cast %24 : vector<16x16x128xbf16> to vector<1x16x16x128xbf16>
    tpu.vector_store %arg7[%c0_16, %c0_17, %c0_18, %c0_19], %27 {strides = array<i32>} : memref<1x16x16x128xbf16, #tpu.memory_space<vmem>>, vector<1x16x16x128xbf16>,
    %cst_20 = arith.constant dense<0.000000e+00> : vector<128xf32>
    %28 = vector.multi_reduction <add>, %22, %cst_20 [0] : vector<256x128xf32> to vector<128xf32>
    %29 = arith.mulf %22, %22 : vector<256x128xf32>
    %cst_21 = arith.constant dense<0.000000e+00> : vector<128xf32>
    %30 = vector.multi_reduction <add>, %29, %cst_21 [0] : vector<256x128xf32> to vector<128xf32>
    %31 = vector.shape_cast %28 : vector<128xf32> to vector<1x128xf32>
    %32 = vector.shape_cast %30 : vector<128xf32> to vector<1x128xf32>
    %33 = tpu.concatenate %31, %32 in 0 : vector<1x128xf32>, vector<1x128xf32> -> vector<2x128xf32>
    %c0_22 = arith.constant 0 : index
    %c0_23 = arith.constant 0 : index
    %c0_24 = arith.constant 0 : index
    %34 = vector.load %arg8[%c0_22, %c0_23, %c0_24] : memref<1x2x128xf32, #tpu.memory_space<vmem>>, vector<1x2x128xf32>
    %35 = vector.shape_cast %34 : vector<1x2x128xf32> to vector<2x128xf32>
    %36 = vector.shape_cast %33 : vector<2x128xf32> to vector<1x2x128xf32>
    tpu.vector_store %arg8[%c0_22, %c0_23, %c0_24], %36 {strides = array<i32>} : memref<1x2x128xf32, #tpu.memory_space<vmem>>, vector<1x2x128xf32>,
    return
  }
  func.func @transform_0(%arg0: i32, %arg1: i32) -> (i32, i32, i32, i32) {
    %c0_i32 = arith.constant 0 : i32
    %c0_i32_0 = arith.constant 0 : i32
    %c0_i32_1 = arith.constant 0 : i32
    %c0_i32_2 = arith.constant 0 : i32
    return %arg0, %c0_i32, %c0_i32_0, %c0_i32_1 : i32, i32, i32, i32
  }
  func.func @transform_1(%arg0: i32, %arg1: i32) -> (i32, i32) {
    %c0_i32 = arith.constant 0 : i32
    %c0_i32_0 = arith.constant 0 : i32
    return %c0_i32, %arg1 : i32, i32
  }
  func.func @transform_2(%arg0: i32, %arg1: i32) -> (i32, i32) {
    %c0_i32 = arith.constant 0 : i32
    %c0_i32_0 = arith.constant 0 : i32
    return %c0_i32, %arg1 : i32, i32
  }
  func.func @transform_3(%arg0: i32, %arg1: i32) -> (i32, i32, i32, i32) {
    %c0_i32 = arith.constant 0 : i32
    %c0_i32_0 = arith.constant 0 : i32
    %c0_i32_1 = arith.constant 0 : i32
    return %arg0, %c0_i32, %c0_i32_0, %arg1 : i32, i32, i32, i32
  }
  func.func @transform_4(%arg0: i32, %arg1: i32) -> (i32, i32, i32) {
    %c0_i32 = arith.constant 0 : i32
    %c0_i32_0 = arith.constant 0 : i32
    return %arg0, %c0_i32, %arg1 : i32, i32, i32
  }
  func.func @transform_5(%arg0: i32, %arg1: i32) -> (i32, i32, i32, i32) {
    %c0_i32 = arith.constant 0 : i32
    %c0_i32_0 = arith.constant 0 : i32
    %c0_i32_1 = arith.constant 0 : i32
    return %arg0, %c0_i32, %c0_i32_0, %arg1 : i32, i32, i32, i32
  }
  func.func @transform_6(%arg0: i32, %arg1: i32) -> (i32, i32, i32) {
    %c0_i32 = arith.constant 0 : i32
    %c0_i32_0 = arith.constant 0 : i32
    return %arg0, %c0_i32, %arg1 : i32, i32, i32
  }
}

module attributes {stable_mosaic.version = 11 : i64} {
  func.func @_conv_block_kernel(%arg0: i32, %arg1: i32, %arg2: memref<1x18x18x128xbf16, #tpu.memory_space<vmem>>, %arg3: memref<1x128xf32, #tpu.memory_space<vmem>>, %arg4: memref<1x128xf32, #tpu.memory_space<vmem>>, %arg5: memref<1152x128xbf16, #tpu.memory_space<vmem>>, %arg6: memref<1x16x16x128xbf16, #tpu.memory_space<vmem>>, %arg7: memref<1x2x128xf32, #tpu.memory_space<vmem>>, %arg8: memref<256x1152xbf16, #tpu.memory_space<vmem>>) attributes {dimension_semantics = [#tpu.dimension_semantics<parallel>, #tpu.dimension_semantics<arbitrary>], iteration_bounds = array<i64: 2, 1>, scalar_prefetch = 0 : i64, scratch_operands = 1 : i64, tpu.core_type = #tpu.core_type<tc>, window_params = [{transform_indices = @transform_0, window_bounds = array<i64: 1, 18, 18, 128>}, {pipeline_mode = #tpu.pipeline_mode<synchronous>, transform_indices = @transform_1, window_bounds = array<i64: 1, 128>}, {pipeline_mode = #tpu.pipeline_mode<synchronous>, transform_indices = @transform_2, window_bounds = array<i64: 1, 128>}, {transform_indices = @transform_3, window_bounds = array<i64: 1152, 128>}, {transform_indices = @transform_4, window_bounds = array<i64: 1, 16, 16, 128>}, {transform_indices = @transform_5, window_bounds = array<i64: 1, 2, 128>}]} {
    %c0_i32 = arith.constant 0 : i32
    %0 = arith.cmpi eq, %arg1, %c0_i32 : i32
    %1 = arith.extui %0 : i1 to i32
    %c0_i32_0 = arith.constant 0 : i32
    %2 = arith.cmpi ne, %1, %c0_i32_0 : i32
    scf.if %2 {
      %20 = tpu.iota {dimensions = array<i32: 0>} : vector<18x18x128xi32>
      %21 = tpu.iota {dimensions = array<i32: 1>} : vector<18x18x128xi32>
      %c1_i32 = arith.constant 1 : i32
      %22 = vector.broadcast %c1_i32 : i32 to vector<18x18x128xi32>
      %23 = arith.cmpi sge, %20, %22 : vector<18x18x128xi32>
      %c17_i32 = arith.constant 17 : i32
      %24 = vector.broadcast %c17_i32 : i32 to vector<18x18x128xi32>
      %25 = arith.cmpi slt, %20, %24 : vector<18x18x128xi32>
      %26 = arith.andi %23, %25 : vector<18x18x128xi1>
      %c1_i32_13 = arith.constant 1 : i32
      %27 = vector.broadcast %c1_i32_13 : i32 to vector<18x18x128xi32>
      %28 = arith.cmpi sge, %21, %27 : vector<18x18x128xi32>
      %29 = arith.andi %26, %28 : vector<18x18x128xi1>
      %c17_i32_14 = arith.constant 17 : i32
      %30 = vector.broadcast %c17_i32_14 : i32 to vector<18x18x128xi32>
      %31 = arith.cmpi slt, %21, %30 : vector<18x18x128xi32>
      %32 = arith.andi %29, %31 : vector<18x18x128xi1>
      %c0_15 = arith.constant 0 : index
      %c0_16 = arith.constant 0 : index
      %c0_17 = arith.constant 0 : index
      %c0_18 = arith.constant 0 : index
      %33 = vector.load %arg2[%c0_15, %c0_16, %c0_17, %c0_18] : memref<1x18x18x128xbf16, #tpu.memory_space<vmem>>, vector<1x18x18x128xbf16>
      %34 = vector.shape_cast %33 : vector<1x18x18x128xbf16> to vector<18x18x128xbf16>
      %35 = arith.extf %34 : vector<18x18x128xbf16> to vector<18x18x128xf32>
      %c0_19 = arith.constant 0 : index
      %c0_20 = arith.constant 0 : index
      %36 = vector.load %arg3[%c0_19, %c0_20] : memref<1x128xf32, #tpu.memory_space<vmem>>, vector<1x128xf32>
      %37 = vector.shape_cast %36 : vector<1x128xf32> to vector<128xf32>
      %38 = vector.shape_cast %37 : vector<128xf32> to vector<1x1x128xf32>
      %39 = vector.broadcast %38 : vector<1x1x128xf32> to vector<18x18x128xf32>
      %40 = arith.mulf %35, %39 : vector<18x18x128xf32>
      %c0_21 = arith.constant 0 : index
      %c0_22 = arith.constant 0 : index
      %41 = vector.load %arg4[%c0_21, %c0_22] : memref<1x128xf32, #tpu.memory_space<vmem>>, vector<1x128xf32>
      %42 = vector.shape_cast %41 : vector<1x128xf32> to vector<128xf32>
      %43 = vector.shape_cast %42 : vector<128xf32> to vector<1x1x128xf32>
      %44 = vector.broadcast %43 : vector<1x1x128xf32> to vector<18x18x128xf32>
      %45 = arith.addf %40, %44 : vector<18x18x128xf32>
      %cst_23 = arith.constant 0.000000e+00 : f32
      %46 = vector.broadcast %cst_23 : f32 to vector<18x18x128xf32>
      %47 = arith.maximumf %45, %46 : vector<18x18x128xf32>
      %cst_24 = arith.constant 0.000000e+00 : f32
      %48 = vector.broadcast %cst_24 : f32 to vector<18x18x128xf32>
      %49 = arith.select %32, %47, %48 : vector<18x18x128xi1>, vector<18x18x128xf32>
      %50 = arith.truncf %49 : vector<18x18x128xf32> to vector<18x18x128xbf16>
      %51 = vector.extract_strided_slice %50 {offsets = [0, 0, 0], sizes = [16, 16, 128], strides = [1, 1, 1]} : vector<18x18x128xbf16> to vector<16x16x128xbf16>
      %52 = vector.extract_strided_slice %50 {offsets = [0, 1, 0], sizes = [16, 16, 128], strides = [1, 1, 1]} : vector<18x18x128xbf16> to vector<16x16x128xbf16>
      %53 = vector.extract_strided_slice %50 {offsets = [0, 2, 0], sizes = [16, 16, 128], strides = [1, 1, 1]} : vector<18x18x128xbf16> to vector<16x16x128xbf16>
      %54 = vector.extract_strided_slice %50 {offsets = [1, 0, 0], sizes = [16, 16, 128], strides = [1, 1, 1]} : vector<18x18x128xbf16> to vector<16x16x128xbf16>
      %55 = vector.extract_strided_slice %50 {offsets = [1, 1, 0], sizes = [16, 16, 128], strides = [1, 1, 1]} : vector<18x18x128xbf16> to vector<16x16x128xbf16>
      %56 = vector.extract_strided_slice %50 {offsets = [1, 2, 0], sizes = [16, 16, 128], strides = [1, 1, 1]} : vector<18x18x128xbf16> to vector<16x16x128xbf16>
      %57 = vector.extract_strided_slice %50 {offsets = [2, 0, 0], sizes = [16, 16, 128], strides = [1, 1, 1]} : vector<18x18x128xbf16> to vector<16x16x128xbf16>
      %58 = vector.extract_strided_slice %50 {offsets = [2, 1, 0], sizes = [16, 16, 128], strides = [1, 1, 1]} : vector<18x18x128xbf16> to vector<16x16x128xbf16>
      %59 = vector.extract_strided_slice %50 {offsets = [2, 2, 0], sizes = [16, 16, 128], strides = [1, 1, 1]} : vector<18x18x128xbf16> to vector<16x16x128xbf16>
      %60 = tpu.concatenate %51, %52, %53, %54, %55, %56, %57, %58, %59 in 2 : vector<16x16x128xbf16>, vector<16x16x128xbf16>, vector<16x16x128xbf16>, vector<16x16x128xbf16>, vector<16x16x128xbf16>, vector<16x16x128xbf16>, vector<16x16x128xbf16>, vector<16x16x128xbf16>, vector<16x16x128xbf16> -> vector<16x16x1152xbf16>
      %61 = vector.shape_cast %60 : vector<16x16x1152xbf16> to vector<256x1152xbf16>
      %c0_25 = arith.constant 0 : index
      %c0_26 = arith.constant 0 : index
      %62 = vector.load %arg8[%c0_25, %c0_26] : memref<256x1152xbf16, #tpu.memory_space<vmem>>, vector<256x1152xbf16>
      tpu.vector_store %arg8[%c0_25, %c0_26], %61 {strides = array<i32>} : memref<256x1152xbf16, #tpu.memory_space<vmem>>, vector<256x1152xbf16>,
    } else {
    }
    %c0 = arith.constant 0 : index
    %c0_1 = arith.constant 0 : index
    %3 = vector.load %arg8[%c0, %c0_1] : memref<256x1152xbf16, #tpu.memory_space<vmem>>, vector<256x1152xbf16>
    %c0_2 = arith.constant 0 : index
    %c0_3 = arith.constant 0 : index
    %4 = vector.load %arg5[%c0_2, %c0_3] : memref<1152x128xbf16, #tpu.memory_space<vmem>>, vector<1152x128xbf16>
    %cst = arith.constant dense<0.000000e+00> : vector<256x128xf32>
    %5 = tpu.matmul %3, %4, %cst {dimension_numbers = #tpu.dot_dimension_numbers<[1], [0], [0], [1], [0, 0, 1, 1], [], []>} : vector<256x1152xbf16>, vector<1152x128xbf16>, vector<256x128xf32> -> vector<256x128xf32>
    %6 = vector.shape_cast %5 : vector<256x128xf32> to vector<16x16x128xf32>
    %7 = arith.truncf %6 : vector<16x16x128xf32> to vector<16x16x128xbf16>
    %c0_4 = arith.constant 0 : index
    %c0_5 = arith.constant 0 : index
    %c0_6 = arith.constant 0 : index
    %c0_7 = arith.constant 0 : index
    %8 = vector.load %arg6[%c0_4, %c0_5, %c0_6, %c0_7] : memref<1x16x16x128xbf16, #tpu.memory_space<vmem>>, vector<1x16x16x128xbf16>
    %9 = vector.shape_cast %8 : vector<1x16x16x128xbf16> to vector<16x16x128xbf16>
    %10 = vector.shape_cast %7 : vector<16x16x128xbf16> to vector<1x16x16x128xbf16>
    tpu.vector_store %arg6[%c0_4, %c0_5, %c0_6, %c0_7], %10 {strides = array<i32>} : memref<1x16x16x128xbf16, #tpu.memory_space<vmem>>, vector<1x16x16x128xbf16>,
    %cst_8 = arith.constant dense<0.000000e+00> : vector<128xf32>
    %11 = vector.multi_reduction <add>, %5, %cst_8 [0] : vector<256x128xf32> to vector<128xf32>
    %12 = arith.mulf %5, %5 : vector<256x128xf32>
    %cst_9 = arith.constant dense<0.000000e+00> : vector<128xf32>
    %13 = vector.multi_reduction <add>, %12, %cst_9 [0] : vector<256x128xf32> to vector<128xf32>
    %14 = vector.shape_cast %11 : vector<128xf32> to vector<1x128xf32>
    %15 = vector.shape_cast %13 : vector<128xf32> to vector<1x128xf32>
    %16 = tpu.concatenate %14, %15 in 0 : vector<1x128xf32>, vector<1x128xf32> -> vector<2x128xf32>
    %c0_10 = arith.constant 0 : index
    %c0_11 = arith.constant 0 : index
    %c0_12 = arith.constant 0 : index
    %17 = vector.load %arg7[%c0_10, %c0_11, %c0_12] : memref<1x2x128xf32, #tpu.memory_space<vmem>>, vector<1x2x128xf32>
    %18 = vector.shape_cast %17 : vector<1x2x128xf32> to vector<2x128xf32>
    %19 = vector.shape_cast %16 : vector<2x128xf32> to vector<1x2x128xf32>
    tpu.vector_store %arg7[%c0_10, %c0_11, %c0_12], %19 {strides = array<i32>} : memref<1x2x128xf32, #tpu.memory_space<vmem>>, vector<1x2x128xf32>,
    return
  }
  func.func @transform_0(%arg0: i32, %arg1: i32) -> (i32, i32, i32, i32) {
    %c0_i32 = arith.constant 0 : i32
    %c0_i32_0 = arith.constant 0 : i32
    %c0_i32_1 = arith.constant 0 : i32
    %c0_i32_2 = arith.constant 0 : i32
    return %arg0, %c0_i32, %c0_i32_0, %c0_i32_1 : i32, i32, i32, i32
  }
  func.func @transform_1(%arg0: i32, %arg1: i32) -> (i32, i32) {
    %c0_i32 = arith.constant 0 : i32
    %c0_i32_0 = arith.constant 0 : i32
    %c0_i32_1 = arith.constant 0 : i32
    return %c0_i32, %c0_i32_0 : i32, i32
  }
  func.func @transform_2(%arg0: i32, %arg1: i32) -> (i32, i32) {
    %c0_i32 = arith.constant 0 : i32
    %c0_i32_0 = arith.constant 0 : i32
    %c0_i32_1 = arith.constant 0 : i32
    return %c0_i32, %c0_i32_0 : i32, i32
  }
  func.func @transform_3(%arg0: i32, %arg1: i32) -> (i32, i32) {
    %c0_i32 = arith.constant 0 : i32
    %c0_i32_0 = arith.constant 0 : i32
    return %c0_i32, %arg1 : i32, i32
  }
  func.func @transform_4(%arg0: i32, %arg1: i32) -> (i32, i32, i32, i32) {
    %c0_i32 = arith.constant 0 : i32
    %c0_i32_0 = arith.constant 0 : i32
    %c0_i32_1 = arith.constant 0 : i32
    return %arg0, %c0_i32, %c0_i32_0, %arg1 : i32, i32, i32, i32
  }
  func.func @transform_5(%arg0: i32, %arg1: i32) -> (i32, i32, i32) {
    %c0_i32 = arith.constant 0 : i32
    %c0_i32_0 = arith.constant 0 : i32
    return %arg0, %c0_i32, %arg1 : i32, i32, i32
  }
}

module attributes {stable_mosaic.version = 11 : i64} {
  func.func @_bn_add_relu_kernel(%arg0: i32, %arg1: i32, %arg2: memref<1x16x16x128xbf16, #tpu.memory_space<vmem>>, %arg3: memref<1x128xf32, #tpu.memory_space<vmem>>, %arg4: memref<1x128xf32, #tpu.memory_space<vmem>>, %arg5: memref<1x16x16x128xbf16, #tpu.memory_space<vmem>>, %arg6: memref<1x128xf32, #tpu.memory_space<vmem>>, %arg7: memref<1x128xf32, #tpu.memory_space<vmem>>, %arg8: memref<1x16x16x128xf32, #tpu.memory_space<vmem>>) attributes {dimension_semantics = [#tpu.dimension_semantics<parallel>, #tpu.dimension_semantics<parallel>], iteration_bounds = array<i64: 2, 1>, scalar_prefetch = 0 : i64, scratch_operands = 0 : i64, tpu.core_type = #tpu.core_type<tc>, window_params = [{transform_indices = @transform_0, window_bounds = array<i64: 1, 16, 16, 128>}, {transform_indices = @transform_1, window_bounds = array<i64: 1, 128>}, {transform_indices = @transform_2, window_bounds = array<i64: 1, 128>}, {transform_indices = @transform_3, window_bounds = array<i64: 1, 16, 16, 128>}, {transform_indices = @transform_4, window_bounds = array<i64: 1, 128>}, {transform_indices = @transform_5, window_bounds = array<i64: 1, 128>}, {transform_indices = @transform_6, window_bounds = array<i64: 1, 16, 16, 128>}]} {
    %c0 = arith.constant 0 : index
    %c0_0 = arith.constant 0 : index
    %c0_1 = arith.constant 0 : index
    %c0_2 = arith.constant 0 : index
    %0 = vector.load %arg2[%c0, %c0_0, %c0_1, %c0_2] : memref<1x16x16x128xbf16, #tpu.memory_space<vmem>>, vector<1x16x16x128xbf16>
    %1 = vector.shape_cast %0 : vector<1x16x16x128xbf16> to vector<16x16x128xbf16>
    %2 = arith.extf %1 : vector<16x16x128xbf16> to vector<16x16x128xf32>
    %c0_3 = arith.constant 0 : index
    %c0_4 = arith.constant 0 : index
    %3 = vector.load %arg3[%c0_3, %c0_4] : memref<1x128xf32, #tpu.memory_space<vmem>>, vector<1x128xf32>
    %4 = vector.shape_cast %3 : vector<1x128xf32> to vector<128xf32>
    %5 = vector.shape_cast %4 : vector<128xf32> to vector<1x1x128xf32>
    %6 = vector.broadcast %5 : vector<1x1x128xf32> to vector<16x16x128xf32>
    %7 = arith.mulf %2, %6 : vector<16x16x128xf32>
    %c0_5 = arith.constant 0 : index
    %c0_6 = arith.constant 0 : index
    %8 = vector.load %arg4[%c0_5, %c0_6] : memref<1x128xf32, #tpu.memory_space<vmem>>, vector<1x128xf32>
    %9 = vector.shape_cast %8 : vector<1x128xf32> to vector<128xf32>
    %10 = vector.shape_cast %9 : vector<128xf32> to vector<1x1x128xf32>
    %11 = vector.broadcast %10 : vector<1x1x128xf32> to vector<16x16x128xf32>
    %12 = arith.addf %7, %11 : vector<16x16x128xf32>
    %c0_7 = arith.constant 0 : index
    %c0_8 = arith.constant 0 : index
    %c0_9 = arith.constant 0 : index
    %c0_10 = arith.constant 0 : index
    %13 = vector.load %arg5[%c0_7, %c0_8, %c0_9, %c0_10] : memref<1x16x16x128xbf16, #tpu.memory_space<vmem>>, vector<1x16x16x128xbf16>
    %14 = vector.shape_cast %13 : vector<1x16x16x128xbf16> to vector<16x16x128xbf16>
    %15 = arith.extf %14 : vector<16x16x128xbf16> to vector<16x16x128xf32>
    %c0_11 = arith.constant 0 : index
    %c0_12 = arith.constant 0 : index
    %16 = vector.load %arg6[%c0_11, %c0_12] : memref<1x128xf32, #tpu.memory_space<vmem>>, vector<1x128xf32>
    %17 = vector.shape_cast %16 : vector<1x128xf32> to vector<128xf32>
    %18 = vector.shape_cast %17 : vector<128xf32> to vector<1x1x128xf32>
    %19 = vector.broadcast %18 : vector<1x1x128xf32> to vector<16x16x128xf32>
    %20 = arith.mulf %15, %19 : vector<16x16x128xf32>
    %c0_13 = arith.constant 0 : index
    %c0_14 = arith.constant 0 : index
    %21 = vector.load %arg7[%c0_13, %c0_14] : memref<1x128xf32, #tpu.memory_space<vmem>>, vector<1x128xf32>
    %22 = vector.shape_cast %21 : vector<1x128xf32> to vector<128xf32>
    %23 = vector.shape_cast %22 : vector<128xf32> to vector<1x1x128xf32>
    %24 = vector.broadcast %23 : vector<1x1x128xf32> to vector<16x16x128xf32>
    %25 = arith.addf %20, %24 : vector<16x16x128xf32>
    %26 = arith.addf %12, %25 : vector<16x16x128xf32>
    %cst = arith.constant 0.000000e+00 : f32
    %27 = vector.broadcast %cst : f32 to vector<16x16x128xf32>
    %28 = arith.maximumf %26, %27 : vector<16x16x128xf32>
    %c0_15 = arith.constant 0 : index
    %c0_16 = arith.constant 0 : index
    %c0_17 = arith.constant 0 : index
    %c0_18 = arith.constant 0 : index
    %29 = vector.load %arg8[%c0_15, %c0_16, %c0_17, %c0_18] : memref<1x16x16x128xf32, #tpu.memory_space<vmem>>, vector<1x16x16x128xf32>
    %30 = vector.shape_cast %29 : vector<1x16x16x128xf32> to vector<16x16x128xf32>
    %31 = vector.shape_cast %28 : vector<16x16x128xf32> to vector<1x16x16x128xf32>
    tpu.vector_store %arg8[%c0_15, %c0_16, %c0_17, %c0_18], %31 {strides = array<i32>} : memref<1x16x16x128xf32, #tpu.memory_space<vmem>>, vector<1x16x16x128xf32>,
    return
  }
  func.func @transform_0(%arg0: i32, %arg1: i32) -> (i32, i32, i32, i32) {
    %c0_i32 = arith.constant 0 : i32
    %c0_i32_0 = arith.constant 0 : i32
    %c0_i32_1 = arith.constant 0 : i32
    return %arg0, %c0_i32, %c0_i32_0, %arg1 : i32, i32, i32, i32
  }
  func.func @transform_1(%arg0: i32, %arg1: i32) -> (i32, i32) {
    %c0_i32 = arith.constant 0 : i32
    %c0_i32_0 = arith.constant 0 : i32
    return %c0_i32, %arg1 : i32, i32
  }
  func.func @transform_2(%arg0: i32, %arg1: i32) -> (i32, i32) {
    %c0_i32 = arith.constant 0 : i32
    %c0_i32_0 = arith.constant 0 : i32
    return %c0_i32, %arg1 : i32, i32
  }
  func.func @transform_3(%arg0: i32, %arg1: i32) -> (i32, i32, i32, i32) {
    %c0_i32 = arith.constant 0 : i32
    %c0_i32_0 = arith.constant 0 : i32
    %c0_i32_1 = arith.constant 0 : i32
    return %arg0, %c0_i32, %c0_i32_0, %arg1 : i32, i32, i32, i32
  }
  func.func @transform_4(%arg0: i32, %arg1: i32) -> (i32, i32) {
    %c0_i32 = arith.constant 0 : i32
    %c0_i32_0 = arith.constant 0 : i32
    return %c0_i32, %arg1 : i32, i32
  }
  func.func @transform_5(%arg0: i32, %arg1: i32) -> (i32, i32) {
    %c0_i32 = arith.constant 0 : i32
    %c0_i32_0 = arith.constant 0 : i32
    return %c0_i32, %arg1 : i32, i32
  }
  func.func @transform_6(%arg0: i32, %arg1: i32) -> (i32, i32, i32, i32) {
    %c0_i32 = arith.constant 0 : i32
    %c0_i32_0 = arith.constant 0 : i32
    %c0_i32_1 = arith.constant 0 : i32
    return %arg0, %c0_i32, %c0_i32_0, %arg1 : i32, i32, i32, i32
  }
}

</mosaic_0001>

<llo_original>
// kernel: _forward_impl.5
$region0: #{_forward_impl.5}
  #allocation0 [shape = 'u32[]', space=smem, size = 0x4, offset = 0x4, fixed_abs, tag = 'smem constant byte address 0x4 - core index']
  #allocation1 [shape = 'u32[144,128]{1,0:T(1,128)}', space=vmem, size = 0x12000, scoped, tag = 'internal scratch']
  %s0 = inlined_call_operand.vmem [shape: bf16[2,16,16,128], index: 0, kind: input, shape index: {}]
  %s1 = inlined_call_operand.vmem [shape: f32[1,128], index: 1, kind: input, shape index: {}]
  %s2 = inlined_call_operand.vmem [shape: f32[1,128], index: 2, kind: input, shape index: {}]
  %s3 = inlined_call_operand.vmem [shape: bf16[2,16,16,128], index: 3, kind: input, shape index: {}]
  %s4 = inlined_call_operand.vmem [shape: f32[1,128], index: 4, kind: input, shape index: {}]
  %s5 = inlined_call_operand.vmem [shape: f32[1,128], index: 5, kind: input, shape index: {}]
  %s6 = inlined_call_operand.vmem [shape: f32[2,16,16,128], index: 6, kind: output, shape index: {}]
  %s7 = sld [smem:[#allocation0]]
  $region57: #{_forward_impl.5} parent=0
    _
  %s9 = ssub.s32 1, %s7
  %s10 = scalar_select 0, %s9, %s7
  loop: start=0, step=1, limit=4
  $region2: #{_forward_impl.5} parent=0 // loop_pre_header
    _
  $region3: #{_forward_impl.5} parent=0 // loop_header
    %s12 = sphi 0, %s16
    %p13 = scmp.ge.s32.totalorder %s12, 4
    %s19 = sphi 0, %s31
    %s20 = sphi 0, %s27
    %s21 = sphi 0, %s19
    %s22 = sphi 0, %s20
    %s23 = sphi 0, %s21
    %s24 = sphi 0, %s22
    %s36 = sphi 0, %s38
    %s39 = sphi 0, %s36
    %s40 = sphi 0, %s39
    %s56 = sphi 0, %s40
    %s62 = sphi 0, %s64
    %s65 = sphi 0, %s62
    %s66 = sphi 0, %s65
    %s82 = sphi 0, %s66
    %s88 = sphi 0, %s90
    %s91 = sphi 0, %s88
    %s92 = sphi 0, %s91
    %s108 = sphi 0, %s92
    %s116 = sphi 0, %s118
    %s119 = sphi 0, %s116
    %s120 = sphi 0, %s119
    %s136 = sphi 0, %s120
    %s142 = sphi 0, %s144
    %s145 = sphi 0, %s142
    %s146 = sphi 0, %s145
    %s162 = sphi 0, %s146
    %s168 = sphi 0, %s170
    %s171 = sphi 0, %s168
    %s172 = sphi 0, %s171
    %s188 = sphi 0, %s172
    %s196 = sphi 0, %s198
    %s199 = sphi 0, %s196
    %s200 = sphi 0, %s199
    %s216 = sphi 0, %s200
  $region4: #{_forward_impl.5} parent=0 // loop_header_branch
    %15 = sbr.rel (%p13) target = $region8
  $region5: #{_forward_impl.5} parent=0 // loop_body
    %s17 = ssub.s32 %s12, 1
    %s18 = ssub.s32 %s12, 2
    %s25 = sadd.s32 1, %s20
    %p26 = scmp.ge.s32.totalorder %s25, 1
    %s27 = scalar_select %p26, 0, %s25
    %s28 = sadd.s32 1, %s19
    %s29 = scalar_select %p26, %s28, %s19
    %p30 = scmp.ge.s32.totalorder %s29, 2
    %s31 = scalar_select %p30, 0, %s29
    %s32 = ssub.s32 %s19, %s31
    %s33 = ssub.s32 %s20, %s27
    %s34 = sor.u32 %s32, %s33
    %p35 = scmp.eq.s32.totalorder %s34, 0
    %s37 = sadd.s32 %s36, 1
    %s38 = scalar_select %p35, %s36, %s37
    %p41 = pneg %p35
    %p42 = scmp.eq.s32.totalorder %s12, 1
    %p43 = por %p41, %p42
    %p44 = scmp.ne.s32.totalorder %s36, %s39
    %p45 = scmp.eq.s32.totalorder %s12, 0
    %p46 = por %p44, %p45
    %p47 = scmp.ne.s32.totalorder %s36, %s39
    %p48 = scmp.eq.s32.totalorder %s17, 1
    %p49 = por %p47, %p48
    %p50 = scmp.ne.s32.totalorder %s39, %s40
    %p51 = scmp.eq.s32.totalorder %s17, 0
    %p52 = por %p50, %p51
    %p53 = scmp.ne.s32.totalorder %s39, %s40
    %p54 = scmp.eq.s32.totalorder %s18, 1
    %p55 = por %p53, %p54
    %p57 = scmp.ne.s32.totalorder %s40, %s56
    %p58 = scmp.eq.s32.totalorder %s18, 0
    %p59 = por %p57, %p58
    %s60 = ssub.s32 %s20, %s27
    %p61 = scmp.eq.s32.totalorder %s60, 0
    %s63 = sadd.s32 %s62, 1
    %s64 = scalar_select %p61, %s62, %s63
    %p67 = pneg %p61
    %p68 = scmp.eq.s32.totalorder %s12, 1
    %p69 = por %p67, %p68
    %p70 = scmp.ne.s32.totalorder %s62, %s65
    %p71 = scmp.eq.s32.totalorder %s12, 0
    %p72 = por %p70, %p71
    %p73 = scmp.ne.s32.totalorder %s62, %s65
    %p74 = scmp.eq.s32.totalorder %s17, 1
    %p75 = por %p73, %p74
    %p76 = scmp.ne.s32.totalorder %s65, %s66
    %p77 = scmp.eq.s32.totalorder %s17, 0
    %p78 = por %p76, %p77
    %p79 = scmp.ne.s32.totalorder %s65, %s66
    %p80 = scmp.eq.s32.totalorder %s18, 1
    %p81 = por %p79, %p80
    %p83 = scmp.ne.s32.totalorder %s66, %s82
    %p84 = scmp.eq.s32.totalorder %s18, 0
    %p85 = por %p83, %p84
    %s86 = ssub.s32 %s20, %s27
    %p87 = scmp.eq.s32.totalorder %s86, 0
    %s89 = sadd.s32 %s88, 1
    %s90 = scalar_select %p87, %s88, %s89
    %p93 = pneg %p87
    %p94 = scmp.eq.s32.totalorder %s12, 1
    %p95 = por %p93, %p94
    %p96 = scmp.ne.s32.totalorder %s88, %s91
    %p97 = scmp.eq.s32.totalorder %s12, 0
    %p98 = por %p96, %p97
    %p99 = scmp.ne.s32.totalorder %s88, %s91
    %p100 = scmp.eq.s32.totalorder %s17, 1
    %p101 = por %p99, %p100
    %p102 = scmp.ne.s32.totalorder %s91, %s92
    %p103 = scmp.eq.s32.totalorder %s17, 0
    %p104 = por %p102, %p103
    %p105 = scmp.ne.s32.totalorder %s91, %s92
    %p106 = scmp.eq.s32.totalorder %s18, 1
    %p107 = por %p105, %p106
    %p109 = scmp.ne.s32.totalorder %s92, %s108
    %p110 = scmp.eq.s32.totalorder %s18, 0
    %p111 = por %p109, %p110
    %s112 = ssub.s32 %s19, %s31
    %s113 = ssub.s32 %s20, %s27
    %s114 = sor.u32 %s112, %s113
    %p115 = scmp.eq.s32.totalorder %s114, 0
    %s117 = sadd.s32 %s116, 1
    %s118 = scalar_select %p115, %s116, %s117
    %p121 = pneg %p115
    %p122 = scmp.eq.s32.totalorder %s12, 1
    %p123 = por %p121, %p122
    %p124 = scmp.ne.s32.totalorder %s116, %s119
    %p125 = scmp.eq.s32.totalorder %s12, 0
    %p126 = por %p124, %p125
    %p127 = scmp.ne.s32.totalorder %s116, %s119
    %p128 = scmp.eq.s32.totalorder %s17, 1
    %p129 = por %p127, %p128
    %p130 = scmp.ne.s32.totalorder %s119, %s120
    %p131 = scmp.eq.s32.totalorder %s17, 0
    %p132 = por %p130, %p131
    %p133 = scmp.ne.s32.totalorder %s119, %s120
    %p134 = scmp.eq.s32.totalorder %s18, 1
    %p135 = por %p133, %p134
    %p137 = scmp.ne.s32.totalorder %s120, %s136
    %p138 = scmp.eq.s32.totalorder %s18, 0
    %p139 = por %p137, %p138
    %s140 = ssub.s32 %s20, %s27
    %p141 = scmp.eq.s32.totalorder %s140, 0
    %s143 = sadd.s32 %s142, 1
    %s144 = scalar_select %p141, %s142, %s143
    %p147 = pneg %p141
    %p148 = scmp.eq.s32.totalorder %s12, 1
    %p149 = por %p147, %p148
    %p150 = scmp.ne.s32.totalorder %s142, %s145
    %p151 = scmp.eq.s32.totalorder %s12, 0
    %p152 = por %p150, %p151
    %p153 = scmp.ne.s32.totalorder %s142, %s145
    %p154 = scmp.eq.s32.totalorder %s17, 1
    %p155 = por %p153, %p154
    %p156 = scmp.ne.s32.totalorder %s145, %s146
    %p157 = scmp.eq.s32.totalorder %s17, 0
    %p158 = por %p156, %p157
    %p159 = scmp.ne.s32.totalorder %s145, %s146
    %p160 = scmp.eq.s32.totalorder %s18, 1
    %p161 = por %p159, %p160
    %p163 = scmp.ne.s32.totalorder %s146, %s162
    %p164 = scmp.eq.s32.totalorder %s18, 0
    %p165 = por %p163, %p164
    %s166 = ssub.s32 %s20, %s27
    %p167 = scmp.eq.s32.totalorder %s166, 0
    %s169 = sadd.s32 %s168, 1
    %s170 = scalar_select %p167, %s168, %s169
    %p173 = pneg %p167
    %p174 = scmp.eq.s32.totalorder %s12, 1
    %p175 = por %p173, %p174
    %p176 = scmp.ne.s32.totalorder %s168, %s171
    %p177 = scmp.eq.s32.totalorder %s12, 0
    %p178 = por %p176, %p177
    %p179 = scmp.ne.s32.totalorder %s168, %s171
    %p180 = scmp.eq.s32.totalorder %s17, 1
    %p181 = por %p179, %p180
    %p182 = scmp.ne.s32.totalorder %s171, %s172
    %p183 = scmp.eq.s32.totalorder %s17, 0
    %p184 = por %p182, %p183
    %p185 = scmp.ne.s32.totalorder %s171, %s172
    %p186 = scmp.eq.s32.totalorder %s18, 1
    %p187 = por %p185, %p186
    %p189 = scmp.ne.s32.totalorder %s172, %s188
    %p190 = scmp.eq.s32.totalorder %s18, 0
    %p191 = por %p189, %p190
    %s192 = ssub.s32 %s19, %s31
    %s193 = ssub.s32 %s20, %s27
    %s194 = sor.u32 %s192, %s193
    %p195 = scmp.eq.s32.totalorder %s194, 0
    %s197 = sadd.s32 %s196, 1
    %s198 = scalar_select %p195, %s196, %s197
    %p201 = pneg %p195
    %p202 = scmp.eq.s32.totalorder %s12, 1
    %p203 = por %p201, %p202
    %p204 = scmp.ne.s32.totalorder %s196, %s199
    %p205 = scmp.eq.s32.totalorder %s12, 0
    %p206 = por %p204, %p205
    %p207 = scmp.ne.s32.totalorder %s196, %s199
    %p208 = scmp.eq.s32.totalorder %s17, 1
    %p209 = por %p207, %p208
    %p210 = scmp.ne.s32.totalorder %s199, %s200
    %p211 = scmp.eq.s32.totalorder %s17, 0
    %p212 = por %p210, %p211
    %p213 = scmp.ne.s32.totalorder %s199, %s200
    %p214 = scmp.eq.s32.totalorder %s18, 1
    %p215 = por %p213, %p214
    %p217 = scmp.ne.s32.totalorder %s200, %s216
    %p218 = scmp.eq.s32.totalorder %s18, 0
    %p219 = por %p217, %p218
    %p220 = scmp.le.s32.totalorder 1, %s12
    %p221 = scmp.lt.s32.totalorder %s12, 3
    %p222 = pnand %p220, %p221
    %p223 = pneg %p222
    // Predicated region
    $region9: #{_forward_impl.5} parent=5 // pred_check
      _
    $region10: #{_forward_impl.5} parent=5 // pred_check_branch
      %225 = sbr.rel (%p222) target = $region12
    $region11: #{_forward_impl.5} parent=5 // pred_region
      %s226 = ssub.s32 %s12, 1
      // Predicated region
      $region13: #{_forward_impl.5} parent=11 // pred_check
        %p227 = pneg %p78
      $region14: #{_forward_impl.5} parent=11 // pred_check_branch
        %229 = sbr.rel (%p227) target = $region16
      $region15: #{_forward_impl.5} parent=11 // pred_region
        %p230 = scmp.lt.s32.totalorder %s22, 0
        %s231 = scalar_select %p230, %s22, 0
        %s232 = scalar_lea.vmem %s1, %s231
      $region16: #{_forward_impl.5} parent=11 // pred_fallthru
        _
      // Predicated region
      $region17: #{_forward_impl.5} parent=11 // pred_check
        %p233 = pneg %p104
      $region18: #{_forward_impl.5} parent=11 // pred_check_branch
        %235 = sbr.rel (%p233) target = $region20
      $region19: #{_forward_impl.5} parent=11 // pred_region
        %p236 = scmp.lt.s32.totalorder %s22, 0
        %s237 = scalar_select %p236, %s22, 0
        %s238 = scalar_lea.vmem %s2, %s237
      $region20: #{_forward_impl.5} parent=11 // pred_fallthru
        _
      // Predicated region
      $region21: #{_forward_impl.5} parent=11 // pred_check
        %p239 = pneg %p158
      $region22: #{_forward_impl.5} parent=11 // pred_check_branch
        %241 = sbr.rel (%p239) target = $region24
      $region23: #{_forward_impl.5} parent=11 // pred_region
        %p242 = scmp.lt.s32.totalorder %s22, 0
        %s243 = scalar_select %p242, %s22, 0
        %s244 = scalar_lea.vmem %s4, %s243
      $region24: #{_forward_impl.5} parent=11 // pred_fallthru
        _
      // Predicated region
      $region25: #{_forward_impl.5} parent=11 // pred_check
        %p245 = pneg %p184
      $region26: #{_forward_impl.5} parent=11 // pred_check_branch
        %247 = sbr.rel (%p245) target = $region28
      $region27: #{_forward_impl.5} parent=11 // pred_region
        %p248 = scmp.lt.s32.totalorder %s22, 0
        %s249 = scalar_select %p248, %s22, 0
        %s250 = scalar_lea.vmem %s5, %s249
      $region28: #{_forward_impl.5} parent=11 // pred_fallthru
        _
    $region12: #{_forward_impl.5} parent=5 // pred_fallthru
      _
    %p251 = scmp.lt.s32.totalorder %s12, 2
    // Predicated region
    $region29: #{_forward_impl.5} parent=5 // pred_check
      %p252 = pneg %p251
    $region30: #{_forward_impl.5} parent=5 // pred_check_branch
      %254 = sbr.rel (%p252) target = $region32
    $region31: #{_forward_impl.5} parent=5 // pred_region
      // Predicated region
      $region33: #{_forward_impl.5} parent=31 // pred_check
        %p255 = pneg %p46
      $region34: #{_forward_impl.5} parent=31 // pred_check_branch
        %257 = sbr.rel (%p255) target = $region36
      $region35: #{_forward_impl.5} parent=31 // pred_region
        %p258 = scmp.lt.s32.totalorder %s19, 1
        %s259 = scalar_select %p258, %s19, 1
        %p260 = scmp.lt.s32.totalorder %s20, 0
        %s261 = scalar_select %p260, %s20, 0
        %s262 = smul.addr %s259, 32
        %s263 = sadd.s32 %s261, %s262
        %s264 = smul.addr %s263, 4
        %s265 = scalar_lea.vmem %s0, %s264
      $region36: #{_forward_impl.5} parent=31 // pred_fallthru
        _
      // Predicated region
      $region37: #{_forward_impl.5} parent=31 // pred_check
        %p266 = pneg %p126
      $region38: #{_forward_impl.5} parent=31 // pred_check_branch
        %268 = sbr.rel (%p266) target = $region40
      $region39: #{_forward_impl.5} parent=31 // pred_region
        %p269 = scmp.lt.s32.totalorder %s19, 1
        %s270 = scalar_select %p269, %s19, 1
        %p271 = scmp.lt.s32.totalorder %s20, 0
        %s272 = scalar_select %p271, %s20, 0
        %s273 = smul.addr %s270, 32
        %s274 = sadd.s32 %s272, %s273
        %s275 = smul.addr %s274, 4
        %s276 = scalar_lea.vmem %s3, %s275
      $region40: #{_forward_impl.5} parent=31 // pred_fallthru
        _
    $region32: #{_forward_impl.5} parent=5 // pred_fallthru
      _
    %p277 = scmp.le.s32.totalorder 1, %s12
    %p278 = scmp.lt.s32.totalorder %s12, 3
    %p279 = pnand %p277, %p278
    %p280 = pneg %p279
    // Predicated region
    $region41: #{_forward_impl.5} parent=5 // pred_check
      _
    $region42: #{_forward_impl.5} parent=5 // pred_check_branch
      %282 = sbr.rel (%p279) target = $region44
    $region43: #{_forward_impl.5} parent=5 // pred_region
      %s283 = ssub.s32 %s12, 1
      %p284 = scmp.lt.s32.totalorder %s21, 1
      %s285 = scalar_select %p284, %s21, 1
      %p286 = scmp.lt.s32.totalorder %s22, 0
      %s287 = scalar_select %p286, %s22, 0
      %s288 = smul.addr %s285, 32
      %s289 = sadd.s32 %s287, %s288
      %s290 = smul.addr %s289, 4
      %s291 = scalar_lea.vmem %s0, %s290
      %p292 = pneg %p52
      %p293 = pneg %p49
      %p294 = scmp.lt.s32.totalorder %s22, 0
      %s295 = scalar_select %p294, %s22, 0
      %s296 = scalar_lea.vmem %s1, %s295
      %p297 = pneg %p78
      %p298 = pneg %p75
      %p299 = scmp.lt.s32.totalorder %s22, 0
      %s300 = scalar_select %p299, %s22, 0
      %s301 = scalar_lea.vmem %s2, %s300
      %p302 = pneg %p104
      %p303 = pneg %p101
      %p304 = scmp.lt.s32.totalorder %s21, 1
      %s305 = scalar_select %p304, %s21, 1
      %p306 = scmp.lt.s32.totalorder %s22, 0
      %s307 = scalar_select %p306, %s22, 0
      %s308 = smul.addr %s305, 32
      %s309 = sadd.s32 %s307, %s308
      %s310 = smul.addr %s309, 4
      %s311 = scalar_lea.vmem %s3, %s310
      %p312 = pneg %p132
      %p313 = pneg %p129
      %p314 = scmp.lt.s32.totalorder %s22, 0
      %s315 = scalar_select %p314, %s22, 0
      %s316 = scalar_lea.vmem %s4, %s315
      %p317 = pneg %p158
      %p318 = pneg %p155
      %p319 = scmp.lt.s32.totalorder %s22, 0
      %s320 = scalar_select %p319, %s22, 0
      %s321 = scalar_lea.vmem %s5, %s320
      %p322 = pneg %p184
      %p323 = pneg %p181
      %p324 = pneg %p212
      %p325 = pneg %p209
      %p326 = scmp.lt.s32.totalorder %s21, 1
      %s327 = scalar_select %p326, %s21, 1
      %p328 = scmp.lt.s32.totalorder %s22, 0
      %s329 = scalar_select %p328, %s22, 0
      %s330 = smul.addr %s327, 32
      %s331 = sadd.s32 %s329, %s330
      %s332 = smul.addr %s331, 8
      %s333 = scalar_lea.vmem %s6, %s332
      %p334 = scmp.lt.s32.totalorder %s21, 1
      %s335 = scalar_select %p334, %s21, 1
      %p336 = scmp.lt.s32.totalorder %s22, 0
      %s337 = scalar_select %p336, %s22, 0
      %s338 = smul.addr %s335, 32
      %s339 = sadd.s32 %s337, %s338
      %s340 = smul.addr %s339, 4
      %s341 = scalar_lea.vmem %s0, %s340
      %p342 = scmp.lt.s32.totalorder %s22, 0
      %s343 = scalar_select %p342, %s22, 0
      %s344 = scalar_lea.vmem %s1, %s343
      %p345 = scmp.lt.s32.totalorder %s22, 0
      %s346 = scalar_select %p345, %s22, 0
      %s347 = scalar_lea.vmem %s2, %s346
      %p348 = scmp.lt.s32.totalorder %s21, 1
      %s349 = scalar_select %p348, %s21, 1
      %p350 = scmp.lt.s32.totalorder %s22, 0
      %s351 = scalar_select %p350, %s22, 0
      %s352 = smul.addr %s349, 32
      %s353 = sadd.s32 %s351, %s352
      %s354 = smul.addr %s353, 4
      %s355 = scalar_lea.vmem %s3, %s354
      %p356 = scmp.lt.s32.totalorder %s22, 0
      %s357 = scalar_select %p356, %s22, 0
      %s358 = scalar_lea.vmem %s4, %s357
      %p359 = scmp.lt.s32.totalorder %s22, 0
      %s360 = scalar_select %p359, %s22, 0
      %s361 = scalar_lea.vmem %s5, %s360
      %p362 = scmp.lt.s32.totalorder %s21, 1
      %s363 = scalar_select %p362, %s21, 1
      %p364 = scmp.lt.s32.totalorder %s22, 0
      %s365 = scalar_select %p364, %s22, 0
      %s366 = smul.addr %s363, 32
      %s367 = sadd.s32 %s365, %s366
      %s368 = smul.addr %s367, 8
      %s369 = scalar_lea.vmem %s6, %s368
      %v370 = vld [vmem:[%s341] sm:$0xf]
      %v371 = vld [vmem:[%s341 + $0x4] sm:$0xf]
      %v372 = vld [vmem:[%s341 + $0x8] sm:$0xf]
      %v373 = vld [vmem:[%s341 + $0xc] sm:$0xf]
      %v374 = vld [vmem:[%s341 + $0x10] sm:$0xf]
      %v375 = vld [vmem:[%s341 + $0x14] sm:$0xf]
      %v376 = vld [vmem:[%s341 + $0x18] sm:$0xf]
      %v377 = vld [vmem:[%s341 + $0x1c] sm:$0xf]
      %v378 = vld [vmem:[%s341 + $0x20] sm:$0xf]
      %v379 = vld [vmem:[%s341 + $0x24] sm:$0xf]
      %v380 = vld [vmem:[%s341 + $0x28] sm:$0xf]
      %v381 = vld [vmem:[%s341 + $0x2c] sm:$0xf]
      %v382 = vld [vmem:[%s341 + $0x30] sm:$0xf]
      %v383 = vld [vmem:[%s341 + $0x34] sm:$0xf]
      %v384 = vld [vmem:[%s341 + $0x38] sm:$0xf]
      %v385 = vld [vmem:[%s341 + $0x3c] sm:$0xf]
      %v386 = vld [vmem:[%s341 + $0x40] sm:$0xf]
      %v387 = vld [vmem:[%s341 + $0x44] sm:$0xf]
      %v388 = vld [vmem:[%s341 + $0x48] sm:$0xf]
      %v389 = vld [vmem:[%s341 + $0x4c] sm:$0xf]
      %v390 = vld [vmem:[%s341 + $0x50] sm:$0xf]
      %v391 = vld [vmem:[%s341 + $0x54] sm:$0xf]
      %v392 = vld [vmem:[%s341 + $0x58] sm:$0xf]
      %v393 = vld [vmem:[%s341 + $0x5c] sm:$0xf]
      %v394 = vld [vmem:[%s341 + $0x60] sm:$0xf]
      %v395 = vld [vmem:[%s341 + $0x64] sm:$0xf]
      %v396 = vld [vmem:[%s341 + $0x68] sm:$0xf]
      %v397 = vld [vmem:[%s341 + $0x6c] sm:$0xf]
      %v398 = vld [vmem:[%s341 + $0x70] sm:$0xf]
      %v399 = vld [vmem:[%s341 + $0x74] sm:$0xf]
      %v400 = vld [vmem:[%s341 + $0x78] sm:$0xf]
      %v401 = vld [vmem:[%s341 + $0x7c] sm:$0xf]
      %v402 = vunpack.c.l.bf16 %v370
      %v403 = vunpack.c.l.bf16 %v371
      %v404 = vunpack.c.l.bf16 %v372
      %v405 = vunpack.c.l.bf16 %v373
      %v406 = vunpack.c.l.bf16 %v374
      %v407 = vunpack.c.l.bf16 %v375
      %v408 = vunpack.c.l.bf16 %v376
      %v409 = vunpack.c.l.bf16 %v377
      %v410 = vunpack.c.l.bf16 %v378
      %v411 = vunpack.c.l.bf16 %v379
      %v412 = vunpack.c.l.bf16 %v380
      %v413 = vunpack.c.l.bf16 %v381
      %v414 = vunpack.c.l.bf16 %v382
      %v415 = vunpack.c.l.bf16 %v383
      %v416 = vunpack.c.l.bf16 %v384
      %v417 = vunpack.c.l.bf16 %v385
      %v418 = vunpack.c.l.bf16 %v386
      %v419 = vunpack.c.l.bf16 %v387
      %v420 = vunpack.c.l.bf16 %v388
      %v421 = vunpack.c.l.bf16 %v389
      %v422 = vunpack.c.l.bf16 %v390
      %v423 = vunpack.c.l.bf16 %v391
      %v424 = vunpack.c.l.bf16 %v392
      %v425 = vunpack.c.l.bf16 %v393
      %v426 = vunpack.c.l.bf16 %v394
      %v427 = vunpack.c.l.bf16 %v395
      %v428 = vunpack.c.l.bf16 %v396
      %v429 = vunpack.c.l.bf16 %v397
      %v430 = vunpack.c.l.bf16 %v398
      %v431 = vunpack.c.l.bf16 %v399
      %v432 = vunpack.c.l.bf16 %v400
      %v433 = vunpack.c.l.bf16 %v401
      %v434 = vld [vmem:[%s344] sm:$0x1]
      %v436 = vlaneseq
      %v437 = vshrl.u32 %v436, 7
      %v438 = vsub.s32 0, %v437
      %v439 = vrot.slane %v434, %v438
      %v441 = vmul.f32 %v402, %v439
      %v442 = vmul.f32 %v403, %v439
      %v443 = vmul.f32 %v404, %v439
      %v444 = vmul.f32 %v405, %v439
      %v445 = vmul.f32 %v406, %v439
      %v446 = vmul.f32 %v407, %v439
      %v447 = vmul.f32 %v408, %v439
      %v448 = vmul.f32 %v409, %v439
      %v449 = vmul.f32 %v410, %v439
      %v450 = vmul.f32 %v411, %v439
      %v451 = vmul.f32 %v412, %v439
      %v452 = vmul.f32 %v413, %v439
      %v453 = vmul.f32 %v414, %v439
      %v454 = vmul.f32 %v415, %v439
      %v455 = vmul.f32 %v416, %v439
      %v456 = vmul.f32 %v417, %v439
      %v457 = vmul.f32 %v418, %v439
      %v458 = vmul.f32 %v419, %v439
      %v459 = vmul.f32 %v420, %v439
      %v460 = vmul.f32 %v421, %v439
      %v461 = vmul.f32 %v422, %v439
      %v462 = vmul.f32 %v423, %v439
      %v463 = vmul.f32 %v424, %v439
      %v464 = vmul.f32 %v425, %v439
      %v465 = vmul.f32 %v426, %v439
      %v466 = vmul.f32 %v427, %v439
      %v467 = vmul.f32 %v428, %v439
      %v468 = vmul.f32 %v429, %v439
      %v469 = vmul.f32 %v430, %v439
      %v470 = vmul.f32 %v431, %v439
      %v471 = vmul.f32 %v432, %v439
      %v472 = vmul.f32 %v433, %v439
      %v473 = vld [vmem:[%s347] sm:$0x1]
      %v475 = vlaneseq
      %v476 = vshrl.u32 %v475, 7
      %v477 = vsub.s32 0, %v476
      %v478 = vrot.slane %v473, %v477
      %v480 = vadd.f32 %v441, %v478
      %v481 = vadd.f32 %v442, %v478
      %v482 = vadd.f32 %v443, %v478
      %v483 = vadd.f32 %v444, %v478
      %v484 = vadd.f32 %v445, %v478
      %v485 = vadd.f32 %v446, %v478
      %v486 = vadd.f32 %v447, %v478
      %v487 = vadd.f32 %v448, %v478
      %v488 = vadd.f32 %v449, %v478
      %v489 = vadd.f32 %v450, %v478
      %v490 = vadd.f32 %v451, %v478
      %v491 = vadd.f32 %v452, %v478
      %v492 = vadd.f32 %v453, %v478
      %v493 = vadd.f32 %v454, %v478
      %v494 = vadd.f32 %v455, %v478
      %v495 = vadd.f32 %v456, %v478
      %v496 = vadd.f32 %v457, %v478
      %v497 = vadd.f32 %v458, %v478
      %v498 = vadd.f32 %v459, %v478
      %v499 = vadd.f32 %v460, %v478
      %v500 = vadd.f32 %v461, %v478
      %v501 = vadd.f32 %v462, %v478
      %v502 = vadd.f32 %v463, %v478
      %v503 = vadd.f32 %v464, %v478
      %v504 = vadd.f32 %v465, %v478
      %v505 = vadd.f32 %v466, %v478
      %v506 = vadd.f32 %v467, %v478
      %v507 = vadd.f32 %v468, %v478
      %v508 = vadd.f32 %v469, %v478
      %v509 = vadd.f32 %v470, %v478
      %v510 = vadd.f32 %v471, %v478
      %v511 = vadd.f32 %v472, %v478
      %v512 = vld [vmem:[%s355] sm:$0xf]
      %v513 = vld [vmem:[%s355 + $0x4] sm:$0xf]
      %v514 = vld [vmem:[%s355 + $0x8] sm:$0xf]
      %v515 = vld [vmem:[%s355 + $0xc] sm:$0xf]
      %v516 = vld [vmem:[%s355 + $0x10] sm:$0xf]
      %v517 = vld [vmem:[%s355 + $0x14] sm:$0xf]
      %v518 = vld [vmem:[%s355 + $0x18] sm:$0xf]
      %v519 = vld [vmem:[%s355 + $0x1c] sm:$0xf]
      %v520 = vld [vmem:[%s355 + $0x20] sm:$0xf]
      %v521 = vld [vmem:[%s355 + $0x24] sm:$0xf]
      %v522 = vld [vmem:[%s355 + $0x28] sm:$0xf]
      %v523 = vld [vmem:[%s355 + $0x2c] sm:$0xf]
      %v524 = vld [vmem:[%s355 + $0x30] sm:$0xf]
      %v525 = vld [vmem:[%s355 + $0x34] sm:$0xf]
      %v526 = vld [vmem:[%s355 + $0x38] sm:$0xf]
      %v527 = vld [vmem:[%s355 + $0x3c] sm:$0xf]
      %v528 = vld [vmem:[%s355 + $0x40] sm:$0xf]
      %v529 = vld [vmem:[%s355 + $0x44] sm:$0xf]
      %v530 = vld [vmem:[%s355 + $0x48] sm:$0xf]
      %v531 = vld [vmem:[%s355 + $0x4c] sm:$0xf]
      %v532 = vld [vmem:[%s355 + $0x50] sm:$0xf]
      %v533 = vld [vmem:[%s355 + $0x54] sm:$0xf]
      %v534 = vld [vmem:[%s355 + $0x58] sm:$0xf]
      %v535 = vld [vmem:[%s355 + $0x5c] sm:$0xf]
      %v536 = vld [vmem:[%s355 + $0x60] sm:$0xf]
      %v537 = vld [vmem:[%s355 + $0x64] sm:$0xf]
      %v538 = vld [vmem:[%s355 + $0x68] sm:$0xf]
      %v539 = vld [vmem:[%s355 + $0x6c] sm:$0xf]
      %v540 = vld [vmem:[%s355 + $0x70] sm:$0xf]
      %v541 = vld [vmem:[%s355 + $0x74] sm:$0xf]
      %v542 = vld [vmem:[%s355 + $0x78] sm:$0xf]
      %v543 = vld [vmem:[%s355 + $0x7c] sm:$0xf]
      %v544 = vunpack.c.l.bf16 %v512
      %v545 = vunpack.c.l.bf16 %v513
      %v546 = vunpack.c.l.bf16 %v514
      %v547 = vunpack.c.l.bf16 %v515
      %v548 = vunpack.c.l.bf16 %v516
      %v549 = vunpack.c.l.bf16 %v517
      %v550 = vunpack.c.l.bf16 %v518
      %v551 = vunpack.c.l.bf16 %v519
      %v552 = vunpack.c.l.bf16 %v520
      %v553 = vunpack.c.l.bf16 %v521
      %v554 = vunpack.c.l.bf16 %v522
      %v555 = vunpack.c.l.bf16 %v523
      %v556 = vunpack.c.l.bf16 %v524
      %v557 = vunpack.c.l.bf16 %v525
      %v558 = vunpack.c.l.bf16 %v526
      %v559 = vunpack.c.l.bf16 %v527
      %v560 = vunpack.c.l.bf16 %v528
      %v561 = vunpack.c.l.bf16 %v529
      %v562 = vunpack.c.l.bf16 %v530
      %v563 = vunpack.c.l.bf16 %v531
      %v564 = vunpack.c.l.bf16 %v532
      %v565 = vunpack.c.l.bf16 %v533
      %v566 = vunpack.c.l.bf16 %v534
      %v567 = vunpack.c.l.bf16 %v535
      %v568 = vunpack.c.l.bf16 %v536
      %v569 = vunpack.c.l.bf16 %v537
      %v570 = vunpack.c.l.bf16 %v538
      %v571 = vunpack.c.l.bf16 %v539
      %v572 = vunpack.c.l.bf16 %v540
      %v573 = vunpack.c.l.bf16 %v541
      %v574 = vunpack.c.l.bf16 %v542
      %v575 = vunpack.c.l.bf16 %v543
      %v576 = vld [vmem:[%s358] sm:$0x1]
      %v578 = vlaneseq
      %v579 = vshrl.u32 %v578, 7
      %v580 = vsub.s32 0, %v579
      %v581 = vrot.slane %v576, %v580
      %v583 = vmul.f32 %v544, %v581
      %v584 = vmul.f32 %v545, %v581
      %v585 = vmul.f32 %v546, %v581
      %v586 = vmul.f32 %v547, %v581
      %v587 = vmul.f32 %v548, %v581
      %v588 = vmul.f32 %v549, %v581
      %v589 = vmul.f32 %v550, %v581
      %v590 = vmul.f32 %v551, %v581
      %v591 = vmul.f32 %v552, %v581
      %v592 = vmul.f32 %v553, %v581
      %v593 = vmul.f32 %v554, %v581
      %v594 = vmul.f32 %v555, %v581
      %v595 = vmul.f32 %v556, %v581
      %v596 = vmul.f32 %v557, %v581
      %v597 = vmul.f32 %v558, %v581
      %v598 = vmul.f32 %v559, %v581
      %v599 = vmul.f32 %v560, %v581
      %v600 = vmul.f32 %v561, %v581
      %v601 = vmul.f32 %v562, %v581
      %v602 = vmul.f32 %v563, %v581
      %v603 = vmul.f32 %v564, %v581
      %v604 = vmul.f32 %v565, %v581
      %v605 = vmul.f32 %v566, %v581
      %v606 = vmul.f32 %v567, %v581
      %v607 = vmul.f32 %v568, %v581
      %v608 = vmul.f32 %v569, %v581
      %v609 = vmul.f32 %v570, %v581
      %v610 = vmul.f32 %v571, %v581
      %v611 = vmul.f32 %v572, %v581
      %v612 = vmul.f32 %v573, %v581
      %v613 = vmul.f32 %v574, %v581
      %v614 = vmul.f32 %v575, %v581
      %v615 = vld [vmem:[%s361] sm:$0x1]
      %v617 = vlaneseq
      %v618 = vshrl.u32 %v617, 7
      %v619 = vsub.s32 0, %v618
      %v620 = vrot.slane %v615, %v619
      %v622 = vadd.f32 %v583, %v620
      %v623 = vadd.f32 %v584, %v620
      %v624 = vadd.f32 %v585, %v620
      %v625 = vadd.f32 %v586, %v620
      %v626 = vadd.f32 %v587, %v620
      %v627 = vadd.f32 %v588, %v620
      %v628 = vadd.f32 %v589, %v620
      %v629 = vadd.f32 %v590, %v620
      %v630 = vadd.f32 %v591, %v620
      %v631 = vadd.f32 %v592, %v620
      %v632 = vadd.f32 %v593, %v620
      %v633 = vadd.f32 %v594, %v620
      %v634 = vadd.f32 %v595, %v620
      %v635 = vadd.f32 %v596, %v620
      %v636 = vadd.f32 %v597, %v620
      %v637 = vadd.f32 %v598, %v620
      %v638 = vadd.f32 %v599, %v620
      %v639 = vadd.f32 %v600, %v620
      %v640 = vadd.f32 %v601, %v620
      %v641 = vadd.f32 %v602, %v620
      %v642 = vadd.f32 %v603, %v620
      %v643 = vadd.f32 %v604, %v620
      %v644 = vadd.f32 %v605, %v620
      %v645 = vadd.f32 %v606, %v620
      %v646 = vadd.f32 %v607, %v620
      %v647 = vadd.f32 %v608, %v620
      %v648 = vadd.f32 %v609, %v620
      %v649 = vadd.f32 %v610, %v620
      %v650 = vadd.f32 %v611, %v620
      %v651 = vadd.f32 %v612, %v620
      %v652 = vadd.f32 %v613, %v620
      %v653 = vadd.f32 %v614, %v620
      %v654 = vadd.f32 %v480, %v622
      %v655 = vadd.f32 %v481, %v623
      %v656 = vadd.f32 %v482, %v624
      %v657 = vadd.f32 %v483, %v625
      %v658 = vadd.f32 %v484, %v626
      %v659 = vadd.f32 %v485, %v627
      %v660 = vadd.f32 %v486, %v628
      %v661 = vadd.f32 %v487, %v629
      %v662 = vadd.f32 %v488, %v630
      %v663 = vadd.f32 %v489, %v631
      %v664 = vadd.f32 %v490, %v632
      %v665 = vadd.f32 %v491, %v633
      %v666 = vadd.f32 %v492, %v634
      %v667 = vadd.f32 %v493, %v635
      %v668 = vadd.f32 %v494, %v636
      %v669 = vadd.f32 %v495, %v637
      %v670 = vadd.f32 %v496, %v638
      %v671 = vadd.f32 %v497, %v639
      %v672 = vadd.f32 %v498, %v640
      %v673 = vadd.f32 %v499, %v641
      %v674 = vadd.f32 %v500, %v642
      %v675 = vadd.f32 %v501, %v643
      %v676 = vadd.f32 %v502, %v644
      %v677 = vadd.f32 %v503, %v645
      %v678 = vadd.f32 %v504, %v646
      %v679 = vadd.f32 %v505, %v647
      %v680 = vadd.f32 %v506, %v648
      %v681 = vadd.f32 %v507, %v649
      %v682 = vadd.f32 %v508, %v650
      %v683 = vadd.f32 %v509, %v651
      %v684 = vadd.f32 %v510, %v652
      %v685 = vadd.f32 %v511, %v653
      %v686 = vmax.f32 %v654, 0.0
      %v687 = vmax.f32 %v655, 0.0
      %v688 = vmax.f32 %v656, 0.0
      %v689 = vmax.f32 %v657, 0.0
      %v690 = vmax.f32 %v658, 0.0
      %v691 = vmax.f32 %v659, 0.0
      %v692 = vmax.f32 %v660, 0.0
      %v693 = vmax.f32 %v661, 0.0
      %v694 = vmax.f32 %v662, 0.0
      %v695 = vmax.f32 %v663, 0.0
      %v696 = vmax.f32 %v664, 0.0
      %v697 = vmax.f32 %v665, 0.0
      %v698 = vmax.f32 %v666, 0.0
      %v699 = vmax.f32 %v667, 0.0
      %v700 = vmax.f32 %v668, 0.0
      %v701 = vmax.f32 %v669, 0.0
      %v702 = vmax.f32 %v670, 0.0
      %v703 = vmax.f32 %v671, 0.0
      %v704 = vmax.f32 %v672, 0.0
      %v705 = vmax.f32 %v673, 0.0
      %v706 = vmax.f32 %v674, 0.0
      %v707 = vmax.f32 %v675, 0.0
      %v708 = vmax.f32 %v676, 0.0
      %v709 = vmax.f32 %v677, 0.0
      %v710 = vmax.f32 %v678, 0.0
      %v711 = vmax.f32 %v679, 0.0
      %v712 = vmax.f32 %v680, 0.0
      %v713 = vmax.f32 %v681, 0.0
      %v714 = vmax.f32 %v682, 0.0
      %v715 = vmax.f32 %v683, 0.0
      %v716 = vmax.f32 %v684, 0.0
      %v717 = vmax.f32 %v685, 0.0
      %718 = vst [vmem:[%s369] sm:$0xff] %v686
      %719 = vst [vmem:[%s369 + $0x8] sm:$0xff] %v687
      %720 = vst [vmem:[%s369 + $0x10] sm:$0xff] %v688
      %721 = vst [vmem:[%s369 + $0x18] sm:$0xff] %v689
      %722 = vst [vmem:[%s369 + $0x20] sm:$0xff] %v690
      %723 = vst [vmem:[%s369 + $0x28] sm:$0xff] %v691
      %724 = vst [vmem:[%s369 + $0x30] sm:$0xff] %v692
      %725 = vst [vmem:[%s369 + $0x38] sm:$0xff] %v693
      %726 = vst [vmem:[%s369 + $0x40] sm:$0xff] %v694
      %727 = vst [vmem:[%s369 + $0x48] sm:$0xff] %v695
      %728 = vst [vmem:[%s369 + $0x50] sm:$0xff] %v696
      %729 = vst [vmem:[%s369 + $0x58] sm:$0xff] %v697
      %730 = vst [vmem:[%s369 + $0x60] sm:$0xff] %v698
      %731 = vst [vmem:[%s369 + $0x68] sm:$0xff] %v699
      %732 = vst [vmem:[%s369 + $0x70] sm:$0xff] %v700
      %733 = vst [vmem:[%s369 + $0x78] sm:$0xff] %v701
      %734 = vst [vmem:[%s369 + $0x80] sm:$0xff] %v702
      %735 = vst [vmem:[%s369 + $0x88] sm:$0xff] %v703
      %736 = vst [vmem:[%s369 + $0x90] sm:$0xff] %v704
      %737 = vst [vmem:[%s369 + $0x98] sm:$0xff] %v705
      %738 = vst [vmem:[%s369 + $0xa0] sm:$0xff] %v706
      %739 = vst [vmem:[%s369 + $0xa8] sm:$0xff] %v707
      %740 = vst [vmem:[%s369 + $0xb0] sm:$0xff] %v708
      %741 = vst [vmem:[%s369 + $0xb8] sm:$0xff] %v709
      %742 = vst [vmem:[%s369 + $0xc0] sm:$0xff] %v710
      %743 = vst [vmem:[%s369 + $0xc8] sm:$0xff] %v711
      %744 = vst [vmem:[%s369 + $0xd0] sm:$0xff] %v712
      %745 = vst [vmem:[%s369 + $0xd8] sm:$0xff] %v713
      %746 = vst [vmem:[%s369 + $0xe0] sm:$0xff] %v714
      %747 = vst [vmem:[%s369 + $0xe8] sm:$0xff] %v715
      %748 = vst [vmem:[%s369 + $0xf0] sm:$0xff] %v716
      %749 = vst [vmem:[%s369 + $0xf8] sm:$0xff] %v717
      %p750 = scmp.lt.s32.totalorder %s21, 1
      %s751 = scalar_select %p750, %s21, 1
      %p752 = scmp.lt.s32.totalorder %s22, 0
      %s753 = scalar_select %p752, %s22, 0
      %s754 = smul.addr %s751, 32
      %s755 = sadd.s32 %s753, %s754
      %s756 = smul.addr %s755, 8
      %s757 = scalar_lea.vmem %s6, %s756
      // Predicated region
      $region45: #{_forward_impl.5} parent=43 // pred_check
        %p758 = pneg %p209
      $region46: #{_forward_impl.5} parent=43 // pred_check_branch
        %760 = sbr.rel (%p758) target = $region48
      $region47: #{_forward_impl.5} parent=43 // pred_region
        _
      $region48: #{_forward_impl.5} parent=43 // pred_fallthru
        _
    $region44: #{_forward_impl.5} parent=5 // pred_fallthru
      _
    %p761 = scmp.le.s32.totalorder 2, %s12
    // Predicated region
    $region49: #{_forward_impl.5} parent=5 // pred_check
      %p762 = pneg %p761
    $region50: #{_forward_impl.5} parent=5 // pred_check_branch
      %764 = sbr.rel (%p762) target = $region52
    $region51: #{_forward_impl.5} parent=5 // pred_region
      %s765 = ssub.s32 %s12, 2
      // Predicated region
      $region53: #{_forward_impl.5} parent=51 // pred_check
        %p766 = pneg %p215
      $region54: #{_forward_impl.5} parent=51 // pred_check_branch
        %768 = sbr.rel (%p766) target = $region56
      $region55: #{_forward_impl.5} parent=51 // pred_region
        %p769 = scmp.lt.s32.totalorder %s23, 1
        %s770 = scalar_select %p769, %s23, 1
        %p771 = scmp.lt.s32.totalorder %s24, 0
        %s772 = scalar_select %p771, %s24, 0
        %s773 = smul.addr %s770, 32
        %s774 = sadd.s32 %s772, %s773
        %s775 = smul.addr %s774, 8
        %s776 = scalar_lea.vmem %s6, %s775
      $region56: #{_forward_impl.5} parent=51 // pred_fallthru
        _
    $region52: #{_forward_impl.5} parent=5 // pred_fallthru
      _
  $region6: #{_forward_impl.5} parent=0 // loop_footer
    %s16 = sadd.s32 1, %s12
  $region7: #{_forward_impl.5} parent=0 // loop_footer_branch
    %11 = sbr.rel target = $region3
  $region8: #{_forward_impl.5} parent=0 // loop_exit
    _

// kernel: _forward_impl.4
$region0: #{_forward_impl.4}
  #allocation0 [shape = 'u32[]', space=smem, size = 0x4, offset = 0x4, fixed_abs, tag = 'smem constant byte address 0x4 - core index']
  #allocation1 [shape = 'u32[144,128]{1,0:T(1,128)}', space=vmem, size = 0x12000, scoped, tag = 'internal scratch']
  #allocation2 [shape = 'bf16[256,1152]{1,0:T(8,128)(2,1)}', space=vmem, size = 0x90000, scoped, tag = 'scratch operand']
  %s0 = inlined_call_operand.vmem [shape: bf16[2,18,18,128], index: 0, kind: input, shape index: {}]
  %s1 = inlined_call_operand.vmem [shape: f32[1,128], index: 1, kind: input, shape index: {}]
  %s2 = inlined_call_operand.vmem [shape: f32[1,128], index: 2, kind: input, shape index: {}]
  %s3 = inlined_call_operand.vmem [shape: bf16[1152,128], index: 3, kind: input, shape index: {}]
  %s4 = inlined_call_operand.vmem [shape: bf16[2,16,16,128], index: 4, kind: output, shape index: {0}]
  %s5 = inlined_call_operand.vmem [shape: f32[2,2,128], index: 5, kind: output, shape index: {1}]
  %6 = xla_tuple %s4, %s5
  %s7 = sld [smem:[#allocation0]]
  $region61: #{_forward_impl.4} parent=0
    _
  %s9 = ssub.s32 1, %s7
  %s10 = scalar_select 0, %s9, %s7
  loop: start=0, step=1, limit=4
  $region2: #{_forward_impl.4} parent=0 // loop_pre_header
    _
  $region3: #{_forward_impl.4} parent=0 // loop_header
    %s12 = sphi 0, %s16
    %p13 = scmp.ge.s32.totalorder %s12, 4
    %s19 = sphi 0, %s31
    %s20 = sphi 0, %s27
    %s21 = sphi 0, %s19
    %s22 = sphi 0, %s20
    %s23 = sphi 0, %s21
    %s24 = sphi 0, %s22
    %s34 = sphi 0, %s36
    %s37 = sphi 0, %s34
    %s38 = sphi 0, %s37
    %s54 = sphi 0, %s38
    %s58 = sphi 0, %s58
    %s60 = sphi 0, %s58
    %s61 = sphi 0, %s60
    %s75 = sphi 0, %s61
    %s79 = sphi 0, %s79
    %s81 = sphi 0, %s79
    %s82 = sphi 0, %s81
    %s96 = sphi 0, %s82
    %s102 = sphi 0, %s104
    %s105 = sphi 0, %s102
    %s106 = sphi 0, %s105
    %s122 = sphi 0, %s106
    %s130 = sphi 0, %s132
    %s133 = sphi 0, %s130
    %s134 = sphi 0, %s133
    %s150 = sphi 0, %s134
    %s158 = sphi 0, %s160
    %s161 = sphi 0, %s158
    %s162 = sphi 0, %s161
    %s178 = sphi 0, %s162
  $region4: #{_forward_impl.4} parent=0 // loop_header_branch
    %15 = sbr.rel (%p13) target = $region8
  $region5: #{_forward_impl.4} parent=0 // loop_body
    %s17 = ssub.s32 %s12, 1
    %s18 = ssub.s32 %s12, 2
    %s25 = sadd.s32 1, %s20
    %p26 = scmp.ge.s32.totalorder %s25, 1
    %s27 = scalar_select %p26, 0, %s25
    %s28 = sadd.s32 1, %s19
    %s29 = scalar_select %p26, %s28, %s19
    %p30 = scmp.ge.s32.totalorder %s29, 2
    %s31 = scalar_select %p30, 0, %s29
    %s32 = ssub.s32 %s19, %s31
    %p33 = scmp.eq.s32.totalorder %s32, 0
    %s35 = sadd.s32 %s34, 1
    %s36 = scalar_select %p33, %s34, %s35
    %p39 = pneg %p33
    %p40 = scmp.eq.s32.totalorder %s12, 1
    %p41 = por %p39, %p40
    %p42 = scmp.ne.s32.totalorder %s34, %s37
    %p43 = scmp.eq.s32.totalorder %s12, 0
    %p44 = por %p42, %p43
    %p45 = scmp.ne.s32.totalorder %s34, %s37
    %p46 = scmp.eq.s32.totalorder %s17, 1
    %p47 = por %p45, %p46
    %p48 = scmp.ne.s32.totalorder %s37, %s38
    %p49 = scmp.eq.s32.totalorder %s17, 0
    %p50 = por %p48, %p49
    %p51 = scmp.ne.s32.totalorder %s37, %s38
    %p52 = scmp.eq.s32.totalorder %s18, 1
    %p53 = por %p51, %p52
    %p55 = scmp.ne.s32.totalorder %s38, %s54
    %p56 = scmp.eq.s32.totalorder %s18, 0
    %p57 = por %p55, %p56
    %s59 = sadd.s32 %s58, 1
    %p62 = scmp.eq.s32.totalorder %s12, 1
    %p63 = scmp.ne.s32.totalorder %s58, %s60
    %p64 = scmp.eq.s32.totalorder %s12, 0
    %p65 = por %p63, %p64
    %p66 = scmp.ne.s32.totalorder %s58, %s60
    %p67 = scmp.eq.s32.totalorder %s17, 1
    %p68 = por %p66, %p67
    %p69 = scmp.ne.s32.totalorder %s60, %s61
    %p70 = scmp.eq.s32.totalorder %s17, 0
    %p71 = por %p69, %p70
    %p72 = scmp.ne.s32.totalorder %s60, %s61
    %p73 = scmp.eq.s32.totalorder %s18, 1
    %p74 = por %p72, %p73
    %p76 = scmp.ne.s32.totalorder %s61, %s75
    %p77 = scmp.eq.s32.totalorder %s18, 0
    %p78 = por %p76, %p77
    %s80 = sadd.s32 %s79, 1
    %p83 = scmp.eq.s32.totalorder %s12, 1
    %p84 = scmp.ne.s32.totalorder %s79, %s81
    %p85 = scmp.eq.s32.totalorder %s12, 0
    %p86 = por %p84, %p85
    %p87 = scmp.ne.s32.totalorder %s79, %s81
    %p88 = scmp.eq.s32.totalorder %s17, 1
    %p89 = por %p87, %p88
    %p90 = scmp.ne.s32.totalorder %s81, %s82
    %p91 = scmp.eq.s32.totalorder %s17, 0
    %p92 = por %p90, %p91
    %p93 = scmp.ne.s32.totalorder %s81, %s82
    %p94 = scmp.eq.s32.totalorder %s18, 1
    %p95 = por %p93, %p94
    %p97 = scmp.ne.s32.totalorder %s82, %s96
    %p98 = scmp.eq.s32.totalorder %s18, 0
    %p99 = por %p97, %p98
    %s100 = ssub.s32 %s20, %s27
    %p101 = scmp.eq.s32.totalorder %s100, 0
    %s103 = sadd.s32 %s102, 1
    %s104 = scalar_select %p101, %s102, %s103
    %p107 = pneg %p101
    %p108 = scmp.eq.s32.totalorder %s12, 1
    %p109 = por %p107, %p108
    %p110 = scmp.ne.s32.totalorder %s102, %s105
    %p111 = scmp.eq.s32.totalorder %s12, 0
    %p112 = por %p110, %p111
    %p113 = scmp.ne.s32.totalorder %s102, %s105
    %p114 = scmp.eq.s32.totalorder %s17, 1
    %p115 = por %p113, %p114
    %p116 = scmp.ne.s32.totalorder %s105, %s106
    %p117 = scmp.eq.s32.totalorder %s17, 0
    %p118 = por %p116, %p117
    %p119 = scmp.ne.s32.totalorder %s105, %s106
    %p120 = scmp.eq.s32.totalorder %s18, 1
    %p121 = por %p119, %p120
    %p123 = scmp.ne.s32.totalorder %s106, %s122
    %p124 = scmp.eq.s32.totalorder %s18, 0
    %p125 = por %p123, %p124
    %s126 = ssub.s32 %s19, %s31
    %s127 = ssub.s32 %s20, %s27
    %s128 = sor.u32 %s126, %s127
    %p129 = scmp.eq.s32.totalorder %s128, 0
    %s131 = sadd.s32 %s130, 1
    %s132 = scalar_select %p129, %s130, %s131
    %p135 = pneg %p129
    %p136 = scmp.eq.s32.totalorder %s12, 1
    %p137 = por %p135, %p136
    %p138 = scmp.ne.s32.totalorder %s130, %s133
    %p139 = scmp.eq.s32.totalorder %s12, 0
    %p140 = por %p138, %p139
    %p141 = scmp.ne.s32.totalorder %s130, %s133
    %p142 = scmp.eq.s32.totalorder %s17, 1
    %p143 = por %p141, %p142
    %p144 = scmp.ne.s32.totalorder %s133, %s134
    %p145 = scmp.eq.s32.totalorder %s17, 0
    %p146 = por %p144, %p145
    %p147 = scmp.ne.s32.totalorder %s133, %s134
    %p148 = scmp.eq.s32.totalorder %s18, 1
    %p149 = por %p147, %p148
    %p151 = scmp.ne.s32.totalorder %s134, %s150
    %p152 = scmp.eq.s32.totalorder %s18, 0
    %p153 = por %p151, %p152
    %s154 = ssub.s32 %s19, %s31
    %s155 = ssub.s32 %s20, %s27
    %s156 = sor.u32 %s154, %s155
    %p157 = scmp.eq.s32.totalorder %s156, 0
    %s159 = sadd.s32 %s158, 1
    %s160 = scalar_select %p157, %s158, %s159
    %p163 = pneg %p157
    %p164 = scmp.eq.s32.totalorder %s12, 1
    %p165 = por %p163, %p164
    %p166 = scmp.ne.s32.totalorder %s158, %s161
    %p167 = scmp.eq.s32.totalorder %s12, 0
    %p168 = por %p166, %p167
    %p169 = scmp.ne.s32.totalorder %s158, %s161
    %p170 = scmp.eq.s32.totalorder %s17, 1
    %p171 = por %p169, %p170
    %p172 = scmp.ne.s32.totalorder %s161, %s162
    %p173 = scmp.eq.s32.totalorder %s17, 0
    %p174 = por %p172, %p173
    %p175 = scmp.ne.s32.totalorder %s161, %s162
    %p176 = scmp.eq.s32.totalorder %s18, 1
    %p177 = por %p175, %p176
    %p179 = scmp.ne.s32.totalorder %s162, %s178
    %p180 = scmp.eq.s32.totalorder %s18, 0
    %p181 = por %p179, %p180
    %p182 = scmp.le.s32.totalorder 1, %s12
    %p183 = scmp.lt.s32.totalorder %s12, 3
    %p184 = pnand %p182, %p183
    %p185 = pneg %p184
    // Predicated region
    $region9: #{_forward_impl.4} parent=5 // pred_check
      _
    $region10: #{_forward_impl.4} parent=5 // pred_check_branch
      %187 = sbr.rel (%p184) target = $region12
    $region11: #{_forward_impl.4} parent=5 // pred_region
      %s188 = ssub.s32 %s12, 1
      // Predicated region
      $region13: #{_forward_impl.4} parent=11 // pred_check
        %p189 = pneg %p71
      $region14: #{_forward_impl.4} parent=11 // pred_check_branch
        %191 = sbr.rel (%p189) target = $region16
      $region15: #{_forward_impl.4} parent=11 // pred_region
        _
      $region16: #{_forward_impl.4} parent=11 // pred_fallthru
        _
      // Predicated region
      $region17: #{_forward_impl.4} parent=11 // pred_check
        %p192 = pneg %p92
      $region18: #{_forward_impl.4} parent=11 // pred_check_branch
        %194 = sbr.rel (%p192) target = $region20
      $region19: #{_forward_impl.4} parent=11 // pred_region
        _
      $region20: #{_forward_impl.4} parent=11 // pred_fallthru
        _
      // Predicated region
      $region21: #{_forward_impl.4} parent=11 // pred_check
        %p195 = pneg %p118
      $region22: #{_forward_impl.4} parent=11 // pred_check_branch
        %197 = sbr.rel (%p195) target = $region24
      $region23: #{_forward_impl.4} parent=11 // pred_region
        %p198 = scmp.lt.s32.totalorder %s22, 0
        %s199 = scalar_select %p198, %s22, 0
        %s200 = smul.addr %s199, 4
        %s201 = scalar_lea.vmem %s3, %s200
      $region24: #{_forward_impl.4} parent=11 // pred_fallthru
        _
    $region12: #{_forward_impl.4} parent=5 // pred_fallthru
      _
    %p202 = scmp.lt.s32.totalorder %s12, 2
    // Predicated region
    $region25: #{_forward_impl.4} parent=5 // pred_check
      %p203 = pneg %p202
    $region26: #{_forward_impl.4} parent=5 // pred_check_branch
      %205 = sbr.rel (%p203) target = $region28
    $region27: #{_forward_impl.4} parent=5 // pred_region
      // Predicated region
      $region29: #{_forward_impl.4} parent=27 // pred_check
        %p206 = pneg %p44
      $region30: #{_forward_impl.4} parent=27 // pred_check_branch
        %208 = sbr.rel (%p206) target = $region32
      $region31: #{_forward_impl.4} parent=27 // pred_region
        %p209 = scmp.lt.s32.totalorder %s19, 1
        %s210 = scalar_select %p209, %s19, 1
        %s211 = smul.addr %s210, 54
        %s212 = smul.addr %s211, 4
        %s213 = scalar_lea.vmem %s0, %s212
      $region32: #{_forward_impl.4} parent=27 // pred_fallthru
        _
    $region28: #{_forward_impl.4} parent=5 // pred_fallthru
      _
    %p214 = scmp.le.s32.totalorder 1, %s12
    %p215 = scmp.lt.s32.totalorder %s12, 3
    %p216 = pnand %p214, %p215
    %p217 = pneg %p216
    // Predicated region
    $region33: #{_forward_impl.4} parent=5 // pred_check
      _
    $region34: #{_forward_impl.4} parent=5 // pred_check_branch
      %219 = sbr.rel (%p216) target = $region36
    $region35: #{_forward_impl.4} parent=5 // pred_region
      %s220 = ssub.s32 %s12, 1
      %p221 = scmp.lt.s32.totalorder %s21, 1
      %s222 = scalar_select %p221, %s21, 1
      %s223 = smul.addr %s222, 54
      %s224 = smul.addr %s223, 4
      %s225 = scalar_lea.vmem %s0, %s224
      %p226 = pneg %p50
      %p227 = pneg %p47
      %p228 = pneg %p71
      %p229 = pneg %p68
      %p230 = pneg %p92
      %p231 = pneg %p89
      %p232 = scmp.lt.s32.totalorder %s22, 0
      %s233 = scalar_select %p232, %s22, 0
      %s234 = smul.addr %s233, 4
      %s235 = scalar_lea.vmem %s3, %s234
      %p236 = pneg %p118
      %p237 = pneg %p115
      %p238 = pneg %p146
      %p239 = pneg %p143
      %p240 = scmp.lt.s32.totalorder %s21, 1
      %s241 = scalar_select %p240, %s21, 1
      %p242 = scmp.lt.s32.totalorder %s22, 0
      %s243 = scalar_select %p242, %s22, 0
      %s244 = smul.addr %s241, 32
      %s245 = sadd.s32 %s243, %s244
      %s246 = smul.addr %s245, 4
      %s247 = scalar_lea.vmem %s4, %s246
      %p248 = pneg %p174
      %p249 = pneg %p171
      %p250 = scmp.lt.s32.totalorder %s21, 1
      %s251 = scalar_select %p250, %s21, 1
      %p252 = scmp.lt.s32.totalorder %s22, 0
      %s253 = scalar_select %p252, %s22, 0
      %s254 = sadd.s32 %s253, %s251
      %s255 = smul.addr %s254, 2
      %s256 = scalar_lea.vmem %s5, %s255
      %p257 = scmp.lt.s32.totalorder %s21, 1
      %s258 = scalar_select %p257, %s21, 1
      %s259 = smul.addr %s258, 54
      %s260 = smul.addr %s259, 4
      %s261 = scalar_lea.vmem %s0, %s260
      %p262 = scmp.lt.s32.totalorder %s22, 0
      %s263 = scalar_select %p262, %s22, 0
      %s264 = smul.addr %s263, 4
      %s265 = scalar_lea.vmem %s3, %s264
      %p266 = scmp.lt.s32.totalorder %s21, 1
      %s267 = scalar_select %p266, %s21, 1
      %p268 = scmp.lt.s32.totalorder %s22, 0
      %s269 = scalar_select %p268, %s22, 0
      %s270 = smul.addr %s267, 32
      %s271 = sadd.s32 %s269, %s270
      %s272 = smul.addr %s271, 4
      %s273 = scalar_lea.vmem %s4, %s272
      %p274 = scmp.lt.s32.totalorder %s21, 1
      %s275 = scalar_select %p274, %s21, 1
      %p276 = scmp.lt.s32.totalorder %s22, 0
      %s277 = scalar_select %p276, %s22, 0
      %s278 = sadd.s32 %s277, %s275
      %s279 = smul.addr %s278, 2
      %s280 = scalar_lea.vmem %s5, %s279
      %p282 = scmp.eq.s32.totalorder %s22, 0
      // Predicated region
      $region37: #{_forward_impl.4} parent=35 // pred_check
        %p283 = pneg %p282
      $region38: #{_forward_impl.4} parent=35 // pred_check_branch
        %285 = sbr.rel (%p283) target = $region40
      $region39: #{_forward_impl.4} parent=35 // pred_region
        %v286 = vlaneseq
        %v287 = vshrl.u32 %v286, 7
        %v288 = vadd.s32 %v287, 8
        %v289 = vadd.s32 %v287, 16
        %vm290 = vcmp.ge.s32.totalorder %v287, 1
        %vm291 = vcmp.ge.s32.totalorder %v288, 1
        %vm292 = vcmp.ge.s32.totalorder %v289, 1
        %vm293 = vmand 0, %vm290
        %vm294 = vmand 0, %vm291
        %vm295 = vmand 0, %vm292
        %vm296 = vmand 1, %vm290
        %vm297 = vmand 1, %vm291
        %vm298 = vmand 1, %vm292
        %vm299 = vcmp.lt.s32.totalorder %v287, 17
        %vm300 = vcmp.lt.s32.totalorder %v288, 17
        %vm301 = vcmp.lt.s32.totalorder %v289, 17
        %vm302 = vmand %vm293, %vm299
        %vm303 = vmand %vm294, %vm300
        %vm304 = vmand %vm295, %vm301
        %vm305 = vmand %vm296, %vm299
        %vm306 = vmand %vm297, %vm300
        %vm307 = vmand %vm298, %vm301
        %v308 = vld [vmem:[%s261] sm:$0xf]
        %v309 = vld [vmem:[%s261 + $0x4] sm:$0xf]
        %v310 = vld [vmem:[%s261 + $0x8] sm:$0x1]
        %v311 = vld [vmem:[%s261 + $0xc] sm:$0xf]
        %v312 = vld [vmem:[%s261 + $0x10] sm:$0xf]
        %v313 = vld [vmem:[%s261 + $0x14] sm:$0x1]
        %v314 = vld [vmem:[%s261 + $0x18] sm:$0xf]
        %v315 = vld [vmem:[%s261 + $0x1c] sm:$0xf]
        %v316 = vld [vmem:[%s261 + $0x20] sm:$0x1]
        %v317 = vld [vmem:[%s261 + $0x24] sm:$0xf]
        %v318 = vld [vmem:[%s261 + $0x28] sm:$0xf]
        %v319 = vld [vmem:[%s261 + $0x2c] sm:$0x1]
        %v320 = vld [vmem:[%s261 + $0x30] sm:$0xf]
        %v321 = vld [vmem:[%s261 + $0x34] sm:$0xf]
        %v322 = vld [vmem:[%s261 + $0x38] sm:$0x1]
        %v323 = vld [vmem:[%s261 + $0x3c] sm:$0xf]
        %v324 = vld [vmem:[%s261 + $0x40] sm:$0xf]
        %v325 = vld [vmem:[%s261 + $0x44] sm:$0x1]
        %v326 = vld [vmem:[%s261 + $0x48] sm:$0xf]
        %v327 = vld [vmem:[%s261 + $0x4c] sm:$0xf]
        %v328 = vld [vmem:[%s261 + $0x50] sm:$0x1]
        %v329 = vld [vmem:[%s261 + $0x54] sm:$0xf]
        %v330 = vld [vmem:[%s261 + $0x58] sm:$0xf]
        %v331 = vld [vmem:[%s261 + $0x5c] sm:$0x1]
        %v332 = vld [vmem:[%s261 + $0x60] sm:$0xf]
        %v333 = vld [vmem:[%s261 + $0x64] sm:$0xf]
        %v334 = vld [vmem:[%s261 + $0x68] sm:$0x1]
        %v335 = vld [vmem:[%s261 + $0x6c] sm:$0xf]
        %v336 = vld [vmem:[%s261 + $0x70] sm:$0xf]
        %v337 = vld [vmem:[%s261 + $0x74] sm:$0x1]
        %v338 = vld [vmem:[%s261 + $0x78] sm:$0xf]
        %v339 = vld [vmem:[%s261 + $0x7c] sm:$0xf]
        %v340 = vld [vmem:[%s261 + $0x80] sm:$0x1]
        %v341 = vld [vmem:[%s261 + $0x84] sm:$0xf]
        %v342 = vld [vmem:[%s261 + $0x88] sm:$0xf]
        %v343 = vld [vmem:[%s261 + $0x8c] sm:$0x1]
        %v344 = vld [vmem:[%s261 + $0x90] sm:$0xf]
        %v345 = vld [vmem:[%s261 + $0x94] sm:$0xf]
        %v346 = vld [vmem:[%s261 + $0x98] sm:$0x1]
        %v347 = vld [vmem:[%s261 + $0x9c] sm:$0xf]
        %v348 = vld [vmem:[%s261 + $0xa0] sm:$0xf]
        %v349 = vld [vmem:[%s261 + $0xa4] sm:$0x1]
        %v350 = vld [vmem:[%s261 + $0xa8] sm:$0xf]
        %v351 = vld [vmem:[%s261 + $0xac] sm:$0xf]
        %v352 = vld [vmem:[%s261 + $0xb0] sm:$0x1]
        %v353 = vld [vmem:[%s261 + $0xb4] sm:$0xf]
        %v354 = vld [vmem:[%s261 + $0xb8] sm:$0xf]
        %v355 = vld [vmem:[%s261 + $0xbc] sm:$0x1]
        %v356 = vld [vmem:[%s261 + $0xc0] sm:$0xf]
        %v357 = vld [vmem:[%s261 + $0xc4] sm:$0xf]
        %v358 = vld [vmem:[%s261 + $0xc8] sm:$0x1]
        %v359 = vld [vmem:[%s261 + $0xcc] sm:$0xf]
        %v360 = vld [vmem:[%s261 + $0xd0] sm:$0xf]
        %v361 = vld [vmem:[%s261 + $0xd4] sm:$0x1]
        %v362 = vunpack.c.l.bf16 %v308
        %v363 = vunpack.c.l.bf16 %v309
        %v364 = vunpack.c.l.bf16 %v310
        %v365 = vunpack.c.l.bf16 %v311
        %v366 = vunpack.c.l.bf16 %v312
        %v367 = vunpack.c.l.bf16 %v313
        %v368 = vunpack.c.l.bf16 %v314
        %v369 = vunpack.c.l.bf16 %v315
        %v370 = vunpack.c.l.bf16 %v316
        %v371 = vunpack.c.l.bf16 %v317
        %v372 = vunpack.c.l.bf16 %v318
        %v373 = vunpack.c.l.bf16 %v319
        %v374 = vunpack.c.l.bf16 %v320
        %v375 = vunpack.c.l.bf16 %v321
        %v376 = vunpack.c.l.bf16 %v322
        %v377 = vunpack.c.l.bf16 %v323
        %v378 = vunpack.c.l.bf16 %v324
        %v379 = vunpack.c.l.bf16 %v325
        %v380 = vunpack.c.l.bf16 %v326
        %v381 = vunpack.c.l.bf16 %v327
        %v382 = vunpack.c.l.bf16 %v328
        %v383 = vunpack.c.l.bf16 %v329
        %v384 = vunpack.c.l.bf16 %v330
        %v385 = vunpack.c.l.bf16 %v331
        %v386 = vunpack.c.l.bf16 %v332
        %v387 = vunpack.c.l.bf16 %v333
        %v388 = vunpack.c.l.bf16 %v334
        %v389 = vunpack.c.l.bf16 %v335
        %v390 = vunpack.c.l.bf16 %v336
        %v391 = vunpack.c.l.bf16 %v337
        %v392 = vunpack.c.l.bf16 %v338
        %v393 = vunpack.c.l.bf16 %v339
        %v394 = vunpack.c.l.bf16 %v340
        %v395 = vunpack.c.l.bf16 %v341
        %v396 = vunpack.c.l.bf16 %v342
        %v397 = vunpack.c.l.bf16 %v343
        %v398 = vunpack.c.l.bf16 %v344
        %v399 = vunpack.c.l.bf16 %v345
        %v400 = vunpack.c.l.bf16 %v346
        %v401 = vunpack.c.l.bf16 %v347
        %v402 = vunpack.c.l.bf16 %v348
        %v403 = vunpack.c.l.bf16 %v349
        %v404 = vunpack.c.l.bf16 %v350
        %v405 = vunpack.c.l.bf16 %v351
        %v406 = vunpack.c.l.bf16 %v352
        %v407 = vunpack.c.l.bf16 %v353
        %v408 = vunpack.c.l.bf16 %v354
        %v409 = vunpack.c.l.bf16 %v355
        %v410 = vunpack.c.l.bf16 %v356
        %v411 = vunpack.c.l.bf16 %v357
        %v412 = vunpack.c.l.bf16 %v358
        %v413 = vunpack.c.l.bf16 %v359
        %v414 = vunpack.c.l.bf16 %v360
        %v415 = vunpack.c.l.bf16 %v361
        %v416 = vld [vmem:[%s1] sm:$0x1]
        %v418 = vlaneseq
        %v419 = vshrl.u32 %v418, 7
        %v420 = vsub.s32 0, %v419
        %v421 = vrot.slane %v416, %v420
        %v423 = vmul.f32 %v362, %v421
        %v424 = vmul.f32 %v363, %v421
        %v425 = vmul.f32 %v364, %v421
        %v426 = vmul.f32 %v365, %v421
        %v427 = vmul.f32 %v366, %v421
        %v428 = vmul.f32 %v367, %v421
        %v429 = vmul.f32 %v368, %v421
        %v430 = vmul.f32 %v369, %v421
        %v431 = vmul.f32 %v370, %v421
        %v432 = vmul.f32 %v371, %v421
        %v433 = vmul.f32 %v372, %v421
        %v434 = vmul.f32 %v373, %v421
        %v435 = vmul.f32 %v374, %v421
        %v436 = vmul.f32 %v375, %v421
        %v437 = vmul.f32 %v376, %v421
        %v438 = vmul.f32 %v377, %v421
        %v439 = vmul.f32 %v378, %v421
        %v440 = vmul.f32 %v379, %v421
        %v441 = vmul.f32 %v380, %v421
        %v442 = vmul.f32 %v381, %v421
        %v443 = vmul.f32 %v382, %v421
        %v444 = vmul.f32 %v383, %v421
        %v445 = vmul.f32 %v384, %v421
        %v446 = vmul.f32 %v385, %v421
        %v447 = vmul.f32 %v386, %v421
        %v448 = vmul.f32 %v387, %v421
        %v449 = vmul.f32 %v388, %v421
        %v450 = vmul.f32 %v389, %v421
        %v451 = vmul.f32 %v390, %v421
        %v452 = vmul.f32 %v391, %v421
        %v453 = vmul.f32 %v392, %v421
        %v454 = vmul.f32 %v393, %v421
        %v455 = vmul.f32 %v394, %v421
        %v456 = vmul.f32 %v395, %v421
        %v457 = vmul.f32 %v396, %v421
        %v458 = vmul.f32 %v397, %v421
        %v459 = vmul.f32 %v398, %v421
        %v460 = vmul.f32 %v399, %v421
        %v461 = vmul.f32 %v400, %v421
        %v462 = vmul.f32 %v401, %v421
        %v463 = vmul.f32 %v402, %v421
        %v464 = vmul.f32 %v403, %v421
        %v465 = vmul.f32 %v404, %v421
        %v466 = vmul.f32 %v405, %v421
        %v467 = vmul.f32 %v406, %v421
        %v468 = vmul.f32 %v407, %v421
        %v469 = vmul.f32 %v408, %v421
        %v470 = vmul.f32 %v409, %v421
        %v471 = vmul.f32 %v410, %v421
        %v472 = vmul.f32 %v411, %v421
        %v473 = vmul.f32 %v412, %v421
        %v474 = vmul.f32 %v413, %v421
        %v475 = vmul.f32 %v414, %v421
        %v476 = vmul.f32 %v415, %v421
        %v477 = vld [vmem:[%s2] sm:$0x1]
        %v479 = vlaneseq
        %v480 = vshrl.u32 %v479, 7
        %v481 = vsub.s32 0, %v480
        %v482 = vrot.slane %v477, %v481
        %v484 = vadd.f32 %v423, %v482
        %v485 = vadd.f32 %v424, %v482
        %v486 = vadd.f32 %v425, %v482
        %v487 = vadd.f32 %v426, %v482
        %v488 = vadd.f32 %v427, %v482
        %v489 = vadd.f32 %v428, %v482
        %v490 = vadd.f32 %v429, %v482
        %v491 = vadd.f32 %v430, %v482
        %v492 = vadd.f32 %v431, %v482
        %v493 = vadd.f32 %v432, %v482
        %v494 = vadd.f32 %v433, %v482
        %v495 = vadd.f32 %v434, %v482
        %v496 = vadd.f32 %v435, %v482
        %v497 = vadd.f32 %v436, %v482
        %v498 = vadd.f32 %v437, %v482
        %v499 = vadd.f32 %v438, %v482
        %v500 = vadd.f32 %v439, %v482
        %v501 = vadd.f32 %v440, %v482
        %v502 = vadd.f32 %v441, %v482
        %v503 = vadd.f32 %v442, %v482
        %v504 = vadd.f32 %v443, %v482
        %v505 = vadd.f32 %v444, %v482
        %v506 = vadd.f32 %v445, %v482
        %v507 = vadd.f32 %v446, %v482
        %v508 = vadd.f32 %v447, %v482
        %v509 = vadd.f32 %v448, %v482
        %v510 = vadd.f32 %v449, %v482
        %v511 = vadd.f32 %v450, %v482
        %v512 = vadd.f32 %v451, %v482
        %v513 = vadd.f32 %v452, %v482
        %v514 = vadd.f32 %v453, %v482
        %v515 = vadd.f32 %v454, %v482
        %v516 = vadd.f32 %v455, %v482
        %v517 = vadd.f32 %v456, %v482
        %v518 = vadd.f32 %v457, %v482
        %v519 = vadd.f32 %v458, %v482
        %v520 = vadd.f32 %v459, %v482
        %v521 = vadd.f32 %v460, %v482
        %v522 = vadd.f32 %v461, %v482
        %v523 = vadd.f32 %v462, %v482
        %v524 = vadd.f32 %v463, %v482
        %v525 = vadd.f32 %v464, %v482
        %v526 = vadd.f32 %v465, %v482
        %v527 = vadd.f32 %v466, %v482
        %v528 = vadd.f32 %v467, %v482
        %v529 = vadd.f32 %v468, %v482
        %v530 = vadd.f32 %v469, %v482
        %v531 = vadd.f32 %v470, %v482
        %v532 = vadd.f32 %v471, %v482
        %v533 = vadd.f32 %v472, %v482
        %v534 = vadd.f32 %v473, %v482
        %v535 = vadd.f32 %v474, %v482
        %v536 = vadd.f32 %v475, %v482
        %v537 = vadd.f32 %v476, %v482
        %v538 = vmax.f32 %v484, 0.0
        %v539 = vmax.f32 %v485, 0.0
        %v540 = vmax.f32 %v486, 0.0
        %v541 = vmax.f32 %v487, 0.0
        %v542 = vmax.f32 %v488, 0.0
        %v543 = vmax.f32 %v489, 0.0
        %v544 = vmax.f32 %v490, 0.0
        %v545 = vmax.f32 %v491, 0.0
        %v546 = vmax.f32 %v492, 0.0
        %v547 = vmax.f32 %v493, 0.0
        %v548 = vmax.f32 %v494, 0.0
        %v549 = vmax.f32 %v495, 0.0
        %v550 = vmax.f32 %v496, 0.0
        %v551 = vmax.f32 %v497, 0.0
        %v552 = vmax.f32 %v498, 0.0
        %v553 = vmax.f32 %v499, 0.0
        %v554 = vmax.f32 %v500, 0.0
        %v555 = vmax.f32 %v501, 0.0
        %v556 = vmax.f32 %v502, 0.0
        %v557 = vmax.f32 %v503, 0.0
        %v558 = vmax.f32 %v504, 0.0
        %v559 = vmax.f32 %v505, 0.0
        %v560 = vmax.f32 %v506, 0.0
        %v561 = vmax.f32 %v507, 0.0
        %v562 = vmax.f32 %v508, 0.0
        %v563 = vmax.f32 %v509, 0.0
        %v564 = vmax.f32 %v510, 0.0
        %v565 = vmax.f32 %v511, 0.0
        %v566 = vmax.f32 %v512, 0.0
        %v567 = vmax.f32 %v513, 0.0
        %v568 = vmax.f32 %v514, 0.0
        %v569 = vmax.f32 %v515, 0.0
        %v570 = vmax.f32 %v516, 0.0
        %v571 = vmax.f32 %v517, 0.0
        %v572 = vmax.f32 %v518, 0.0
        %v573 = vmax.f32 %v519, 0.0
        %v574 = vmax.f32 %v520, 0.0
        %v575 = vmax.f32 %v521, 0.0
        %v576 = vmax.f32 %v522, 0.0
        %v577 = vmax.f32 %v523, 0.0
        %v578 = vmax.f32 %v524, 0.0
        %v579 = vmax.f32 %v525, 0.0
        %v580 = vmax.f32 %v526, 0.0
        %v581 = vmax.f32 %v527, 0.0
        %v582 = vmax.f32 %v528, 0.0
        %v583 = vmax.f32 %v529, 0.0
        %v584 = vmax.f32 %v530, 0.0
        %v585 = vmax.f32 %v531, 0.0
        %v586 = vmax.f32 %v532, 0.0
        %v587 = vmax.f32 %v533, 0.0
        %v588 = vmax.f32 %v534, 0.0
        %v589 = vmax.f32 %v535, 0.0
        %v590 = vmax.f32 %v536, 0.0
        %v591 = vmax.f32 %v537, 0.0
        %v592 = vsel %vm302, %v538, 0.0
        %v593 = vsel %vm303, %v539, 0.0
        %v594 = vsel %vm304, %v540, 0.0
        %v595 = vsel %vm305, %v541, 0.0
        %v596 = vsel %vm306, %v542, 0.0
        %v597 = vsel %vm307, %v543, 0.0
        %v598 = vsel %vm305, %v544, 0.0
        %v599 = vsel %vm306, %v545, 0.0
        %v600 = vsel %vm307, %v546, 0.0
        %v601 = vsel %vm305, %v547, 0.0
        %v602 = vsel %vm306, %v548, 0.0
        %v603 = vsel %vm307, %v549, 0.0
        %v604 = vsel %vm305, %v550, 0.0
        %v605 = vsel %vm306, %v551, 0.0
        %v606 = vsel %vm307, %v552, 0.0
        %v607 = vsel %vm305, %v553, 0.0
        %v608 = vsel %vm306, %v554, 0.0
        %v609 = vsel %vm307, %v555, 0.0
        %v610 = vsel %vm305, %v556, 0.0
        %v611 = vsel %vm306, %v557, 0.0
        %v612 = vsel %vm307, %v558, 0.0
        %v613 = vsel %vm305, %v559, 0.0
        %v614 = vsel %vm306, %v560, 0.0
        %v615 = vsel %vm307, %v561, 0.0
        %v616 = vsel %vm305, %v562, 0.0
        %v617 = vsel %vm306, %v563, 0.0
        %v618 = vsel %vm307, %v564, 0.0
        %v619 = vsel %vm305, %v565, 0.0
        %v620 = vsel %vm306, %v566, 0.0
        %v621 = vsel %vm307, %v567, 0.0
        %v622 = vsel %vm305, %v568, 0.0
        %v623 = vsel %vm306, %v569, 0.0
        %v624 = vsel %vm307, %v570, 0.0
        %v625 = vsel %vm305, %v571, 0.0
        %v626 = vsel %vm306, %v572, 0.0
        %v627 = vsel %vm307, %v573, 0.0
        %v628 = vsel %vm305, %v574, 0.0
        %v629 = vsel %vm306, %v575, 0.0
        %v630 = vsel %vm307, %v576, 0.0
        %v631 = vsel %vm305, %v577, 0.0
        %v632 = vsel %vm306, %v578, 0.0
        %v633 = vsel %vm307, %v579, 0.0
        %v634 = vsel %vm305, %v580, 0.0
        %v635 = vsel %vm306, %v581, 0.0
        %v636 = vsel %vm307, %v582, 0.0
        %v637 = vsel %vm305, %v583, 0.0
        %v638 = vsel %vm306, %v584, 0.0
        %v639 = vsel %vm307, %v585, 0.0
        %v640 = vsel %vm305, %v586, 0.0
        %v641 = vsel %vm306, %v587, 0.0
        %v642 = vsel %vm307, %v588, 0.0
        %v643 = vsel %vm302, %v589, 0.0
        %v644 = vsel %vm303, %v590, 0.0
        %v645 = vsel %vm304, %v591, 0.0
        %v646 = vpack.c.bf16 %v593, %v592
        %v647 = vpack.c.bf16 %v594, %v594
        %v648 = vpack.c.bf16 %v596, %v595
        %v649 = vpack.c.bf16 %v597, %v597
        %v650 = vpack.c.bf16 %v599, %v598
        %v651 = vpack.c.bf16 %v600, %v600
        %v652 = vpack.c.bf16 %v602, %v601
        %v653 = vpack.c.bf16 %v603, %v603
        %v654 = vpack.c.bf16 %v605, %v604
        %v655 = vpack.c.bf16 %v606, %v606
        %v656 = vpack.c.bf16 %v608, %v607
        %v657 = vpack.c.bf16 %v609, %v609
        %v658 = vpack.c.bf16 %v611, %v610
        %v659 = vpack.c.bf16 %v612, %v612
        %v660 = vpack.c.bf16 %v614, %v613
        %v661 = vpack.c.bf16 %v615, %v615
        %v662 = vpack.c.bf16 %v617, %v616
        %v663 = vpack.c.bf16 %v618, %v618
        %v664 = vpack.c.bf16 %v620, %v619
        %v665 = vpack.c.bf16 %v621, %v621
        %v666 = vpack.c.bf16 %v623, %v622
        %v667 = vpack.c.bf16 %v624, %v624
        %v668 = vpack.c.bf16 %v626, %v625
        %v669 = vpack.c.bf16 %v627, %v627
        %v670 = vpack.c.bf16 %v629, %v628
        %v671 = vpack.c.bf16 %v630, %v630
        %v672 = vpack.c.bf16 %v632, %v631
        %v673 = vpack.c.bf16 %v633, %v633
        %v674 = vpack.c.bf16 %v635, %v634
        %v675 = vpack.c.bf16 %v636, %v636
        %v676 = vpack.c.bf16 %v638, %v637
        %v677 = vpack.c.bf16 %v639, %v639
        %v678 = vpack.c.bf16 %v641, %v640
        %v679 = vpack.c.bf16 %v642, %v642
        %v680 = vpack.c.bf16 %v644, %v643
        %v681 = vpack.c.bf16 %v645, %v645
        %vm682 = vsmask.f32 7424
        %v684 = vshrl.u32 %v646, 16
        %v686 = vshll.u32 %v646, 16
        %v688 = vrot.slane %v686, 1
        %v689 = vor.u32 %v684, %v688
        %v691 = vshll.u32 %v647, 16
        %v693 = vrot.slane %v691, 1
        %v694 = vsel %vm682, %v689, %v693
        %v696 = vshrl.u32 %v648, 16
        %v698 = vshll.u32 %v648, 16
        %v700 = vrot.slane %v698, 1
        %v701 = vor.u32 %v696, %v700
        %v703 = vshll.u32 %v649, 16
        %v705 = vrot.slane %v703, 1
        %v706 = vsel %vm682, %v701, %v705
        %v708 = vshrl.u32 %v650, 16
        %v710 = vshll.u32 %v650, 16
        %v712 = vrot.slane %v710, 1
        %v713 = vor.u32 %v708, %v712
        %v715 = vshll.u32 %v651, 16
        %v717 = vrot.slane %v715, 1
        %v718 = vsel %vm682, %v713, %v717
        %v720 = vshrl.u32 %v652, 16
        %v722 = vshll.u32 %v652, 16
        %v724 = vrot.slane %v722, 1
        %v725 = vor.u32 %v720, %v724
        %v727 = vshll.u32 %v653, 16
        %v729 = vrot.slane %v727, 1
        %v730 = vsel %vm682, %v725, %v729
        %v732 = vshrl.u32 %v654, 16
        %v734 = vshll.u32 %v654, 16
        %v736 = vrot.slane %v734, 1
        %v737 = vor.u32 %v732, %v736
        %v739 = vshll.u32 %v655, 16
        %v741 = vrot.slane %v739, 1
        %v742 = vsel %vm682, %v737, %v741
        %v744 = vshrl.u32 %v656, 16
        %v746 = vshll.u32 %v656, 16
        %v748 = vrot.slane %v746, 1
        %v749 = vor.u32 %v744, %v748
        %v751 = vshll.u32 %v657, 16
        %v753 = vrot.slane %v751, 1
        %v754 = vsel %vm682, %v749, %v753
        %v756 = vshrl.u32 %v658, 16
        %v758 = vshll.u32 %v658, 16
        %v760 = vrot.slane %v758, 1
        %v761 = vor.u32 %v756, %v760
        %v763 = vshll.u32 %v659, 16
        %v765 = vrot.slane %v763, 1
        %v766 = vsel %vm682, %v761, %v765
        %v768 = vshrl.u32 %v660, 16
        %v770 = vshll.u32 %v660, 16
        %v772 = vrot.slane %v770, 1
        %v773 = vor.u32 %v768, %v772
        %v775 = vshll.u32 %v661, 16
        %v777 = vrot.slane %v775, 1
        %v778 = vsel %vm682, %v773, %v777
        %v780 = vshrl.u32 %v662, 16
        %v782 = vshll.u32 %v662, 16
        %v784 = vrot.slane %v782, 1
        %v785 = vor.u32 %v780, %v784
        %v787 = vshll.u32 %v663, 16
        %v789 = vrot.slane %v787, 1
        %v790 = vsel %vm682, %v785, %v789
        %v792 = vshrl.u32 %v664, 16
        %v794 = vshll.u32 %v664, 16
        %v796 = vrot.slane %v794, 1
        %v797 = vor.u32 %v792, %v796
        %v799 = vshll.u32 %v665, 16
        %v801 = vrot.slane %v799, 1
        %v802 = vsel %vm682, %v797, %v801
        %v804 = vshrl.u32 %v666, 16
        %v806 = vshll.u32 %v666, 16
        %v808 = vrot.slane %v806, 1
        %v809 = vor.u32 %v804, %v808
        %v811 = vshll.u32 %v667, 16
        %v813 = vrot.slane %v811, 1
        %v814 = vsel %vm682, %v809, %v813
        %v816 = vshrl.u32 %v668, 16
        %v818 = vshll.u32 %v668, 16
        %v820 = vrot.slane %v818, 1
        %v821 = vor.u32 %v816, %v820
        %v823 = vshll.u32 %v669, 16
        %v825 = vrot.slane %v823, 1
        %v826 = vsel %vm682, %v821, %v825
        %v828 = vshrl.u32 %v670, 16
        %v830 = vshll.u32 %v670, 16
        %v832 = vrot.slane %v830, 1
        %v833 = vor.u32 %v828, %v832
        %v835 = vshll.u32 %v671, 16
        %v837 = vrot.slane %v835, 1
        %v838 = vsel %vm682, %v833, %v837
        %v840 = vshrl.u32 %v672, 16
        %v842 = vshll.u32 %v672, 16
        %v844 = vrot.slane %v842, 1
        %v845 = vor.u32 %v840, %v844
        %v847 = vshll.u32 %v673, 16
        %v849 = vrot.slane %v847, 1
        %v850 = vsel %vm682, %v845, %v849
        %v852 = vshrl.u32 %v674, 16
        %v854 = vshll.u32 %v674, 16
        %v856 = vrot.slane %v854, 1
        %v857 = vor.u32 %v852, %v856
        %v859 = vshll.u32 %v675, 16
        %v861 = vrot.slane %v859, 1
        %v862 = vsel %vm682, %v857, %v861
        %v864 = vshrl.u32 %v676, 16
        %v866 = vshll.u32 %v676, 16
        %v868 = vrot.slane %v866, 1
        %v869 = vor.u32 %v864, %v868
        %v871 = vshll.u32 %v677, 16
        %v873 = vrot.slane %v871, 1
        %v874 = vsel %vm682, %v869, %v873
        %vm907 = vcmask 1046528
        %v908 = vrot.slane %v646, 1
        %v909 = vrot.slane %v647, 1
        %v910 = vsel %vm907, %v908, %v909
        %v911 = vrot.slane %v648, 1
        %v912 = vrot.slane %v649, 1
        %v913 = vsel %vm907, %v911, %v912
        %v914 = vrot.slane %v650, 1
        %v915 = vrot.slane %v651, 1
        %v916 = vsel %vm907, %v914, %v915
        %v917 = vrot.slane %v652, 1
        %v918 = vrot.slane %v653, 1
        %v919 = vsel %vm907, %v917, %v918
        %v920 = vrot.slane %v654, 1
        %v921 = vrot.slane %v655, 1
        %v922 = vsel %vm907, %v920, %v921
        %v923 = vrot.slane %v656, 1
        %v924 = vrot.slane %v657, 1
        %v925 = vsel %vm907, %v923, %v924
        %v926 = vrot.slane %v658, 1
        %v927 = vrot.slane %v659, 1
        %v928 = vsel %vm907, %v926, %v927
        %v929 = vrot.slane %v660, 1
        %v930 = vrot.slane %v661, 1
        %v931 = vsel %vm907, %v929, %v930
        %v932 = vrot.slane %v662, 1
        %v933 = vrot.slane %v663, 1
        %v934 = vsel %vm907, %v932, %v933
        %v935 = vrot.slane %v664, 1
        %v936 = vrot.slane %v665, 1
        %v937 = vsel %vm907, %v935, %v936
        %v938 = vrot.slane %v666, 1
        %v939 = vrot.slane %v667, 1
        %v940 = vsel %vm907, %v938, %v939
        %v941 = vrot.slane %v668, 1
        %v942 = vrot.slane %v669, 1
        %v943 = vsel %vm907, %v941, %v942
        %v944 = vrot.slane %v670, 1
        %v945 = vrot.slane %v671, 1
        %v946 = vsel %vm907, %v944, %v945
        %v947 = vrot.slane %v672, 1
        %v948 = vrot.slane %v673, 1
        %v949 = vsel %vm907, %v947, %v948
        %v950 = vrot.slane %v674, 1
        %v951 = vrot.slane %v675, 1
        %v952 = vsel %vm907, %v950, %v951
        %v953 = vrot.slane %v676, 1
        %v954 = vrot.slane %v677, 1
        %v955 = vsel %vm907, %v953, %v954
        %v957 = vshrl.u32 %v678, 16
        %v959 = vshll.u32 %v678, 16
        %v961 = vrot.slane %v959, 1
        %v962 = vor.u32 %v957, %v961
        %v964 = vshll.u32 %v679, 16
        %v966 = vrot.slane %v964, 1
        %v967 = vsel %vm682, %v962, %v966
        %v970 = vrot.slane %v678, 1
        %v971 = vrot.slane %v679, 1
        %v972 = vsel %vm907, %v970, %v971
        %v974 = vshrl.u32 %v680, 16
        %v976 = vshll.u32 %v680, 16
        %v978 = vrot.slane %v976, 1
        %v979 = vor.u32 %v974, %v978
        %v981 = vshll.u32 %v681, 16
        %v983 = vrot.slane %v981, 1
        %v984 = vsel %vm682, %v979, %v983
        %v987 = vrot.slane %v680, 1
        %v988 = vrot.slane %v681, 1
        %v989 = vsel %vm907, %v987, %v988
        %v990 = vunpack.c.l.b16 %v646
        %v991 = vunpack.c.l.b16 %v694
        %v992 = vunpack.c.l.b16 %v910
        %v993 = vunpack.c.l.b16 %v648
        %v994 = vunpack.c.l.b16 %v706
        %v995 = vunpack.c.l.b16 %v913
        %v996 = vunpack.c.l.b16 %v650
        %v997 = vunpack.c.l.b16 %v718
        %v998 = vunpack.c.l.b16 %v916
        %v999 = vunpack.c.h.b16 %v646
        %v1000 = vunpack.c.h.b16 %v694
        %v1001 = vunpack.c.h.b16 %v910
        %v1002 = vunpack.c.h.b16 %v648
        %v1003 = vunpack.c.h.b16 %v706
        %v1004 = vunpack.c.h.b16 %v913
        %v1005 = vunpack.c.h.b16 %v650
        %v1006 = vunpack.c.h.b16 %v718
        %v1007 = vunpack.c.h.b16 %v916
        %v1008 = vunpack.c.l.b16 %v652
        %v1009 = vunpack.c.l.b16 %v730
        %v1010 = vunpack.c.l.b16 %v919
        %v1011 = vunpack.c.h.b16 %v652
        %v1012 = vunpack.c.h.b16 %v730
        %v1013 = vunpack.c.h.b16 %v919
        %v1014 = vunpack.c.l.b16 %v654
        %v1015 = vunpack.c.l.b16 %v742
        %v1016 = vunpack.c.l.b16 %v922
        %v1017 = vunpack.c.h.b16 %v654
        %v1018 = vunpack.c.h.b16 %v742
        %v1019 = vunpack.c.h.b16 %v922
        %v1020 = vunpack.c.l.b16 %v656
        %v1021 = vunpack.c.l.b16 %v754
        %v1022 = vunpack.c.l.b16 %v925
        %v1023 = vunpack.c.h.b16 %v656
        %v1024 = vunpack.c.h.b16 %v754
        %v1025 = vunpack.c.h.b16 %v925
        %v1026 = vunpack.c.l.b16 %v658
        %v1027 = vunpack.c.l.b16 %v766
        %v1028 = vunpack.c.l.b16 %v928
        %v1029 = vunpack.c.h.b16 %v658
        %v1030 = vunpack.c.h.b16 %v766
        %v1031 = vunpack.c.h.b16 %v928
        %v1032 = vunpack.c.l.b16 %v660
        %v1033 = vunpack.c.l.b16 %v778
        %v1034 = vunpack.c.l.b16 %v931
        %v1035 = vunpack.c.h.b16 %v660
        %v1036 = vunpack.c.h.b16 %v778
        %v1037 = vunpack.c.h.b16 %v931
        %v1038 = vunpack.c.l.b16 %v662
        %v1039 = vunpack.c.l.b16 %v790
        %v1040 = vunpack.c.l.b16 %v934
        %v1041 = vunpack.c.h.b16 %v662
        %v1042 = vunpack.c.h.b16 %v790
        %v1043 = vunpack.c.h.b16 %v934
        %v1044 = vunpack.c.l.b16 %v664
        %v1045 = vunpack.c.l.b16 %v802
        %v1046 = vunpack.c.l.b16 %v937
        %v1047 = vunpack.c.h.b16 %v664
        %v1048 = vunpack.c.h.b16 %v802
        %v1049 = vunpack.c.h.b16 %v937
        %v1050 = vunpack.c.l.b16 %v666
        %v1051 = vunpack.c.l.b16 %v814
        %v1052 = vunpack.c.l.b16 %v940
        %v1053 = vunpack.c.h.b16 %v666
        %v1054 = vunpack.c.h.b16 %v814
        %v1055 = vunpack.c.h.b16 %v940
        %v1056 = vunpack.c.l.b16 %v668
        %v1057 = vunpack.c.l.b16 %v826
        %v1058 = vunpack.c.l.b16 %v943
        %v1059 = vunpack.c.h.b16 %v668
        %v1060 = vunpack.c.h.b16 %v826
        %v1061 = vunpack.c.h.b16 %v943
        %v1062 = vunpack.c.l.b16 %v670
        %v1063 = vunpack.c.l.b16 %v838
        %v1064 = vunpack.c.l.b16 %v946
        %v1065 = vunpack.c.h.b16 %v670
        %v1066 = vunpack.c.h.b16 %v838
        %v1067 = vunpack.c.h.b16 %v946
        %v1068 = vunpack.c.l.b16 %v672
        %v1069 = vunpack.c.l.b16 %v850
        %v1070 = vunpack.c.l.b16 %v949
        %v1071 = vunpack.c.h.b16 %v672
        %v1072 = vunpack.c.h.b16 %v850
        %v1073 = vunpack.c.h.b16 %v949
        %v1074 = vunpack.c.l.b16 %v674
        %v1075 = vunpack.c.l.b16 %v862
        %v1076 = vunpack.c.l.b16 %v952
        %v1077 = vunpack.c.h.b16 %v674
        %v1078 = vunpack.c.h.b16 %v862
        %v1079 = vunpack.c.h.b16 %v952
        %v1080 = vunpack.c.l.b16 %v676
        %v1081 = vunpack.c.l.b16 %v874
        %v1082 = vunpack.c.l.b16 %v955
        %v1083 = vunpack.c.h.b16 %v676
        %v1084 = vunpack.c.h.b16 %v874
        %v1085 = vunpack.c.h.b16 %v955
        %v1086 = vunpack.c.l.b16 %v678
        %v1087 = vunpack.c.l.b16 %v967
        %v1088 = vunpack.c.l.b16 %v972
        %v1089 = vunpack.c.h.b16 %v678
        %v1090 = vunpack.c.h.b16 %v967
        %v1091 = vunpack.c.h.b16 %v972
        %v1092 = vunpack.c.l.b16 %v680
        %v1093 = vunpack.c.l.b16 %v984
        %v1094 = vunpack.c.l.b16 %v989
        %v1095 = vunpack.c.h.b16 %v680
        %v1096 = vunpack.c.h.b16 %v984
        %v1097 = vunpack.c.h.b16 %v989
        %v1098 = vpack.c.b16 %v991, %v990
        %v1099 = vpack.c.b16 %v993, %v992
        %v1100 = vpack.c.b16 %v995, %v994
        %v1101 = vpack.c.b16 %v997, %v996
        %v1102 = vpack.c.b16 %v998, %v998
        %v1103 = vpack.c.b16 %v1000, %v999
        %v1104 = vpack.c.b16 %v1002, %v1001
        %v1105 = vpack.c.b16 %v1004, %v1003
        %v1106 = vpack.c.b16 %v1006, %v1005
        %v1107 = vpack.c.b16 %v1007, %v1007
        %v1108 = vpack.c.b16 %v994, %v993
        %v1109 = vpack.c.b16 %v996, %v995
        %v1110 = vpack.c.b16 %v998, %v997
        %v1111 = vpack.c.b16 %v1009, %v1008
        %v1112 = vpack.c.b16 %v1010, %v1010
        %v1113 = vpack.c.b16 %v1003, %v1002
        %v1114 = vpack.c.b16 %v1005, %v1004
        %v1115 = vpack.c.b16 %v1007, %v1006
        %v1116 = vpack.c.b16 %v1012, %v1011
        %v1117 = vpack.c.b16 %v1013, %v1013
        %v1118 = vpack.c.b16 %v1008, %v998
        %v1119 = vpack.c.b16 %v1010, %v1009
        %v1120 = vpack.c.b16 %v1015, %v1014
        %v1121 = vpack.c.b16 %v1016, %v1016
        %v1122 = vpack.c.b16 %v1011, %v1007
        %v1123 = vpack.c.b16 %v1013, %v1012
        %v1124 = vpack.c.b16 %v1018, %v1017
        %v1125 = vpack.c.b16 %v1019, %v1019
        %v1126 = vpack.c.b16 %v1014, %v1010
        %v1127 = vpack.c.b16 %v1016, %v1015
        %v1128 = vpack.c.b16 %v1021, %v1020
        %v1129 = vpack.c.b16 %v1022, %v1022
        %v1130 = vpack.c.b16 %v1017, %v1013
        %v1131 = vpack.c.b16 %v1019, %v1018
        %v1132 = vpack.c.b16 %v1024, %v1023
        %v1133 = vpack.c.b16 %v1025, %v1025
        %v1134 = vpack.c.b16 %v1020, %v1016
        %v1135 = vpack.c.b16 %v1022, %v1021
        %v1136 = vpack.c.b16 %v1027, %v1026
        %v1137 = vpack.c.b16 %v1028, %v1028
        %v1138 = vpack.c.b16 %v1023, %v1019
        %v1139 = vpack.c.b16 %v1025, %v1024
        %v1140 = vpack.c.b16 %v1030, %v1029
        %v1141 = vpack.c.b16 %v1031, %v1031
        %v1142 = vpack.c.b16 %v1026, %v1022
        %v1143 = vpack.c.b16 %v1028, %v1027
        %v1144 = vpack.c.b16 %v1033, %v1032
        %v1145 = vpack.c.b16 %v1034, %v1034
        %v1146 = vpack.c.b16 %v1029, %v1025
        %v1147 = vpack.c.b16 %v1031, %v1030
        %v1148 = vpack.c.b16 %v1036, %v1035
        %v1149 = vpack.c.b16 %v1037, %v1037
        %v1150 = vpack.c.b16 %v1032, %v1028
        %v1151 = vpack.c.b16 %v1034, %v1033
        %v1152 = vpack.c.b16 %v1039, %v1038
        %v1153 = vpack.c.b16 %v1040, %v1040
        %v1154 = vpack.c.b16 %v1035, %v1031
        %v1155 = vpack.c.b16 %v1037, %v1036
        %v1156 = vpack.c.b16 %v1042, %v1041
        %v1157 = vpack.c.b16 %v1043, %v1043
        %v1158 = vpack.c.b16 %v1038, %v1034
        %v1159 = vpack.c.b16 %v1040, %v1039
        %v1160 = vpack.c.b16 %v1045, %v1044
        %v1161 = vpack.c.b16 %v1046, %v1046
        %v1162 = vpack.c.b16 %v1041, %v1037
        %v1163 = vpack.c.b16 %v1043, %v1042
        %v1164 = vpack.c.b16 %v1048, %v1047
        %v1165 = vpack.c.b16 %v1049, %v1049
        %v1166 = vpack.c.b16 %v1044, %v1040
        %v1167 = vpack.c.b16 %v1046, %v1045
        %v1168 = vpack.c.b16 %v1051, %v1050
        %v1169 = vpack.c.b16 %v1052, %v1052
        %v1170 = vpack.c.b16 %v1047, %v1043
        %v1171 = vpack.c.b16 %v1049, %v1048
        %v1172 = vpack.c.b16 %v1054, %v1053
        %v1173 = vpack.c.b16 %v1055, %v1055
        %v1174 = vpack.c.b16 %v1050, %v1046
        %v1175 = vpack.c.b16 %v1052, %v1051
        %v1176 = vpack.c.b16 %v1057, %v1056
        %v1177 = vpack.c.b16 %v1058, %v1058
        %v1178 = vpack.c.b16 %v1053, %v1049
        %v1179 = vpack.c.b16 %v1055, %v1054
        %v1180 = vpack.c.b16 %v1060, %v1059
        %v1181 = vpack.c.b16 %v1061, %v1061
        %v1182 = vpack.c.b16 %v1056, %v1052
        %v1183 = vpack.c.b16 %v1058, %v1057
        %v1184 = vpack.c.b16 %v1063, %v1062
        %v1185 = vpack.c.b16 %v1064, %v1064
        %v1186 = vpack.c.b16 %v1059, %v1055
        %v1187 = vpack.c.b16 %v1061, %v1060
        %v1188 = vpack.c.b16 %v1066, %v1065
        %v1189 = vpack.c.b16 %v1067, %v1067
        %v1190 = vpack.c.b16 %v1062, %v1058
        %v1191 = vpack.c.b16 %v1064, %v1063
        %v1192 = vpack.c.b16 %v1069, %v1068
        %v1193 = vpack.c.b16 %v1070, %v1070
        %v1194 = vpack.c.b16 %v1065, %v1061
        %v1195 = vpack.c.b16 %v1067, %v1066
        %v1196 = vpack.c.b16 %v1072, %v1071
        %v1197 = vpack.c.b16 %v1073, %v1073
        %v1198 = vpack.c.b16 %v1068, %v1064
        %v1199 = vpack.c.b16 %v1070, %v1069
        %v1200 = vpack.c.b16 %v1075, %v1074
        %v1201 = vpack.c.b16 %v1076, %v1076
        %v1202 = vpack.c.b16 %v1071, %v1067
        %v1203 = vpack.c.b16 %v1073, %v1072
        %v1204 = vpack.c.b16 %v1078, %v1077
        %v1205 = vpack.c.b16 %v1079, %v1079
        %v1206 = vpack.c.b16 %v1074, %v1070
        %v1207 = vpack.c.b16 %v1076, %v1075
        %v1208 = vpack.c.b16 %v1081, %v1080
        %v1209 = vpack.c.b16 %v1082, %v1082
        %v1210 = vpack.c.b16 %v1077, %v1073
        %v1211 = vpack.c.b16 %v1079, %v1078
        %v1212 = vpack.c.b16 %v1084, %v1083
        %v1213 = vpack.c.b16 %v1085, %v1085
        %v1214 = vpack.c.b16 %v1080, %v1076
        %v1215 = vpack.c.b16 %v1082, %v1081
        %v1216 = vpack.c.b16 %v1087, %v1086
        %v1217 = vpack.c.b16 %v1088, %v1088
        %v1218 = vpack.c.b16 %v1083, %v1079
        %v1219 = vpack.c.b16 %v1085, %v1084
        %v1220 = vpack.c.b16 %v1090, %v1089
        %v1221 = vpack.c.b16 %v1091, %v1091
        %v1222 = vpack.c.b16 %v1086, %v1082
        %v1223 = vpack.c.b16 %v1088, %v1087
        %v1224 = vpack.c.b16 %v1093, %v1092
        %v1225 = vpack.c.b16 %v1094, %v1094
        %v1226 = vpack.c.b16 %v1089, %v1085
        %v1227 = vpack.c.b16 %v1091, %v1090
        %v1228 = vpack.c.b16 %v1096, %v1095
        %v1229 = vpack.c.b16 %v1097, %v1097
        %1362 = vst [vmem:[#allocation2] sm:$0xff] %v1098
        %1363 = vst [vmem:[#allocation2 + $0x8] sm:$0xff] %v1099
        %1364 = vst [vmem:[#allocation2 + $0x10] sm:$0xff] %v1100
        %1365 = vst [vmem:[#allocation2 + $0x18] sm:$0xff] %v1101
        %1366 = vst [vmem:[#allocation2 + $0x20] sm:$0xf] %v1102
        %1367 = vst [vmem:[#allocation2 + $0x24] sm:$0xff] %v1103
        %1368 = vst [vmem:[#allocation2 + $0x2c] sm:$0xff] %v1104
        %1369 = vst [vmem:[#allocation2 + $0x34] sm:$0xff] %v1105
        %1370 = vst [vmem:[#allocation2 + $0x3c] sm:$0xff] %v1106
        %1371 = vst [vmem:[#allocation2 + $0x44] sm:$0xf] %v1107
        %1372 = vst [vmem:[#allocation2 + $0x48] sm:$0xff] %v1108
        %1373 = vst [vmem:[#allocation2 + $0x50] sm:$0xff] %v1109
        %1374 = vst [vmem:[#allocation2 + $0x58] sm:$0xff] %v1110
        %1375 = vst [vmem:[#allocation2 + $0x60] sm:$0xff] %v1111
        %1376 = vst [vmem:[#allocation2 + $0x68] sm:$0xf] %v1112
        %1377 = vst [vmem:[#allocation2 + $0x6c] sm:$0xff] %v1113
        %1378 = vst [vmem:[#allocation2 + $0x74] sm:$0xff] %v1114
        %1379 = vst [vmem:[#allocation2 + $0x7c] sm:$0xff] %v1115
        %1380 = vst [vmem:[#allocation2 + $0x84] sm:$0xff] %v1116
        %1381 = vst [vmem:[#allocation2 + $0x8c] sm:$0xf] %v1117
        %1382 = vst [vmem:[#allocation2 + $0x90] sm:$0xff] %v1101
        %1383 = vst [vmem:[#allocation2 + $0x98] sm:$0xff] %v1118
        %1384 = vst [vmem:[#allocation2 + $0xa0] sm:$0xff] %v1119
        %1385 = vst [vmem:[#allocation2 + $0xa8] sm:$0xff] %v1120
        %1386 = vst [vmem:[#allocation2 + $0xb0] sm:$0xf] %v1121
        %1387 = vst [vmem:[#allocation2 + $0xb4] sm:$0xff] %v1106
        %1388 = vst [vmem:[#allocation2 + $0xbc] sm:$0xff] %v1122
        %1389 = vst [vmem:[#allocation2 + $0xc4] sm:$0xff] %v1123
        %1390 = vst [vmem:[#allocation2 + $0xcc] sm:$0xff] %v1124
        %1391 = vst [vmem:[#allocation2 + $0xd4] sm:$0xf] %v1125
        %1392 = vst [vmem:[#allocation2 + $0xd8] sm:$0xff] %v1111
        %1393 = vst [vmem:[#allocation2 + $0xe0] sm:$0xff] %v1126
        %1394 = vst [vmem:[#allocation2 + $0xe8] sm:$0xff] %v1127
        %1395 = vst [vmem:[#allocation2 + $0xf0] sm:$0xff] %v1128
        %1396 = vst [vmem:[#allocation2 + $0xf8] sm:$0xf] %v1129
        %1397 = vst [vmem:[#allocation2 + $0xfc] sm:$0xff] %v1116
        %1398 = vst [vmem:[#allocation2 + $0x104] sm:$0xff] %v1130
        %1399 = vst [vmem:[#allocation2 + $0x10c] sm:$0xff] %v1131
        %1400 = vst [vmem:[#allocation2 + $0x114] sm:$0xff] %v1132
        %1401 = vst [vmem:[#allocation2 + $0x11c] sm:$0xf] %v1133
        %1402 = vst [vmem:[#allocation2 + $0x120] sm:$0xff] %v1120
        %1403 = vst [vmem:[#allocation2 + $0x128] sm:$0xff] %v1134
        %1404 = vst [vmem:[#allocation2 + $0x130] sm:$0xff] %v1135
        %1405 = vst [vmem:[#allocation2 + $0x138] sm:$0xff] %v1136
        %1406 = vst [vmem:[#allocation2 + $0x140] sm:$0xf] %v1137
        %1407 = vst [vmem:[#allocation2 + $0x144] sm:$0xff] %v1124
        %1408 = vst [vmem:[#allocation2 + $0x14c] sm:$0xff] %v1138
        %1409 = vst [vmem:[#allocation2 + $0x154] sm:$0xff] %v1139
        %1410 = vst [vmem:[#allocation2 + $0x15c] sm:$0xff] %v1140
        %1411 = vst [vmem:[#allocation2 + $0x164] sm:$0xf] %v1141
        %1412 = vst [vmem:[#allocation2 + $0x168] sm:$0xff] %v1128
        %1413 = vst [vmem:[#allocation2 + $0x170] sm:$0xff] %v1142
        %1414 = vst [vmem:[#allocation2 + $0x178] sm:$0xff] %v1143
        %1415 = vst [vmem:[#allocation2 + $0x180] sm:$0xff] %v1144
        %1416 = vst [vmem:[#allocation2 + $0x188] sm:$0xf] %v1145
        %1417 = vst [vmem:[#allocation2 + $0x18c] sm:$0xff] %v1132
        %1418 = vst [vmem:[#allocation2 + $0x194] sm:$0xff] %v1146
        %1419 = vst [vmem:[#allocation2 + $0x19c] sm:$0xff] %v1147
        %1420 = vst [vmem:[#allocation2 + $0x1a4] sm:$0xff] %v1148
        %1421 = vst [vmem:[#allocation2 + $0x1ac] sm:$0xf] %v1149
        %1422 = vst [vmem:[#allocation2 + $0x1b0] sm:$0xff] %v1136
        %1423 = vst [vmem:[#allocation2 + $0x1b8] sm:$0xff] %v1150
        %1424 = vst [vmem:[#allocation2 + $0x1c0] sm:$0xff] %v1151
        %1425 = vst [vmem:[#allocation2 + $0x1c8] sm:$0xff] %v1152
        %1426 = vst [vmem:[#allocation2 + $0x1d0] sm:$0xf] %v1153
        %1427 = vst [vmem:[#allocation2 + $0x1d4] sm:$0xff] %v1140
        %1428 = vst [vmem:[#allocation2 + $0x1dc] sm:$0xff] %v1154
        %1429 = vst [vmem:[#allocation2 + $0x1e4] sm:$0xff] %v1155
        %1430 = vst [vmem:[#allocation2 + $0x1ec] sm:$0xff] %v1156
        %1431 = vst [vmem:[#allocation2 + $0x1f4] sm:$0xf] %v1157
        %1432 = vst [vmem:[#allocation2 + $0x1f8] sm:$0xff] %v1144
        %1433 = vst [vmem:[#allocation2 + $0x200] sm:$0xff] %v1158
        %1434 = vst [vmem:[#allocation2 + $0x208] sm:$0xff] %v1159
        %1435 = vst [vmem:[#allocation2 + $0x210] sm:$0xff] %v1160
        %1436 = vst [vmem:[#allocation2 + $0x218] sm:$0xf] %v1161
        %1437 = vst [vmem:[#allocation2 + $0x21c] sm:$0xff] %v1148
        %1438 = vst [vmem:[#allocation2 + $0x224] sm:$0xff] %v1162
        %1439 = vst [vmem:[#allocation2 + $0x22c] sm:$0xff] %v1163
        %1440 = vst [vmem:[#allocation2 + $0x234] sm:$0xff] %v1164
        %1441 = vst [vmem:[#allocation2 + $0x23c] sm:$0xf] %v1165
        %1442 = vst [vmem:[#allocation2 + $0x240] sm:$0xff] %v1152
        %1443 = vst [vmem:[#allocation2 + $0x248] sm:$0xff] %v1166
        %1444 = vst [vmem:[#allocation2 + $0x250] sm:$0xff] %v1167
        %1445 = vst [vmem:[#allocation2 + $0x258] sm:$0xff] %v1168
        %1446 = vst [vmem:[#allocation2 + $0x260] sm:$0xf] %v1169
        %1447 = vst [vmem:[#allocation2 + $0x264] sm:$0xff] %v1156
        %1448 = vst [vmem:[#allocation2 + $0x26c] sm:$0xff] %v1170
        %1449 = vst [vmem:[#allocation2 + $0x274] sm:$0xff] %v1171
        %1450 = vst [vmem:[#allocation2 + $0x27c] sm:$0xff] %v1172
        %1451 = vst [vmem:[#allocation2 + $0x284] sm:$0xf] %v1173
        %1452 = vst [vmem:[#allocation2 + $0x288] sm:$0xff] %v1160
        %1453 = vst [vmem:[#allocation2 + $0x290] sm:$0xff] %v1174
        %1454 = vst [vmem:[#allocation2 + $0x298] sm:$0xff] %v1175
        %1455 = vst [vmem:[#allocation2 + $0x2a0] sm:$0xff] %v1176
        %1456 = vst [vmem:[#allocation2 + $0x2a8] sm:$0xf] %v1177
        %1457 = vst [vmem:[#allocation2 + $0x2ac] sm:$0xff] %v1164
        %1458 = vst [vmem:[#allocation2 + $0x2b4] sm:$0xff] %v1178
        %1459 = vst [vmem:[#allocation2 + $0x2bc] sm:$0xff] %v1179
        %1460 = vst [vmem:[#allocation2 + $0x2c4] sm:$0xff] %v1180
        %1461 = vst [vmem:[#allocation2 + $0x2cc] sm:$0xf] %v1181
        %1462 = vst [vmem:[#allocation2 + $0x2d0] sm:$0xff] %v1168
        %1463 = vst [vmem:[#allocation2 + $0x2d8] sm:$0xff] %v1182
        %1464 = vst [vmem:[#allocation2 + $0x2e0] sm:$0xff] %v1183
        %1465 = vst [vmem:[#allocation2 + $0x2e8] sm:$0xff] %v1184
        %1466 = vst [vmem:[#allocation2 + $0x2f0] sm:$0xf] %v1185
        %1467 = vst [vmem:[#allocation2 + $0x2f4] sm:$0xff] %v1172
        %1468 = vst [vmem:[#allocation2 + $0x2fc] sm:$0xff] %v1186
        %1469 = vst [vmem:[#allocation2 + $0x304] sm:$0xff] %v1187
        %1470 = vst [vmem:[#allocation2 + $0x30c] sm:$0xff] %v1188
        %1471 = vst [vmem:[#allocation2 + $0x314] sm:$0xf] %v1189
        %1472 = vst [vmem:[#allocation2 + $0x318] sm:$0xff] %v1176
        %1473 = vst [vmem:[#allocation2 + $0x320] sm:$0xff] %v1190
        %1474 = vst [vmem:[#allocation2 + $0x328] sm:$0xff] %v1191
        %1475 = vst [vmem:[#allocation2 + $0x330] sm:$0xff] %v1192
        %1476 = vst [vmem:[#allocation2 + $0x338] sm:$0xf] %v1193
        %1477 = vst [vmem:[#allocation2 + $0x33c] sm:$0xff] %v1180
        %1478 = vst [vmem:[#allocation2 + $0x344] sm:$0xff] %v1194
        %1479 = vst [vmem:[#allocation2 + $0x34c] sm:$0xff] %v1195
        %1480 = vst [vmem:[#allocation2 + $0x354] sm:$0xff] %v1196
        %1481 = vst [vmem:[#allocation2 + $0x35c] sm:$0xf] %v1197
        %1482 = vst [vmem:[#allocation2 + $0x360] sm:$0xff] %v1184
        %1483 = vst [vmem:[#allocation2 + $0x368] sm:$0xff] %v1198
        %1484 = vst [vmem:[#allocation2 + $0x370] sm:$0xff] %v1199
        %1485 = vst [vmem:[#allocation2 + $0x378] sm:$0xff] %v1200
        %1486 = vst [vmem:[#allocation2 + $0x380] sm:$0xf] %v1201
        %1487 = vst [vmem:[#allocation2 + $0x384] sm:$0xff] %v1188
        %1488 = vst [vmem:[#allocation2 + $0x38c] sm:$0xff] %v1202
        %1489 = vst [vmem:[#allocation2 + $0x394] sm:$0xff] %v1203
        %1490 = vst [vmem:[#allocation2 + $0x39c] sm:$0xff] %v1204
        %1491 = vst [vmem:[#allocation2 + $0x3a4] sm:$0xf] %v1205
        %1492 = vst [vmem:[#allocation2 + $0x3a8] sm:$0xff] %v1192
        %1493 = vst [vmem:[#allocation2 + $0x3b0] sm:$0xff] %v1206
        %1494 = vst [vmem:[#allocation2 + $0x3b8] sm:$0xff] %v1207
        %1495 = vst [vmem:[#allocation2 + $0x3c0] sm:$0xff] %v1208
        %1496 = vst [vmem:[#allocation2 + $0x3c8] sm:$0xf] %v1209
        %1497 = vst [vmem:[#allocation2 + $0x3cc] sm:$0xff] %v1196
        %1498 = vst [vmem:[#allocation2 + $0x3d4] sm:$0xff] %v1210
        %1499 = vst [vmem:[#allocation2 + $0x3dc] sm:$0xff] %v1211
        %1500 = vst [vmem:[#allocation2 + $0x3e4] sm:$0xff] %v1212
        %1501 = vst [vmem:[#allocation2 + $0x3ec] sm:$0xf] %v1213
        %1502 = vst [vmem:[#allocation2 + $0x3f0] sm:$0xff] %v1200
        %1503 = vst [vmem:[#allocation2 + $0x3f8] sm:$0xff] %v1214
        %1504 = vst [vmem:[#allocation2 + $0x400] sm:$0xff] %v1215
        %1505 = vst [vmem:[#allocation2 + $0x408] sm:$0xff] %v1216
        %1506 = vst [vmem:[#allocation2 + $0x410] sm:$0xf] %v1217
        %1507 = vst [vmem:[#allocation2 + $0x414] sm:$0xff] %v1204
        %1508 = vst [vmem:[#allocation2 + $0x41c] sm:$0xff] %v1218
        %1509 = vst [vmem:[#allocation2 + $0x424] sm:$0xff] %v1219
        %1510 = vst [vmem:[#allocation2 + $0x42c] sm:$0xff] %v1220
        %1511 = vst [vmem:[#allocation2 + $0x434] sm:$0xf] %v1221
        %1512 = vst [vmem:[#allocation2 + $0x438] sm:$0xff] %v1208
        %1513 = vst [vmem:[#allocation2 + $0x440] sm:$0xff] %v1222
        %1514 = vst [vmem:[#allocation2 + $0x448] sm:$0xff] %v1223
        %1515 = vst [vmem:[#allocation2 + $0x450] sm:$0xff] %v1224
        %1516 = vst [vmem:[#allocation2 + $0x458] sm:$0xf] %v1225
        %1517 = vst [vmem:[#allocation2 + $0x45c] sm:$0xff] %v1212
        %1518 = vst [vmem:[#allocation2 + $0x464] sm:$0xff] %v1226
        %1519 = vst [vmem:[#allocation2 + $0x46c] sm:$0xff] %v1227
        %1520 = vst [vmem:[#allocation2 + $0x474] sm:$0xff] %v1228
        %1521 = vst [vmem:[#allocation2 + $0x47c] sm:$0xf] %v1229
      $region40: #{_forward_impl.4} parent=35 // pred_fallthru
        _
      %v1522 = vld [vmem:[#allocation2] sm:$0xff]
      %v1523 = vld [vmem:[#allocation2 + $0x8] sm:$0xff]
      %v1524 = vld [vmem:[#allocation2 + $0x10] sm:$0xff]
      %v1525 = vld [vmem:[#allocation2 + $0x18] sm:$0xff]
      %v1526 = vld [vmem:[#allocation2 + $0x20] sm:$0xf]
      %v1527 = vld [vmem:[#allocation2 + $0x24] sm:$0xff]
      %v1528 = vld [vmem:[#allocation2 + $0x2c] sm:$0xff]
      %v1529 = vld [vmem:[#allocation2 + $0x34] sm:$0xff]
      %v1530 = vld [vmem:[#allocation2 + $0x3c] sm:$0xff]
      %v1531 = vld [vmem:[#allocation2 + $0x44] sm:$0xf]
      %v1532 = vld [vmem:[#allocation2 + $0x48] sm:$0xff]
      %v1533 = vld [vmem:[#allocation2 + $0x50] sm:$0xff]
      %v1534 = vld [vmem:[#allocation2 + $0x58] sm:$0xff]
      %v1535 = vld [vmem:[#allocation2 + $0x60] sm:$0xff]
      %v1536 = vld [vmem:[#allocation2 + $0x68] sm:$0xf]
      %v1537 = vld [vmem:[#allocation2 + $0x6c] sm:$0xff]
      %v1538 = vld [vmem:[#allocation2 + $0x74] sm:$0xff]
      %v1539 = vld [vmem:[#allocation2 + $0x7c] sm:$0xff]
      %v1540 = vld [vmem:[#allocation2 + $0x84] sm:$0xff]
      %v1541 = vld [vmem:[#allocation2 + $0x8c] sm:$0xf]
      %v1542 = vld [vmem:[#allocation2 + $0x90] sm:$0xff]
      %v1543 = vld [vmem:[#allocation2 + $0x98] sm:$0xff]
      %v1544 = vld [vmem:[#allocation2 + $0xa0] sm:$0xff]
      %v1545 = vld [vmem:[#allocation2 + $0xa8] sm:$0xff]
      %v1546 = vld [vmem:[#allocation2 + $0xb0] sm:$0xf]
      %v1547 = vld [vmem:[#allocation2 + $0xb4] sm:$0xff]
      %v1548 = vld [vmem:[#allocation2 + $0xbc] sm:$0xff]
      %v1549 = vld [vmem:[#allocation2 + $0xc4] sm:$0xff]
      %v1550 = vld [vmem:[#allocation2 + $0xcc] sm:$0xff]
      %v1551 = vld [vmem:[#allocation2 + $0xd4] sm:$0xf]
      %v1552 = vld [vmem:[#allocation2 + $0xd8] sm:$0xff]
      %v1553 = vld [vmem:[#allocation2 + $0xe0] sm:$0xff]
      %v1554 = vld [vmem:[#allocation2 + $0xe8] sm:$0xff]
      %v1555 = vld [vmem:[#allocation2 + $0xf0] sm:$0xff]
      %v1556 = vld [vmem:[#allocation2 + $0xf8] sm:$0xf]
      %v1557 = vld [vmem:[#allocation2 + $0xfc] sm:$0xff]
      %v1558 = vld [vmem:[#allocation2 + $0x104] sm:$0xff]
      %v1559 = vld [vmem:[#allocation2 + $0x10c] sm:$0xff]
      %v1560 = vld [vmem:[#allocation2 + $0x114] sm:$0xff]
      %v1561 = vld [vmem:[#allocation2 + $0x11c] sm:$0xf]
      %v1562 = vld [vmem:[#allocation2 + $0x120] sm:$0xff]
      %v1563 = vld [vmem:[#allocation2 + $0x128] sm:$0xff]
      %v1564 = vld [vmem:[#allocation2 + $0x130] sm:$0xff]
      %v1565 = vld [vmem:[#allocation2 + $0x138] sm:$0xff]
      %v1566 = vld [vmem:[#allocation2 + $0x140] sm:$0xf]
      %v1567 = vld [vmem:[#allocation2 + $0x144] sm:$0xff]
      %v1568 = vld [vmem:[#allocation2 + $0x14c] sm:$0xff]
      %v1569 = vld [vmem:[#allocation2 + $0x154] sm:$0xff]
      %v1570 = vld [vmem:[#allocation2 + $0x15c] sm:$0xff]
      %v1571 = vld [vmem:[#allocation2 + $0x164] sm:$0xf]
      %v1572 = vld [vmem:[#allocation2 + $0x168] sm:$0xff]
      %v1573 = vld [vmem:[#allocation2 + $0x170] sm:$0xff]
      %v1574 = vld [vmem:[#allocation2 + $0x178] sm:$0xff]
      %v1575 = vld [vmem:[#allocation2 + $0x180] sm:$0xff]
      %v1576 = vld [vmem:[#allocation2 + $0x188] sm:$0xf]
      %v1577 = vld [vmem:[#allocation2 + $0x18c] sm:$0xff]
      %v1578 = vld [vmem:[#allocation2 + $0x194] sm:$0xff]
      %v1579 = vld [vmem:[#allocation2 + $0x19c] sm:$0xff]
      %v1580 = vld [vmem:[#allocation2 + $0x1a4] sm:$0xff]
      %v1581 = vld [vmem:[#allocation2 + $0x1ac] sm:$0xf]
      %v1582 = vld [vmem:[#allocation2 + $0x1b0] sm:$0xff]
      %v1583 = vld [vmem:[#allocation2 + $0x1b8] sm:$0xff]
      %v1584 = vld [vmem:[#allocation2 + $0x1c0] sm:$0xff]
      %v1585 = vld [vmem:[#allocation2 + $0x1c8] sm:$0xff]
      %v1586 = vld [vmem:[#allocation2 + $0x1d0] sm:$0xf]
      %v1587 = vld [vmem:[#allocation2 + $0x1d4] sm:$0xff]
      %v1588 = vld [vmem:[#allocation2 + $0x1dc] sm:$0xff]
      %v1589 = vld [vmem:[#allocation2 + $0x1e4] sm:$0xff]
      %v1590 = vld [vmem:[#allocation2 + $0x1ec] sm:$0xff]
      %v1591 = vld [vmem:[#allocation2 + $0x1f4] sm:$0xf]
      %v1592 = vld [vmem:[#allocation2 + $0x1f8] sm:$0xff]
      %v1593 = vld [vmem:[#allocation2 + $0x200] sm:$0xff]
      %v1594 = vld [vmem:[#allocation2 + $0x208] sm:$0xff]
      %v1595 = vld [vmem:[#allocation2 + $0x210] sm:$0xff]
      %v1596 = vld [vmem:[#allocation2 + $0x218] sm:$0xf]
      %v1597 = vld [vmem:[#allocation2 + $0x21c] sm:$0xff]
      %v1598 = vld [vmem:[#allocation2 + $0x224] sm:$0xff]
      %v1599 = vld [vmem:[#allocation2 + $0x22c] sm:$0xff]
      %v1600 = vld [vmem:[#allocation2 + $0x234] sm:$0xff]
      %v1601 = vld [vmem:[#allocation2 + $0x23c] sm:$0xf]
      %v1602 = vld [vmem:[#allocation2 + $0x240] sm:$0xff]
      %v1603 = vld [vmem:[#allocation2 + $0x248] sm:$0xff]
      %v1604 = vld [vmem:[#allocation2 + $0x250] sm:$0xff]
      %v1605 = vld [vmem:[#allocation2 + $0x258] sm:$0xff]
      %v1606 = vld [vmem:[#allocation2 + $0x260] sm:$0xf]
      %v1607 = vld [vmem:[#allocation2 + $0x264] sm:$0xff]
      %v1608 = vld [vmem:[#allocation2 + $0x26c] sm:$0xff]
      %v1609 = vld [vmem:[#allocation2 + $0x274] sm:$0xff]
      %v1610 = vld [vmem:[#allocation2 + $0x27c] sm:$0xff]
      %v1611 = vld [vmem:[#allocation2 + $0x284] sm:$0xf]
      %v1612 = vld [vmem:[#allocation2 + $0x288] sm:$0xff]
      %v1613 = vld [vmem:[#allocation2 + $0x290] sm:$0xff]
      %v1614 = vld [vmem:[#allocation2 + $0x298] sm:$0xff]
      %v1615 = vld [vmem:[#allocation2 + $0x2a0] sm:$0xff]
      %v1616 = vld [vmem:[#allocation2 + $0x2a8] sm:$0xf]
      %v1617 = vld [vmem:[#allocation2 + $0x2ac] sm:$0xff]
      %v1618 = vld [vmem:[#allocation2 + $0x2b4] sm:$0xff]
      %v1619 = vld [vmem:[#allocation2 + $0x2bc] sm:$0xff]
      %v1620 = vld [vmem:[#allocation2 + $0x2c4] sm:$0xff]
      %v1621 = vld [vmem:[#allocation2 + $0x2cc] sm:$0xf]
      %v1622 = vld [vmem:[#allocation2 + $0x2d0] sm:$0xff]
      %v1623 = vld [vmem:[#allocation2 + $0x2d8] sm:$0xff]
      %v1624 = vld [vmem:[#allocation2 + $0x2e0] sm:$0xff]
      %v1625 = vld [vmem:[#allocation2 + $0x2e8] sm:$0xff]
      %v1626 = vld [vmem:[#allocation2 + $0x2f0] sm:$0xf]
      %v1627 = vld [vmem:[#allocation2 + $0x2f4] sm:$0xff]
      %v1628 = vld [vmem:[#allocation2 + $0x2fc] sm:$0xff]
      %v1629 = vld [vmem:[#allocation2 + $0x304] sm:$0xff]
      %v1630 = vld [vmem:[#allocation2 + $0x30c] sm:$0xff]
      %v1631 = vld [vmem:[#allocation2 + $0x314] sm:$0xf]
      %v1632 = vld [vmem:[#allocation2 + $0x318] sm:$0xff]
      %v1633 = vld [vmem:[#allocation2 + $0x320] sm:$0xff]
      %v1634 = vld [vmem:[#allocation2 + $0x328] sm:$0xff]
      %v1635 = vld [vmem:[#allocation2 + $0x330] sm:$0xff]
      %v1636 = vld [vmem:[#allocation2 + $0x338] sm:$0xf]
      %v1637 = vld [vmem:[#allocation2 + $0x33c] sm:$0xff]
      %v1638 = vld [vmem:[#allocation2 + $0x344] sm:$0xff]
      %v1639 = vld [vmem:[#allocation2 + $0x34c] sm:$0xff]
      %v1640 = vld [vmem:[#allocation2 + $0x354] sm:$0xff]
      %v1641 = vld [vmem:[#allocation2 + $0x35c] sm:$0xf]
      %v1642 = vld [vmem:[#allocation2 + $0x360] sm:$0xff]
      %v1643 = vld [vmem:[#allocation2 + $0x368] sm:$0xff]
      %v1644 = vld [vmem:[#allocation2 + $0x370] sm:$0xff]
      %v1645 = vld [vmem:[#allocation2 + $0x378] sm:$0xff]
      %v1646 = vld [vmem:[#allocation2 + $0x380] sm:$0xf]
      %v1647 = vld [vmem:[#allocation2 + $0x384] sm:$0xff]
      %v1648 = vld [vmem:[#allocation2 + $0x38c] sm:$0xff]
      %v1649 = vld [vmem:[#allocation2 + $0x394] sm:$0xff]
      %v1650 = vld [vmem:[#allocation2 + $0x39c] sm:$0xff]
      %v1651 = vld [vmem:[#allocation2 + $0x3a4] sm:$0xf]
      %v1652 = vld [vmem:[#allocation2 + $0x3a8] sm:$0xff]
      %v1653 = vld [vmem:[#allocation2 + $0x3b0] sm:$0xff]
      %v1654 = vld [vmem:[#allocation2 + $0x3b8] sm:$0xff]
      %v1655 = vld [vmem:[#allocation2 + $0x3c0] sm:$0xff]
      %v1656 = vld [vmem:[#allocation2 + $0x3c8] sm:$0xf]
      %v1657 = vld [vmem:[#allocation2 + $0x3cc] sm:$0xff]
      %v1658 = vld [vmem:[#allocation2 + $0x3d4] sm:$0xff]
      %v1659 = vld [vmem:[#allocation2 + $0x3dc] sm:$0xff]
      %v1660 = vld [vmem:[#allocation2 + $0x3e4] sm:$0xff]
      %v1661 = vld [vmem:[#allocation2 + $0x3ec] sm:$0xf]
      %v1662 = vld [vmem:[#allocation2 + $0x3f0] sm:$0xff]
      %v1663 = vld [vmem:[#allocation2 + $0x3f8] sm:$0xff]
      %v1664 = vld [vmem:[#allocation2 + $0x400] sm:$0xff]
      %v1665 = vld [vmem:[#allocation2 + $0x408] sm:$0xff]
      %v1666 = vld [vmem:[#allocation2 + $0x410] sm:$0xf]
      %v1667 = vld [vmem:[#allocation2 + $0x414] sm:$0xff]
      %v1668 = vld [vmem:[#allocation2 + $0x41c] sm:$0xff]
      %v1669 = vld [vmem:[#allocation2 + $0x424] sm:$0xff]
      %v1670 = vld [vmem:[#allocation2 + $0x42c] sm:$0xff]
      %v1671 = vld [vmem:[#allocation2 + $0x434] sm:$0xf]
      %v1672 = vld [vmem:[#allocation2 + $0x438] sm:$0xff]
      %v1673 = vld [vmem:[#allocation2 + $0x440] sm:$0xff]
      %v1674 = vld [vmem:[#allocation2 + $0x448] sm:$0xff]
      %v1675 = vld [vmem:[#allocation2 + $0x450] sm:$0xff]
      %v1676 = vld [vmem:[#allocation2 + $0x458] sm:$0xf]
      %v1677 = vld [vmem:[#allocation2 + $0x45c] sm:$0xff]
      %v1678 = vld [vmem:[#allocation2 + $0x464] sm:$0xff]
      %v1679 = vld [vmem:[#allocation2 + $0x46c] sm:$0xff]
      %v1680 = vld [vmem:[#allocation2 + $0x474] sm:$0xff]
      %v1681 = vld [vmem:[#allocation2 + $0x47c] sm:$0xf]
      %v1682 = vld [vmem:[%s265] sm:$0xf]
      %v1683 = vld [vmem:[%s265 + $0x4] sm:$0xf]
      %v1684 = vld [vmem:[%s265 + $0x8] sm:$0xf]
      %v1685 = vld [vmem:[%s265 + $0xc] sm:$0xf]
      %v1686 = vld [vmem:[%s265 + $0x10] sm:$0xf]
      %v1687 = vld [vmem:[%s265 + $0x14] sm:$0xf]
      %v1688 = vld [vmem:[%s265 + $0x18] sm:$0xf]
      %v1689 = vld [vmem:[%s265 + $0x1c] sm:$0xf]
      %v1690 = vld [vmem:[%s265 + $0x20] sm:$0xf]
      %v1691 = vld [vmem:[%s265 + $0x24] sm:$0xf]
      %v1692 = vld [vmem:[%s265 + $0x28] sm:$0xf]
      %v1693 = vld [vmem:[%s265 + $0x2c] sm:$0xf]
      %v1694 = vld [vmem:[%s265 + $0x30] sm:$0xf]
      %v1695 = vld [vmem:[%s265 + $0x34] sm:$0xf]
      %v1696 = vld [vmem:[%s265 + $0x38] sm:$0xf]
      %v1697 = vld [vmem:[%s265 + $0x3c] sm:$0xf]
      %v1698 = vld [vmem:[%s265 + $0x40] sm:$0xf]
      %v1699 = vld [vmem:[%s265 + $0x44] sm:$0xf]
      %v1700 = vld [vmem:[%s265 + $0x48] sm:$0xf]
      %v1701 = vld [vmem:[%s265 + $0x4c] sm:$0xf]
      %v1702 = vld [vmem:[%s265 + $0x50] sm:$0xf]
      %v1703 = vld [vmem:[%s265 + $0x54] sm:$0xf]
      %v1704 = vld [vmem:[%s265 + $0x58] sm:$0xf]
      %v1705 = vld [vmem:[%s265 + $0x5c] sm:$0xf]
      %v1706 = vld [vmem:[%s265 + $0x60] sm:$0xf]
      %v1707 = vld [vmem:[%s265 + $0x64] sm:$0xf]
      %v1708 = vld [vmem:[%s265 + $0x68] sm:$0xf]
      %v1709 = vld [vmem:[%s265 + $0x6c] sm:$0xf]
      %v1710 = vld [vmem:[%s265 + $0x70] sm:$0xf]
      %v1711 = vld [vmem:[%s265 + $0x74] sm:$0xf]
      %v1712 = vld [vmem:[%s265 + $0x78] sm:$0xf]
      %v1713 = vld [vmem:[%s265 + $0x7c] sm:$0xf]
      %v1714 = vld [vmem:[%s265 + $0x80] sm:$0xf]
      %v1715 = vld [vmem:[%s265 + $0x84] sm:$0xf]
      %v1716 = vld [vmem:[%s265 + $0x88] sm:$0xf]
      %v1717 = vld [vmem:[%s265 + $0x8c] sm:$0xf]
      %v1718 = vld [vmem:[%s265 + $0x90] sm:$0xf]
      %v1719 = vld [vmem:[%s265 + $0x94] sm:$0xf]
      %v1720 = vld [vmem:[%s265 + $0x98] sm:$0xf]
      %v1721 = vld [vmem:[%s265 + $0x9c] sm:$0xf]
      %v1722 = vld [vmem:[%s265 + $0xa0] sm:$0xf]
      %v1723 = vld [vmem:[%s265 + $0xa4] sm:$0xf]
      %v1724 = vld [vmem:[%s265 + $0xa8] sm:$0xf]
      %v1725 = vld [vmem:[%s265 + $0xac] sm:$0xf]
      %v1726 = vld [vmem:[%s265 + $0xb0] sm:$0xf]
      %v1727 = vld [vmem:[%s265 + $0xb4] sm:$0xf]
      %v1728 = vld [vmem:[%s265 + $0xb8] sm:$0xf]
      %v1729 = vld [vmem:[%s265 + $0xbc] sm:$0xf]
      %v1730 = vld [vmem:[%s265 + $0xc0] sm:$0xf]
      %v1731 = vld [vmem:[%s265 + $0xc4] sm:$0xf]
      %v1732 = vld [vmem:[%s265 + $0xc8] sm:$0xf]
      %v1733 = vld [vmem:[%s265 + $0xcc] sm:$0xf]
      %v1734 = vld [vmem:[%s265 + $0xd0] sm:$0xf]
      %v1735 = vld [vmem:[%s265 + $0xd4] sm:$0xf]
      %v1736 = vld [vmem:[%s265 + $0xd8] sm:$0xf]
      %v1737 = vld [vmem:[%s265 + $0xdc] sm:$0xf]
      %v1738 = vld [vmem:[%s265 + $0xe0] sm:$0xf]
      %v1739 = vld [vmem:[%s265 + $0xe4] sm:$0xf]
      %v1740 = vld [vmem:[%s265 + $0xe8] sm:$0xf]
      %v1741 = vld [vmem:[%s265 + $0xec] sm:$0xf]
      %v1742 = vld [vmem:[%s265 + $0xf0] sm:$0xf]
      %v1743 = vld [vmem:[%s265 + $0xf4] sm:$0xf]
      %v1744 = vld [vmem:[%s265 + $0xf8] sm:$0xf]
      %v1745 = vld [vmem:[%s265 + $0xfc] sm:$0xf]
      %v1746 = vld [vmem:[%s265 + $0x100] sm:$0xf]
      %v1747 = vld [vmem:[%s265 + $0x104] sm:$0xf]
      %v1748 = vld [vmem:[%s265 + $0x108] sm:$0xf]
      %v1749 = vld [vmem:[%s265 + $0x10c] sm:$0xf]
      %v1750 = vld [vmem:[%s265 + $0x110] sm:$0xf]
      %v1751 = vld [vmem:[%s265 + $0x114] sm:$0xf]
      %v1752 = vld [vmem:[%s265 + $0x118] sm:$0xf]
      %v1753 = vld [vmem:[%s265 + $0x11c] sm:$0xf]
      %v1754 = vld [vmem:[%s265 + $0x120] sm:$0xf]
      %v1755 = vld [vmem:[%s265 + $0x124] sm:$0xf]
      %v1756 = vld [vmem:[%s265 + $0x128] sm:$0xf]
      %v1757 = vld [vmem:[%s265 + $0x12c] sm:$0xf]
      %v1758 = vld [vmem:[%s265 + $0x130] sm:$0xf]
      %v1759 = vld [vmem:[%s265 + $0x134] sm:$0xf]
      %v1760 = vld [vmem:[%s265 + $0x138] sm:$0xf]
      %v1761 = vld [vmem:[%s265 + $0x13c] sm:$0xf]
      %v1762 = vld [vmem:[%s265 + $0x140] sm:$0xf]
      %v1763 = vld [vmem:[%s265 + $0x144] sm:$0xf]
      %v1764 = vld [vmem:[%s265 + $0x148] sm:$0xf]
      %v1765 = vld [vmem:[%s265 + $0x14c] sm:$0xf]
      %v1766 = vld [vmem:[%s265 + $0x150] sm:$0xf]
      %v1767 = vld [vmem:[%s265 + $0x154] sm:$0xf]
      %v1768 = vld [vmem:[%s265 + $0x158] sm:$0xf]
      %v1769 = vld [vmem:[%s265 + $0x15c] sm:$0xf]
      %v1770 = vld [vmem:[%s265 + $0x160] sm:$0xf]
      %v1771 = vld [vmem:[%s265 + $0x164] sm:$0xf]
      %v1772 = vld [vmem:[%s265 + $0x168] sm:$0xf]
      %v1773 = vld [vmem:[%s265 + $0x16c] sm:$0xf]
      %v1774 = vld [vmem:[%s265 + $0x170] sm:$0xf]
      %v1775 = vld [vmem:[%s265 + $0x174] sm:$0xf]
      %v1776 = vld [vmem:[%s265 + $0x178] sm:$0xf]
      %v1777 = vld [vmem:[%s265 + $0x17c] sm:$0xf]
      %v1778 = vld [vmem:[%s265 + $0x180] sm:$0xf]
      %v1779 = vld [vmem:[%s265 + $0x184] sm:$0xf]
      %v1780 = vld [vmem:[%s265 + $0x188] sm:$0xf]
      %v1781 = vld [vmem:[%s265 + $0x18c] sm:$0xf]
      %v1782 = vld [vmem:[%s265 + $0x190] sm:$0xf]
      %v1783 = vld [vmem:[%s265 + $0x194] sm:$0xf]
      %v1784 = vld [vmem:[%s265 + $0x198] sm:$0xf]
      %v1785 = vld [vmem:[%s265 + $0x19c] sm:$0xf]
      %v1786 = vld [vmem:[%s265 + $0x1a0] sm:$0xf]
      %v1787 = vld [vmem:[%s265 + $0x1a4] sm:$0xf]
      %v1788 = vld [vmem:[%s265 + $0x1a8] sm:$0xf]
      %v1789 = vld [vmem:[%s265 + $0x1ac] sm:$0xf]
      %v1790 = vld [vmem:[%s265 + $0x1b0] sm:$0xf]
      %v1791 = vld [vmem:[%s265 + $0x1b4] sm:$0xf]
      %v1792 = vld [vmem:[%s265 + $0x1b8] sm:$0xf]
      %v1793 = vld [vmem:[%s265 + $0x1bc] sm:$0xf]
      %v1794 = vld [vmem:[%s265 + $0x1c0] sm:$0xf]
      %v1795 = vld [vmem:[%s265 + $0x1c4] sm:$0xf]
      %v1796 = vld [vmem:[%s265 + $0x1c8] sm:$0xf]
      %v1797 = vld [vmem:[%s265 + $0x1cc] sm:$0xf]
      %v1798 = vld [vmem:[%s265 + $0x1d0] sm:$0xf]
      %v1799 = vld [vmem:[%s265 + $0x1d4] sm:$0xf]
      %v1800 = vld [vmem:[%s265 + $0x1d8] sm:$0xf]
      %v1801 = vld [vmem:[%s265 + $0x1dc] sm:$0xf]
      %v1802 = vld [vmem:[%s265 + $0x1e0] sm:$0xf]
      %v1803 = vld [vmem:[%s265 + $0x1e4] sm:$0xf]
      %v1804 = vld [vmem:[%s265 + $0x1e8] sm:$0xf]
      %v1805 = vld [vmem:[%s265 + $0x1ec] sm:$0xf]
      %v1806 = vld [vmem:[%s265 + $0x1f0] sm:$0xf]
      %v1807 = vld [vmem:[%s265 + $0x1f4] sm:$0xf]
      %v1808 = vld [vmem:[%s265 + $0x1f8] sm:$0xf]
      %v1809 = vld [vmem:[%s265 + $0x1fc] sm:$0xf]
      %v1810 = vld [vmem:[%s265 + $0x200] sm:$0xf]
      %v1811 = vld [vmem:[%s265 + $0x204] sm:$0xf]
      %v1812 = vld [vmem:[%s265 + $0x208] sm:$0xf]
      %v1813 = vld [vmem:[%s265 + $0x20c] sm:$0xf]
      %v1814 = vld [vmem:[%s265 + $0x210] sm:$0xf]
      %v1815 = vld [vmem:[%s265 + $0x214] sm:$0xf]
      %v1816 = vld [vmem:[%s265 + $0x218] sm:$0xf]
      %v1817 = vld [vmem:[%s265 + $0x21c] sm:$0xf]
      %v1818 = vld [vmem:[%s265 + $0x220] sm:$0xf]
      %v1819 = vld [vmem:[%s265 + $0x224] sm:$0xf]
      %v1820 = vld [vmem:[%s265 + $0x228] sm:$0xf]
      %v1821 = vld [vmem:[%s265 + $0x22c] sm:$0xf]
      %v1822 = vld [vmem:[%s265 + $0x230] sm:$0xf]
      %v1823 = vld [vmem:[%s265 + $0x234] sm:$0xf]
      %v1824 = vld [vmem:[%s265 + $0x238] sm:$0xf]
      %v1825 = vld [vmem:[%s265 + $0x23c] sm:$0xf]
      %v1986 = vunpack.c.l.b16 %v1522
      %v1987 = vunpack.c.h.b16 %v1522
      %v1988 = vunpack.c.l.b16 %v1523
      %v1989 = vunpack.c.h.b16 %v1523
      %v1990 = vunpack.c.l.b16 %v1524
      %v1991 = vunpack.c.h.b16 %v1524
      %v1992 = vunpack.c.l.b16 %v1525
      %v1993 = vunpack.c.h.b16 %v1525
      %v1994 = vunpack.c.l.b16 %v1526
      %v1995 = vunpack.c.l.b16 %v1527
      %v1996 = vunpack.c.h.b16 %v1527
      %v1997 = vunpack.c.l.b16 %v1528
      %v1998 = vunpack.c.h.b16 %v1528
      %v1999 = vunpack.c.l.b16 %v1529
      %v2000 = vunpack.c.h.b16 %v1529
      %v2001 = vunpack.c.l.b16 %v1530
      %v2002 = vunpack.c.h.b16 %v1530
      %v2003 = vunpack.c.l.b16 %v1531
      %v2004 = vunpack.c.l.b16 %v1532
      %v2005 = vunpack.c.h.b16 %v1532
      %v2006 = vunpack.c.l.b16 %v1533
      %v2007 = vunpack.c.h.b16 %v1533
      %v2008 = vunpack.c.l.b16 %v1534
      %v2009 = vunpack.c.h.b16 %v1534
      %v2010 = vunpack.c.l.b16 %v1535
      %v2011 = vunpack.c.h.b16 %v1535
      %v2012 = vunpack.c.l.b16 %v1536
      %v2013 = vunpack.c.l.b16 %v1537
      %v2014 = vunpack.c.h.b16 %v1537
      %v2015 = vunpack.c.l.b16 %v1538
      %v2016 = vunpack.c.h.b16 %v1538
      %v2017 = vunpack.c.l.b16 %v1539
      %v2018 = vunpack.c.h.b16 %v1539
      %v2019 = vunpack.c.l.b16 %v1540
      %v2020 = vunpack.c.h.b16 %v1540
      %v2021 = vunpack.c.l.b16 %v1541
      %v2022 = vunpack.c.l.b16 %v1542
      %v2023 = vunpack.c.h.b16 %v1542
      %v2024 = vunpack.c.l.b16 %v1543
      %v2025 = vunpack.c.h.b16 %v1543
      %v2026 = vunpack.c.l.b16 %v1544
      %v2027 = vunpack.c.h.b16 %v1544
      %v2028 = vunpack.c.l.b16 %v1545
      %v2029 = vunpack.c.h.b16 %v1545
      %v2030 = vunpack.c.l.b16 %v1546
      %v2031 = vunpack.c.l.b16 %v1547
      %v2032 = vunpack.c.h.b16 %v1547
      %v2033 = vunpack.c.l.b16 %v1548
      %v2034 = vunpack.c.h.b16 %v1548
      %v2035 = vunpack.c.l.b16 %v1549
      %v2036 = vunpack.c.h.b16 %v1549
      %v2037 = vunpack.c.l.b16 %v1550
      %v2038 = vunpack.c.h.b16 %v1550
      %v2039 = vunpack.c.l.b16 %v1551
      %v2040 = vunpack.c.l.b16 %v1552
      %v2041 = vunpack.c.h.b16 %v1552
      %v2042 = vunpack.c.l.b16 %v1553
      %v2043 = vunpack.c.h.b16 %v1553
      %v2044 = vunpack.c.l.b16 %v1554
      %v2045 = vunpack.c.h.b16 %v1554
      %v2046 = vunpack.c.l.b16 %v1555
      %v2047 = vunpack.c.h.b16 %v1555
      %v2048 = vunpack.c.l.b16 %v1556
      %v2049 = vunpack.c.l.b16 %v1557
      %v2050 = vunpack.c.h.b16 %v1557
      %v2051 = vunpack.c.l.b16 %v1558
      %v2052 = vunpack.c.h.b16 %v1558
      %v2053 = vunpack.c.l.b16 %v1559
      %v2054 = vunpack.c.h.b16 %v1559
      %v2055 = vunpack.c.l.b16 %v1560
      %v2056 = vunpack.c.h.b16 %v1560
      %v2057 = vunpack.c.l.b16 %v1561
      %v2058 = vunpack.c.l.b16 %v1562
      %v2059 = vunpack.c.h.b16 %v1562
      %v2060 = vunpack.c.l.b16 %v1563
      %v2061 = vunpack.c.h.b16 %v1563
      %v2062 = vunpack.c.l.b16 %v1564
      %v2063 = vunpack.c.h.b16 %v1564
      %v2064 = vunpack.c.l.b16 %v1565
      %v2065 = vunpack.c.h.b16 %v1565
      %v2066 = vunpack.c.l.b16 %v1566
      %v2067 = vunpack.c.l.b16 %v1567
      %v2068 = vunpack.c.h.b16 %v1567
      %v2069 = vunpack.c.l.b16 %v1568
      %v2070 = vunpack.c.h.b16 %v1568
      %v2071 = vunpack.c.l.b16 %v1569
      %v2072 = vunpack.c.h.b16 %v1569
      %v2073 = vunpack.c.l.b16 %v1570
      %v2074 = vunpack.c.h.b16 %v1570
      %v2075 = vunpack.c.l.b16 %v1571
      %v2076 = vunpack.c.l.b16 %v1572
      %v2077 = vunpack.c.h.b16 %v1572
      %v2078 = vunpack.c.l.b16 %v1573
      %v2079 = vunpack.c.h.b16 %v1573
      %v2080 = vunpack.c.l.b16 %v1574
      %v2081 = vunpack.c.h.b16 %v1574
      %v2082 = vunpack.c.l.b16 %v1575
      %v2083 = vunpack.c.h.b16 %v1575
      %v2084 = vunpack.c.l.b16 %v1576
      %v2085 = vunpack.c.l.b16 %v1577
      %v2086 = vunpack.c.h.b16 %v1577
      %v2087 = vunpack.c.l.b16 %v1578
      %v2088 = vunpack.c.h.b16 %v1578
      %v2089 = vunpack.c.l.b16 %v1579
      %v2090 = vunpack.c.h.b16 %v1579
      %v2091 = vunpack.c.l.b16 %v1580
      %v2092 = vunpack.c.h.b16 %v1580
      %v2093 = vunpack.c.l.b16 %v1581
      %v2094 = vunpack.c.l.b16 %v1582
      %v2095 = vunpack.c.h.b16 %v1582
      %v2096 = vunpack.c.l.b16 %v1583
      %v2097 = vunpack.c.h.b16 %v1583
      %v2098 = vunpack.c.l.b16 %v1584
      %v2099 = vunpack.c.h.b16 %v1584
      %v2100 = vunpack.c.l.b16 %v1585
      %v2101 = vunpack.c.h.b16 %v1585
      %v2102 = vunpack.c.l.b16 %v1586
      %v2103 = vunpack.c.l.b16 %v1587
      %v2104 = vunpack.c.h.b16 %v1587
      %v2105 = vunpack.c.l.b16 %v1588
      %v2106 = vunpack.c.h.b16 %v1588
      %v2107 = vunpack.c.l.b16 %v1589
      %v2108 = vunpack.c.h.b16 %v1589
      %v2109 = vunpack.c.l.b16 %v1590
      %v2110 = vunpack.c.h.b16 %v1590
      %v2111 = vunpack.c.l.b16 %v1591
      %v2112 = vunpack.c.l.b16 %v1592
      %v2113 = vunpack.c.h.b16 %v1592
      %v2114 = vunpack.c.l.b16 %v1593
      %v2115 = vunpack.c.h.b16 %v1593
      %v2116 = vunpack.c.l.b16 %v1594
      %v2117 = vunpack.c.h.b16 %v1594
      %v2118 = vunpack.c.l.b16 %v1595
      %v2119 = vunpack.c.h.b16 %v1595
      %v2120 = vunpack.c.l.b16 %v1596
      %v2121 = vunpack.c.l.b16 %v1597
      %v2122 = vunpack.c.h.b16 %v1597
      %v2123 = vunpack.c.l.b16 %v1598
      %v2124 = vunpack.c.h.b16 %v1598
      %v2125 = vunpack.c.l.b16 %v1599
      %v2126 = vunpack.c.h.b16 %v1599
      %v2127 = vunpack.c.l.b16 %v1600
      %v2128 = vunpack.c.h.b16 %v1600
      %v2129 = vunpack.c.l.b16 %v1601
      %v2130 = vunpack.c.l.b16 %v1602
      %v2131 = vunpack.c.h.b16 %v1602
      %v2132 = vunpack.c.l.b16 %v1603
      %v2133 = vunpack.c.h.b16 %v1603
      %v2134 = vunpack.c.l.b16 %v1604
      %v2135 = vunpack.c.h.b16 %v1604
      %v2136 = vunpack.c.l.b16 %v1605
      %v2137 = vunpack.c.h.b16 %v1605
      %v2138 = vunpack.c.l.b16 %v1606
      %v2139 = vunpack.c.l.b16 %v1607
      %v2140 = vunpack.c.h.b16 %v1607
      %v2141 = vunpack.c.l.b16 %v1608
      %v2142 = vunpack.c.h.b16 %v1608
      %v2143 = vunpack.c.l.b16 %v1609
      %v2144 = vunpack.c.h.b16 %v1609
      %v2145 = vunpack.c.l.b16 %v1610
      %v2146 = vunpack.c.h.b16 %v1610
      %v2147 = vunpack.c.l.b16 %v1611
      %v2148 = vunpack.c.l.b16 %v1612
      %v2149 = vunpack.c.h.b16 %v1612
      %v2150 = vunpack.c.l.b16 %v1613
      %v2151 = vunpack.c.h.b16 %v1613
      %v2152 = vunpack.c.l.b16 %v1614
      %v2153 = vunpack.c.h.b16 %v1614
      %v2154 = vunpack.c.l.b16 %v1615
      %v2155 = vunpack.c.h.b16 %v1615
      %v2156 = vunpack.c.l.b16 %v1616
      %v2157 = vunpack.c.l.b16 %v1617
      %v2158 = vunpack.c.h.b16 %v1617
      %v2159 = vunpack.c.l.b16 %v1618
      %v2160 = vunpack.c.h.b16 %v1618
      %v2161 = vunpack.c.l.b16 %v1619
      %v2162 = vunpack.c.h.b16 %v1619
      %v2163 = vunpack.c.l.b16 %v1620
      %v2164 = vunpack.c.h.b16 %v1620
      %v2165 = vunpack.c.l.b16 %v1621
      %v2166 = vunpack.c.l.b16 %v1622
      %v2167 = vunpack.c.h.b16 %v1622
      %v2168 = vunpack.c.l.b16 %v1623
      %v2169 = vunpack.c.h.b16 %v1623
      %v2170 = vunpack.c.l.b16 %v1624
      %v2171 = vunpack.c.h.b16 %v1624
      %v2172 = vunpack.c.l.b16 %v1625
      %v2173 = vunpack.c.h.b16 %v1625
      %v2174 = vunpack.c.l.b16 %v1626
      %v2175 = vunpack.c.l.b16 %v1627
      %v2176 = vunpack.c.h.b16 %v1627
      %v2177 = vunpack.c.l.b16 %v1628
      %v2178 = vunpack.c.h.b16 %v1628
      %v2179 = vunpack.c.l.b16 %v1629
      %v2180 = vunpack.c.h.b16 %v1629
      %v2181 = vunpack.c.l.b16 %v1630
      %v2182 = vunpack.c.h.b16 %v1630
      %v2183 = vunpack.c.l.b16 %v1631
      %v2184 = vunpack.c.l.b16 %v1632
      %v2185 = vunpack.c.h.b16 %v1632
      %v2186 = vunpack.c.l.b16 %v1633
      %v2187 = vunpack.c.h.b16 %v1633
      %v2188 = vunpack.c.l.b16 %v1634
      %v2189 = vunpack.c.h.b16 %v1634
      %v2190 = vunpack.c.l.b16 %v1635
      %v2191 = vunpack.c.h.b16 %v1635
      %v2192 = vunpack.c.l.b16 %v1636
      %v2193 = vunpack.c.l.b16 %v1637
      %v2194 = vunpack.c.h.b16 %v1637
      %v2195 = vunpack.c.l.b16 %v1638
      %v2196 = vunpack.c.h.b16 %v1638
      %v2197 = vunpack.c.l.b16 %v1639
      %v2198 = vunpack.c.h.b16 %v1639
      %v2199 = vunpack.c.l.b16 %v1640
      %v2200 = vunpack.c.h.b16 %v1640
      %v2201 = vunpack.c.l.b16 %v1641
      %v2202 = vunpack.c.l.b16 %v1642
      %v2203 = vunpack.c.h.b16 %v1642
      %v2204 = vunpack.c.l.b16 %v1643
      %v2205 = vunpack.c.h.b16 %v1643
      %v2206 = vunpack.c.l.b16 %v1644
      %v2207 = vunpack.c.h.b16 %v1644
      %v2208 = vunpack.c.l.b16 %v1645
      %v2209 = vunpack.c.h.b16 %v1645
      %v2210 = vunpack.c.l.b16 %v1646
      %v2211 = vunpack.c.l.b16 %v1647
      %v2212 = vunpack.c.h.b16 %v1647
      %v2213 = vunpack.c.l.b16 %v1648
      %v2214 = vunpack.c.h.b16 %v1648
      %v2215 = vunpack.c.l.b16 %v1649
      %v2216 = vunpack.c.h.b16 %v1649
      %v2217 = vunpack.c.l.b16 %v1650
      %v2218 = vunpack.c.h.b16 %v1650
      %v2219 = vunpack.c.l.b16 %v1651
      %v2220 = vunpack.c.l.b16 %v1652
      %v2221 = vunpack.c.h.b16 %v1652
      %v2222 = vunpack.c.l.b16 %v1653
      %v2223 = vunpack.c.h.b16 %v1653
      %v2224 = vunpack.c.l.b16 %v1654
      %v2225 = vunpack.c.h.b16 %v1654
      %v2226 = vunpack.c.l.b16 %v1655
      %v2227 = vunpack.c.h.b16 %v1655
      %v2228 = vunpack.c.l.b16 %v1656
      %v2229 = vunpack.c.l.b16 %v1657
      %v2230 = vunpack.c.h.b16 %v1657
      %v2231 = vunpack.c.l.b16 %v1658
      %v2232 = vunpack.c.h.b16 %v1658
      %v2233 = vunpack.c.l.b16 %v1659
      %v2234 = vunpack.c.h.b16 %v1659
      %v2235 = vunpack.c.l.b16 %v1660
      %v2236 = vunpack.c.h.b16 %v1660
      %v2237 = vunpack.c.l.b16 %v1661
      %v2238 = vunpack.c.l.b16 %v1662
      %v2239 = vunpack.c.h.b16 %v1662
      %v2240 = vunpack.c.l.b16 %v1663
      %v2241 = vunpack.c.h.b16 %v1663
      %v2242 = vunpack.c.l.b16 %v1664
      %v2243 = vunpack.c.h.b16 %v1664
      %v2244 = vunpack.c.l.b16 %v1665
      %v2245 = vunpack.c.h.b16 %v1665
      %v2246 = vunpack.c.l.b16 %v1666
      %v2247 = vunpack.c.l.b16 %v1667
      %v2248 = vunpack.c.h.b16 %v1667
      %v2249 = vunpack.c.l.b16 %v1668
      %v2250 = vunpack.c.h.b16 %v1668
      %v2251 = vunpack.c.l.b16 %v1669
      %v2252 = vunpack.c.h.b16 %v1669
      %v2253 = vunpack.c.l.b16 %v1670
      %v2254 = vunpack.c.h.b16 %v1670
      %v2255 = vunpack.c.l.b16 %v1671
      %v2256 = vunpack.c.l.b16 %v1672
      %v2257 = vunpack.c.h.b16 %v1672
      %v2258 = vunpack.c.l.b16 %v1673
      %v2259 = vunpack.c.h.b16 %v1673
      %v2260 = vunpack.c.l.b16 %v1674
      %v2261 = vunpack.c.h.b16 %v1674
      %v2262 = vunpack.c.l.b16 %v1675
      %v2263 = vunpack.c.h.b16 %v1675
      %v2264 = vunpack.c.l.b16 %v1676
      %v2265 = vunpack.c.l.b16 %v1677
      %v2266 = vunpack.c.h.b16 %v1677
      %v2267 = vunpack.c.l.b16 %v1678
      %v2268 = vunpack.c.h.b16 %v1678
      %v2269 = vunpack.c.l.b16 %v1679
      %v2270 = vunpack.c.h.b16 %v1679
      %v2271 = vunpack.c.l.b16 %v1680
      %v2272 = vunpack.c.h.b16 %v1680
      %v2273 = vunpack.c.l.b16 %v1681
      %v2274 = vpack.c.b16 %v1995, %v1986
      %v2275 = vpack.c.b16 %v1996, %v1987
      %v2276 = vpack.c.b16 %v1997, %v1988
      %v2277 = vpack.c.b16 %v1998, %v1989
      %v2278 = vpack.c.b16 %v1999, %v1990
      %v2279 = vpack.c.b16 %v2000, %v1991
      %v2280 = vpack.c.b16 %v2001, %v1992
      %v2281 = vpack.c.b16 %v2002, %v1993
      %v2282 = vpack.c.b16 %v2003, %v1994
      %v2283 = vpack.c.b16 %v2013, %v2004
      %v2284 = vpack.c.b16 %v2014, %v2005
      %v2285 = vpack.c.b16 %v2015, %v2006
      %v2286 = vpack.c.b16 %v2016, %v2007
      %v2287 = vpack.c.b16 %v2017, %v2008
      %v2288 = vpack.c.b16 %v2018, %v2009
      %v2289 = vpack.c.b16 %v2019, %v2010
      %v2290 = vpack.c.b16 %v2020, %v2011
      %v2291 = vpack.c.b16 %v2021, %v2012
      %v2292 = vpack.c.b16 %v2031, %v2022
      %v2293 = vpack.c.b16 %v2032, %v2023
      %v2294 = vpack.c.b16 %v2033, %v2024
      %v2295 = vpack.c.b16 %v2034, %v2025
      %v2296 = vpack.c.b16 %v2035, %v2026
      %v2297 = vpack.c.b16 %v2036, %v2027
      %v2298 = vpack.c.b16 %v2037, %v2028
      %v2299 = vpack.c.b16 %v2038, %v2029
      %v2300 = vpack.c.b16 %v2039, %v2030
      %v2301 = vpack.c.b16 %v2049, %v2040
      %v2302 = vpack.c.b16 %v2050, %v2041
      %v2303 = vpack.c.b16 %v2051, %v2042
      %v2304 = vpack.c.b16 %v2052, %v2043
      %v2305 = vpack.c.b16 %v2053, %v2044
      %v2306 = vpack.c.b16 %v2054, %v2045
      %v2307 = vpack.c.b16 %v2055, %v2046
      %v2308 = vpack.c.b16 %v2056, %v2047
      %v2309 = vpack.c.b16 %v2057, %v2048
      %v2310 = vpack.c.b16 %v2067, %v2058
      %v2311 = vpack.c.b16 %v2068, %v2059
      %v2312 = vpack.c.b16 %v2069, %v2060
      %v2313 = vpack.c.b16 %v2070, %v2061
      %v2314 = vpack.c.b16 %v2071, %v2062
      %v2315 = vpack.c.b16 %v2072, %v2063
      %v2316 = vpack.c.b16 %v2073, %v2064
      %v2317 = vpack.c.b16 %v2074, %v2065
      %v2318 = vpack.c.b16 %v2075, %v2066
      %v2319 = vpack.c.b16 %v2085, %v2076
      %v2320 = vpack.c.b16 %v2086, %v2077
      %v2321 = vpack.c.b16 %v2087, %v2078
      %v2322 = vpack.c.b16 %v2088, %v2079
      %v2323 = vpack.c.b16 %v2089, %v2080
      %v2324 = vpack.c.b16 %v2090, %v2081
      %v2325 = vpack.c.b16 %v2091, %v2082
      %v2326 = vpack.c.b16 %v2092, %v2083
      %v2327 = vpack.c.b16 %v2093, %v2084
      %v2328 = vpack.c.b16 %v2103, %v2094
      %v2329 = vpack.c.b16 %v2104, %v2095
      %v2330 = vpack.c.b16 %v2105, %v2096
      %v2331 = vpack.c.b16 %v2106, %v2097
      %v2332 = vpack.c.b16 %v2107, %v2098
      %v2333 = vpack.c.b16 %v2108, %v2099
      %v2334 = vpack.c.b16 %v2109, %v2100
      %v2335 = vpack.c.b16 %v2110, %v2101
      %v2336 = vpack.c.b16 %v2111, %v2102
      %v2337 = vpack.c.b16 %v2121, %v2112
      %v2338 = vpack.c.b16 %v2122, %v2113
      %v2339 = vpack.c.b16 %v2123, %v2114
      %v2340 = vpack.c.b16 %v2124, %v2115
      %v2341 = vpack.c.b16 %v2125, %v2116
      %v2342 = vpack.c.b16 %v2126, %v2117
      %v2343 = vpack.c.b16 %v2127, %v2118
      %v2344 = vpack.c.b16 %v2128, %v2119
      %v2345 = vpack.c.b16 %v2129, %v2120
      %v2346 = vpack.c.b16 %v2139, %v2130
      %v2347 = vpack.c.b16 %v2140, %v2131
      %v2348 = vpack.c.b16 %v2141, %v2132
      %v2349 = vpack.c.b16 %v2142, %v2133
      %v2350 = vpack.c.b16 %v2143, %v2134
      %v2351 = vpack.c.b16 %v2144, %v2135
      %v2352 = vpack.c.b16 %v2145, %v2136
      %v2353 = vpack.c.b16 %v2146, %v2137
      %v2354 = vpack.c.b16 %v2147, %v2138
      %v2355 = vpack.c.b16 %v2157, %v2148
      %v2356 = vpack.c.b16 %v2158, %v2149
      %v2357 = vpack.c.b16 %v2159, %v2150
      %v2358 = vpack.c.b16 %v2160, %v2151
      %v2359 = vpack.c.b16 %v2161, %v2152
      %v2360 = vpack.c.b16 %v2162, %v2153
      %v2361 = vpack.c.b16 %v2163, %v2154
      %v2362 = vpack.c.b16 %v2164, %v2155
      %v2363 = vpack.c.b16 %v2165, %v2156
      %v2364 = vpack.c.b16 %v2175, %v2166
      %v2365 = vpack.c.b16 %v2176, %v2167
      %v2366 = vpack.c.b16 %v2177, %v2168
      %v2367 = vpack.c.b16 %v2178, %v2169
      %v2368 = vpack.c.b16 %v2179, %v2170
      %v2369 = vpack.c.b16 %v2180, %v2171
      %v2370 = vpack.c.b16 %v2181, %v2172
      %v2371 = vpack.c.b16 %v2182, %v2173
      %v2372 = vpack.c.b16 %v2183, %v2174
      %v2373 = vpack.c.b16 %v2193, %v2184
      %v2374 = vpack.c.b16 %v2194, %v2185
      %v2375 = vpack.c.b16 %v2195, %v2186
      %v2376 = vpack.c.b16 %v2196, %v2187
      %v2377 = vpack.c.b16 %v2197, %v2188
      %v2378 = vpack.c.b16 %v2198, %v2189
      %v2379 = vpack.c.b16 %v2199, %v2190
      %v2380 = vpack.c.b16 %v2200, %v2191
      %v2381 = vpack.c.b16 %v2201, %v2192
      %v2382 = vpack.c.b16 %v2211, %v2202
      %v2383 = vpack.c.b16 %v2212, %v2203
      %v2384 = vpack.c.b16 %v2213, %v2204
      %v2385 = vpack.c.b16 %v2214, %v2205
      %v2386 = vpack.c.b16 %v2215, %v2206
      %v2387 = vpack.c.b16 %v2216, %v2207
      %v2388 = vpack.c.b16 %v2217, %v2208
      %v2389 = vpack.c.b16 %v2218, %v2209
      %v2390 = vpack.c.b16 %v2219, %v2210
      %v2391 = vpack.c.b16 %v2229, %v2220
      %v2392 = vpack.c.b16 %v2230, %v2221
      %v2393 = vpack.c.b16 %v2231, %v2222
      %v2394 = vpack.c.b16 %v2232, %v2223
      %v2395 = vpack.c.b16 %v2233, %v2224
      %v2396 = vpack.c.b16 %v2234, %v2225
      %v2397 = vpack.c.b16 %v2235, %v2226
      %v2398 = vpack.c.b16 %v2236, %v2227
      %v2399 = vpack.c.b16 %v2237, %v2228
      %v2400 = vpack.c.b16 %v2247, %v2238
      %v2401 = vpack.c.b16 %v2248, %v2239
      %v2402 = vpack.c.b16 %v2249, %v2240
      %v2403 = vpack.c.b16 %v2250, %v2241
      %v2404 = vpack.c.b16 %v2251, %v2242
      %v2405 = vpack.c.b16 %v2252, %v2243
      %v2406 = vpack.c.b16 %v2253, %v2244
      %v2407 = vpack.c.b16 %v2254, %v2245
      %v2408 = vpack.c.b16 %v2255, %v2246
      %v2409 = vpack.c.b16 %v2265, %v2256
      %v2410 = vpack.c.b16 %v2266, %v2257
      %v2411 = vpack.c.b16 %v2267, %v2258
      %v2412 = vpack.c.b16 %v2268, %v2259
      %v2413 = vpack.c.b16 %v2269, %v2260
      %v2414 = vpack.c.b16 %v2270, %v2261
      %v2415 = vpack.c.b16 %v2271, %v2262
      %v2416 = vpack.c.b16 %v2272, %v2263
      %v2417 = vpack.c.b16 %v2273, %v2264
      %v2706 = vunpack.c.l.b16 %v1682
      %v2707 = vunpack.c.l.b16 %v1683
      %v2708 = vunpack.c.l.b16 %v1684
      %v2709 = vunpack.c.l.b16 %v1685
      %v2710 = vunpack.c.l.b16 %v1686
      %v2711 = vunpack.c.l.b16 %v1687
      %v2712 = vunpack.c.l.b16 %v1688
      %v2713 = vunpack.c.l.b16 %v1689
      %v2714 = vunpack.c.l.b16 %v1690
      %v2715 = vunpack.c.l.b16 %v1691
      %v2716 = vunpack.c.l.b16 %v1692
      %v2717 = vunpack.c.l.b16 %v1693
      %v2718 = vunpack.c.l.b16 %v1694
      %v2719 = vunpack.c.l.b16 %v1695
      %v2720 = vunpack.c.l.b16 %v1696
      %v2721 = vunpack.c.l.b16 %v1697
      %v2722 = vunpack.c.l.b16 %v1698
      %v2723 = vunpack.c.l.b16 %v1699
      %v2724 = vunpack.c.l.b16 %v1700
      %v2725 = vunpack.c.l.b16 %v1701
      %v2726 = vunpack.c.l.b16 %v1702
      %v2727 = vunpack.c.l.b16 %v1703
      %v2728 = vunpack.c.l.b16 %v1704
      %v2729 = vunpack.c.l.b16 %v1705
      %v2730 = vunpack.c.l.b16 %v1706
      %v2731 = vunpack.c.l.b16 %v1707
      %v2732 = vunpack.c.l.b16 %v1708
      %v2733 = vunpack.c.l.b16 %v1709
      %v2734 = vunpack.c.l.b16 %v1710
      %v2735 = vunpack.c.l.b16 %v1711
      %v2736 = vunpack.c.l.b16 %v1712
      %v2737 = vunpack.c.l.b16 %v1713
      %v2738 = vunpack.c.l.b16 %v1714
      %v2739 = vunpack.c.l.b16 %v1715
      %v2740 = vunpack.c.l.b16 %v1716
      %v2741 = vunpack.c.l.b16 %v1717
      %v2742 = vunpack.c.l.b16 %v1718
      %v2743 = vunpack.c.l.b16 %v1719
      %v2744 = vunpack.c.l.b16 %v1720
      %v2745 = vunpack.c.l.b16 %v1721
      %v2746 = vunpack.c.l.b16 %v1722
      %v2747 = vunpack.c.l.b16 %v1723
      %v2748 = vunpack.c.l.b16 %v1724
      %v2749 = vunpack.c.l.b16 %v1725
      %v2750 = vunpack.c.l.b16 %v1726
      %v2751 = vunpack.c.l.b16 %v1727
      %v2752 = vunpack.c.l.b16 %v1728
      %v2753 = vunpack.c.l.b16 %v1729
      %v2754 = vunpack.c.l.b16 %v1730
      %v2755 = vunpack.c.l.b16 %v1731
      %v2756 = vunpack.c.l.b16 %v1732
      %v2757 = vunpack.c.l.b16 %v1733
      %v2758 = vunpack.c.l.b16 %v1734
      %v2759 = vunpack.c.l.b16 %v1735
      %v2760 = vunpack.c.l.b16 %v1736
      %v2761 = vunpack.c.l.b16 %v1737
      %v2762 = vunpack.c.l.b16 %v1738
      %v2763 = vunpack.c.l.b16 %v1739
      %v2764 = vunpack.c.l.b16 %v1740
      %v2765 = vunpack.c.l.b16 %v1741
      %v2766 = vunpack.c.l.b16 %v1742
      %v2767 = vunpack.c.l.b16 %v1743
      %v2768 = vunpack.c.l.b16 %v1744
      %v2769 = vunpack.c.l.b16 %v1745
      %v2770 = vunpack.c.l.b16 %v1746
      %v2771 = vunpack.c.l.b16 %v1747
      %v2772 = vunpack.c.l.b16 %v1748
      %v2773 = vunpack.c.l.b16 %v1749
      %v2774 = vunpack.c.l.b16 %v1750
      %v2775 = vunpack.c.l.b16 %v1751
      %v2776 = vunpack.c.l.b16 %v1752
      %v2777 = vunpack.c.l.b16 %v1753
      %v2778 = vunpack.c.l.b16 %v1754
      %v2779 = vunpack.c.l.b16 %v1755
      %v2780 = vunpack.c.l.b16 %v1756
      %v2781 = vunpack.c.l.b16 %v1757
      %v2782 = vunpack.c.l.b16 %v1758
      %v2783 = vunpack.c.l.b16 %v1759
      %v2784 = vunpack.c.l.b16 %v1760
      %v2785 = vunpack.c.l.b16 %v1761
      %v2786 = vunpack.c.l.b16 %v1762
      %v2787 = vunpack.c.l.b16 %v1763
      %v2788 = vunpack.c.l.b16 %v1764
      %v2789 = vunpack.c.l.b16 %v1765
      %v2790 = vunpack.c.l.b16 %v1766
      %v2791 = vunpack.c.l.b16 %v1767
      %v2792 = vunpack.c.l.b16 %v1768
      %v2793 = vunpack.c.l.b16 %v1769
      %v2794 = vunpack.c.l.b16 %v1770
      %v2795 = vunpack.c.l.b16 %v1771
      %v2796 = vunpack.c.l.b16 %v1772
      %v2797 = vunpack.c.l.b16 %v1773
      %v2798 = vunpack.c.l.b16 %v1774
      %v2799 = vunpack.c.l.b16 %v1775
      %v2800 = vunpack.c.l.b16 %v1776
      %v2801 = vunpack.c.l.b16 %v1777
      %v2802 = vunpack.c.l.b16 %v1778
      %v2803 = vunpack.c.l.b16 %v1779
      %v2804 = vunpack.c.l.b16 %v1780
      %v2805 = vunpack.c.l.b16 %v1781
      %v2806 = vunpack.c.l.b16 %v1782
      %v2807 = vunpack.c.l.b16 %v1783
      %v2808 = vunpack.c.l.b16 %v1784
      %v2809 = vunpack.c.l.b16 %v1785
      %v2810 = vunpack.c.l.b16 %v1786
      %v2811 = vunpack.c.l.b16 %v1787
      %v2812 = vunpack.c.l.b16 %v1788
      %v2813 = vunpack.c.l.b16 %v1789
      %v2814 = vunpack.c.l.b16 %v1790
      %v2815 = vunpack.c.l.b16 %v1791
      %v2816 = vunpack.c.l.b16 %v1792
      %v2817 = vunpack.c.l.b16 %v1793
      %v2818 = vunpack.c.l.b16 %v1794
      %v2819 = vunpack.c.l.b16 %v1795
      %v2820 = vunpack.c.l.b16 %v1796
      %v2821 = vunpack.c.l.b16 %v1797
      %v2822 = vunpack.c.l.b16 %v1798
      %v2823 = vunpack.c.l.b16 %v1799
      %v2824 = vunpack.c.l.b16 %v1800
      %v2825 = vunpack.c.l.b16 %v1801
      %v2826 = vunpack.c.l.b16 %v1802
      %v2827 = vunpack.c.l.b16 %v1803
      %v2828 = vunpack.c.l.b16 %v1804
      %v2829 = vunpack.c.l.b16 %v1805
      %v2830 = vunpack.c.l.b16 %v1806
      %v2831 = vunpack.c.l.b16 %v1807
      %v2832 = vunpack.c.l.b16 %v1808
      %v2833 = vunpack.c.l.b16 %v1809
      %v2834 = vunpack.c.l.b16 %v1810
      %v2835 = vunpack.c.l.b16 %v1811
      %v2836 = vunpack.c.l.b16 %v1812
      %v2837 = vunpack.c.l.b16 %v1813
      %v2838 = vunpack.c.l.b16 %v1814
      %v2839 = vunpack.c.l.b16 %v1815
      %v2840 = vunpack.c.l.b16 %v1816
      %v2841 = vunpack.c.l.b16 %v1817
      %v2842 = vunpack.c.l.b16 %v1818
      %v2843 = vunpack.c.l.b16 %v1819
      %v2844 = vunpack.c.l.b16 %v1820
      %v2845 = vunpack.c.l.b16 %v1821
      %v2846 = vunpack.c.l.b16 %v1822
      %v2847 = vunpack.c.l.b16 %v1823
      %v2848 = vunpack.c.l.b16 %v1824
      %v2849 = vunpack.c.l.b16 %v1825
      %v2850 = vpack.c.b16 %v2707, %v2706
      %v2851 = vpack.c.b16 %v2709, %v2708
      %v2852 = vpack.c.b16 %v2711, %v2710
      %v2853 = vpack.c.b16 %v2713, %v2712
      %v2854 = vpack.c.b16 %v2715, %v2714
      %v2855 = vpack.c.b16 %v2717, %v2716
      %v2856 = vpack.c.b16 %v2719, %v2718
      %v2857 = vpack.c.b16 %v2721, %v2720
      %v2858 = vpack.c.b16 %v2723, %v2722
      %v2859 = vpack.c.b16 %v2725, %v2724
      %v2860 = vpack.c.b16 %v2727, %v2726
      %v2861 = vpack.c.b16 %v2729, %v2728
      %v2862 = vpack.c.b16 %v2731, %v2730
      %v2863 = vpack.c.b16 %v2733, %v2732
      %v2864 = vpack.c.b16 %v2735, %v2734
      %v2865 = vpack.c.b16 %v2737, %v2736
      %v2866 = vpack.c.b16 %v2739, %v2738
      %v2867 = vpack.c.b16 %v2741, %v2740
      %v2868 = vpack.c.b16 %v2743, %v2742
      %v2869 = vpack.c.b16 %v2745, %v2744
      %v2870 = vpack.c.b16 %v2747, %v2746
      %v2871 = vpack.c.b16 %v2749, %v2748
      %v2872 = vpack.c.b16 %v2751, %v2750
      %v2873 = vpack.c.b16 %v2753, %v2752
      %v2874 = vpack.c.b16 %v2755, %v2754
      %v2875 = vpack.c.b16 %v2757, %v2756
      %v2876 = vpack.c.b16 %v2759, %v2758
      %v2877 = vpack.c.b16 %v2761, %v2760
      %v2878 = vpack.c.b16 %v2763, %v2762
      %v2879 = vpack.c.b16 %v2765, %v2764
      %v2880 = vpack.c.b16 %v2767, %v2766
      %v2881 = vpack.c.b16 %v2769, %v2768
      %v2882 = vpack.c.b16 %v2771, %v2770
      %v2883 = vpack.c.b16 %v2773, %v2772
      %v2884 = vpack.c.b16 %v2775, %v2774
      %v2885 = vpack.c.b16 %v2777, %v2776
      %v2886 = vpack.c.b16 %v2779, %v2778
      %v2887 = vpack.c.b16 %v2781, %v2780
      %v2888 = vpack.c.b16 %v2783, %v2782
      %v2889 = vpack.c.b16 %v2785, %v2784
      %v2890 = vpack.c.b16 %v2787, %v2786
      %v2891 = vpack.c.b16 %v2789, %v2788
      %v2892 = vpack.c.b16 %v2791, %v2790
      %v2893 = vpack.c.b16 %v2793, %v2792
      %v2894 = vpack.c.b16 %v2795, %v2794
      %v2895 = vpack.c.b16 %v2797, %v2796
      %v2896 = vpack.c.b16 %v2799, %v2798
      %v2897 = vpack.c.b16 %v2801, %v2800
      %v2898 = vpack.c.b16 %v2803, %v2802
      %v2899 = vpack.c.b16 %v2805, %v2804
      %v2900 = vpack.c.b16 %v2807, %v2806
      %v2901 = vpack.c.b16 %v2809, %v2808
      %v2902 = vpack.c.b16 %v2811, %v2810
      %v2903 = vpack.c.b16 %v2813, %v2812
      %v2904 = vpack.c.b16 %v2815, %v2814
      %v2905 = vpack.c.b16 %v2817, %v2816
      %v2906 = vpack.c.b16 %v2819, %v2818
      %v2907 = vpack.c.b16 %v2821, %v2820
      %v2908 = vpack.c.b16 %v2823, %v2822
      %v2909 = vpack.c.b16 %v2825, %v2824
      %v2910 = vpack.c.b16 %v2827, %v2826
      %v2911 = vpack.c.b16 %v2829, %v2828
      %v2912 = vpack.c.b16 %v2831, %v2830
      %v2913 = vpack.c.b16 %v2833, %v2832
      %v2914 = vpack.c.b16 %v2835, %v2834
      %v2915 = vpack.c.b16 %v2837, %v2836
      %v2916 = vpack.c.b16 %v2839, %v2838
      %v2917 = vpack.c.b16 %v2841, %v2840
      %v2918 = vpack.c.b16 %v2843, %v2842
      %v2919 = vpack.c.b16 %v2845, %v2844
      %v2920 = vpack.c.b16 %v2847, %v2846
      %v2921 = vpack.c.b16 %v2849, %v2848
      %2994 = vmatprep.subr.bf16.mxu0 0
      %2995 = vmatpush1.bf16.msra.mxu0 %v2857
      %2996 = vmatprep.subr.bf16.mxu0 0
      %2997 = vmatpush1.bf16.msra.mxu0 %v2856
      %2998 = vmatprep.subr.bf16.mxu0 0
      %2999 = vmatpush1.bf16.msra.mxu0 %v2855
      %3000 = vmatprep.subr.bf16.mxu0 0
      %3001 = vmatpush1.bf16.msra.mxu0 %v2854
      %3002 = vmatprep.subr.bf16.mxu0 0
      %3003 = vmatpush1.bf16.msra.mxu0 %v2853
      %3004 = vmatprep.subr.bf16.mxu0 0
      %3005 = vmatpush1.bf16.msra.mxu0 %v2852
      %3006 = vmatprep.subr.bf16.mxu0 0
      %3007 = vmatpush1.bf16.msra.mxu0 %v2851
      %3008 = vmatprep.subr.bf16.mxu0 0
      %3009 = vmatpush1.bf16.msra.mxu0 %v2850
      %3010 = vmatprep.subr.bf16.mxu0 0
      %3011 = vmatpush2.bf16.msra.mxu0 %v2865
      %3012 = vmatprep.subr.bf16.mxu0 0
      %3013 = vmatpush2.bf16.msra.mxu0 %v2864
      %3014 = vmatprep.subr.bf16.mxu0 0
      %3015 = vmatpush2.bf16.msra.mxu0 %v2863
      %3016 = vmatprep.subr.bf16.mxu0 0
      %3017 = vmatpush2.bf16.msra.mxu0 %v2862
      %3018 = vmatprep.subr.bf16.mxu0 0
      %3019 = vmatpush2.bf16.msra.mxu0 %v2861
      %3020 = vmatprep.subr.bf16.mxu0 0
      %3021 = vmatpush2.bf16.msra.mxu0 %v2860
      %3022 = vmatprep.subr.bf16.mxu0 0
      %3023 = vmatpush2.bf16.msra.mxu0 %v2859
      %3024 = vmatprep.subr.bf16.mxu0 0
      %3025 = vmatpush2.bf16.msra.mxu0 %v2858
      %3026 = vmatprep.mubr.bf16.mxu0 %v2275
      %3027 = vmatmul.mubr.bf16.gmra.mxu0 %v2274
      %v3028 = vpop.f32.mrf.mxu0
      %v3029 = vadd.f32 0.0, %v3028
      %v3030 = vpop.f32.mrf.mxu0
      %v3031 = vpop.f32.mrf.mxu0
      %v3032 = vadd.f32 0.0, %v3031
      %v3033 = vpop.f32.mrf.mxu0
      %3034 = vmatprep.mubr.bf16.mxu0 %v2284
      %3035 = vmatmul.mubr.bf16.gmra.mxu0 %v2283
      %v3036 = vpop.f32.mrf.mxu0
      %v3037 = vadd.f32 0.0, %v3036
      %v3038 = vpop.f32.mrf.mxu0
      %v3039 = vpop.f32.mrf.mxu0
      %v3040 = vadd.f32 0.0, %v3039
      %v3041 = vpop.f32.mrf.mxu0
      %3042 = vmatprep.mubr.bf16.mxu0 %v2293
      %3043 = vmatmul.mubr.bf16.gmra.mxu0 %v2292
      %v3044 = vpop.f32.mrf.mxu0
      %v3045 = vadd.f32 0.0, %v3044
      %v3046 = vpop.f32.mrf.mxu0
      %v3047 = vpop.f32.mrf.mxu0
      %v3048 = vadd.f32 0.0, %v3047
      %v3049 = vpop.f32.mrf.mxu0
      %3050 = vmatprep.mubr.bf16.mxu0 %v2302
      %3051 = vmatmul.mubr.bf16.gmra.mxu0 %v2301
      %v3052 = vpop.f32.mrf.mxu0
      %v3053 = vadd.f32 0.0, %v3052
      %v3054 = vpop.f32.mrf.mxu0
      %v3055 = vpop.f32.mrf.mxu0
      %v3056 = vadd.f32 0.0, %v3055
      %v3057 = vpop.f32.mrf.mxu0
      %3058 = vmatprep.mubr.bf16.mxu0 %v2311
      %3059 = vmatmul.mubr.bf16.gmra.mxu0 %v2310
      %v3060 = vpop.f32.mrf.mxu0
      %v3061 = vadd.f32 0.0, %v3060
      %v3062 = vpop.f32.mrf.mxu0
      %v3063 = vpop.f32.mrf.mxu0
      %v3064 = vadd.f32 0.0, %v3063
      %v3065 = vpop.f32.mrf.mxu0
      %3066 = vmatprep.mubr.bf16.mxu0 %v2320
      %3067 = vmatmul.mubr.bf16.gmra.mxu0 %v2319
      %v3068 = vpop.f32.mrf.mxu0
      %v3069 = vadd.f32 0.0, %v3068
      %v3070 = vpop.f32.mrf.mxu0
      %v3071 = vpop.f32.mrf.mxu0
      %v3072 = vadd.f32 0.0, %v3071
      %v3073 = vpop.f32.mrf.mxu0
      %3074 = vmatprep.mubr.bf16.mxu0 %v2329
      %3075 = vmatmul.mubr.bf16.gmra.mxu0 %v2328
      %v3076 = vpop.f32.mrf.mxu0
      %v3077 = vadd.f32 0.0, %v3076
      %v3078 = vpop.f32.mrf.mxu0
      %v3079 = vpop.f32.mrf.mxu0
      %v3080 = vadd.f32 0.0, %v3079
      %v3081 = vpop.f32.mrf.mxu0
      %3082 = vmatprep.mubr.bf16.mxu0 %v2338
      %3083 = vmatmul.mubr.bf16.gmra.mxu0 %v2337
      %v3084 = vpop.f32.mrf.mxu0
      %v3085 = vadd.f32 0.0, %v3084
      %v3086 = vpop.f32.mrf.mxu0
      %v3087 = vpop.f32.mrf.mxu0
      %v3088 = vadd.f32 0.0, %v3087
      %v3089 = vpop.f32.mrf.mxu0
      %3090 = vmatprep.mubr.bf16.mxu0 %v2347
      %3091 = vmatmul.mubr.bf16.gmra.mxu0 %v2346
      %v3092 = vpop.f32.mrf.mxu0
      %v3093 = vadd.f32 0.0, %v3092
      %v3094 = vpop.f32.mrf.mxu0
      %v3095 = vpop.f32.mrf.mxu0
      %v3096 = vadd.f32 0.0, %v3095
      %v3097 = vpop.f32.mrf.mxu0
      %3098 = vmatprep.mubr.bf16.mxu0 %v2356
      %3099 = vmatmul.mubr.bf16.gmra.mxu0 %v2355
      %v3100 = vpop.f32.mrf.mxu0
      %v3101 = vadd.f32 0.0, %v3100
      %v3102 = vpop.f32.mrf.mxu0
      %v3103 = vpop.f32.mrf.mxu0
      %v3104 = vadd.f32 0.0, %v3103
      %v3105 = vpop.f32.mrf.mxu0
      %3106 = vmatprep.mubr.bf16.mxu0 %v2365
      %3107 = vmatmul.mubr.bf16.gmra.mxu0 %v2364
      %v3108 = vpop.f32.mrf.mxu0
      %v3109 = vadd.f32 0.0, %v3108
      %v3110 = vpop.f32.mrf.mxu0
      %v3111 = vpop.f32.mrf.mxu0
      %v3112 = vadd.f32 0.0, %v3111
      %v3113 = vpop.f32.mrf.mxu0
      %3114 = vmatprep.mubr.bf16.mxu0 %v2374
      %3115 = vmatmul.mubr.bf16.gmra.mxu0 %v2373
      %v3116 = vpop.f32.mrf.mxu0
      %v3117 = vadd.f32 0.0, %v3116
      %v3118 = vpop.f32.mrf.mxu0
      %v3119 = vpop.f32.mrf.mxu0
      %v3120 = vadd.f32 0.0, %v3119
      %v3121 = vpop.f32.mrf.mxu0
      %3122 = vmatprep.mubr.bf16.mxu0 %v2383
      %3123 = vmatmul.mubr.bf16.gmra.mxu0 %v2382
      %v3124 = vpop.f32.mrf.mxu0
      %v3125 = vadd.f32 0.0, %v3124
      %v3126 = vpop.f32.mrf.mxu0
      %v3127 = vpop.f32.mrf.mxu0
      %v3128 = vadd.f32 0.0, %v3127
      %v3129 = vpop.f32.mrf.mxu0
      %3130 = vmatprep.mubr.bf16.mxu0 %v2392
      %3131 = vmatmul.mubr.bf16.gmra.mxu0 %v2391
      %v3132 = vpop.f32.mrf.mxu0
      %v3133 = vadd.f32 0.0, %v3132
      %v3134 = vpop.f32.mrf.mxu0
      %v3135 = vpop.f32.mrf.mxu0
      %v3136 = vadd.f32 0.0, %v3135
      %v3137 = vpop.f32.mrf.mxu0
      %3138 = vmatprep.mubr.bf16.mxu0 %v2401
      %3139 = vmatmul.mubr.bf16.gmra.mxu0 %v2400
      %v3140 = vpop.f32.mrf.mxu0
      %v3141 = vadd.f32 0.0, %v3140
      %v3142 = vpop.f32.mrf.mxu0
      %v3143 = vpop.f32.mrf.mxu0
      %v3144 = vadd.f32 0.0, %v3143
      %v3145 = vpop.f32.mrf.mxu0
      %3146 = vmatprep.mubr.bf16.mxu0 %v2410
      %3147 = vmatmul.mubr.bf16.gmra.mxu0 %v2409
      %v3148 = vpop.f32.mrf.mxu0
      %v3149 = vadd.f32 0.0, %v3148
      %v3150 = vpop.f32.mrf.mxu0
      %v3151 = vpop.f32.mrf.mxu0
      %v3152 = vadd.f32 0.0, %v3151
      %v3153 = vpop.f32.mrf.mxu0
      %3154 = vdwg.mxu0
      %3155 = vmatprep.subr.bf16.mxu0 0
      %3156 = vmatpush1.bf16.msra.mxu0 %v2873
      %3157 = vmatprep.subr.bf16.mxu0 0
      %3158 = vmatpush1.bf16.msra.mxu0 %v2872
      %3159 = vmatprep.subr.bf16.mxu0 0
      %3160 = vmatpush1.bf16.msra.mxu0 %v2871
      %3161 = vmatprep.subr.bf16.mxu0 0
      %3162 = vmatpush1.bf16.msra.mxu0 %v2870
      %3163 = vmatprep.subr.bf16.mxu0 0
      %3164 = vmatpush1.bf16.msra.mxu0 %v2869
      %3165 = vmatprep.subr.bf16.mxu0 0
      %3166 = vmatpush1.bf16.msra.mxu0 %v2868
      %3167 = vmatprep.subr.bf16.mxu0 0
      %3168 = vmatpush1.bf16.msra.mxu0 %v2867
      %3169 = vmatprep.subr.bf16.mxu0 0
      %3170 = vmatpush1.bf16.msra.mxu0 %v2866
      %3171 = vmatprep.subr.bf16.mxu0 0
      %3172 = vmatpush2.bf16.msra.mxu0 %v2881
      %3173 = vmatprep.subr.bf16.mxu0 0
      %3174 = vmatpush2.bf16.msra.mxu0 %v2880
      %3175 = vmatprep.subr.bf16.mxu0 0
      %3176 = vmatpush2.bf16.msra.mxu0 %v2879
      %3177 = vmatprep.subr.bf16.mxu0 0
      %3178 = vmatpush2.bf16.msra.mxu0 %v2878
      %3179 = vmatprep.subr.bf16.mxu0 0
      %3180 = vmatpush2.bf16.msra.mxu0 %v2877
      %3181 = vmatprep.subr.bf16.mxu0 0
      %3182 = vmatpush2.bf16.msra.mxu0 %v2876
      %3183 = vmatprep.subr.bf16.mxu0 0
      %3184 = vmatpush2.bf16.msra.mxu0 %v2875
      %3185 = vmatprep.subr.bf16.mxu0 0
      %3186 = vmatpush2.bf16.msra.mxu0 %v2874
      %3187 = vmatprep.mubr.bf16.mxu0 %v2277
      %3188 = vmatmul.mubr.bf16.gmra.mxu0 %v2276
      %v3189 = vpop.f32.mrf.mxu0
      %v3190 = vadd.f32 %v3029, %v3189
      %v3191 = vpop.f32.mrf.mxu0
      %v3192 = vpop.f32.mrf.mxu0
      %v3193 = vadd.f32 %v3032, %v3192
      %v3194 = vpop.f32.mrf.mxu0
      %3195 = vmatprep.mubr.bf16.mxu0 %v2286
      %3196 = vmatmul.mubr.bf16.gmra.mxu0 %v2285
      %v3197 = vpop.f32.mrf.mxu0
      %v3198 = vadd.f32 %v3037, %v3197
      %v3199 = vpop.f32.mrf.mxu0
      %v3200 = vpop.f32.mrf.mxu0
      %v3201 = vadd.f32 %v3040, %v3200
      %v3202 = vpop.f32.mrf.mxu0
      %3203 = vmatprep.mubr.bf16.mxu0 %v2295
      %3204 = vmatmul.mubr.bf16.gmra.mxu0 %v2294
      %v3205 = vpop.f32.mrf.mxu0
      %v3206 = vadd.f32 %v3045, %v3205
      %v3207 = vpop.f32.mrf.mxu0
      %v3208 = vpop.f32.mrf.mxu0
      %v3209 = vadd.f32 %v3048, %v3208
      %v3210 = vpop.f32.mrf.mxu0
      %3211 = vmatprep.mubr.bf16.mxu0 %v2304
      %3212 = vmatmul.mubr.bf16.gmra.mxu0 %v2303
      %v3213 = vpop.f32.mrf.mxu0
      %v3214 = vadd.f32 %v3053, %v3213
      %v3215 = vpop.f32.mrf.mxu0
      %v3216 = vpop.f32.mrf.mxu0
      %v3217 = vadd.f32 %v3056, %v3216
      %v3218 = vpop.f32.mrf.mxu0
      %3219 = vmatprep.mubr.bf16.mxu0 %v2313
      %3220 = vmatmul.mubr.bf16.gmra.mxu0 %v2312
      %v3221 = vpop.f32.mrf.mxu0
      %v3222 = vadd.f32 %v3061, %v3221
      %v3223 = vpop.f32.mrf.mxu0
      %v3224 = vpop.f32.mrf.mxu0
      %v3225 = vadd.f32 %v3064, %v3224
      %v3226 = vpop.f32.mrf.mxu0
      %3227 = vmatprep.mubr.bf16.mxu0 %v2322
      %3228 = vmatmul.mubr.bf16.gmra.mxu0 %v2321
      %v3229 = vpop.f32.mrf.mxu0
      %v3230 = vadd.f32 %v3069, %v3229
      %v3231 = vpop.f32.mrf.mxu0
      %v3232 = vpop.f32.mrf.mxu0
      %v3233 = vadd.f32 %v3072, %v3232
      %v3234 = vpop.f32.mrf.mxu0
      %3235 = vmatprep.mubr.bf16.mxu0 %v2331
      %3236 = vmatmul.mubr.bf16.gmra.mxu0 %v2330
      %v3237 = vpop.f32.mrf.mxu0
      %v3238 = vadd.f32 %v3077, %v3237
      %v3239 = vpop.f32.mrf.mxu0
      %v3240 = vpop.f32.mrf.mxu0
      %v3241 = vadd.f32 %v3080, %v3240
      %v3242 = vpop.f32.mrf.mxu0
      %3243 = vmatprep.mubr.bf16.mxu0 %v2340
      %3244 = vmatmul.mubr.bf16.gmra.mxu0 %v2339
      %v3245 = vpop.f32.mrf.mxu0
      %v3246 = vadd.f32 %v3085, %v3245
      %v3247 = vpop.f32.mrf.mxu0
      %v3248 = vpop.f32.mrf.mxu0
      %v3249 = vadd.f32 %v3088, %v3248
      %v3250 = vpop.f32.mrf.mxu0
      %3251 = vmatprep.mubr.bf16.mxu0 %v2349
      %3252 = vmatmul.mubr.bf16.gmra.mxu0 %v2348
      %v3253 = vpop.f32.mrf.mxu0
      %v3254 = vadd.f32 %v3093, %v3253
      %v3255 = vpop.f32.mrf.mxu0
      %v3256 = vpop.f32.mrf.mxu0
      %v3257 = vadd.f32 %v3096, %v3256
      %v3258 = vpop.f32.mrf.mxu0
      %3259 = vmatprep.mubr.bf16.mxu0 %v2358
      %3260 = vmatmul.mubr.bf16.gmra.mxu0 %v2357
      %v3261 = vpop.f32.mrf.mxu0
      %v3262 = vadd.f32 %v3101, %v3261
      %v3263 = vpop.f32.mrf.mxu0
      %v3264 = vpop.f32.mrf.mxu0
      %v3265 = vadd.f32 %v3104, %v3264
      %v3266 = vpop.f32.mrf.mxu0
      %3267 = vmatprep.mubr.bf16.mxu0 %v2367
      %3268 = vmatmul.mubr.bf16.gmra.mxu0 %v2366
      %v3269 = vpop.f32.mrf.mxu0
      %v3270 = vadd.f32 %v3109, %v3269
      %v3271 = vpop.f32.mrf.mxu0
      %v3272 = vpop.f32.mrf.mxu0
      %v3273 = vadd.f32 %v3112, %v3272
      %v3274 = vpop.f32.mrf.mxu0
      %3275 = vmatprep.mubr.bf16.mxu0 %v2376
      %3276 = vmatmul.mubr.bf16.gmra.mxu0 %v2375
      %v3277 = vpop.f32.mrf.mxu0
      %v3278 = vadd.f32 %v3117, %v3277
      %v3279 = vpop.f32.mrf.mxu0
      %v3280 = vpop.f32.mrf.mxu0
      %v3281 = vadd.f32 %v3120, %v3280
      %v3282 = vpop.f32.mrf.mxu0
      %3283 = vmatprep.mubr.bf16.mxu0 %v2385
      %3284 = vmatmul.mubr.bf16.gmra.mxu0 %v2384
      %v3285 = vpop.f32.mrf.mxu0
      %v3286 = vadd.f32 %v3125, %v3285
      %v3287 = vpop.f32.mrf.mxu0
      %v3288 = vpop.f32.mrf.mxu0
      %v3289 = vadd.f32 %v3128, %v3288
      %v3290 = vpop.f32.mrf.mxu0
      %3291 = vmatprep.mubr.bf16.mxu0 %v2394
      %3292 = vmatmul.mubr.bf16.gmra.mxu0 %v2393
      %v3293 = vpop.f32.mrf.mxu0
      %v3294 = vadd.f32 %v3133, %v3293
      %v3295 = vpop.f32.mrf.mxu0
      %v3296 = vpop.f32.mrf.mxu0
      %v3297 = vadd.f32 %v3136, %v3296
      %v3298 = vpop.f32.mrf.mxu0
      %3299 = vmatprep.mubr.bf16.mxu0 %v2403
      %3300 = vmatmul.mubr.bf16.gmra.mxu0 %v2402
      %v3301 = vpop.f32.mrf.mxu0
      %v3302 = vadd.f32 %v3141, %v3301
      %v3303 = vpop.f32.mrf.mxu0
      %v3304 = vpop.f32.mrf.mxu0
      %v3305 = vadd.f32 %v3144, %v3304
      %v3306 = vpop.f32.mrf.mxu0
      %3307 = vmatprep.mubr.bf16.mxu0 %v2412
      %3308 = vmatmul.mubr.bf16.gmra.mxu0 %v2411
      %v3309 = vpop.f32.mrf.mxu0
      %v3310 = vadd.f32 %v3149, %v3309
      %v3311 = vpop.f32.mrf.mxu0
      %v3312 = vpop.f32.mrf.mxu0
      %v3313 = vadd.f32 %v3152, %v3312
      %v3314 = vpop.f32.mrf.mxu0
      %3315 = vdwg.mxu0
      %3316 = vmatprep.subr.bf16.mxu0 0
      %3317 = vmatpush1.bf16.msra.mxu0 %v2889
      %3318 = vmatprep.subr.bf16.mxu0 0
      %3319 = vmatpush1.bf16.msra.mxu0 %v2888
      %3320 = vmatprep.subr.bf16.mxu0 0
      %3321 = vmatpush1.bf16.msra.mxu0 %v2887
      %3322 = vmatprep.subr.bf16.mxu0 0
      %3323 = vmatpush1.bf16.msra.mxu0 %v2886
      %3324 = vmatprep.subr.bf16.mxu0 0
      %3325 = vmatpush1.bf16.msra.mxu0 %v2885
      %3326 = vmatprep.subr.bf16.mxu0 0
      %3327 = vmatpush1.bf16.msra.mxu0 %v2884
      %3328 = vmatprep.subr.bf16.mxu0 0
      %3329 = vmatpush1.bf16.msra.mxu0 %v2883
      %3330 = vmatprep.subr.bf16.mxu0 0
      %3331 = vmatpush1.bf16.msra.mxu0 %v2882
      %3332 = vmatprep.subr.bf16.mxu0 0
      %3333 = vmatpush2.bf16.msra.mxu0 %v2897
      %3334 = vmatprep.subr.bf16.mxu0 0
      %3335 = vmatpush2.bf16.msra.mxu0 %v2896
      %3336 = vmatprep.subr.bf16.mxu0 0
      %3337 = vmatpush2.bf16.msra.mxu0 %v2895
      %3338 = vmatprep.subr.bf16.mxu0 0
      %3339 = vmatpush2.bf16.msra.mxu0 %v2894
      %3340 = vmatprep.subr.bf16.mxu0 0
      %3341 = vmatpush2.bf16.msra.mxu0 %v2893
      %3342 = vmatprep.subr.bf16.mxu0 0
      %3343 = vmatpush2.bf16.msra.mxu0 %v2892
      %3344 = vmatprep.subr.bf16.mxu0 0
      %3345 = vmatpush2.bf16.msra.mxu0 %v2891
      %3346 = vmatprep.subr.bf16.mxu0 0
      %3347 = vmatpush2.bf16.msra.mxu0 %v2890
      %3348 = vmatprep.mubr.bf16.mxu0 %v2279
      %3349 = vmatmul.mubr.bf16.gmra.mxu0 %v2278
      %v3350 = vpop.f32.mrf.mxu0
      %v3351 = vadd.f32 %v3190, %v3350
      %v3352 = vpop.f32.mrf.mxu0
      %v3353 = vpop.f32.mrf.mxu0
      %v3354 = vadd.f32 %v3193, %v3353
      %v3355 = vpop.f32.mrf.mxu0
      %3356 = vmatprep.mubr.bf16.mxu0 %v2288
      %3357 = vmatmul.mubr.bf16.gmra.mxu0 %v2287
      %v3358 = vpop.f32.mrf.mxu0
      %v3359 = vadd.f32 %v3198, %v3358
      %v3360 = vpop.f32.mrf.mxu0
      %v3361 = vpop.f32.mrf.mxu0
      %v3362 = vadd.f32 %v3201, %v3361
      %v3363 = vpop.f32.mrf.mxu0
      %3364 = vmatprep.mubr.bf16.mxu0 %v2297
      %3365 = vmatmul.mubr.bf16.gmra.mxu0 %v2296
      %v3366 = vpop.f32.mrf.mxu0
      %v3367 = vadd.f32 %v3206, %v3366
      %v3368 = vpop.f32.mrf.mxu0
      %v3369 = vpop.f32.mrf.mxu0
      %v3370 = vadd.f32 %v3209, %v3369
      %v3371 = vpop.f32.mrf.mxu0
      %3372 = vmatprep.mubr.bf16.mxu0 %v2306
      %3373 = vmatmul.mubr.bf16.gmra.mxu0 %v2305
      %v3374 = vpop.f32.mrf.mxu0
      %v3375 = vadd.f32 %v3214, %v3374
      %v3376 = vpop.f32.mrf.mxu0
      %v3377 = vpop.f32.mrf.mxu0
      %v3378 = vadd.f32 %v3217, %v3377
      %v3379 = vpop.f32.mrf.mxu0
      %3380 = vmatprep.mubr.bf16.mxu0 %v2315
      %3381 = vmatmul.mubr.bf16.gmra.mxu0 %v2314
      %v3382 = vpop.f32.mrf.mxu0
      %v3383 = vadd.f32 %v3222, %v3382
      %v3384 = vpop.f32.mrf.mxu0
      %v3385 = vpop.f32.mrf.mxu0
      %v3386 = vadd.f32 %v3225, %v3385
      %v3387 = vpop.f32.mrf.mxu0
      %3388 = vmatprep.mubr.bf16.mxu0 %v2324
      %3389 = vmatmul.mubr.bf16.gmra.mxu0 %v2323
      %v3390 = vpop.f32.mrf.mxu0
      %v3391 = vadd.f32 %v3230, %v3390
      %v3392 = vpop.f32.mrf.mxu0
      %v3393 = vpop.f32.mrf.mxu0
      %v3394 = vadd.f32 %v3233, %v3393
      %v3395 = vpop.f32.mrf.mxu0
      %3396 = vmatprep.mubr.bf16.mxu0 %v2333
      %3397 = vmatmul.mubr.bf16.gmra.mxu0 %v2332
      %v3398 = vpop.f32.mrf.mxu0
      %v3399 = vadd.f32 %v3238, %v3398
      %v3400 = vpop.f32.mrf.mxu0
      %v3401 = vpop.f32.mrf.mxu0
      %v3402 = vadd.f32 %v3241, %v3401
      %v3403 = vpop.f32.mrf.mxu0
      %3404 = vmatprep.mubr.bf16.mxu0 %v2342
      %3405 = vmatmul.mubr.bf16.gmra.mxu0 %v2341
      %v3406 = vpop.f32.mrf.mxu0
      %v3407 = vadd.f32 %v3246, %v3406
      %v3408 = vpop.f32.mrf.mxu0
      %v3409 = vpop.f32.mrf.mxu0
      %v3410 = vadd.f32 %v3249, %v3409
      %v3411 = vpop.f32.mrf.mxu0
      %3412 = vmatprep.mubr.bf16.mxu0 %v2351
      %3413 = vmatmul.mubr.bf16.gmra.mxu0 %v2350
      %v3414 = vpop.f32.mrf.mxu0
      %v3415 = vadd.f32 %v3254, %v3414
      %v3416 = vpop.f32.mrf.mxu0
      %v3417 = vpop.f32.mrf.mxu0
      %v3418 = vadd.f32 %v3257, %v3417
      %v3419 = vpop.f32.mrf.mxu0
      %3420 = vmatprep.mubr.bf16.mxu0 %v2360
      %3421 = vmatmul.mubr.bf16.gmra.mxu0 %v2359
      %v3422 = vpop.f32.mrf.mxu0
      %v3423 = vadd.f32 %v3262, %v3422
      %v3424 = vpop.f32.mrf.mxu0
      %v3425 = vpop.f32.mrf.mxu0
      %v3426 = vadd.f32 %v3265, %v3425
      %v3427 = vpop.f32.mrf.mxu0
      %3428 = vmatprep.mubr.bf16.mxu0 %v2369
      %3429 = vmatmul.mubr.bf16.gmra.mxu0 %v2368
      %v3430 = vpop.f32.mrf.mxu0
      %v3431 = vadd.f32 %v3270, %v3430
      %v3432 = vpop.f32.mrf.mxu0
      %v3433 = vpop.f32.mrf.mxu0
      %v3434 = vadd.f32 %v3273, %v3433
      %v3435 = vpop.f32.mrf.mxu0
      %3436 = vmatprep.mubr.bf16.mxu0 %v2378
      %3437 = vmatmul.mubr.bf16.gmra.mxu0 %v2377
      %v3438 = vpop.f32.mrf.mxu0
      %v3439 = vadd.f32 %v3278, %v3438
      %v3440 = vpop.f32.mrf.mxu0
      %v3441 = vpop.f32.mrf.mxu0
      %v3442 = vadd.f32 %v3281, %v3441
      %v3443 = vpop.f32.mrf.mxu0
      %3444 = vmatprep.mubr.bf16.mxu0 %v2387
      %3445 = vmatmul.mubr.bf16.gmra.mxu0 %v2386
      %v3446 = vpop.f32.mrf.mxu0
      %v3447 = vadd.f32 %v3286, %v3446
      %v3448 = vpop.f32.mrf.mxu0
      %v3449 = vpop.f32.mrf.mxu0
      %v3450 = vadd.f32 %v3289, %v3449
      %v3451 = vpop.f32.mrf.mxu0
      %3452 = vmatprep.mubr.bf16.mxu0 %v2396
      %3453 = vmatmul.mubr.bf16.gmra.mxu0 %v2395
      %v3454 = vpop.f32.mrf.mxu0
      %v3455 = vadd.f32 %v3294, %v3454
      %v3456 = vpop.f32.mrf.mxu0
      %v3457 = vpop.f32.mrf.mxu0
      %v3458 = vadd.f32 %v3297, %v3457
      %v3459 = vpop.f32.mrf.mxu0
      %3460 = vmatprep.mubr.bf16.mxu0 %v2405
      %3461 = vmatmul.mubr.bf16.gmra.mxu0 %v2404
      %v3462 = vpop.f32.mrf.mxu0
      %v3463 = vadd.f32 %v3302, %v3462
      %v3464 = vpop.f32.mrf.mxu0
      %v3465 = vpop.f32.mrf.mxu0
      %v3466 = vadd.f32 %v3305, %v3465
      %v3467 = vpop.f32.mrf.mxu0
      %3468 = vmatprep.mubr.bf16.mxu0 %v2414
      %3469 = vmatmul.mubr.bf16.gmra.mxu0 %v2413
      %v3470 = vpop.f32.mrf.mxu0
      %v3471 = vadd.f32 %v3310, %v3470
      %v3472 = vpop.f32.mrf.mxu0
      %v3473 = vpop.f32.mrf.mxu0
      %v3474 = vadd.f32 %v3313, %v3473
      %v3475 = vpop.f32.mrf.mxu0
      %3476 = vdwg.mxu0
      %3477 = vmatprep.subr.bf16.mxu0 0
      %3478 = vmatpush1.bf16.msra.mxu0 %v2905
      %3479 = vmatprep.subr.bf16.mxu0 0
      %3480 = vmatpush1.bf16.msra.mxu0 %v2904
      %3481 = vmatprep.subr.bf16.mxu0 0
      %3482 = vmatpush1.bf16.msra.mxu0 %v2903
      %3483 = vmatprep.subr.bf16.mxu0 0
      %3484 = vmatpush1.bf16.msra.mxu0 %v2902
      %3485 = vmatprep.subr.bf16.mxu0 0
      %3486 = vmatpush1.bf16.msra.mxu0 %v2901
      %3487 = vmatprep.subr.bf16.mxu0 0
      %3488 = vmatpush1.bf16.msra.mxu0 %v2900
      %3489 = vmatprep.subr.bf16.mxu0 0
      %3490 = vmatpush1.bf16.msra.mxu0 %v2899
      %3491 = vmatprep.subr.bf16.mxu0 0
      %3492 = vmatpush1.bf16.msra.mxu0 %v2898
      %3493 = vmatprep.subr.bf16.mxu0 0
      %3494 = vmatpush2.bf16.msra.mxu0 %v2913
      %3495 = vmatprep.subr.bf16.mxu0 0
      %3496 = vmatpush2.bf16.msra.mxu0 %v2912
      %3497 = vmatprep.subr.bf16.mxu0 0
      %3498 = vmatpush2.bf16.msra.mxu0 %v2911
      %3499 = vmatprep.subr.bf16.mxu0 0
      %3500 = vmatpush2.bf16.msra.mxu0 %v2910
      %3501 = vmatprep.subr.bf16.mxu0 0
      %3502 = vmatpush2.bf16.msra.mxu0 %v2909
      %3503 = vmatprep.subr.bf16.mxu0 0
      %3504 = vmatpush2.bf16.msra.mxu0 %v2908
      %3505 = vmatprep.subr.bf16.mxu0 0
      %3506 = vmatpush2.bf16.msra.mxu0 %v2907
      %3507 = vmatprep.subr.bf16.mxu0 0
      %3508 = vmatpush2.bf16.msra.mxu0 %v2906
      %3509 = vmatprep.mubr.bf16.mxu0 %v2281
      %3510 = vmatmul.mubr.bf16.gmra.mxu0 %v2280
      %v3511 = vpop.f32.mrf.mxu0
      %v3512 = vadd.f32 %v3351, %v3511
      %v3513 = vpop.f32.mrf.mxu0
      %v3514 = vpop.f32.mrf.mxu0
      %v3515 = vadd.f32 %v3354, %v3514
      %v3516 = vpop.f32.mrf.mxu0
      %3517 = vmatprep.mubr.bf16.mxu0 %v2290
      %3518 = vmatmul.mubr.bf16.gmra.mxu0 %v2289
      %v3519 = vpop.f32.mrf.mxu0
      %v3520 = vadd.f32 %v3359, %v3519
      %v3521 = vpop.f32.mrf.mxu0
      %v3522 = vpop.f32.mrf.mxu0
      %v3523 = vadd.f32 %v3362, %v3522
      %v3524 = vpop.f32.mrf.mxu0
      %3525 = vmatprep.mubr.bf16.mxu0 %v2299
      %3526 = vmatmul.mubr.bf16.gmra.mxu0 %v2298
      %v3527 = vpop.f32.mrf.mxu0
      %v3528 = vadd.f32 %v3367, %v3527
      %v3529 = vpop.f32.mrf.mxu0
      %v3530 = vpop.f32.mrf.mxu0
      %v3531 = vadd.f32 %v3370, %v3530
      %v3532 = vpop.f32.mrf.mxu0
      %3533 = vmatprep.mubr.bf16.mxu0 %v2308
      %3534 = vmatmul.mubr.bf16.gmra.mxu0 %v2307
      %v3535 = vpop.f32.mrf.mxu0
      %v3536 = vadd.f32 %v3375, %v3535
      %v3537 = vpop.f32.mrf.mxu0
      %v3538 = vpop.f32.mrf.mxu0
      %v3539 = vadd.f32 %v3378, %v3538
      %v3540 = vpop.f32.mrf.mxu0
      %3541 = vmatprep.mubr.bf16.mxu0 %v2317
      %3542 = vmatmul.mubr.bf16.gmra.mxu0 %v2316
      %v3543 = vpop.f32.mrf.mxu0
      %v3544 = vadd.f32 %v3383, %v3543
      %v3545 = vpop.f32.mrf.mxu0
      %v3546 = vpop.f32.mrf.mxu0
      %v3547 = vadd.f32 %v3386, %v3546
      %v3548 = vpop.f32.mrf.mxu0
      %3549 = vmatprep.mubr.bf16.mxu0 %v2326
      %3550 = vmatmul.mubr.bf16.gmra.mxu0 %v2325
      %v3551 = vpop.f32.mrf.mxu0
      %v3552 = vadd.f32 %v3391, %v3551
      %v3553 = vpop.f32.mrf.mxu0
      %v3554 = vpop.f32.mrf.mxu0
      %v3555 = vadd.f32 %v3394, %v3554
      %v3556 = vpop.f32.mrf.mxu0
      %3557 = vmatprep.mubr.bf16.mxu0 %v2335
      %3558 = vmatmul.mubr.bf16.gmra.mxu0 %v2334
      %v3559 = vpop.f32.mrf.mxu0
      %v3560 = vadd.f32 %v3399, %v3559
      %v3561 = vpop.f32.mrf.mxu0
      %v3562 = vpop.f32.mrf.mxu0
      %v3563 = vadd.f32 %v3402, %v3562
      %v3564 = vpop.f32.mrf.mxu0
      %3565 = vmatprep.mubr.bf16.mxu0 %v2344
      %3566 = vmatmul.mubr.bf16.gmra.mxu0 %v2343
      %v3567 = vpop.f32.mrf.mxu0
      %v3568 = vadd.f32 %v3407, %v3567
      %v3569 = vpop.f32.mrf.mxu0
      %v3570 = vpop.f32.mrf.mxu0
      %v3571 = vadd.f32 %v3410, %v3570
      %v3572 = vpop.f32.mrf.mxu0
      %3573 = vmatprep.mubr.bf16.mxu0 %v2353
      %3574 = vmatmul.mubr.bf16.gmra.mxu0 %v2352
      %v3575 = vpop.f32.mrf.mxu0
      %v3576 = vadd.f32 %v3415, %v3575
      %v3577 = vpop.f32.mrf.mxu0
      %v3578 = vpop.f32.mrf.mxu0
      %v3579 = vadd.f32 %v3418, %v3578
      %v3580 = vpop.f32.mrf.mxu0
      %3581 = vmatprep.mubr.bf16.mxu0 %v2362
      %3582 = vmatmul.mubr.bf16.gmra.mxu0 %v2361
      %v3583 = vpop.f32.mrf.mxu0
      %v3584 = vadd.f32 %v3423, %v3583
      %v3585 = vpop.f32.mrf.mxu0
      %v3586 = vpop.f32.mrf.mxu0
      %v3587 = vadd.f32 %v3426, %v3586
      %v3588 = vpop.f32.mrf.mxu0
      %3589 = vmatprep.mubr.bf16.mxu0 %v2371
      %3590 = vmatmul.mubr.bf16.gmra.mxu0 %v2370
      %v3591 = vpop.f32.mrf.mxu0
      %v3592 = vadd.f32 %v3431, %v3591
      %v3593 = vpop.f32.mrf.mxu0
      %v3594 = vpop.f32.mrf.mxu0
      %v3595 = vadd.f32 %v3434, %v3594
      %v3596 = vpop.f32.mrf.mxu0
      %3597 = vmatprep.mubr.bf16.mxu0 %v2380
      %3598 = vmatmul.mubr.bf16.gmra.mxu0 %v2379
      %v3599 = vpop.f32.mrf.mxu0
      %v3600 = vadd.f32 %v3439, %v3599
      %v3601 = vpop.f32.mrf.mxu0
      %v3602 = vpop.f32.mrf.mxu0
      %v3603 = vadd.f32 %v3442, %v3602
      %v3604 = vpop.f32.mrf.mxu0
      %3605 = vmatprep.mubr.bf16.mxu0 %v2389
      %3606 = vmatmul.mubr.bf16.gmra.mxu0 %v2388
      %v3607 = vpop.f32.mrf.mxu0
      %v3608 = vadd.f32 %v3447, %v3607
      %v3609 = vpop.f32.mrf.mxu0
      %v3610 = vpop.f32.mrf.mxu0
      %v3611 = vadd.f32 %v3450, %v3610
      %v3612 = vpop.f32.mrf.mxu0
      %3613 = vmatprep.mubr.bf16.mxu0 %v2398
      %3614 = vmatmul.mubr.bf16.gmra.mxu0 %v2397
      %v3615 = vpop.f32.mrf.mxu0
      %v3616 = vadd.f32 %v3455, %v3615
      %v3617 = vpop.f32.mrf.mxu0
      %v3618 = vpop.f32.mrf.mxu0
      %v3619 = vadd.f32 %v3458, %v3618
      %v3620 = vpop.f32.mrf.mxu0
      %3621 = vmatprep.mubr.bf16.mxu0 %v2407
      %3622 = vmatmul.mubr.bf16.gmra.mxu0 %v2406
      %v3623 = vpop.f32.mrf.mxu0
      %v3624 = vadd.f32 %v3463, %v3623
      %v3625 = vpop.f32.mrf.mxu0
      %v3626 = vpop.f32.mrf.mxu0
      %v3627 = vadd.f32 %v3466, %v3626
      %v3628 = vpop.f32.mrf.mxu0
      %3629 = vmatprep.mubr.bf16.mxu0 %v2416
      %3630 = vmatmul.mubr.bf16.gmra.mxu0 %v2415
      %v3631 = vpop.f32.mrf.mxu0
      %v3632 = vadd.f32 %v3471, %v3631
      %v3633 = vpop.f32.mrf.mxu0
      %v3634 = vpop.f32.mrf.mxu0
      %v3635 = vadd.f32 %v3474, %v3634
      %v3636 = vpop.f32.mrf.mxu0
      %3637 = vdwg.mxu0
      %3638 = vmatprep.subr.bf16.mxu0 0
      %3639 = vmatpush1.bf16.msra.mxu0 %v2921
      %3640 = vmatprep.subr.bf16.mxu0 0
      %3641 = vmatpush1.bf16.msra.mxu0 %v2920
      %3642 = vmatprep.subr.bf16.mxu0 0
      %3643 = vmatpush1.bf16.msra.mxu0 %v2919
      %3644 = vmatprep.subr.bf16.mxu0 0
      %3645 = vmatpush1.bf16.msra.mxu0 %v2918
      %3646 = vmatprep.subr.bf16.mxu0 0
      %3647 = vmatpush1.bf16.msra.mxu0 %v2917
      %3648 = vmatprep.subr.bf16.mxu0 0
      %3649 = vmatpush1.bf16.msra.mxu0 %v2916
      %3650 = vmatprep.subr.bf16.mxu0 0
      %3651 = vmatpush1.bf16.msra.mxu0 %v2915
      %3652 = vmatprep.subr.bf16.mxu0 0
      %3653 = vmatpush1.bf16.msra.mxu0 %v2914
      %3654 = vmatprep.subr.bf16.mxu0 0
      %3655 = vmatpush2.bf16.msra.mxu0 0
      %3656 = vmatprep.subr.bf16.mxu0 0
      %3657 = vmatpush2.bf16.msra.mxu0 0
      %3658 = vmatprep.subr.bf16.mxu0 0
      %3659 = vmatpush2.bf16.msra.mxu0 0
      %3660 = vmatprep.subr.bf16.mxu0 0
      %3661 = vmatpush2.bf16.msra.mxu0 0
      %3662 = vmatprep.subr.bf16.mxu0 0
      %3663 = vmatpush2.bf16.msra.mxu0 0
      %3664 = vmatprep.subr.bf16.mxu0 0
      %3665 = vmatpush2.bf16.msra.mxu0 0
      %3666 = vmatprep.subr.bf16.mxu0 0
      %3667 = vmatpush2.bf16.msra.mxu0 0
      %3668 = vmatprep.subr.bf16.mxu0 0
      %3669 = vmatpush2.bf16.msra.mxu0 0
      %3670 = vmatprep.mubr.bf16.mxu0 0
      %3671 = vmatmul.mubr.bf16.gmra.mxu0 %v2282
      %v3672 = vpop.f32.mrf.mxu0
      %v3673 = vadd.f32 %v3512, %v3672
      %v3674 = vpop.f32.mrf.mxu0
      %v3675 = vpop.f32.mrf.mxu0
      %v3676 = vadd.f32 %v3515, %v3675
      %v3677 = vpop.f32.mrf.mxu0
      %3678 = vmatprep.mubr.bf16.mxu0 0
      %3679 = vmatmul.mubr.bf16.gmra.mxu0 %v2291
      %v3680 = vpop.f32.mrf.mxu0
      %v3681 = vadd.f32 %v3520, %v3680
      %v3682 = vpop.f32.mrf.mxu0
      %v3683 = vpop.f32.mrf.mxu0
      %v3684 = vadd.f32 %v3523, %v3683
      %v3685 = vpop.f32.mrf.mxu0
      %3686 = vmatprep.mubr.bf16.mxu0 0
      %3687 = vmatmul.mubr.bf16.gmra.mxu0 %v2300
      %v3688 = vpop.f32.mrf.mxu0
      %v3689 = vadd.f32 %v3528, %v3688
      %v3690 = vpop.f32.mrf.mxu0
      %v3691 = vpop.f32.mrf.mxu0
      %v3692 = vadd.f32 %v3531, %v3691
      %v3693 = vpop.f32.mrf.mxu0
      %3694 = vmatprep.mubr.bf16.mxu0 0
      %3695 = vmatmul.mubr.bf16.gmra.mxu0 %v2309
      %v3696 = vpop.f32.mrf.mxu0
      %v3697 = vadd.f32 %v3536, %v3696
      %v3698 = vpop.f32.mrf.mxu0
      %v3699 = vpop.f32.mrf.mxu0
      %v3700 = vadd.f32 %v3539, %v3699
      %v3701 = vpop.f32.mrf.mxu0
      %3702 = vmatprep.mubr.bf16.mxu0 0
      %3703 = vmatmul.mubr.bf16.gmra.mxu0 %v2318
      %v3704 = vpop.f32.mrf.mxu0
      %v3705 = vadd.f32 %v3544, %v3704
      %v3706 = vpop.f32.mrf.mxu0
      %v3707 = vpop.f32.mrf.mxu0
      %v3708 = vadd.f32 %v3547, %v3707
      %v3709 = vpop.f32.mrf.mxu0
      %3710 = vmatprep.mubr.bf16.mxu0 0
      %3711 = vmatmul.mubr.bf16.gmra.mxu0 %v2327
      %v3712 = vpop.f32.mrf.mxu0
      %v3713 = vadd.f32 %v3552, %v3712
      %v3714 = vpop.f32.mrf.mxu0
      %v3715 = vpop.f32.mrf.mxu0
      %v3716 = vadd.f32 %v3555, %v3715
      %v3717 = vpop.f32.mrf.mxu0
      %3718 = vmatprep.mubr.bf16.mxu0 0
      %3719 = vmatmul.mubr.bf16.gmra.mxu0 %v2336
      %v3720 = vpop.f32.mrf.mxu0
      %v3721 = vadd.f32 %v3560, %v3720
      %v3722 = vpop.f32.mrf.mxu0
      %v3723 = vpop.f32.mrf.mxu0
      %v3724 = vadd.f32 %v3563, %v3723
      %v3725 = vpop.f32.mrf.mxu0
      %3726 = vmatprep.mubr.bf16.mxu0 0
      %3727 = vmatmul.mubr.bf16.gmra.mxu0 %v2345
      %v3728 = vpop.f32.mrf.mxu0
      %v3729 = vadd.f32 %v3568, %v3728
      %v3730 = vpop.f32.mrf.mxu0
      %v3731 = vpop.f32.mrf.mxu0
      %v3732 = vadd.f32 %v3571, %v3731
      %v3733 = vpop.f32.mrf.mxu0
      %3734 = vmatprep.mubr.bf16.mxu0 0
      %3735 = vmatmul.mubr.bf16.gmra.mxu0 %v2354
      %v3736 = vpop.f32.mrf.mxu0
      %v3737 = vadd.f32 %v3576, %v3736
      %v3738 = vpop.f32.mrf.mxu0
      %v3739 = vpop.f32.mrf.mxu0
      %v3740 = vadd.f32 %v3579, %v3739
      %v3741 = vpop.f32.mrf.mxu0
      %3742 = vmatprep.mubr.bf16.mxu0 0
      %3743 = vmatmul.mubr.bf16.gmra.mxu0 %v2363
      %v3744 = vpop.f32.mrf.mxu0
      %v3745 = vadd.f32 %v3584, %v3744
      %v3746 = vpop.f32.mrf.mxu0
      %v3747 = vpop.f32.mrf.mxu0
      %v3748 = vadd.f32 %v3587, %v3747
      %v3749 = vpop.f32.mrf.mxu0
      %3750 = vmatprep.mubr.bf16.mxu0 0
      %3751 = vmatmul.mubr.bf16.gmra.mxu0 %v2372
      %v3752 = vpop.f32.mrf.mxu0
      %v3753 = vadd.f32 %v3592, %v3752
      %v3754 = vpop.f32.mrf.mxu0
      %v3755 = vpop.f32.mrf.mxu0
      %v3756 = vadd.f32 %v3595, %v3755
      %v3757 = vpop.f32.mrf.mxu0
      %3758 = vmatprep.mubr.bf16.mxu0 0
      %3759 = vmatmul.mubr.bf16.gmra.mxu0 %v2381
      %v3760 = vpop.f32.mrf.mxu0
      %v3761 = vadd.f32 %v3600, %v3760
      %v3762 = vpop.f32.mrf.mxu0
      %v3763 = vpop.f32.mrf.mxu0
      %v3764 = vadd.f32 %v3603, %v3763
      %v3765 = vpop.f32.mrf.mxu0
      %3766 = vmatprep.mubr.bf16.mxu0 0
      %3767 = vmatmul.mubr.bf16.gmra.mxu0 %v2390
      %v3768 = vpop.f32.mrf.mxu0
      %v3769 = vadd.f32 %v3608, %v3768
      %v3770 = vpop.f32.mrf.mxu0
      %v3771 = vpop.f32.mrf.mxu0
      %v3772 = vadd.f32 %v3611, %v3771
      %v3773 = vpop.f32.mrf.mxu0
      %3774 = vmatprep.mubr.bf16.mxu0 0
      %3775 = vmatmul.mubr.bf16.gmra.mxu0 %v2399
      %v3776 = vpop.f32.mrf.mxu0
      %v3777 = vadd.f32 %v3616, %v3776
      %v3778 = vpop.f32.mrf.mxu0
      %v3779 = vpop.f32.mrf.mxu0
      %v3780 = vadd.f32 %v3619, %v3779
      %v3781 = vpop.f32.mrf.mxu0
      %3782 = vmatprep.mubr.bf16.mxu0 0
      %3783 = vmatmul.mubr.bf16.gmra.mxu0 %v2408
      %v3784 = vpop.f32.mrf.mxu0
      %v3785 = vadd.f32 %v3624, %v3784
      %v3786 = vpop.f32.mrf.mxu0
      %v3787 = vpop.f32.mrf.mxu0
      %v3788 = vadd.f32 %v3627, %v3787
      %v3789 = vpop.f32.mrf.mxu0
      %3790 = vmatprep.mubr.bf16.mxu0 0
      %3791 = vmatmul.mubr.bf16.gmra.mxu0 %v2417
      %v3792 = vpop.f32.mrf.mxu0
      %v3793 = vadd.f32 %v3632, %v3792
      %v3794 = vpop.f32.mrf.mxu0
      %v3795 = vpop.f32.mrf.mxu0
      %v3796 = vadd.f32 %v3635, %v3795
      %v3797 = vpop.f32.mrf.mxu0
      %3798 = vdwg.mxu0
      %v3799 = vpack.c.bf16 %v3676, %v3673
      %v3800 = vpack.c.bf16 %v3684, %v3681
      %v3801 = vpack.c.bf16 %v3692, %v3689
      %v3802 = vpack.c.bf16 %v3700, %v3697
      %v3803 = vpack.c.bf16 %v3708, %v3705
      %v3804 = vpack.c.bf16 %v3716, %v3713
      %v3805 = vpack.c.bf16 %v3724, %v3721
      %v3806 = vpack.c.bf16 %v3732, %v3729
      %v3807 = vpack.c.bf16 %v3740, %v3737
      %v3808 = vpack.c.bf16 %v3748, %v3745
      %v3809 = vpack.c.bf16 %v3756, %v3753
      %v3810 = vpack.c.bf16 %v3764, %v3761
      %v3811 = vpack.c.bf16 %v3772, %v3769
      %v3812 = vpack.c.bf16 %v3780, %v3777
      %v3813 = vpack.c.bf16 %v3788, %v3785
      %v3814 = vpack.c.bf16 %v3796, %v3793
      %v3831 = vunpack.c.l.b16 %v3799
      %v3832 = vunpack.c.h.b16 %v3799
      %v3833 = vunpack.c.l.b16 %v3800
      %v3834 = vunpack.c.h.b16 %v3800
      %v3835 = vunpack.c.l.b16 %v3801
      %v3836 = vunpack.c.h.b16 %v3801
      %v3837 = vunpack.c.l.b16 %v3802
      %v3838 = vunpack.c.h.b16 %v3802
      %v3839 = vunpack.c.l.b16 %v3803
      %v3840 = vunpack.c.h.b16 %v3803
      %v3841 = vunpack.c.l.b16 %v3804
      %v3842 = vunpack.c.h.b16 %v3804
      %v3843 = vunpack.c.l.b16 %v3805
      %v3844 = vunpack.c.h.b16 %v3805
      %v3845 = vunpack.c.l.b16 %v3806
      %v3846 = vunpack.c.h.b16 %v3806
      %v3847 = vunpack.c.l.b16 %v3807
      %v3848 = vunpack.c.h.b16 %v3807
      %v3849 = vunpack.c.l.b16 %v3808
      %v3850 = vunpack.c.h.b16 %v3808
      %v3851 = vunpack.c.l.b16 %v3809
      %v3852 = vunpack.c.h.b16 %v3809
      %v3853 = vunpack.c.l.b16 %v3810
      %v3854 = vunpack.c.h.b16 %v3810
      %v3855 = vunpack.c.l.b16 %v3811
      %v3856 = vunpack.c.h.b16 %v3811
      %v3857 = vunpack.c.l.b16 %v3812
      %v3858 = vunpack.c.h.b16 %v3812
      %v3859 = vunpack.c.l.b16 %v3813
      %v3860 = vunpack.c.h.b16 %v3813
      %v3861 = vunpack.c.l.b16 %v3814
      %v3862 = vunpack.c.h.b16 %v3814
      %v3863 = vpack.c.b16 %v3831, %v3831
      %v3864 = vpack.c.b16 %v3832, %v3832
      %v3865 = vpack.c.b16 %v3833, %v3833
      %v3866 = vpack.c.b16 %v3834, %v3834
      %v3867 = vpack.c.b16 %v3835, %v3835
      %v3868 = vpack.c.b16 %v3836, %v3836
      %v3869 = vpack.c.b16 %v3837, %v3837
      %v3870 = vpack.c.b16 %v3838, %v3838
      %v3871 = vpack.c.b16 %v3839, %v3839
      %v3872 = vpack.c.b16 %v3840, %v3840
      %v3873 = vpack.c.b16 %v3841, %v3841
      %v3874 = vpack.c.b16 %v3842, %v3842
      %v3875 = vpack.c.b16 %v3843, %v3843
      %v3876 = vpack.c.b16 %v3844, %v3844
      %v3877 = vpack.c.b16 %v3845, %v3845
      %v3878 = vpack.c.b16 %v3846, %v3846
      %v3879 = vpack.c.b16 %v3847, %v3847
      %v3880 = vpack.c.b16 %v3848, %v3848
      %v3881 = vpack.c.b16 %v3849, %v3849
      %v3882 = vpack.c.b16 %v3850, %v3850
      %v3883 = vpack.c.b16 %v3851, %v3851
      %v3884 = vpack.c.b16 %v3852, %v3852
      %v3885 = vpack.c.b16 %v3853, %v3853
      %v3886 = vpack.c.b16 %v3854, %v3854
      %v3887 = vpack.c.b16 %v3855, %v3855
      %v3888 = vpack.c.b16 %v3856, %v3856
      %v3889 = vpack.c.b16 %v3857, %v3857
      %v3890 = vpack.c.b16 %v3858, %v3858
      %v3891 = vpack.c.b16 %v3859, %v3859
      %v3892 = vpack.c.b16 %v3860, %v3860
      %v3893 = vpack.c.b16 %v3861, %v3861
      %v3894 = vpack.c.b16 %v3862, %v3862
      %3927 = vst [vmem:[%s273] sm:$0xf] %v3863
      %3928 = vst [vmem:[%s273 + $0x4] sm:$0xf] %v3864
      %3929 = vst [vmem:[%s273 + $0x8] sm:$0xf] %v3865
      %3930 = vst [vmem:[%s273 + $0xc] sm:$0xf] %v3866
      %3931 = vst [vmem:[%s273 + $0x10] sm:$0xf] %v3867
      %3932 = vst [vmem:[%s273 + $0x14] sm:$0xf] %v3868
      %3933 = vst [vmem:[%s273 + $0x18] sm:$0xf] %v3869
      %3934 = vst [vmem:[%s273 + $0x1c] sm:$0xf] %v3870
      %3935 = vst [vmem:[%s273 + $0x20] sm:$0xf] %v3871
      %3936 = vst [vmem:[%s273 + $0x24] sm:$0xf] %v3872
      %3937 = vst [vmem:[%s273 + $0x28] sm:$0xf] %v3873
      %3938 = vst [vmem:[%s273 + $0x2c] sm:$0xf] %v3874
      %3939 = vst [vmem:[%s273 + $0x30] sm:$0xf] %v3875
      %3940 = vst [vmem:[%s273 + $0x34] sm:$0xf] %v3876
      %3941 = vst [vmem:[%s273 + $0x38] sm:$0xf] %v3877
      %3942 = vst [vmem:[%s273 + $0x3c] sm:$0xf] %v3878
      %3943 = vst [vmem:[%s273 + $0x40] sm:$0xf] %v3879
      %3944 = vst [vmem:[%s273 + $0x44] sm:$0xf] %v3880
      %3945 = vst [vmem:[%s273 + $0x48] sm:$0xf] %v3881
      %3946 = vst [vmem:[%s273 + $0x4c] sm:$0xf] %v3882
      %3947 = vst [vmem:[%s273 + $0x50] sm:$0xf] %v3883
      %3948 = vst [vmem:[%s273 + $0x54] sm:$0xf] %v3884
      %3949 = vst [vmem:[%s273 + $0x58] sm:$0xf] %v3885
      %3950 = vst [vmem:[%s273 + $0x5c] sm:$0xf] %v3886
      %3951 = vst [vmem:[%s273 + $0x60] sm:$0xf] %v3887
      %3952 = vst [vmem:[%s273 + $0x64] sm:$0xf] %v3888
      %3953 = vst [vmem:[%s273 + $0x68] sm:$0xf] %v3889
      %3954 = vst [vmem:[%s273 + $0x6c] sm:$0xf] %v3890
      %3955 = vst [vmem:[%s273 + $0x70] sm:$0xf] %v3891
      %3956 = vst [vmem:[%s273 + $0x74] sm:$0xf] %v3892
      %3957 = vst [vmem:[%s273 + $0x78] sm:$0xf] %v3893
      %3958 = vst [vmem:[%s273 + $0x7c] sm:$0xf] %v3894
      %v3959 = vadd.f32 %v3673, %v3676
      %v3960 = vadd.f32 %v3959, %v3681
      %v3961 = vadd.f32 %v3960, %v3684
      %v3962 = vadd.f32 %v3961, %v3689
      %v3963 = vadd.f32 %v3962, %v3692
      %v3964 = vadd.f32 %v3963, %v3697
      %v3965 = vadd.f32 %v3964, %v3700
      %v3966 = vadd.f32 %v3965, %v3705
      %v3967 = vadd.f32 %v3966, %v3708
      %v3968 = vadd.f32 %v3967, %v3713
      %v3969 = vadd.f32 %v3968, %v3716
      %v3970 = vadd.f32 %v3969, %v3721
      %v3971 = vadd.f32 %v3970, %v3724
      %v3972 = vadd.f32 %v3971, %v3729
      %v3973 = vadd.f32 %v3972, %v3732
      %v3974 = vadd.f32 %v3973, %v3737
      %v3975 = vadd.f32 %v3974, %v3740
      %v3976 = vadd.f32 %v3975, %v3745
      %v3977 = vadd.f32 %v3976, %v3748
      %v3978 = vadd.f32 %v3977, %v3753
      %v3979 = vadd.f32 %v3978, %v3756
      %v3980 = vadd.f32 %v3979, %v3761
      %v3981 = vadd.f32 %v3980, %v3764
      %v3982 = vadd.f32 %v3981, %v3769
      %v3983 = vadd.f32 %v3982, %v3772
      %v3984 = vadd.f32 %v3983, %v3777
      %v3985 = vadd.f32 %v3984, %v3780
      %v3986 = vadd.f32 %v3985, %v3785
      %v3987 = vadd.f32 %v3986, %v3788
      %v3988 = vadd.f32 %v3987, %v3793
      %v3989 = vadd.f32 %v3988, %v3796
      %v3990 = vrot.slane %v3989, 4
      %v3991 = vadd.f32 %v3989, %v3990
      %v3992 = vrot.slane %v3991, 2
      %v3993 = vadd.f32 %v3991, %v3992
      %v3994 = vrot.slane %v3993, 1
      %v3995 = vadd.f32 %v3993, %v3994
      %v3996 = vmul.f32 %v3673, %v3673
      %v3997 = vmul.f32 %v3676, %v3676
      %v3998 = vmul.f32 %v3681, %v3681
      %v3999 = vmul.f32 %v3684, %v3684
      %v4000 = vmul.f32 %v3689, %v3689
      %v4001 = vmul.f32 %v3692, %v3692
      %v4002 = vmul.f32 %v3697, %v3697
      %v4003 = vmul.f32 %v3700, %v3700
      %v4004 = vmul.f32 %v3705, %v3705
      %v4005 = vmul.f32 %v3708, %v3708
      %v4006 = vmul.f32 %v3713, %v3713
      %v4007 = vmul.f32 %v3716, %v3716
      %v4008 = vmul.f32 %v3721, %v3721
      %v4009 = vmul.f32 %v3724, %v3724
      %v4010 = vmul.f32 %v3729, %v3729
      %v4011 = vmul.f32 %v3732, %v3732
      %v4012 = vmul.f32 %v3737, %v3737
      %v4013 = vmul.f32 %v3740, %v3740
      %v4014 = vmul.f32 %v3745, %v3745
      %v4015 = vmul.f32 %v3748, %v3748
      %v4016 = vmul.f32 %v3753, %v3753
      %v4017 = vmul.f32 %v3756, %v3756
      %v4018 = vmul.f32 %v3761, %v3761
      %v4019 = vmul.f32 %v3764, %v3764
      %v4020 = vmul.f32 %v3769, %v3769
      %v4021 = vmul.f32 %v3772, %v3772
      %v4022 = vmul.f32 %v3777, %v3777
      %v4023 = vmul.f32 %v3780, %v3780
      %v4024 = vmul.f32 %v3785, %v3785
      %v4025 = vmul.f32 %v3788, %v3788
      %v4026 = vmul.f32 %v3793, %v3793
      %v4027 = vmul.f32 %v3796, %v3796
      %v4028 = vadd.f32 %v3996, %v3997
      %v4029 = vadd.f32 %v4028, %v3998
      %v4030 = vadd.f32 %v4029, %v3999
      %v4031 = vadd.f32 %v4030, %v4000
      %v4032 = vadd.f32 %v4031, %v4001
      %v4033 = vadd.f32 %v4032, %v4002
      %v4034 = vadd.f32 %v4033, %v4003
      %v4035 = vadd.f32 %v4034, %v4004
      %v4036 = vadd.f32 %v4035, %v4005
      %v4037 = vadd.f32 %v4036, %v4006
      %v4038 = vadd.f32 %v4037, %v4007
      %v4039 = vadd.f32 %v4038, %v4008
      %v4040 = vadd.f32 %v4039, %v4009
      %v4041 = vadd.f32 %v4040, %v4010
      %v4042 = vadd.f32 %v4041, %v4011
      %v4043 = vadd.f32 %v4042, %v4012
      %v4044 = vadd.f32 %v4043, %v4013
      %v4045 = vadd.f32 %v4044, %v4014
      %v4046 = vadd.f32 %v4045, %v4015
      %v4047 = vadd.f32 %v4046, %v4016
      %v4048 = vadd.f32 %v4047, %v4017
      %v4049 = vadd.f32 %v4048, %v4018
      %v4050 = vadd.f32 %v4049, %v4019
      %v4051 = vadd.f32 %v4050, %v4020
      %v4052 = vadd.f32 %v4051, %v4021
      %v4053 = vadd.f32 %v4052, %v4022
      %v4054 = vadd.f32 %v4053, %v4023
      %v4055 = vadd.f32 %v4054, %v4024
      %v4056 = vadd.f32 %v4055, %v4025
      %v4057 = vadd.f32 %v4056, %v4026
      %v4058 = vadd.f32 %v4057, %v4027
      %v4059 = vrot.slane %v4058, 4
      %v4060 = vadd.f32 %v4058, %v4059
      %v4061 = vrot.slane %v4060, 2
      %v4062 = vadd.f32 %v4060, %v4061
      %v4063 = vrot.slane %v4062, 1
      %v4064 = vadd.f32 %v4062, %v4063
      %vm4065 = vcmask 1040384
      %v4066 = vsel %vm4065, %v3995, %v4064
      %4067 = vst [vmem:[%s280] sm:$0x3] %v4066
      %p4068 = scmp.lt.s32.totalorder %s21, 1
      %s4069 = scalar_select %p4068, %s21, 1
      %p4070 = scmp.lt.s32.totalorder %s22, 0
      %s4071 = scalar_select %p4070, %s22, 0
      %s4072 = smul.addr %s4069, 32
      %s4073 = sadd.s32 %s4071, %s4072
      %s4074 = smul.addr %s4073, 4
      %s4075 = scalar_lea.vmem %s4, %s4074
      %p4076 = scmp.lt.s32.totalorder %s21, 1
      %s4077 = scalar_select %p4076, %s21, 1
      %p4078 = scmp.lt.s32.totalorder %s22, 0
      %s4079 = scalar_select %p4078, %s22, 0
      %s4080 = sadd.s32 %s4079, %s4077
      %s4081 = smul.addr %s4080, 2
      %s4082 = scalar_lea.vmem %s5, %s4081
      // Predicated region
      $region41: #{_forward_impl.4} parent=35 // pred_check
        %p4083 = pneg %p143
      $region42: #{_forward_impl.4} parent=35 // pred_check_branch
        %4085 = sbr.rel (%p4083) target = $region44
      $region43: #{_forward_impl.4} parent=35 // pred_region
        _
      $region44: #{_forward_impl.4} parent=35 // pred_fallthru
        _
      // Predicated region
      $region45: #{_forward_impl.4} parent=35 // pred_check
        %p4086 = pneg %p171
      $region46: #{_forward_impl.4} parent=35 // pred_check_branch
        %4088 = sbr.rel (%p4086) target = $region48
      $region47: #{_forward_impl.4} parent=35 // pred_region
        _
      $region48: #{_forward_impl.4} parent=35 // pred_fallthru
        _
    $region36: #{_forward_impl.4} parent=5 // pred_fallthru
      _
    %p4089 = scmp.le.s32.totalorder 2, %s12
    // Predicated region
    $region49: #{_forward_impl.4} parent=5 // pred_check
      %p4090 = pneg %p4089
    $region50: #{_forward_impl.4} parent=5 // pred_check_branch
      %4092 = sbr.rel (%p4090) target = $region52
    $region51: #{_forward_impl.4} parent=5 // pred_region
      %s4093 = ssub.s32 %s12, 2
      // Predicated region
      $region53: #{_forward_impl.4} parent=51 // pred_check
        %p4094 = pneg %p149
      $region54: #{_forward_impl.4} parent=51 // pred_check_branch
        %4096 = sbr.rel (%p4094) target = $region56
      $region55: #{_forward_impl.4} parent=51 // pred_region
        %p4097 = scmp.lt.s32.totalorder %s23, 1
        %s4098 = scalar_select %p4097, %s23, 1
        %p4099 = scmp.lt.s32.totalorder %s24, 0
        %s4100 = scalar_select %p4099, %s24, 0
        %s4101 = smul.addr %s4098, 32
        %s4102 = sadd.s32 %s4100, %s4101
        %s4103 = smul.addr %s4102, 4
        %s4104 = scalar_lea.vmem %s4, %s4103
      $region56: #{_forward_impl.4} parent=51 // pred_fallthru
        _
      // Predicated region
      $region57: #{_forward_impl.4} parent=51 // pred_check
        %p4105 = pneg %p177
      $region58: #{_forward_impl.4} parent=51 // pred_check_branch
        %4107 = sbr.rel (%p4105) target = $region60
      $region59: #{_forward_impl.4} parent=51 // pred_region
        %p4108 = scmp.lt.s32.totalorder %s23, 1
        %s4109 = scalar_select %p4108, %s23, 1
        %p4110 = scmp.lt.s32.totalorder %s24, 0
        %s4111 = scalar_select %p4110, %s24, 0
        %s4112 = sadd.s32 %s4111, %s4109
        %s4113 = smul.addr %s4112, 2
        %s4114 = scalar_lea.vmem %s5, %s4113
      $region60: #{_forward_impl.4} parent=51 // pred_fallthru
        _
    $region52: #{_forward_impl.4} parent=5 // pred_fallthru
      _
  $region6: #{_forward_impl.4} parent=0 // loop_footer
    %s16 = sadd.s32 1, %s12
  $region7: #{_forward_impl.4} parent=0 // loop_footer_branch
    %11 = sbr.rel target = $region3
  $region8: #{_forward_impl.4} parent=0 // loop_exit
    _

// kernel: _forward_impl.3
$region0: #{_forward_impl.3}
  #allocation0 [shape = 'u32[]', space=smem, size = 0x4, offset = 0x4, fixed_abs, tag = 'smem constant byte address 0x4 - core index']
  #allocation1 [shape = 'u32[144,128]{1,0:T(1,128)}', space=vmem, size = 0x12000, scoped, tag = 'internal scratch']
  #allocation2 [shape = 'bf16[256,1152]{1,0:T(8,128)(2,1)}', space=vmem, size = 0x90000, scoped, tag = 'scratch operand']
  %s0 = inlined_call_operand.vmem [shape: bf16[2,18,18,128], index: 0, kind: input, shape index: {}]
  %s1 = inlined_call_operand.vmem [shape: bf16[1152,128], index: 1, kind: input, shape index: {}]
  %s2 = inlined_call_operand.vmem [shape: bf16[128,128], index: 2, kind: input, shape index: {}]
  %s3 = inlined_call_operand.vmem [shape: bf16[2,16,16,128], index: 3, kind: output, shape index: {0}]
  %s4 = inlined_call_operand.vmem [shape: f32[2,2,128], index: 4, kind: output, shape index: {1}]
  %s5 = inlined_call_operand.vmem [shape: bf16[2,16,16,128], index: 5, kind: output, shape index: {2}]
  %s6 = inlined_call_operand.vmem [shape: f32[2,2,128], index: 6, kind: output, shape index: {3}]
  %7 = xla_tuple %s3, %s4, %s5, %s6
  %s8 = sld [smem:[#allocation0]]
  $region73: #{_forward_impl.3} parent=0
    _
  %s10 = ssub.s32 1, %s8
  %s11 = scalar_select 0, %s10, %s8
  loop: start=0, step=1, limit=4
  $region2: #{_forward_impl.3} parent=0 // loop_pre_header
    _
  $region3: #{_forward_impl.3} parent=0 // loop_header
    %s13 = sphi 0, %s17
    %p14 = scmp.ge.s32.totalorder %s13, 4
    %s20 = sphi 0, %s32
    %s21 = sphi 0, %s28
    %s22 = sphi 0, %s20
    %s23 = sphi 0, %s21
    %s24 = sphi 0, %s22
    %s25 = sphi 0, %s23
    %s35 = sphi 0, %s37
    %s38 = sphi 0, %s35
    %s39 = sphi 0, %s38
    %s55 = sphi 0, %s39
    %s61 = sphi 0, %s63
    %s64 = sphi 0, %s61
    %s65 = sphi 0, %s64
    %s81 = sphi 0, %s65
    %s87 = sphi 0, %s89
    %s90 = sphi 0, %s87
    %s91 = sphi 0, %s90
    %s107 = sphi 0, %s91
    %s115 = sphi 0, %s117
    %s118 = sphi 0, %s115
    %s119 = sphi 0, %s118
    %s135 = sphi 0, %s119
    %s143 = sphi 0, %s145
    %s146 = sphi 0, %s143
    %s147 = sphi 0, %s146
    %s163 = sphi 0, %s147
    %s171 = sphi 0, %s173
    %s174 = sphi 0, %s171
    %s175 = sphi 0, %s174
    %s191 = sphi 0, %s175
    %s199 = sphi 0, %s201
    %s202 = sphi 0, %s199
    %s203 = sphi 0, %s202
    %s219 = sphi 0, %s203
  $region4: #{_forward_impl.3} parent=0 // loop_header_branch
    %16 = sbr.rel (%p14) target = $region8
  $region5: #{_forward_impl.3} parent=0 // loop_body
    %s18 = ssub.s32 %s13, 1
    %s19 = ssub.s32 %s13, 2
    %s26 = sadd.s32 1, %s21
    %p27 = scmp.ge.s32.totalorder %s26, 1
    %s28 = scalar_select %p27, 0, %s26
    %s29 = sadd.s32 1, %s20
    %s30 = scalar_select %p27, %s29, %s20
    %p31 = scmp.ge.s32.totalorder %s30, 2
    %s32 = scalar_select %p31, 0, %s30
    %s33 = ssub.s32 %s20, %s32
    %p34 = scmp.eq.s32.totalorder %s33, 0
    %s36 = sadd.s32 %s35, 1
    %s37 = scalar_select %p34, %s35, %s36
    %p40 = pneg %p34
    %p41 = scmp.eq.s32.totalorder %s13, 1
    %p42 = por %p40, %p41
    %p43 = scmp.ne.s32.totalorder %s35, %s38
    %p44 = scmp.eq.s32.totalorder %s13, 0
    %p45 = por %p43, %p44
    %p46 = scmp.ne.s32.totalorder %s35, %s38
    %p47 = scmp.eq.s32.totalorder %s18, 1
    %p48 = por %p46, %p47
    %p49 = scmp.ne.s32.totalorder %s38, %s39
    %p50 = scmp.eq.s32.totalorder %s18, 0
    %p51 = por %p49, %p50
    %p52 = scmp.ne.s32.totalorder %s38, %s39
    %p53 = scmp.eq.s32.totalorder %s19, 1
    %p54 = por %p52, %p53
    %p56 = scmp.ne.s32.totalorder %s39, %s55
    %p57 = scmp.eq.s32.totalorder %s19, 0
    %p58 = por %p56, %p57
    %s59 = ssub.s32 %s21, %s28
    %p60 = scmp.eq.s32.totalorder %s59, 0
    %s62 = sadd.s32 %s61, 1
    %s63 = scalar_select %p60, %s61, %s62
    %p66 = pneg %p60
    %p67 = scmp.eq.s32.totalorder %s13, 1
    %p68 = por %p66, %p67
    %p69 = scmp.ne.s32.totalorder %s61, %s64
    %p70 = scmp.eq.s32.totalorder %s13, 0
    %p71 = por %p69, %p70
    %p72 = scmp.ne.s32.totalorder %s61, %s64
    %p73 = scmp.eq.s32.totalorder %s18, 1
    %p74 = por %p72, %p73
    %p75 = scmp.ne.s32.totalorder %s64, %s65
    %p76 = scmp.eq.s32.totalorder %s18, 0
    %p77 = por %p75, %p76
    %p78 = scmp.ne.s32.totalorder %s64, %s65
    %p79 = scmp.eq.s32.totalorder %s19, 1
    %p80 = por %p78, %p79
    %p82 = scmp.ne.s32.totalorder %s65, %s81
    %p83 = scmp.eq.s32.totalorder %s19, 0
    %p84 = por %p82, %p83
    %s85 = ssub.s32 %s21, %s28
    %p86 = scmp.eq.s32.totalorder %s85, 0
    %s88 = sadd.s32 %s87, 1
    %s89 = scalar_select %p86, %s87, %s88
    %p92 = pneg %p86
    %p93 = scmp.eq.s32.totalorder %s13, 1
    %p94 = por %p92, %p93
    %p95 = scmp.ne.s32.totalorder %s87, %s90
    %p96 = scmp.eq.s32.totalorder %s13, 0
    %p97 = por %p95, %p96
    %p98 = scmp.ne.s32.totalorder %s87, %s90
    %p99 = scmp.eq.s32.totalorder %s18, 1
    %p100 = por %p98, %p99
    %p101 = scmp.ne.s32.totalorder %s90, %s91
    %p102 = scmp.eq.s32.totalorder %s18, 0
    %p103 = por %p101, %p102
    %p104 = scmp.ne.s32.totalorder %s90, %s91
    %p105 = scmp.eq.s32.totalorder %s19, 1
    %p106 = por %p104, %p105
    %p108 = scmp.ne.s32.totalorder %s91, %s107
    %p109 = scmp.eq.s32.totalorder %s19, 0
    %p110 = por %p108, %p109
    %s111 = ssub.s32 %s20, %s32
    %s112 = ssub.s32 %s21, %s28
    %s113 = sor.u32 %s111, %s112
    %p114 = scmp.eq.s32.totalorder %s113, 0
    %s116 = sadd.s32 %s115, 1
    %s117 = scalar_select %p114, %s115, %s116
    %p120 = pneg %p114
    %p121 = scmp.eq.s32.totalorder %s13, 1
    %p122 = por %p120, %p121
    %p123 = scmp.ne.s32.totalorder %s115, %s118
    %p124 = scmp.eq.s32.totalorder %s13, 0
    %p125 = por %p123, %p124
    %p126 = scmp.ne.s32.totalorder %s115, %s118
    %p127 = scmp.eq.s32.totalorder %s18, 1
    %p128 = por %p126, %p127
    %p129 = scmp.ne.s32.totalorder %s118, %s119
    %p130 = scmp.eq.s32.totalorder %s18, 0
    %p131 = por %p129, %p130
    %p132 = scmp.ne.s32.totalorder %s118, %s119
    %p133 = scmp.eq.s32.totalorder %s19, 1
    %p134 = por %p132, %p133
    %p136 = scmp.ne.s32.totalorder %s119, %s135
    %p137 = scmp.eq.s32.totalorder %s19, 0
    %p138 = por %p136, %p137
    %s139 = ssub.s32 %s20, %s32
    %s140 = ssub.s32 %s21, %s28
    %s141 = sor.u32 %s139, %s140
    %p142 = scmp.eq.s32.totalorder %s141, 0
    %s144 = sadd.s32 %s143, 1
    %s145 = scalar_select %p142, %s143, %s144
    %p148 = pneg %p142
    %p149 = scmp.eq.s32.totalorder %s13, 1
    %p150 = por %p148, %p149
    %p151 = scmp.ne.s32.totalorder %s143, %s146
    %p152 = scmp.eq.s32.totalorder %s13, 0
    %p153 = por %p151, %p152
    %p154 = scmp.ne.s32.totalorder %s143, %s146
    %p155 = scmp.eq.s32.totalorder %s18, 1
    %p156 = por %p154, %p155
    %p157 = scmp.ne.s32.totalorder %s146, %s147
    %p158 = scmp.eq.s32.totalorder %s18, 0
    %p159 = por %p157, %p158
    %p160 = scmp.ne.s32.totalorder %s146, %s147
    %p161 = scmp.eq.s32.totalorder %s19, 1
    %p162 = por %p160, %p161
    %p164 = scmp.ne.s32.totalorder %s147, %s163
    %p165 = scmp.eq.s32.totalorder %s19, 0
    %p166 = por %p164, %p165
    %s167 = ssub.s32 %s20, %s32
    %s168 = ssub.s32 %s21, %s28
    %s169 = sor.u32 %s167, %s168
    %p170 = scmp.eq.s32.totalorder %s169, 0
    %s172 = sadd.s32 %s171, 1
    %s173 = scalar_select %p170, %s171, %s172
    %p176 = pneg %p170
    %p177 = scmp.eq.s32.totalorder %s13, 1
    %p178 = por %p176, %p177
    %p179 = scmp.ne.s32.totalorder %s171, %s174
    %p180 = scmp.eq.s32.totalorder %s13, 0
    %p181 = por %p179, %p180
    %p182 = scmp.ne.s32.totalorder %s171, %s174
    %p183 = scmp.eq.s32.totalorder %s18, 1
    %p184 = por %p182, %p183
    %p185 = scmp.ne.s32.totalorder %s174, %s175
    %p186 = scmp.eq.s32.totalorder %s18, 0
    %p187 = por %p185, %p186
    %p188 = scmp.ne.s32.totalorder %s174, %s175
    %p189 = scmp.eq.s32.totalorder %s19, 1
    %p190 = por %p188, %p189
    %p192 = scmp.ne.s32.totalorder %s175, %s191
    %p193 = scmp.eq.s32.totalorder %s19, 0
    %p194 = por %p192, %p193
    %s195 = ssub.s32 %s20, %s32
    %s196 = ssub.s32 %s21, %s28
    %s197 = sor.u32 %s195, %s196
    %p198 = scmp.eq.s32.totalorder %s197, 0
    %s200 = sadd.s32 %s199, 1
    %s201 = scalar_select %p198, %s199, %s200
    %p204 = pneg %p198
    %p205 = scmp.eq.s32.totalorder %s13, 1
    %p206 = por %p204, %p205
    %p207 = scmp.ne.s32.totalorder %s199, %s202
    %p208 = scmp.eq.s32.totalorder %s13, 0
    %p209 = por %p207, %p208
    %p210 = scmp.ne.s32.totalorder %s199, %s202
    %p211 = scmp.eq.s32.totalorder %s18, 1
    %p212 = por %p210, %p211
    %p213 = scmp.ne.s32.totalorder %s202, %s203
    %p214 = scmp.eq.s32.totalorder %s18, 0
    %p215 = por %p213, %p214
    %p216 = scmp.ne.s32.totalorder %s202, %s203
    %p217 = scmp.eq.s32.totalorder %s19, 1
    %p218 = por %p216, %p217
    %p220 = scmp.ne.s32.totalorder %s203, %s219
    %p221 = scmp.eq.s32.totalorder %s19, 0
    %p222 = por %p220, %p221
    %p223 = scmp.le.s32.totalorder 1, %s13
    %p224 = scmp.lt.s32.totalorder %s13, 3
    %p225 = pnand %p223, %p224
    %p226 = pneg %p225
    // Predicated region
    $region9: #{_forward_impl.3} parent=5 // pred_check
      _
    $region10: #{_forward_impl.3} parent=5 // pred_check_branch
      %228 = sbr.rel (%p225) target = $region12
    $region11: #{_forward_impl.3} parent=5 // pred_region
      %s229 = ssub.s32 %s13, 1
      // Predicated region
      $region13: #{_forward_impl.3} parent=11 // pred_check
        %p230 = pneg %p77
      $region14: #{_forward_impl.3} parent=11 // pred_check_branch
        %232 = sbr.rel (%p230) target = $region16
      $region15: #{_forward_impl.3} parent=11 // pred_region
        %p233 = scmp.lt.s32.totalorder %s23, 0
        %s234 = scalar_select %p233, %s23, 0
        %s235 = smul.addr %s234, 4
        %s236 = scalar_lea.vmem %s1, %s235
      $region16: #{_forward_impl.3} parent=11 // pred_fallthru
        _
      // Predicated region
      $region17: #{_forward_impl.3} parent=11 // pred_check
        %p237 = pneg %p103
      $region18: #{_forward_impl.3} parent=11 // pred_check_branch
        %239 = sbr.rel (%p237) target = $region20
      $region19: #{_forward_impl.3} parent=11 // pred_region
        %p240 = scmp.lt.s32.totalorder %s23, 0
        %s241 = scalar_select %p240, %s23, 0
        %s242 = smul.addr %s241, 4
        %s243 = scalar_lea.vmem %s2, %s242
      $region20: #{_forward_impl.3} parent=11 // pred_fallthru
        _
    $region12: #{_forward_impl.3} parent=5 // pred_fallthru
      _
    %p244 = scmp.lt.s32.totalorder %s13, 2
    // Predicated region
    $region21: #{_forward_impl.3} parent=5 // pred_check
      %p245 = pneg %p244
    $region22: #{_forward_impl.3} parent=5 // pred_check_branch
      %247 = sbr.rel (%p245) target = $region24
    $region23: #{_forward_impl.3} parent=5 // pred_region
      // Predicated region
      $region25: #{_forward_impl.3} parent=23 // pred_check
        %p248 = pneg %p45
      $region26: #{_forward_impl.3} parent=23 // pred_check_branch
        %250 = sbr.rel (%p248) target = $region28
      $region27: #{_forward_impl.3} parent=23 // pred_region
        %p251 = scmp.lt.s32.totalorder %s20, 1
        %s252 = scalar_select %p251, %s20, 1
        %s253 = smul.addr %s252, 54
        %s254 = smul.addr %s253, 4
        %s255 = scalar_lea.vmem %s0, %s254
      $region28: #{_forward_impl.3} parent=23 // pred_fallthru
        _
    $region24: #{_forward_impl.3} parent=5 // pred_fallthru
      _
    %p256 = scmp.le.s32.totalorder 1, %s13
    %p257 = scmp.lt.s32.totalorder %s13, 3
    %p258 = pnand %p256, %p257
    %p259 = pneg %p258
    // Predicated region
    $region29: #{_forward_impl.3} parent=5 // pred_check
      _
    $region30: #{_forward_impl.3} parent=5 // pred_check_branch
      %261 = sbr.rel (%p258) target = $region32
    $region31: #{_forward_impl.3} parent=5 // pred_region
      %s262 = ssub.s32 %s13, 1
      %p263 = scmp.lt.s32.totalorder %s22, 1
      %s264 = scalar_select %p263, %s22, 1
      %s265 = smul.addr %s264, 54
      %s266 = smul.addr %s265, 4
      %s267 = scalar_lea.vmem %s0, %s266
      %p268 = pneg %p51
      %p269 = pneg %p48
      %p270 = scmp.lt.s32.totalorder %s23, 0
      %s271 = scalar_select %p270, %s23, 0
      %s272 = smul.addr %s271, 4
      %s273 = scalar_lea.vmem %s1, %s272
      %p274 = pneg %p77
      %p275 = pneg %p74
      %p276 = scmp.lt.s32.totalorder %s23, 0
      %s277 = scalar_select %p276, %s23, 0
      %s278 = smul.addr %s277, 4
      %s279 = scalar_lea.vmem %s2, %s278
      %p280 = pneg %p103
      %p281 = pneg %p100
      %p282 = pneg %p131
      %p283 = pneg %p128
      %p284 = scmp.lt.s32.totalorder %s22, 1
      %s285 = scalar_select %p284, %s22, 1
      %p286 = scmp.lt.s32.totalorder %s23, 0
      %s287 = scalar_select %p286, %s23, 0
      %s288 = smul.addr %s285, 32
      %s289 = sadd.s32 %s287, %s288
      %s290 = smul.addr %s289, 4
      %s291 = scalar_lea.vmem %s3, %s290
      %p292 = pneg %p159
      %p293 = pneg %p156
      %p294 = scmp.lt.s32.totalorder %s22, 1
      %s295 = scalar_select %p294, %s22, 1
      %p296 = scmp.lt.s32.totalorder %s23, 0
      %s297 = scalar_select %p296, %s23, 0
      %s298 = sadd.s32 %s297, %s295
      %s299 = smul.addr %s298, 2
      %s300 = scalar_lea.vmem %s4, %s299
      %p301 = pneg %p187
      %p302 = pneg %p184
      %p303 = scmp.lt.s32.totalorder %s22, 1
      %s304 = scalar_select %p303, %s22, 1
      %p305 = scmp.lt.s32.totalorder %s23, 0
      %s306 = scalar_select %p305, %s23, 0
      %s307 = smul.addr %s304, 32
      %s308 = sadd.s32 %s306, %s307
      %s309 = smul.addr %s308, 4
      %s310 = scalar_lea.vmem %s5, %s309
      %p311 = pneg %p215
      %p312 = pneg %p212
      %p313 = scmp.lt.s32.totalorder %s22, 1
      %s314 = scalar_select %p313, %s22, 1
      %p315 = scmp.lt.s32.totalorder %s23, 0
      %s316 = scalar_select %p315, %s23, 0
      %s317 = sadd.s32 %s316, %s314
      %s318 = smul.addr %s317, 2
      %s319 = scalar_lea.vmem %s6, %s318
      %p320 = scmp.lt.s32.totalorder %s22, 1
      %s321 = scalar_select %p320, %s22, 1
      %s322 = smul.addr %s321, 54
      %s323 = smul.addr %s322, 4
      %s324 = scalar_lea.vmem %s0, %s323
      %p325 = scmp.lt.s32.totalorder %s23, 0
      %s326 = scalar_select %p325, %s23, 0
      %s327 = smul.addr %s326, 4
      %s328 = scalar_lea.vmem %s1, %s327
      %p329 = scmp.lt.s32.totalorder %s23, 0
      %s330 = scalar_select %p329, %s23, 0
      %s331 = smul.addr %s330, 4
      %s332 = scalar_lea.vmem %s2, %s331
      %p333 = scmp.lt.s32.totalorder %s22, 1
      %s334 = scalar_select %p333, %s22, 1
      %p335 = scmp.lt.s32.totalorder %s23, 0
      %s336 = scalar_select %p335, %s23, 0
      %s337 = smul.addr %s334, 32
      %s338 = sadd.s32 %s336, %s337
      %s339 = smul.addr %s338, 4
      %s340 = scalar_lea.vmem %s3, %s339
      %p341 = scmp.lt.s32.totalorder %s22, 1
      %s342 = scalar_select %p341, %s22, 1
      %p343 = scmp.lt.s32.totalorder %s23, 0
      %s344 = scalar_select %p343, %s23, 0
      %s345 = sadd.s32 %s344, %s342
      %s346 = smul.addr %s345, 2
      %s347 = scalar_lea.vmem %s4, %s346
      %p348 = scmp.lt.s32.totalorder %s22, 1
      %s349 = scalar_select %p348, %s22, 1
      %p350 = scmp.lt.s32.totalorder %s23, 0
      %s351 = scalar_select %p350, %s23, 0
      %s352 = smul.addr %s349, 32
      %s353 = sadd.s32 %s351, %s352
      %s354 = smul.addr %s353, 4
      %s355 = scalar_lea.vmem %s5, %s354
      %p356 = scmp.lt.s32.totalorder %s22, 1
      %s357 = scalar_select %p356, %s22, 1
      %p358 = scmp.lt.s32.totalorder %s23, 0
      %s359 = scalar_select %p358, %s23, 0
      %s360 = sadd.s32 %s359, %s357
      %s361 = smul.addr %s360, 2
      %s362 = scalar_lea.vmem %s6, %s361
      %p364 = scmp.eq.s32.totalorder %s23, 0
      // Predicated region
      $region33: #{_forward_impl.3} parent=31 // pred_check
        %p365 = pneg %p364
      $region34: #{_forward_impl.3} parent=31 // pred_check_branch
        %367 = sbr.rel (%p365) target = $region36
      $region35: #{_forward_impl.3} parent=31 // pred_region
        %v368 = vld [vmem:[%s324] sm:$0xf]
        %v369 = vld [vmem:[%s324 + $0x4] sm:$0xf]
        %v370 = vld [vmem:[%s324 + $0x8] sm:$0x1]
        %v371 = vld [vmem:[%s324 + $0xc] sm:$0xf]
        %v372 = vld [vmem:[%s324 + $0x10] sm:$0xf]
        %v373 = vld [vmem:[%s324 + $0x14] sm:$0x1]
        %v374 = vld [vmem:[%s324 + $0x18] sm:$0xf]
        %v375 = vld [vmem:[%s324 + $0x1c] sm:$0xf]
        %v376 = vld [vmem:[%s324 + $0x20] sm:$0x1]
        %v377 = vld [vmem:[%s324 + $0x24] sm:$0xf]
        %v378 = vld [vmem:[%s324 + $0x28] sm:$0xf]
        %v379 = vld [vmem:[%s324 + $0x2c] sm:$0x1]
        %v380 = vld [vmem:[%s324 + $0x30] sm:$0xf]
        %v381 = vld [vmem:[%s324 + $0x34] sm:$0xf]
        %v382 = vld [vmem:[%s324 + $0x38] sm:$0x1]
        %v383 = vld [vmem:[%s324 + $0x3c] sm:$0xf]
        %v384 = vld [vmem:[%s324 + $0x40] sm:$0xf]
        %v385 = vld [vmem:[%s324 + $0x44] sm:$0x1]
        %v386 = vld [vmem:[%s324 + $0x48] sm:$0xf]
        %v387 = vld [vmem:[%s324 + $0x4c] sm:$0xf]
        %v388 = vld [vmem:[%s324 + $0x50] sm:$0x1]
        %v389 = vld [vmem:[%s324 + $0x54] sm:$0xf]
        %v390 = vld [vmem:[%s324 + $0x58] sm:$0xf]
        %v391 = vld [vmem:[%s324 + $0x5c] sm:$0x1]
        %v392 = vld [vmem:[%s324 + $0x60] sm:$0xf]
        %v393 = vld [vmem:[%s324 + $0x64] sm:$0xf]
        %v394 = vld [vmem:[%s324 + $0x68] sm:$0x1]
        %v395 = vld [vmem:[%s324 + $0x6c] sm:$0xf]
        %v396 = vld [vmem:[%s324 + $0x70] sm:$0xf]
        %v397 = vld [vmem:[%s324 + $0x74] sm:$0x1]
        %v398 = vld [vmem:[%s324 + $0x78] sm:$0xf]
        %v399 = vld [vmem:[%s324 + $0x7c] sm:$0xf]
        %v400 = vld [vmem:[%s324 + $0x80] sm:$0x1]
        %v401 = vld [vmem:[%s324 + $0x84] sm:$0xf]
        %v402 = vld [vmem:[%s324 + $0x88] sm:$0xf]
        %v403 = vld [vmem:[%s324 + $0x8c] sm:$0x1]
        %v404 = vld [vmem:[%s324 + $0x90] sm:$0xf]
        %v405 = vld [vmem:[%s324 + $0x94] sm:$0xf]
        %v406 = vld [vmem:[%s324 + $0x98] sm:$0x1]
        %v407 = vld [vmem:[%s324 + $0x9c] sm:$0xf]
        %v408 = vld [vmem:[%s324 + $0xa0] sm:$0xf]
        %v409 = vld [vmem:[%s324 + $0xa4] sm:$0x1]
        %v410 = vld [vmem:[%s324 + $0xa8] sm:$0xf]
        %v411 = vld [vmem:[%s324 + $0xac] sm:$0xf]
        %v412 = vld [vmem:[%s324 + $0xb0] sm:$0x1]
        %v413 = vld [vmem:[%s324 + $0xb4] sm:$0xf]
        %v414 = vld [vmem:[%s324 + $0xb8] sm:$0xf]
        %v415 = vld [vmem:[%s324 + $0xbc] sm:$0x1]
        %v416 = vld [vmem:[%s324 + $0xc0] sm:$0xf]
        %v417 = vld [vmem:[%s324 + $0xc4] sm:$0xf]
        %v418 = vld [vmem:[%s324 + $0xc8] sm:$0x1]
        %v419 = vld [vmem:[%s324 + $0xcc] sm:$0xf]
        %v420 = vld [vmem:[%s324 + $0xd0] sm:$0xf]
        %v421 = vld [vmem:[%s324 + $0xd4] sm:$0x1]
        %v454 = vunpack.c.l.b16 %v368
        %v455 = vunpack.c.l.b16 %v369
        %v456 = vunpack.c.l.b16 %v371
        %v457 = vunpack.c.l.b16 %v372
        %v458 = vunpack.c.l.b16 %v374
        %v459 = vunpack.c.l.b16 %v375
        %v460 = vunpack.c.l.b16 %v377
        %v461 = vunpack.c.l.b16 %v378
        %v462 = vunpack.c.l.b16 %v380
        %v463 = vunpack.c.l.b16 %v381
        %v464 = vunpack.c.l.b16 %v383
        %v465 = vunpack.c.l.b16 %v384
        %v466 = vunpack.c.l.b16 %v386
        %v467 = vunpack.c.l.b16 %v387
        %v468 = vunpack.c.l.b16 %v389
        %v469 = vunpack.c.l.b16 %v390
        %v470 = vunpack.c.l.b16 %v392
        %v471 = vunpack.c.l.b16 %v393
        %v472 = vunpack.c.l.b16 %v395
        %v473 = vunpack.c.l.b16 %v396
        %v474 = vunpack.c.l.b16 %v398
        %v475 = vunpack.c.l.b16 %v399
        %v476 = vunpack.c.l.b16 %v401
        %v477 = vunpack.c.l.b16 %v402
        %v478 = vunpack.c.l.b16 %v404
        %v479 = vunpack.c.l.b16 %v405
        %v480 = vunpack.c.l.b16 %v407
        %v481 = vunpack.c.l.b16 %v408
        %v482 = vunpack.c.l.b16 %v410
        %v483 = vunpack.c.l.b16 %v411
        %v484 = vunpack.c.l.b16 %v413
        %v485 = vunpack.c.l.b16 %v414
        %v502 = vunpack.c.l.b16 %v370
        %v503 = vunpack.c.l.b16 %v373
        %v504 = vunpack.c.l.b16 %v376
        %v505 = vunpack.c.l.b16 %v379
        %v506 = vunpack.c.l.b16 %v382
        %v507 = vunpack.c.l.b16 %v385
        %v508 = vunpack.c.l.b16 %v388
        %v509 = vunpack.c.l.b16 %v391
        %v510 = vunpack.c.l.b16 %v394
        %v511 = vunpack.c.l.b16 %v397
        %v512 = vunpack.c.l.b16 %v400
        %v513 = vunpack.c.l.b16 %v403
        %v514 = vunpack.c.l.b16 %v406
        %v515 = vunpack.c.l.b16 %v409
        %v516 = vunpack.c.l.b16 %v412
        %v517 = vunpack.c.l.b16 %v415
        %v518 = vpack.c.b16 %v455, %v454
        %v519 = vpack.c.b16 %v502, %v502
        %v520 = vpack.c.b16 %v457, %v456
        %v521 = vpack.c.b16 %v503, %v503
        %v522 = vpack.c.b16 %v459, %v458
        %v523 = vpack.c.b16 %v504, %v504
        %v524 = vpack.c.b16 %v461, %v460
        %v525 = vpack.c.b16 %v505, %v505
        %v526 = vpack.c.b16 %v463, %v462
        %v527 = vpack.c.b16 %v506, %v506
        %v528 = vpack.c.b16 %v465, %v464
        %v529 = vpack.c.b16 %v507, %v507
        %v530 = vpack.c.b16 %v467, %v466
        %v531 = vpack.c.b16 %v508, %v508
        %v532 = vpack.c.b16 %v469, %v468
        %v533 = vpack.c.b16 %v509, %v509
        %v534 = vpack.c.b16 %v471, %v470
        %v535 = vpack.c.b16 %v510, %v510
        %v536 = vpack.c.b16 %v473, %v472
        %v537 = vpack.c.b16 %v511, %v511
        %v538 = vpack.c.b16 %v475, %v474
        %v539 = vpack.c.b16 %v512, %v512
        %v540 = vpack.c.b16 %v477, %v476
        %v541 = vpack.c.b16 %v513, %v513
        %v542 = vpack.c.b16 %v479, %v478
        %v543 = vpack.c.b16 %v514, %v514
        %v544 = vpack.c.b16 %v481, %v480
        %v545 = vpack.c.b16 %v515, %v515
        %v546 = vpack.c.b16 %v483, %v482
        %v547 = vpack.c.b16 %v516, %v516
        %v548 = vpack.c.b16 %v485, %v484
        %v549 = vpack.c.b16 %v517, %v517
        %vm550 = vsmask.f32 7424
        %v552 = vshrl.u32 %v518, 16
        %v554 = vshll.u32 %v518, 16
        %v556 = vrot.slane %v554, 1
        %v557 = vor.u32 %v552, %v556
        %v559 = vshll.u32 %v519, 16
        %v561 = vrot.slane %v559, 1
        %v562 = vsel %vm550, %v557, %v561
        %v564 = vshrl.u32 %v520, 16
        %v566 = vshll.u32 %v520, 16
        %v568 = vrot.slane %v566, 1
        %v569 = vor.u32 %v564, %v568
        %v571 = vshll.u32 %v521, 16
        %v573 = vrot.slane %v571, 1
        %v574 = vsel %vm550, %v569, %v573
        %v576 = vshrl.u32 %v522, 16
        %v578 = vshll.u32 %v522, 16
        %v580 = vrot.slane %v578, 1
        %v581 = vor.u32 %v576, %v580
        %v583 = vshll.u32 %v523, 16
        %v585 = vrot.slane %v583, 1
        %v586 = vsel %vm550, %v581, %v585
        %v588 = vshrl.u32 %v524, 16
        %v590 = vshll.u32 %v524, 16
        %v592 = vrot.slane %v590, 1
        %v593 = vor.u32 %v588, %v592
        %v595 = vshll.u32 %v525, 16
        %v597 = vrot.slane %v595, 1
        %v598 = vsel %vm550, %v593, %v597
        %v600 = vshrl.u32 %v526, 16
        %v602 = vshll.u32 %v526, 16
        %v604 = vrot.slane %v602, 1
        %v605 = vor.u32 %v600, %v604
        %v607 = vshll.u32 %v527, 16
        %v609 = vrot.slane %v607, 1
        %v610 = vsel %vm550, %v605, %v609
        %v612 = vshrl.u32 %v528, 16
        %v614 = vshll.u32 %v528, 16
        %v616 = vrot.slane %v614, 1
        %v617 = vor.u32 %v612, %v616
        %v619 = vshll.u32 %v529, 16
        %v621 = vrot.slane %v619, 1
        %v622 = vsel %vm550, %v617, %v621
        %v624 = vshrl.u32 %v530, 16
        %v626 = vshll.u32 %v530, 16
        %v628 = vrot.slane %v626, 1
        %v629 = vor.u32 %v624, %v628
        %v631 = vshll.u32 %v531, 16
        %v633 = vrot.slane %v631, 1
        %v634 = vsel %vm550, %v629, %v633
        %v636 = vshrl.u32 %v532, 16
        %v638 = vshll.u32 %v532, 16
        %v640 = vrot.slane %v638, 1
        %v641 = vor.u32 %v636, %v640
        %v643 = vshll.u32 %v533, 16
        %v645 = vrot.slane %v643, 1
        %v646 = vsel %vm550, %v641, %v645
        %v648 = vshrl.u32 %v534, 16
        %v650 = vshll.u32 %v534, 16
        %v652 = vrot.slane %v650, 1
        %v653 = vor.u32 %v648, %v652
        %v655 = vshll.u32 %v535, 16
        %v657 = vrot.slane %v655, 1
        %v658 = vsel %vm550, %v653, %v657
        %v660 = vshrl.u32 %v536, 16
        %v662 = vshll.u32 %v536, 16
        %v664 = vrot.slane %v662, 1
        %v665 = vor.u32 %v660, %v664
        %v667 = vshll.u32 %v537, 16
        %v669 = vrot.slane %v667, 1
        %v670 = vsel %vm550, %v665, %v669
        %v672 = vshrl.u32 %v538, 16
        %v674 = vshll.u32 %v538, 16
        %v676 = vrot.slane %v674, 1
        %v677 = vor.u32 %v672, %v676
        %v679 = vshll.u32 %v539, 16
        %v681 = vrot.slane %v679, 1
        %v682 = vsel %vm550, %v677, %v681
        %v684 = vshrl.u32 %v540, 16
        %v686 = vshll.u32 %v540, 16
        %v688 = vrot.slane %v686, 1
        %v689 = vor.u32 %v684, %v688
        %v691 = vshll.u32 %v541, 16
        %v693 = vrot.slane %v691, 1
        %v694 = vsel %vm550, %v689, %v693
        %v696 = vshrl.u32 %v542, 16
        %v698 = vshll.u32 %v542, 16
        %v700 = vrot.slane %v698, 1
        %v701 = vor.u32 %v696, %v700
        %v703 = vshll.u32 %v543, 16
        %v705 = vrot.slane %v703, 1
        %v706 = vsel %vm550, %v701, %v705
        %v708 = vshrl.u32 %v544, 16
        %v710 = vshll.u32 %v544, 16
        %v712 = vrot.slane %v710, 1
        %v713 = vor.u32 %v708, %v712
        %v715 = vshll.u32 %v545, 16
        %v717 = vrot.slane %v715, 1
        %v718 = vsel %vm550, %v713, %v717
        %v720 = vshrl.u32 %v546, 16
        %v722 = vshll.u32 %v546, 16
        %v724 = vrot.slane %v722, 1
        %v725 = vor.u32 %v720, %v724
        %v727 = vshll.u32 %v547, 16
        %v729 = vrot.slane %v727, 1
        %v730 = vsel %vm550, %v725, %v729
        %v732 = vshrl.u32 %v548, 16
        %v734 = vshll.u32 %v548, 16
        %v736 = vrot.slane %v734, 1
        %v737 = vor.u32 %v732, %v736
        %v739 = vshll.u32 %v549, 16
        %v741 = vrot.slane %v739, 1
        %v742 = vsel %vm550, %v737, %v741
        %vm743 = vcmask 1046528
        %v744 = vrot.slane %v518, 1
        %v745 = vrot.slane %v519, 1
        %v746 = vsel %vm743, %v744, %v745
        %v747 = vrot.slane %v520, 1
        %v748 = vrot.slane %v521, 1
        %v749 = vsel %vm743, %v747, %v748
        %v750 = vrot.slane %v522, 1
        %v751 = vrot.slane %v523, 1
        %v752 = vsel %vm743, %v750, %v751
        %v753 = vrot.slane %v524, 1
        %v754 = vrot.slane %v525, 1
        %v755 = vsel %vm743, %v753, %v754
        %v756 = vrot.slane %v526, 1
        %v757 = vrot.slane %v527, 1
        %v758 = vsel %vm743, %v756, %v757
        %v759 = vrot.slane %v528, 1
        %v760 = vrot.slane %v529, 1
        %v761 = vsel %vm743, %v759, %v760
        %v762 = vrot.slane %v530, 1
        %v763 = vrot.slane %v531, 1
        %v764 = vsel %vm743, %v762, %v763
        %v765 = vrot.slane %v532, 1
        %v766 = vrot.slane %v533, 1
        %v767 = vsel %vm743, %v765, %v766
        %v768 = vrot.slane %v534, 1
        %v769 = vrot.slane %v535, 1
        %v770 = vsel %vm743, %v768, %v769
        %v771 = vrot.slane %v536, 1
        %v772 = vrot.slane %v537, 1
        %v773 = vsel %vm743, %v771, %v772
        %v774 = vrot.slane %v538, 1
        %v775 = vrot.slane %v539, 1
        %v776 = vsel %vm743, %v774, %v775
        %v777 = vrot.slane %v540, 1
        %v778 = vrot.slane %v541, 1
        %v779 = vsel %vm743, %v777, %v778
        %v780 = vrot.slane %v542, 1
        %v781 = vrot.slane %v543, 1
        %v782 = vsel %vm743, %v780, %v781
        %v783 = vrot.slane %v544, 1
        %v784 = vrot.slane %v545, 1
        %v785 = vsel %vm743, %v783, %v784
        %v786 = vrot.slane %v546, 1
        %v787 = vrot.slane %v547, 1
        %v788 = vsel %vm743, %v786, %v787
        %v789 = vrot.slane %v548, 1
        %v790 = vrot.slane %v549, 1
        %v791 = vsel %vm743, %v789, %v790
        %v794 = vunpack.c.l.b16 %v416
        %v795 = vunpack.c.l.b16 %v417
        %v797 = vunpack.c.l.b16 %v418
        %v798 = vpack.c.b16 %v795, %v794
        %v799 = vpack.c.b16 %v797, %v797
        %v801 = vshrl.u32 %v798, 16
        %v803 = vshll.u32 %v798, 16
        %v805 = vrot.slane %v803, 1
        %v806 = vor.u32 %v801, %v805
        %v808 = vshll.u32 %v799, 16
        %v810 = vrot.slane %v808, 1
        %v811 = vsel %vm550, %v806, %v810
        %v812 = vrot.slane %v798, 1
        %v813 = vrot.slane %v799, 1
        %v814 = vsel %vm743, %v812, %v813
        %v817 = vunpack.c.l.b16 %v419
        %v818 = vunpack.c.l.b16 %v420
        %v820 = vunpack.c.l.b16 %v421
        %v821 = vpack.c.b16 %v818, %v817
        %v822 = vpack.c.b16 %v820, %v820
        %v824 = vshrl.u32 %v821, 16
        %v826 = vshll.u32 %v821, 16
        %v828 = vrot.slane %v826, 1
        %v829 = vor.u32 %v824, %v828
        %v831 = vshll.u32 %v822, 16
        %v833 = vrot.slane %v831, 1
        %v834 = vsel %vm550, %v829, %v833
        %v835 = vrot.slane %v821, 1
        %v836 = vrot.slane %v822, 1
        %v837 = vsel %vm743, %v835, %v836
        %v838 = vunpack.c.l.b16 %v562
        %v839 = vunpack.c.l.b16 %v746
        %v840 = vunpack.c.l.b16 %v574
        %v841 = vunpack.c.l.b16 %v749
        %v842 = vunpack.c.l.b16 %v586
        %v843 = vunpack.c.l.b16 %v752
        %v844 = vunpack.c.h.b16 %v562
        %v845 = vunpack.c.h.b16 %v746
        %v846 = vunpack.c.h.b16 %v574
        %v847 = vunpack.c.h.b16 %v749
        %v848 = vunpack.c.h.b16 %v586
        %v849 = vunpack.c.h.b16 %v752
        %v850 = vunpack.c.l.b16 %v598
        %v851 = vunpack.c.l.b16 %v755
        %v852 = vunpack.c.h.b16 %v598
        %v853 = vunpack.c.h.b16 %v755
        %v854 = vunpack.c.l.b16 %v610
        %v855 = vunpack.c.l.b16 %v758
        %v856 = vunpack.c.h.b16 %v610
        %v857 = vunpack.c.h.b16 %v758
        %v858 = vunpack.c.l.b16 %v622
        %v859 = vunpack.c.l.b16 %v761
        %v860 = vunpack.c.h.b16 %v622
        %v861 = vunpack.c.h.b16 %v761
        %v862 = vunpack.c.l.b16 %v634
        %v863 = vunpack.c.l.b16 %v764
        %v864 = vunpack.c.h.b16 %v634
        %v865 = vunpack.c.h.b16 %v764
        %v866 = vunpack.c.l.b16 %v646
        %v867 = vunpack.c.l.b16 %v767
        %v868 = vunpack.c.h.b16 %v646
        %v869 = vunpack.c.h.b16 %v767
        %v870 = vunpack.c.l.b16 %v658
        %v871 = vunpack.c.l.b16 %v770
        %v872 = vunpack.c.h.b16 %v658
        %v873 = vunpack.c.h.b16 %v770
        %v874 = vunpack.c.l.b16 %v670
        %v875 = vunpack.c.l.b16 %v773
        %v876 = vunpack.c.h.b16 %v670
        %v877 = vunpack.c.h.b16 %v773
        %v878 = vunpack.c.l.b16 %v682
        %v879 = vunpack.c.l.b16 %v776
        %v880 = vunpack.c.h.b16 %v682
        %v881 = vunpack.c.h.b16 %v776
        %v882 = vunpack.c.l.b16 %v694
        %v883 = vunpack.c.l.b16 %v779
        %v884 = vunpack.c.h.b16 %v694
        %v885 = vunpack.c.h.b16 %v779
        %v886 = vunpack.c.l.b16 %v706
        %v887 = vunpack.c.l.b16 %v782
        %v888 = vunpack.c.h.b16 %v706
        %v889 = vunpack.c.h.b16 %v782
        %v890 = vunpack.c.l.b16 %v718
        %v891 = vunpack.c.l.b16 %v785
        %v892 = vunpack.c.h.b16 %v718
        %v893 = vunpack.c.h.b16 %v785
        %v894 = vunpack.c.l.b16 %v730
        %v895 = vunpack.c.l.b16 %v788
        %v896 = vunpack.c.h.b16 %v730
        %v897 = vunpack.c.h.b16 %v788
        %v898 = vunpack.c.l.b16 %v742
        %v899 = vunpack.c.l.b16 %v791
        %v900 = vunpack.c.h.b16 %v742
        %v901 = vunpack.c.h.b16 %v791
        %v902 = vunpack.c.l.b16 %v811
        %v903 = vunpack.c.l.b16 %v814
        %v904 = vunpack.c.h.b16 %v811
        %v905 = vunpack.c.h.b16 %v814
        %v906 = vunpack.c.l.b16 %v834
        %v907 = vunpack.c.l.b16 %v837
        %v908 = vunpack.c.h.b16 %v834
        %v909 = vunpack.c.h.b16 %v837
        %v910 = vpack.c.b16 %v838, %v454
        %v911 = vpack.c.b16 %v456, %v839
        %v912 = vpack.c.b16 %v841, %v840
        %v913 = vpack.c.b16 %v842, %v458
        %v914 = vpack.c.b16 %v843, %v843
        %v915 = vpack.c.b16 %v844, %v455
        %v916 = vpack.c.b16 %v457, %v845
        %v917 = vpack.c.b16 %v847, %v846
        %v918 = vpack.c.b16 %v848, %v459
        %v919 = vpack.c.b16 %v849, %v849
        %v920 = vpack.c.b16 %v840, %v456
        %v921 = vpack.c.b16 %v458, %v841
        %v922 = vpack.c.b16 %v843, %v842
        %v923 = vpack.c.b16 %v850, %v460
        %v924 = vpack.c.b16 %v851, %v851
        %v925 = vpack.c.b16 %v846, %v457
        %v926 = vpack.c.b16 %v459, %v847
        %v927 = vpack.c.b16 %v849, %v848
        %v928 = vpack.c.b16 %v852, %v461
        %v929 = vpack.c.b16 %v853, %v853
        %v930 = vpack.c.b16 %v460, %v843
        %v931 = vpack.c.b16 %v851, %v850
        %v932 = vpack.c.b16 %v854, %v462
        %v933 = vpack.c.b16 %v855, %v855
        %v934 = vpack.c.b16 %v461, %v849
        %v935 = vpack.c.b16 %v853, %v852
        %v936 = vpack.c.b16 %v856, %v463
        %v937 = vpack.c.b16 %v857, %v857
        %v938 = vpack.c.b16 %v462, %v851
        %v939 = vpack.c.b16 %v855, %v854
        %v940 = vpack.c.b16 %v858, %v464
        %v941 = vpack.c.b16 %v859, %v859
        %v942 = vpack.c.b16 %v463, %v853
        %v943 = vpack.c.b16 %v857, %v856
        %v944 = vpack.c.b16 %v860, %v465
        %v945 = vpack.c.b16 %v861, %v861
        %v946 = vpack.c.b16 %v464, %v855
        %v947 = vpack.c.b16 %v859, %v858
        %v948 = vpack.c.b16 %v862, %v466
        %v949 = vpack.c.b16 %v863, %v863
        %v950 = vpack.c.b16 %v465, %v857
        %v951 = vpack.c.b16 %v861, %v860
        %v952 = vpack.c.b16 %v864, %v467
        %v953 = vpack.c.b16 %v865, %v865
        %v954 = vpack.c.b16 %v466, %v859
        %v955 = vpack.c.b16 %v863, %v862
        %v956 = vpack.c.b16 %v866, %v468
        %v957 = vpack.c.b16 %v867, %v867
        %v958 = vpack.c.b16 %v467, %v861
        %v959 = vpack.c.b16 %v865, %v864
        %v960 = vpack.c.b16 %v868, %v469
        %v961 = vpack.c.b16 %v869, %v869
        %v962 = vpack.c.b16 %v468, %v863
        %v963 = vpack.c.b16 %v867, %v866
        %v964 = vpack.c.b16 %v870, %v470
        %v965 = vpack.c.b16 %v871, %v871
        %v966 = vpack.c.b16 %v469, %v865
        %v967 = vpack.c.b16 %v869, %v868
        %v968 = vpack.c.b16 %v872, %v471
        %v969 = vpack.c.b16 %v873, %v873
        %v970 = vpack.c.b16 %v470, %v867
        %v971 = vpack.c.b16 %v871, %v870
        %v972 = vpack.c.b16 %v874, %v472
        %v973 = vpack.c.b16 %v875, %v875
        %v974 = vpack.c.b16 %v471, %v869
        %v975 = vpack.c.b16 %v873, %v872
        %v976 = vpack.c.b16 %v876, %v473
        %v977 = vpack.c.b16 %v877, %v877
        %v978 = vpack.c.b16 %v472, %v871
        %v979 = vpack.c.b16 %v875, %v874
        %v980 = vpack.c.b16 %v878, %v474
        %v981 = vpack.c.b16 %v879, %v879
        %v982 = vpack.c.b16 %v473, %v873
        %v983 = vpack.c.b16 %v877, %v876
        %v984 = vpack.c.b16 %v880, %v475
        %v985 = vpack.c.b16 %v881, %v881
        %v986 = vpack.c.b16 %v474, %v875
        %v987 = vpack.c.b16 %v879, %v878
        %v988 = vpack.c.b16 %v882, %v476
        %v989 = vpack.c.b16 %v883, %v883
        %v990 = vpack.c.b16 %v475, %v877
        %v991 = vpack.c.b16 %v881, %v880
        %v992 = vpack.c.b16 %v884, %v477
        %v993 = vpack.c.b16 %v885, %v885
        %v994 = vpack.c.b16 %v476, %v879
        %v995 = vpack.c.b16 %v883, %v882
        %v996 = vpack.c.b16 %v886, %v478
        %v997 = vpack.c.b16 %v887, %v887
        %v998 = vpack.c.b16 %v477, %v881
        %v999 = vpack.c.b16 %v885, %v884
        %v1000 = vpack.c.b16 %v888, %v479
        %v1001 = vpack.c.b16 %v889, %v889
        %v1002 = vpack.c.b16 %v478, %v883
        %v1003 = vpack.c.b16 %v887, %v886
        %v1004 = vpack.c.b16 %v890, %v480
        %v1005 = vpack.c.b16 %v891, %v891
        %v1006 = vpack.c.b16 %v479, %v885
        %v1007 = vpack.c.b16 %v889, %v888
        %v1008 = vpack.c.b16 %v892, %v481
        %v1009 = vpack.c.b16 %v893, %v893
        %v1010 = vpack.c.b16 %v480, %v887
        %v1011 = vpack.c.b16 %v891, %v890
        %v1012 = vpack.c.b16 %v894, %v482
        %v1013 = vpack.c.b16 %v895, %v895
        %v1014 = vpack.c.b16 %v481, %v889
        %v1015 = vpack.c.b16 %v893, %v892
        %v1016 = vpack.c.b16 %v896, %v483
        %v1017 = vpack.c.b16 %v897, %v897
        %v1018 = vpack.c.b16 %v482, %v891
        %v1019 = vpack.c.b16 %v895, %v894
        %v1020 = vpack.c.b16 %v898, %v484
        %v1021 = vpack.c.b16 %v899, %v899
        %v1022 = vpack.c.b16 %v483, %v893
        %v1023 = vpack.c.b16 %v897, %v896
        %v1024 = vpack.c.b16 %v900, %v485
        %v1025 = vpack.c.b16 %v901, %v901
        %v1026 = vpack.c.b16 %v484, %v895
        %v1027 = vpack.c.b16 %v899, %v898
        %v1028 = vpack.c.b16 %v902, %v794
        %v1029 = vpack.c.b16 %v903, %v903
        %v1030 = vpack.c.b16 %v485, %v897
        %v1031 = vpack.c.b16 %v901, %v900
        %v1032 = vpack.c.b16 %v904, %v795
        %v1033 = vpack.c.b16 %v905, %v905
        %v1034 = vpack.c.b16 %v794, %v899
        %v1035 = vpack.c.b16 %v903, %v902
        %v1036 = vpack.c.b16 %v906, %v817
        %v1037 = vpack.c.b16 %v907, %v907
        %v1038 = vpack.c.b16 %v795, %v901
        %v1039 = vpack.c.b16 %v905, %v904
        %v1040 = vpack.c.b16 %v908, %v818
        %v1041 = vpack.c.b16 %v909, %v909
        %1174 = vst [vmem:[#allocation2] sm:$0xff] %v910
        %1175 = vst [vmem:[#allocation2 + $0x8] sm:$0xff] %v911
        %1176 = vst [vmem:[#allocation2 + $0x10] sm:$0xff] %v912
        %1177 = vst [vmem:[#allocation2 + $0x18] sm:$0xff] %v913
        %1178 = vst [vmem:[#allocation2 + $0x20] sm:$0xf] %v914
        %1179 = vst [vmem:[#allocation2 + $0x24] sm:$0xff] %v915
        %1180 = vst [vmem:[#allocation2 + $0x2c] sm:$0xff] %v916
        %1181 = vst [vmem:[#allocation2 + $0x34] sm:$0xff] %v917
        %1182 = vst [vmem:[#allocation2 + $0x3c] sm:$0xff] %v918
        %1183 = vst [vmem:[#allocation2 + $0x44] sm:$0xf] %v919
        %1184 = vst [vmem:[#allocation2 + $0x48] sm:$0xff] %v920
        %1185 = vst [vmem:[#allocation2 + $0x50] sm:$0xff] %v921
        %1186 = vst [vmem:[#allocation2 + $0x58] sm:$0xff] %v922
        %1187 = vst [vmem:[#allocation2 + $0x60] sm:$0xff] %v923
        %1188 = vst [vmem:[#allocation2 + $0x68] sm:$0xf] %v924
        %1189 = vst [vmem:[#allocation2 + $0x6c] sm:$0xff] %v925
        %1190 = vst [vmem:[#allocation2 + $0x74] sm:$0xff] %v926
        %1191 = vst [vmem:[#allocation2 + $0x7c] sm:$0xff] %v927
        %1192 = vst [vmem:[#allocation2 + $0x84] sm:$0xff] %v928
        %1193 = vst [vmem:[#allocation2 + $0x8c] sm:$0xf] %v929
        %1194 = vst [vmem:[#allocation2 + $0x90] sm:$0xff] %v913
        %1195 = vst [vmem:[#allocation2 + $0x98] sm:$0xff] %v930
        %1196 = vst [vmem:[#allocation2 + $0xa0] sm:$0xff] %v931
        %1197 = vst [vmem:[#allocation2 + $0xa8] sm:$0xff] %v932
        %1198 = vst [vmem:[#allocation2 + $0xb0] sm:$0xf] %v933
        %1199 = vst [vmem:[#allocation2 + $0xb4] sm:$0xff] %v918
        %1200 = vst [vmem:[#allocation2 + $0xbc] sm:$0xff] %v934
        %1201 = vst [vmem:[#allocation2 + $0xc4] sm:$0xff] %v935
        %1202 = vst [vmem:[#allocation2 + $0xcc] sm:$0xff] %v936
        %1203 = vst [vmem:[#allocation2 + $0xd4] sm:$0xf] %v937
        %1204 = vst [vmem:[#allocation2 + $0xd8] sm:$0xff] %v923
        %1205 = vst [vmem:[#allocation2 + $0xe0] sm:$0xff] %v938
        %1206 = vst [vmem:[#allocation2 + $0xe8] sm:$0xff] %v939
        %1207 = vst [vmem:[#allocation2 + $0xf0] sm:$0xff] %v940
        %1208 = vst [vmem:[#allocation2 + $0xf8] sm:$0xf] %v941
        %1209 = vst [vmem:[#allocation2 + $0xfc] sm:$0xff] %v928
        %1210 = vst [vmem:[#allocation2 + $0x104] sm:$0xff] %v942
        %1211 = vst [vmem:[#allocation2 + $0x10c] sm:$0xff] %v943
        %1212 = vst [vmem:[#allocation2 + $0x114] sm:$0xff] %v944
        %1213 = vst [vmem:[#allocation2 + $0x11c] sm:$0xf] %v945
        %1214 = vst [vmem:[#allocation2 + $0x120] sm:$0xff] %v932
        %1215 = vst [vmem:[#allocation2 + $0x128] sm:$0xff] %v946
        %1216 = vst [vmem:[#allocation2 + $0x130] sm:$0xff] %v947
        %1217 = vst [vmem:[#allocation2 + $0x138] sm:$0xff] %v948
        %1218 = vst [vmem:[#allocation2 + $0x140] sm:$0xf] %v949
        %1219 = vst [vmem:[#allocation2 + $0x144] sm:$0xff] %v936
        %1220 = vst [vmem:[#allocation2 + $0x14c] sm:$0xff] %v950
        %1221 = vst [vmem:[#allocation2 + $0x154] sm:$0xff] %v951
        %1222 = vst [vmem:[#allocation2 + $0x15c] sm:$0xff] %v952
        %1223 = vst [vmem:[#allocation2 + $0x164] sm:$0xf] %v953
        %1224 = vst [vmem:[#allocation2 + $0x168] sm:$0xff] %v940
        %1225 = vst [vmem:[#allocation2 + $0x170] sm:$0xff] %v954
        %1226 = vst [vmem:[#allocation2 + $0x178] sm:$0xff] %v955
        %1227 = vst [vmem:[#allocation2 + $0x180] sm:$0xff] %v956
        %1228 = vst [vmem:[#allocation2 + $0x188] sm:$0xf] %v957
        %1229 = vst [vmem:[#allocation2 + $0x18c] sm:$0xff] %v944
        %1230 = vst [vmem:[#allocation2 + $0x194] sm:$0xff] %v958
        %1231 = vst [vmem:[#allocation2 + $0x19c] sm:$0xff] %v959
        %1232 = vst [vmem:[#allocation2 + $0x1a4] sm:$0xff] %v960
        %1233 = vst [vmem:[#allocation2 + $0x1ac] sm:$0xf] %v961
        %1234 = vst [vmem:[#allocation2 + $0x1b0] sm:$0xff] %v948
        %1235 = vst [vmem:[#allocation2 + $0x1b8] sm:$0xff] %v962
        %1236 = vst [vmem:[#allocation2 + $0x1c0] sm:$0xff] %v963
        %1237 = vst [vmem:[#allocation2 + $0x1c8] sm:$0xff] %v964
        %1238 = vst [vmem:[#allocation2 + $0x1d0] sm:$0xf] %v965
        %1239 = vst [vmem:[#allocation2 + $0x1d4] sm:$0xff] %v952
        %1240 = vst [vmem:[#allocation2 + $0x1dc] sm:$0xff] %v966
        %1241 = vst [vmem:[#allocation2 + $0x1e4] sm:$0xff] %v967
        %1242 = vst [vmem:[#allocation2 + $0x1ec] sm:$0xff] %v968
        %1243 = vst [vmem:[#allocation2 + $0x1f4] sm:$0xf] %v969
        %1244 = vst [vmem:[#allocation2 + $0x1f8] sm:$0xff] %v956
        %1245 = vst [vmem:[#allocation2 + $0x200] sm:$0xff] %v970
        %1246 = vst [vmem:[#allocation2 + $0x208] sm:$0xff] %v971
        %1247 = vst [vmem:[#allocation2 + $0x210] sm:$0xff] %v972
        %1248 = vst [vmem:[#allocation2 + $0x218] sm:$0xf] %v973
        %1249 = vst [vmem:[#allocation2 + $0x21c] sm:$0xff] %v960
        %1250 = vst [vmem:[#allocation2 + $0x224] sm:$0xff] %v974
        %1251 = vst [vmem:[#allocation2 + $0x22c] sm:$0xff] %v975
        %1252 = vst [vmem:[#allocation2 + $0x234] sm:$0xff] %v976
        %1253 = vst [vmem:[#allocation2 + $0x23c] sm:$0xf] %v977
        %1254 = vst [vmem:[#allocation2 + $0x240] sm:$0xff] %v964
        %1255 = vst [vmem:[#allocation2 + $0x248] sm:$0xff] %v978
        %1256 = vst [vmem:[#allocation2 + $0x250] sm:$0xff] %v979
        %1257 = vst [vmem:[#allocation2 + $0x258] sm:$0xff] %v980
        %1258 = vst [vmem:[#allocation2 + $0x260] sm:$0xf] %v981
        %1259 = vst [vmem:[#allocation2 + $0x264] sm:$0xff] %v968
        %1260 = vst [vmem:[#allocation2 + $0x26c] sm:$0xff] %v982
        %1261 = vst [vmem:[#allocation2 + $0x274] sm:$0xff] %v983
        %1262 = vst [vmem:[#allocation2 + $0x27c] sm:$0xff] %v984
        %1263 = vst [vmem:[#allocation2 + $0x284] sm:$0xf] %v985
        %1264 = vst [vmem:[#allocation2 + $0x288] sm:$0xff] %v972
        %1265 = vst [vmem:[#allocation2 + $0x290] sm:$0xff] %v986
        %1266 = vst [vmem:[#allocation2 + $0x298] sm:$0xff] %v987
        %1267 = vst [vmem:[#allocation2 + $0x2a0] sm:$0xff] %v988
        %1268 = vst [vmem:[#allocation2 + $0x2a8] sm:$0xf] %v989
        %1269 = vst [vmem:[#allocation2 + $0x2ac] sm:$0xff] %v976
        %1270 = vst [vmem:[#allocation2 + $0x2b4] sm:$0xff] %v990
        %1271 = vst [vmem:[#allocation2 + $0x2bc] sm:$0xff] %v991
        %1272 = vst [vmem:[#allocation2 + $0x2c4] sm:$0xff] %v992
        %1273 = vst [vmem:[#allocation2 + $0x2cc] sm:$0xf] %v993
        %1274 = vst [vmem:[#allocation2 + $0x2d0] sm:$0xff] %v980
        %1275 = vst [vmem:[#allocation2 + $0x2d8] sm:$0xff] %v994
        %1276 = vst [vmem:[#allocation2 + $0x2e0] sm:$0xff] %v995
        %1277 = vst [vmem:[#allocation2 + $0x2e8] sm:$0xff] %v996
        %1278 = vst [vmem:[#allocation2 + $0x2f0] sm:$0xf] %v997
        %1279 = vst [vmem:[#allocation2 + $0x2f4] sm:$0xff] %v984
        %1280 = vst [vmem:[#allocation2 + $0x2fc] sm:$0xff] %v998
        %1281 = vst [vmem:[#allocation2 + $0x304] sm:$0xff] %v999
        %1282 = vst [vmem:[#allocation2 + $0x30c] sm:$0xff] %v1000
        %1283 = vst [vmem:[#allocation2 + $0x314] sm:$0xf] %v1001
        %1284 = vst [vmem:[#allocation2 + $0x318] sm:$0xff] %v988
        %1285 = vst [vmem:[#allocation2 + $0x320] sm:$0xff] %v1002
        %1286 = vst [vmem:[#allocation2 + $0x328] sm:$0xff] %v1003
        %1287 = vst [vmem:[#allocation2 + $0x330] sm:$0xff] %v1004
        %1288 = vst [vmem:[#allocation2 + $0x338] sm:$0xf] %v1005
        %1289 = vst [vmem:[#allocation2 + $0x33c] sm:$0xff] %v992
        %1290 = vst [vmem:[#allocation2 + $0x344] sm:$0xff] %v1006
        %1291 = vst [vmem:[#allocation2 + $0x34c] sm:$0xff] %v1007
        %1292 = vst [vmem:[#allocation2 + $0x354] sm:$0xff] %v1008
        %1293 = vst [vmem:[#allocation2 + $0x35c] sm:$0xf] %v1009
        %1294 = vst [vmem:[#allocation2 + $0x360] sm:$0xff] %v996
        %1295 = vst [vmem:[#allocation2 + $0x368] sm:$0xff] %v1010
        %1296 = vst [vmem:[#allocation2 + $0x370] sm:$0xff] %v1011
        %1297 = vst [vmem:[#allocation2 + $0x378] sm:$0xff] %v1012
        %1298 = vst [vmem:[#allocation2 + $0x380] sm:$0xf] %v1013
        %1299 = vst [vmem:[#allocation2 + $0x384] sm:$0xff] %v1000
        %1300 = vst [vmem:[#allocation2 + $0x38c] sm:$0xff] %v1014
        %1301 = vst [vmem:[#allocation2 + $0x394] sm:$0xff] %v1015
        %1302 = vst [vmem:[#allocation2 + $0x39c] sm:$0xff] %v1016
        %1303 = vst [vmem:[#allocation2 + $0x3a4] sm:$0xf] %v1017
        %1304 = vst [vmem:[#allocation2 + $0x3a8] sm:$0xff] %v1004
        %1305 = vst [vmem:[#allocation2 + $0x3b0] sm:$0xff] %v1018
        %1306 = vst [vmem:[#allocation2 + $0x3b8] sm:$0xff] %v1019
        %1307 = vst [vmem:[#allocation2 + $0x3c0] sm:$0xff] %v1020
        %1308 = vst [vmem:[#allocation2 + $0x3c8] sm:$0xf] %v1021
        %1309 = vst [vmem:[#allocation2 + $0x3cc] sm:$0xff] %v1008
        %1310 = vst [vmem:[#allocation2 + $0x3d4] sm:$0xff] %v1022
        %1311 = vst [vmem:[#allocation2 + $0x3dc] sm:$0xff] %v1023
        %1312 = vst [vmem:[#allocation2 + $0x3e4] sm:$0xff] %v1024
        %1313 = vst [vmem:[#allocation2 + $0x3ec] sm:$0xf] %v1025
        %1314 = vst [vmem:[#allocation2 + $0x3f0] sm:$0xff] %v1012
        %1315 = vst [vmem:[#allocation2 + $0x3f8] sm:$0xff] %v1026
        %1316 = vst [vmem:[#allocation2 + $0x400] sm:$0xff] %v1027
        %1317 = vst [vmem:[#allocation2 + $0x408] sm:$0xff] %v1028
        %1318 = vst [vmem:[#allocation2 + $0x410] sm:$0xf] %v1029
        %1319 = vst [vmem:[#allocation2 + $0x414] sm:$0xff] %v1016
        %1320 = vst [vmem:[#allocation2 + $0x41c] sm:$0xff] %v1030
        %1321 = vst [vmem:[#allocation2 + $0x424] sm:$0xff] %v1031
        %1322 = vst [vmem:[#allocation2 + $0x42c] sm:$0xff] %v1032
        %1323 = vst [vmem:[#allocation2 + $0x434] sm:$0xf] %v1033
        %1324 = vst [vmem:[#allocation2 + $0x438] sm:$0xff] %v1020
        %1325 = vst [vmem:[#allocation2 + $0x440] sm:$0xff] %v1034
        %1326 = vst [vmem:[#allocation2 + $0x448] sm:$0xff] %v1035
        %1327 = vst [vmem:[#allocation2 + $0x450] sm:$0xff] %v1036
        %1328 = vst [vmem:[#allocation2 + $0x458] sm:$0xf] %v1037
        %1329 = vst [vmem:[#allocation2 + $0x45c] sm:$0xff] %v1024
        %1330 = vst [vmem:[#allocation2 + $0x464] sm:$0xff] %v1038
        %1331 = vst [vmem:[#allocation2 + $0x46c] sm:$0xff] %v1039
        %1332 = vst [vmem:[#allocation2 + $0x474] sm:$0xff] %v1040
        %1333 = vst [vmem:[#allocation2 + $0x47c] sm:$0xf] %v1041
      $region36: #{_forward_impl.3} parent=31 // pred_fallthru
        _
      %v1334 = vld [vmem:[#allocation2] sm:$0xff]
      %v1335 = vld [vmem:[#allocation2 + $0x8] sm:$0xff]
      %v1336 = vld [vmem:[#allocation2 + $0x10] sm:$0xff]
      %v1337 = vld [vmem:[#allocation2 + $0x18] sm:$0xff]
      %v1338 = vld [vmem:[#allocation2 + $0x20] sm:$0xf]
      %v1339 = vld [vmem:[#allocation2 + $0x24] sm:$0xff]
      %v1340 = vld [vmem:[#allocation2 + $0x2c] sm:$0xff]
      %v1341 = vld [vmem:[#allocation2 + $0x34] sm:$0xff]
      %v1342 = vld [vmem:[#allocation2 + $0x3c] sm:$0xff]
      %v1343 = vld [vmem:[#allocation2 + $0x44] sm:$0xf]
      %v1344 = vld [vmem:[#allocation2 + $0x48] sm:$0xff]
      %v1345 = vld [vmem:[#allocation2 + $0x50] sm:$0xff]
      %v1346 = vld [vmem:[#allocation2 + $0x58] sm:$0xff]
      %v1347 = vld [vmem:[#allocation2 + $0x60] sm:$0xff]
      %v1348 = vld [vmem:[#allocation2 + $0x68] sm:$0xf]
      %v1349 = vld [vmem:[#allocation2 + $0x6c] sm:$0xff]
      %v1350 = vld [vmem:[#allocation2 + $0x74] sm:$0xff]
      %v1351 = vld [vmem:[#allocation2 + $0x7c] sm:$0xff]
      %v1352 = vld [vmem:[#allocation2 + $0x84] sm:$0xff]
      %v1353 = vld [vmem:[#allocation2 + $0x8c] sm:$0xf]
      %v1354 = vld [vmem:[#allocation2 + $0x90] sm:$0xff]
      %v1355 = vld [vmem:[#allocation2 + $0x98] sm:$0xff]
      %v1356 = vld [vmem:[#allocation2 + $0xa0] sm:$0xff]
      %v1357 = vld [vmem:[#allocation2 + $0xa8] sm:$0xff]
      %v1358 = vld [vmem:[#allocation2 + $0xb0] sm:$0xf]
      %v1359 = vld [vmem:[#allocation2 + $0xb4] sm:$0xff]
      %v1360 = vld [vmem:[#allocation2 + $0xbc] sm:$0xff]
      %v1361 = vld [vmem:[#allocation2 + $0xc4] sm:$0xff]
      %v1362 = vld [vmem:[#allocation2 + $0xcc] sm:$0xff]
      %v1363 = vld [vmem:[#allocation2 + $0xd4] sm:$0xf]
      %v1364 = vld [vmem:[#allocation2 + $0xd8] sm:$0xff]
      %v1365 = vld [vmem:[#allocation2 + $0xe0] sm:$0xff]
      %v1366 = vld [vmem:[#allocation2 + $0xe8] sm:$0xff]
      %v1367 = vld [vmem:[#allocation2 + $0xf0] sm:$0xff]
      %v1368 = vld [vmem:[#allocation2 + $0xf8] sm:$0xf]
      %v1369 = vld [vmem:[#allocation2 + $0xfc] sm:$0xff]
      %v1370 = vld [vmem:[#allocation2 + $0x104] sm:$0xff]
      %v1371 = vld [vmem:[#allocation2 + $0x10c] sm:$0xff]
      %v1372 = vld [vmem:[#allocation2 + $0x114] sm:$0xff]
      %v1373 = vld [vmem:[#allocation2 + $0x11c] sm:$0xf]
      %v1374 = vld [vmem:[#allocation2 + $0x120] sm:$0xff]
      %v1375 = vld [vmem:[#allocation2 + $0x128] sm:$0xff]
      %v1376 = vld [vmem:[#allocation2 + $0x130] sm:$0xff]
      %v1377 = vld [vmem:[#allocation2 + $0x138] sm:$0xff]
      %v1378 = vld [vmem:[#allocation2 + $0x140] sm:$0xf]
      %v1379 = vld [vmem:[#allocation2 + $0x144] sm:$0xff]
      %v1380 = vld [vmem:[#allocation2 + $0x14c] sm:$0xff]
      %v1381 = vld [vmem:[#allocation2 + $0x154] sm:$0xff]
      %v1382 = vld [vmem:[#allocation2 + $0x15c] sm:$0xff]
      %v1383 = vld [vmem:[#allocation2 + $0x164] sm:$0xf]
      %v1384 = vld [vmem:[#allocation2 + $0x168] sm:$0xff]
      %v1385 = vld [vmem:[#allocation2 + $0x170] sm:$0xff]
      %v1386 = vld [vmem:[#allocation2 + $0x178] sm:$0xff]
      %v1387 = vld [vmem:[#allocation2 + $0x180] sm:$0xff]
      %v1388 = vld [vmem:[#allocation2 + $0x188] sm:$0xf]
      %v1389 = vld [vmem:[#allocation2 + $0x18c] sm:$0xff]
      %v1390 = vld [vmem:[#allocation2 + $0x194] sm:$0xff]
      %v1391 = vld [vmem:[#allocation2 + $0x19c] sm:$0xff]
      %v1392 = vld [vmem:[#allocation2 + $0x1a4] sm:$0xff]
      %v1393 = vld [vmem:[#allocation2 + $0x1ac] sm:$0xf]
      %v1394 = vld [vmem:[#allocation2 + $0x1b0] sm:$0xff]
      %v1395 = vld [vmem:[#allocation2 + $0x1b8] sm:$0xff]
      %v1396 = vld [vmem:[#allocation2 + $0x1c0] sm:$0xff]
      %v1397 = vld [vmem:[#allocation2 + $0x1c8] sm:$0xff]
      %v1398 = vld [vmem:[#allocation2 + $0x1d0] sm:$0xf]
      %v1399 = vld [vmem:[#allocation2 + $0x1d4] sm:$0xff]
      %v1400 = vld [vmem:[#allocation2 + $0x1dc] sm:$0xff]
      %v1401 = vld [vmem:[#allocation2 + $0x1e4] sm:$0xff]
      %v1402 = vld [vmem:[#allocation2 + $0x1ec] sm:$0xff]
      %v1403 = vld [vmem:[#allocation2 + $0x1f4] sm:$0xf]
      %v1404 = vld [vmem:[#allocation2 + $0x1f8] sm:$0xff]
      %v1405 = vld [vmem:[#allocation2 + $0x200] sm:$0xff]
      %v1406 = vld [vmem:[#allocation2 + $0x208] sm:$0xff]
      %v1407 = vld [vmem:[#allocation2 + $0x210] sm:$0xff]
      %v1408 = vld [vmem:[#allocation2 + $0x218] sm:$0xf]
      %v1409 = vld [vmem:[#allocation2 + $0x21c] sm:$0xff]
      %v1410 = vld [vmem:[#allocation2 + $0x224] sm:$0xff]
      %v1411 = vld [vmem:[#allocation2 + $0x22c] sm:$0xff]
      %v1412 = vld [vmem:[#allocation2 + $0x234] sm:$0xff]
      %v1413 = vld [vmem:[#allocation2 + $0x23c] sm:$0xf]
      %v1414 = vld [vmem:[#allocation2 + $0x240] sm:$0xff]
      %v1415 = vld [vmem:[#allocation2 + $0x248] sm:$0xff]
      %v1416 = vld [vmem:[#allocation2 + $0x250] sm:$0xff]
      %v1417 = vld [vmem:[#allocation2 + $0x258] sm:$0xff]
      %v1418 = vld [vmem:[#allocation2 + $0x260] sm:$0xf]
      %v1419 = vld [vmem:[#allocation2 + $0x264] sm:$0xff]
      %v1420 = vld [vmem:[#allocation2 + $0x26c] sm:$0xff]
      %v1421 = vld [vmem:[#allocation2 + $0x274] sm:$0xff]
      %v1422 = vld [vmem:[#allocation2 + $0x27c] sm:$0xff]
      %v1423 = vld [vmem:[#allocation2 + $0x284] sm:$0xf]
      %v1424 = vld [vmem:[#allocation2 + $0x288] sm:$0xff]
      %v1425 = vld [vmem:[#allocation2 + $0x290] sm:$0xff]
      %v1426 = vld [vmem:[#allocation2 + $0x298] sm:$0xff]
      %v1427 = vld [vmem:[#allocation2 + $0x2a0] sm:$0xff]
      %v1428 = vld [vmem:[#allocation2 + $0x2a8] sm:$0xf]
      %v1429 = vld [vmem:[#allocation2 + $0x2ac] sm:$0xff]
      %v1430 = vld [vmem:[#allocation2 + $0x2b4] sm:$0xff]
      %v1431 = vld [vmem:[#allocation2 + $0x2bc] sm:$0xff]
      %v1432 = vld [vmem:[#allocation2 + $0x2c4] sm:$0xff]
      %v1433 = vld [vmem:[#allocation2 + $0x2cc] sm:$0xf]
      %v1434 = vld [vmem:[#allocation2 + $0x2d0] sm:$0xff]
      %v1435 = vld [vmem:[#allocation2 + $0x2d8] sm:$0xff]
      %v1436 = vld [vmem:[#allocation2 + $0x2e0] sm:$0xff]
      %v1437 = vld [vmem:[#allocation2 + $0x2e8] sm:$0xff]
      %v1438 = vld [vmem:[#allocation2 + $0x2f0] sm:$0xf]
      %v1439 = vld [vmem:[#allocation2 + $0x2f4] sm:$0xff]
      %v1440 = vld [vmem:[#allocation2 + $0x2fc] sm:$0xff]
      %v1441 = vld [vmem:[#allocation2 + $0x304] sm:$0xff]
      %v1442 = vld [vmem:[#allocation2 + $0x30c] sm:$0xff]
      %v1443 = vld [vmem:[#allocation2 + $0x314] sm:$0xf]
      %v1444 = vld [vmem:[#allocation2 + $0x318] sm:$0xff]
      %v1445 = vld [vmem:[#allocation2 + $0x320] sm:$0xff]
      %v1446 = vld [vmem:[#allocation2 + $0x328] sm:$0xff]
      %v1447 = vld [vmem:[#allocation2 + $0x330] sm:$0xff]
      %v1448 = vld [vmem:[#allocation2 + $0x338] sm:$0xf]
      %v1449 = vld [vmem:[#allocation2 + $0x33c] sm:$0xff]
      %v1450 = vld [vmem:[#allocation2 + $0x344] sm:$0xff]
      %v1451 = vld [vmem:[#allocation2 + $0x34c] sm:$0xff]
      %v1452 = vld [vmem:[#allocation2 + $0x354] sm:$0xff]
      %v1453 = vld [vmem:[#allocation2 + $0x35c] sm:$0xf]
      %v1454 = vld [vmem:[#allocation2 + $0x360] sm:$0xff]
      %v1455 = vld [vmem:[#allocation2 + $0x368] sm:$0xff]
      %v1456 = vld [vmem:[#allocation2 + $0x370] sm:$0xff]
      %v1457 = vld [vmem:[#allocation2 + $0x378] sm:$0xff]
      %v1458 = vld [vmem:[#allocation2 + $0x380] sm:$0xf]
      %v1459 = vld [vmem:[#allocation2 + $0x384] sm:$0xff]
      %v1460 = vld [vmem:[#allocation2 + $0x38c] sm:$0xff]
      %v1461 = vld [vmem:[#allocation2 + $0x394] sm:$0xff]
      %v1462 = vld [vmem:[#allocation2 + $0x39c] sm:$0xff]
      %v1463 = vld [vmem:[#allocation2 + $0x3a4] sm:$0xf]
      %v1464 = vld [vmem:[#allocation2 + $0x3a8] sm:$0xff]
      %v1465 = vld [vmem:[#allocation2 + $0x3b0] sm:$0xff]
      %v1466 = vld [vmem:[#allocation2 + $0x3b8] sm:$0xff]
      %v1467 = vld [vmem:[#allocation2 + $0x3c0] sm:$0xff]
      %v1468 = vld [vmem:[#allocation2 + $0x3c8] sm:$0xf]
      %v1469 = vld [vmem:[#allocation2 + $0x3cc] sm:$0xff]
      %v1470 = vld [vmem:[#allocation2 + $0x3d4] sm:$0xff]
      %v1471 = vld [vmem:[#allocation2 + $0x3dc] sm:$0xff]
      %v1472 = vld [vmem:[#allocation2 + $0x3e4] sm:$0xff]
      %v1473 = vld [vmem:[#allocation2 + $0x3ec] sm:$0xf]
      %v1474 = vld [vmem:[#allocation2 + $0x3f0] sm:$0xff]
      %v1475 = vld [vmem:[#allocation2 + $0x3f8] sm:$0xff]
      %v1476 = vld [vmem:[#allocation2 + $0x400] sm:$0xff]
      %v1477 = vld [vmem:[#allocation2 + $0x408] sm:$0xff]
      %v1478 = vld [vmem:[#allocation2 + $0x410] sm:$0xf]
      %v1479 = vld [vmem:[#allocation2 + $0x414] sm:$0xff]
      %v1480 = vld [vmem:[#allocation2 + $0x41c] sm:$0xff]
      %v1481 = vld [vmem:[#allocation2 + $0x424] sm:$0xff]
      %v1482 = vld [vmem:[#allocation2 + $0x42c] sm:$0xff]
      %v1483 = vld [vmem:[#allocation2 + $0x434] sm:$0xf]
      %v1484 = vld [vmem:[#allocation2 + $0x438] sm:$0xff]
      %v1485 = vld [vmem:[#allocation2 + $0x440] sm:$0xff]
      %v1486 = vld [vmem:[#allocation2 + $0x448] sm:$0xff]
      %v1487 = vld [vmem:[#allocation2 + $0x450] sm:$0xff]
      %v1488 = vld [vmem:[#allocation2 + $0x458] sm:$0xf]
      %v1489 = vld [vmem:[#allocation2 + $0x45c] sm:$0xff]
      %v1490 = vld [vmem:[#allocation2 + $0x464] sm:$0xff]
      %v1491 = vld [vmem:[#allocation2 + $0x46c] sm:$0xff]
      %v1492 = vld [vmem:[#allocation2 + $0x474] sm:$0xff]
      %v1493 = vld [vmem:[#allocation2 + $0x47c] sm:$0xf]
      %v1494 = vld [vmem:[%s328] sm:$0xf]
      %v1495 = vld [vmem:[%s328 + $0x4] sm:$0xf]
      %v1496 = vld [vmem:[%s328 + $0x8] sm:$0xf]
      %v1497 = vld [vmem:[%s328 + $0xc] sm:$0xf]
      %v1498 = vld [vmem:[%s328 + $0x10] sm:$0xf]
      %v1499 = vld [vmem:[%s328 + $0x14] sm:$0xf]
      %v1500 = vld [vmem:[%s328 + $0x18] sm:$0xf]
      %v1501 = vld [vmem:[%s328 + $0x1c] sm:$0xf]
      %v1502 = vld [vmem:[%s328 + $0x20] sm:$0xf]
      %v1503 = vld [vmem:[%s328 + $0x24] sm:$0xf]
      %v1504 = vld [vmem:[%s328 + $0x28] sm:$0xf]
      %v1505 = vld [vmem:[%s328 + $0x2c] sm:$0xf]
      %v1506 = vld [vmem:[%s328 + $0x30] sm:$0xf]
      %v1507 = vld [vmem:[%s328 + $0x34] sm:$0xf]
      %v1508 = vld [vmem:[%s328 + $0x38] sm:$0xf]
      %v1509 = vld [vmem:[%s328 + $0x3c] sm:$0xf]
      %v1510 = vld [vmem:[%s328 + $0x40] sm:$0xf]
      %v1511 = vld [vmem:[%s328 + $0x44] sm:$0xf]
      %v1512 = vld [vmem:[%s328 + $0x48] sm:$0xf]
      %v1513 = vld [vmem:[%s328 + $0x4c] sm:$0xf]
      %v1514 = vld [vmem:[%s328 + $0x50] sm:$0xf]
      %v1515 = vld [vmem:[%s328 + $0x54] sm:$0xf]
      %v1516 = vld [vmem:[%s328 + $0x58] sm:$0xf]
      %v1517 = vld [vmem:[%s328 + $0x5c] sm:$0xf]
      %v1518 = vld [vmem:[%s328 + $0x60] sm:$0xf]
      %v1519 = vld [vmem:[%s328 + $0x64] sm:$0xf]
      %v1520 = vld [vmem:[%s328 + $0x68] sm:$0xf]
      %v1521 = vld [vmem:[%s328 + $0x6c] sm:$0xf]
      %v1522 = vld [vmem:[%s328 + $0x70] sm:$0xf]
      %v1523 = vld [vmem:[%s328 + $0x74] sm:$0xf]
      %v1524 = vld [vmem:[%s328 + $0x78] sm:$0xf]
      %v1525 = vld [vmem:[%s328 + $0x7c] sm:$0xf]
      %v1526 = vld [vmem:[%s328 + $0x80] sm:$0xf]
      %v1527 = vld [vmem:[%s328 + $0x84] sm:$0xf]
      %v1528 = vld [vmem:[%s328 + $0x88] sm:$0xf]
      %v1529 = vld [vmem:[%s328 + $0x8c] sm:$0xf]
      %v1530 = vld [vmem:[%s328 + $0x90] sm:$0xf]
      %v1531 = vld [vmem:[%s328 + $0x94] sm:$0xf]
      %v1532 = vld [vmem:[%s328 + $0x98] sm:$0xf]
      %v1533 = vld [vmem:[%s328 + $0x9c] sm:$0xf]
      %v1534 = vld [vmem:[%s328 + $0xa0] sm:$0xf]
      %v1535 = vld [vmem:[%s328 + $0xa4] sm:$0xf]
      %v1536 = vld [vmem:[%s328 + $0xa8] sm:$0xf]
      %v1537 = vld [vmem:[%s328 + $0xac] sm:$0xf]
      %v1538 = vld [vmem:[%s328 + $0xb0] sm:$0xf]
      %v1539 = vld [vmem:[%s328 + $0xb4] sm:$0xf]
      %v1540 = vld [vmem:[%s328 + $0xb8] sm:$0xf]
      %v1541 = vld [vmem:[%s328 + $0xbc] sm:$0xf]
      %v1542 = vld [vmem:[%s328 + $0xc0] sm:$0xf]
      %v1543 = vld [vmem:[%s328 + $0xc4] sm:$0xf]
      %v1544 = vld [vmem:[%s328 + $0xc8] sm:$0xf]
      %v1545 = vld [vmem:[%s328 + $0xcc] sm:$0xf]
      %v1546 = vld [vmem:[%s328 + $0xd0] sm:$0xf]
      %v1547 = vld [vmem:[%s328 + $0xd4] sm:$0xf]
      %v1548 = vld [vmem:[%s328 + $0xd8] sm:$0xf]
      %v1549 = vld [vmem:[%s328 + $0xdc] sm:$0xf]
      %v1550 = vld [vmem:[%s328 + $0xe0] sm:$0xf]
      %v1551 = vld [vmem:[%s328 + $0xe4] sm:$0xf]
      %v1552 = vld [vmem:[%s328 + $0xe8] sm:$0xf]
      %v1553 = vld [vmem:[%s328 + $0xec] sm:$0xf]
      %v1554 = vld [vmem:[%s328 + $0xf0] sm:$0xf]
      %v1555 = vld [vmem:[%s328 + $0xf4] sm:$0xf]
      %v1556 = vld [vmem:[%s328 + $0xf8] sm:$0xf]
      %v1557 = vld [vmem:[%s328 + $0xfc] sm:$0xf]
      %v1558 = vld [vmem:[%s328 + $0x100] sm:$0xf]
      %v1559 = vld [vmem:[%s328 + $0x104] sm:$0xf]
      %v1560 = vld [vmem:[%s328 + $0x108] sm:$0xf]
      %v1561 = vld [vmem:[%s328 + $0x10c] sm:$0xf]
      %v1562 = vld [vmem:[%s328 + $0x110] sm:$0xf]
      %v1563 = vld [vmem:[%s328 + $0x114] sm:$0xf]
      %v1564 = vld [vmem:[%s328 + $0x118] sm:$0xf]
      %v1565 = vld [vmem:[%s328 + $0x11c] sm:$0xf]
      %v1566 = vld [vmem:[%s328 + $0x120] sm:$0xf]
      %v1567 = vld [vmem:[%s328 + $0x124] sm:$0xf]
      %v1568 = vld [vmem:[%s328 + $0x128] sm:$0xf]
      %v1569 = vld [vmem:[%s328 + $0x12c] sm:$0xf]
      %v1570 = vld [vmem:[%s328 + $0x130] sm:$0xf]
      %v1571 = vld [vmem:[%s328 + $0x134] sm:$0xf]
      %v1572 = vld [vmem:[%s328 + $0x138] sm:$0xf]
      %v1573 = vld [vmem:[%s328 + $0x13c] sm:$0xf]
      %v1574 = vld [vmem:[%s328 + $0x140] sm:$0xf]
      %v1575 = vld [vmem:[%s328 + $0x144] sm:$0xf]
      %v1576 = vld [vmem:[%s328 + $0x148] sm:$0xf]
      %v1577 = vld [vmem:[%s328 + $0x14c] sm:$0xf]
      %v1578 = vld [vmem:[%s328 + $0x150] sm:$0xf]
      %v1579 = vld [vmem:[%s328 + $0x154] sm:$0xf]
      %v1580 = vld [vmem:[%s328 + $0x158] sm:$0xf]
      %v1581 = vld [vmem:[%s328 + $0x15c] sm:$0xf]
      %v1582 = vld [vmem:[%s328 + $0x160] sm:$0xf]
      %v1583 = vld [vmem:[%s328 + $0x164] sm:$0xf]
      %v1584 = vld [vmem:[%s328 + $0x168] sm:$0xf]
      %v1585 = vld [vmem:[%s328 + $0x16c] sm:$0xf]
      %v1586 = vld [vmem:[%s328 + $0x170] sm:$0xf]
      %v1587 = vld [vmem:[%s328 + $0x174] sm:$0xf]
      %v1588 = vld [vmem:[%s328 + $0x178] sm:$0xf]
      %v1589 = vld [vmem:[%s328 + $0x17c] sm:$0xf]
      %v1590 = vld [vmem:[%s328 + $0x180] sm:$0xf]
      %v1591 = vld [vmem:[%s328 + $0x184] sm:$0xf]
      %v1592 = vld [vmem:[%s328 + $0x188] sm:$0xf]
      %v1593 = vld [vmem:[%s328 + $0x18c] sm:$0xf]
      %v1594 = vld [vmem:[%s328 + $0x190] sm:$0xf]
      %v1595 = vld [vmem:[%s328 + $0x194] sm:$0xf]
      %v1596 = vld [vmem:[%s328 + $0x198] sm:$0xf]
      %v1597 = vld [vmem:[%s328 + $0x19c] sm:$0xf]
      %v1598 = vld [vmem:[%s328 + $0x1a0] sm:$0xf]
      %v1599 = vld [vmem:[%s328 + $0x1a4] sm:$0xf]
      %v1600 = vld [vmem:[%s328 + $0x1a8] sm:$0xf]
      %v1601 = vld [vmem:[%s328 + $0x1ac] sm:$0xf]
      %v1602 = vld [vmem:[%s328 + $0x1b0] sm:$0xf]
      %v1603 = vld [vmem:[%s328 + $0x1b4] sm:$0xf]
      %v1604 = vld [vmem:[%s328 + $0x1b8] sm:$0xf]
      %v1605 = vld [vmem:[%s328 + $0x1bc] sm:$0xf]
      %v1606 = vld [vmem:[%s328 + $0x1c0] sm:$0xf]
      %v1607 = vld [vmem:[%s328 + $0x1c4] sm:$0xf]
      %v1608 = vld [vmem:[%s328 + $0x1c8] sm:$0xf]
      %v1609 = vld [vmem:[%s328 + $0x1cc] sm:$0xf]
      %v1610 = vld [vmem:[%s328 + $0x1d0] sm:$0xf]
      %v1611 = vld [vmem:[%s328 + $0x1d4] sm:$0xf]
      %v1612 = vld [vmem:[%s328 + $0x1d8] sm:$0xf]
      %v1613 = vld [vmem:[%s328 + $0x1dc] sm:$0xf]
      %v1614 = vld [vmem:[%s328 + $0x1e0] sm:$0xf]
      %v1615 = vld [vmem:[%s328 + $0x1e4] sm:$0xf]
      %v1616 = vld [vmem:[%s328 + $0x1e8] sm:$0xf]
      %v1617 = vld [vmem:[%s328 + $0x1ec] sm:$0xf]
      %v1618 = vld [vmem:[%s328 + $0x1f0] sm:$0xf]
      %v1619 = vld [vmem:[%s328 + $0x1f4] sm:$0xf]
      %v1620 = vld [vmem:[%s328 + $0x1f8] sm:$0xf]
      %v1621 = vld [vmem:[%s328 + $0x1fc] sm:$0xf]
      %v1622 = vld [vmem:[%s328 + $0x200] sm:$0xf]
      %v1623 = vld [vmem:[%s328 + $0x204] sm:$0xf]
      %v1624 = vld [vmem:[%s328 + $0x208] sm:$0xf]
      %v1625 = vld [vmem:[%s328 + $0x20c] sm:$0xf]
      %v1626 = vld [vmem:[%s328 + $0x210] sm:$0xf]
      %v1627 = vld [vmem:[%s328 + $0x214] sm:$0xf]
      %v1628 = vld [vmem:[%s328 + $0x218] sm:$0xf]
      %v1629 = vld [vmem:[%s328 + $0x21c] sm:$0xf]
      %v1630 = vld [vmem:[%s328 + $0x220] sm:$0xf]
      %v1631 = vld [vmem:[%s328 + $0x224] sm:$0xf]
      %v1632 = vld [vmem:[%s328 + $0x228] sm:$0xf]
      %v1633 = vld [vmem:[%s328 + $0x22c] sm:$0xf]
      %v1634 = vld [vmem:[%s328 + $0x230] sm:$0xf]
      %v1635 = vld [vmem:[%s328 + $0x234] sm:$0xf]
      %v1636 = vld [vmem:[%s328 + $0x238] sm:$0xf]
      %v1637 = vld [vmem:[%s328 + $0x23c] sm:$0xf]
      %v1798 = vunpack.c.l.b16 %v1334
      %v1799 = vunpack.c.h.b16 %v1334
      %v1800 = vunpack.c.l.b16 %v1335
      %v1801 = vunpack.c.h.b16 %v1335
      %v1802 = vunpack.c.l.b16 %v1336
      %v1803 = vunpack.c.h.b16 %v1336
      %v1804 = vunpack.c.l.b16 %v1337
      %v1805 = vunpack.c.h.b16 %v1337
      %v1806 = vunpack.c.l.b16 %v1338
      %v1807 = vunpack.c.l.b16 %v1339
      %v1808 = vunpack.c.h.b16 %v1339
      %v1809 = vunpack.c.l.b16 %v1340
      %v1810 = vunpack.c.h.b16 %v1340
      %v1811 = vunpack.c.l.b16 %v1341
      %v1812 = vunpack.c.h.b16 %v1341
      %v1813 = vunpack.c.l.b16 %v1342
      %v1814 = vunpack.c.h.b16 %v1342
      %v1815 = vunpack.c.l.b16 %v1343
      %v1816 = vunpack.c.l.b16 %v1344
      %v1817 = vunpack.c.h.b16 %v1344
      %v1818 = vunpack.c.l.b16 %v1345
      %v1819 = vunpack.c.h.b16 %v1345
      %v1820 = vunpack.c.l.b16 %v1346
      %v1821 = vunpack.c.h.b16 %v1346
      %v1822 = vunpack.c.l.b16 %v1347
      %v1823 = vunpack.c.h.b16 %v1347
      %v1824 = vunpack.c.l.b16 %v1348
      %v1825 = vunpack.c.l.b16 %v1349
      %v1826 = vunpack.c.h.b16 %v1349
      %v1827 = vunpack.c.l.b16 %v1350
      %v1828 = vunpack.c.h.b16 %v1350
      %v1829 = vunpack.c.l.b16 %v1351
      %v1830 = vunpack.c.h.b16 %v1351
      %v1831 = vunpack.c.l.b16 %v1352
      %v1832 = vunpack.c.h.b16 %v1352
      %v1833 = vunpack.c.l.b16 %v1353
      %v1834 = vunpack.c.l.b16 %v1354
      %v1835 = vunpack.c.h.b16 %v1354
      %v1836 = vunpack.c.l.b16 %v1355
      %v1837 = vunpack.c.h.b16 %v1355
      %v1838 = vunpack.c.l.b16 %v1356
      %v1839 = vunpack.c.h.b16 %v1356
      %v1840 = vunpack.c.l.b16 %v1357
      %v1841 = vunpack.c.h.b16 %v1357
      %v1842 = vunpack.c.l.b16 %v1358
      %v1843 = vunpack.c.l.b16 %v1359
      %v1844 = vunpack.c.h.b16 %v1359
      %v1845 = vunpack.c.l.b16 %v1360
      %v1846 = vunpack.c.h.b16 %v1360
      %v1847 = vunpack.c.l.b16 %v1361
      %v1848 = vunpack.c.h.b16 %v1361
      %v1849 = vunpack.c.l.b16 %v1362
      %v1850 = vunpack.c.h.b16 %v1362
      %v1851 = vunpack.c.l.b16 %v1363
      %v1852 = vunpack.c.l.b16 %v1364
      %v1853 = vunpack.c.h.b16 %v1364
      %v1854 = vunpack.c.l.b16 %v1365
      %v1855 = vunpack.c.h.b16 %v1365
      %v1856 = vunpack.c.l.b16 %v1366
      %v1857 = vunpack.c.h.b16 %v1366
      %v1858 = vunpack.c.l.b16 %v1367
      %v1859 = vunpack.c.h.b16 %v1367
      %v1860 = vunpack.c.l.b16 %v1368
      %v1861 = vunpack.c.l.b16 %v1369
      %v1862 = vunpack.c.h.b16 %v1369
      %v1863 = vunpack.c.l.b16 %v1370
      %v1864 = vunpack.c.h.b16 %v1370
      %v1865 = vunpack.c.l.b16 %v1371
      %v1866 = vunpack.c.h.b16 %v1371
      %v1867 = vunpack.c.l.b16 %v1372
      %v1868 = vunpack.c.h.b16 %v1372
      %v1869 = vunpack.c.l.b16 %v1373
      %v1870 = vunpack.c.l.b16 %v1374
      %v1871 = vunpack.c.h.b16 %v1374
      %v1872 = vunpack.c.l.b16 %v1375
      %v1873 = vunpack.c.h.b16 %v1375
      %v1874 = vunpack.c.l.b16 %v1376
      %v1875 = vunpack.c.h.b16 %v1376
      %v1876 = vunpack.c.l.b16 %v1377
      %v1877 = vunpack.c.h.b16 %v1377
      %v1878 = vunpack.c.l.b16 %v1378
      %v1879 = vunpack.c.l.b16 %v1379
      %v1880 = vunpack.c.h.b16 %v1379
      %v1881 = vunpack.c.l.b16 %v1380
      %v1882 = vunpack.c.h.b16 %v1380
      %v1883 = vunpack.c.l.b16 %v1381
      %v1884 = vunpack.c.h.b16 %v1381
      %v1885 = vunpack.c.l.b16 %v1382
      %v1886 = vunpack.c.h.b16 %v1382
      %v1887 = vunpack.c.l.b16 %v1383
      %v1888 = vunpack.c.l.b16 %v1384
      %v1889 = vunpack.c.h.b16 %v1384
      %v1890 = vunpack.c.l.b16 %v1385
      %v1891 = vunpack.c.h.b16 %v1385
      %v1892 = vunpack.c.l.b16 %v1386
      %v1893 = vunpack.c.h.b16 %v1386
      %v1894 = vunpack.c.l.b16 %v1387
      %v1895 = vunpack.c.h.b16 %v1387
      %v1896 = vunpack.c.l.b16 %v1388
      %v1897 = vunpack.c.l.b16 %v1389
      %v1898 = vunpack.c.h.b16 %v1389
      %v1899 = vunpack.c.l.b16 %v1390
      %v1900 = vunpack.c.h.b16 %v1390
      %v1901 = vunpack.c.l.b16 %v1391
      %v1902 = vunpack.c.h.b16 %v1391
      %v1903 = vunpack.c.l.b16 %v1392
      %v1904 = vunpack.c.h.b16 %v1392
      %v1905 = vunpack.c.l.b16 %v1393
      %v1906 = vunpack.c.l.b16 %v1394
      %v1907 = vunpack.c.h.b16 %v1394
      %v1908 = vunpack.c.l.b16 %v1395
      %v1909 = vunpack.c.h.b16 %v1395
      %v1910 = vunpack.c.l.b16 %v1396
      %v1911 = vunpack.c.h.b16 %v1396
      %v1912 = vunpack.c.l.b16 %v1397
      %v1913 = vunpack.c.h.b16 %v1397
      %v1914 = vunpack.c.l.b16 %v1398
      %v1915 = vunpack.c.l.b16 %v1399
      %v1916 = vunpack.c.h.b16 %v1399
      %v1917 = vunpack.c.l.b16 %v1400
      %v1918 = vunpack.c.h.b16 %v1400
      %v1919 = vunpack.c.l.b16 %v1401
      %v1920 = vunpack.c.h.b16 %v1401
      %v1921 = vunpack.c.l.b16 %v1402
      %v1922 = vunpack.c.h.b16 %v1402
      %v1923 = vunpack.c.l.b16 %v1403
      %v1924 = vunpack.c.l.b16 %v1404
      %v1925 = vunpack.c.h.b16 %v1404
      %v1926 = vunpack.c.l.b16 %v1405
      %v1927 = vunpack.c.h.b16 %v1405
      %v1928 = vunpack.c.l.b16 %v1406
      %v1929 = vunpack.c.h.b16 %v1406
      %v1930 = vunpack.c.l.b16 %v1407
      %v1931 = vunpack.c.h.b16 %v1407
      %v1932 = vunpack.c.l.b16 %v1408
      %v1933 = vunpack.c.l.b16 %v1409
      %v1934 = vunpack.c.h.b16 %v1409
      %v1935 = vunpack.c.l.b16 %v1410
      %v1936 = vunpack.c.h.b16 %v1410
      %v1937 = vunpack.c.l.b16 %v1411
      %v1938 = vunpack.c.h.b16 %v1411
      %v1939 = vunpack.c.l.b16 %v1412
      %v1940 = vunpack.c.h.b16 %v1412
      %v1941 = vunpack.c.l.b16 %v1413
      %v1942 = vunpack.c.l.b16 %v1414
      %v1943 = vunpack.c.h.b16 %v1414
      %v1944 = vunpack.c.l.b16 %v1415
      %v1945 = vunpack.c.h.b16 %v1415
      %v1946 = vunpack.c.l.b16 %v1416
      %v1947 = vunpack.c.h.b16 %v1416
      %v1948 = vunpack.c.l.b16 %v1417
      %v1949 = vunpack.c.h.b16 %v1417
      %v1950 = vunpack.c.l.b16 %v1418
      %v1951 = vunpack.c.l.b16 %v1419
      %v1952 = vunpack.c.h.b16 %v1419
      %v1953 = vunpack.c.l.b16 %v1420
      %v1954 = vunpack.c.h.b16 %v1420
      %v1955 = vunpack.c.l.b16 %v1421
      %v1956 = vunpack.c.h.b16 %v1421
      %v1957 = vunpack.c.l.b16 %v1422
      %v1958 = vunpack.c.h.b16 %v1422
      %v1959 = vunpack.c.l.b16 %v1423
      %v1960 = vunpack.c.l.b16 %v1424
      %v1961 = vunpack.c.h.b16 %v1424
      %v1962 = vunpack.c.l.b16 %v1425
      %v1963 = vunpack.c.h.b16 %v1425
      %v1964 = vunpack.c.l.b16 %v1426
      %v1965 = vunpack.c.h.b16 %v1426
      %v1966 = vunpack.c.l.b16 %v1427
      %v1967 = vunpack.c.h.b16 %v1427
      %v1968 = vunpack.c.l.b16 %v1428
      %v1969 = vunpack.c.l.b16 %v1429
      %v1970 = vunpack.c.h.b16 %v1429
      %v1971 = vunpack.c.l.b16 %v1430
      %v1972 = vunpack.c.h.b16 %v1430
      %v1973 = vunpack.c.l.b16 %v1431
      %v1974 = vunpack.c.h.b16 %v1431
      %v1975 = vunpack.c.l.b16 %v1432
      %v1976 = vunpack.c.h.b16 %v1432
      %v1977 = vunpack.c.l.b16 %v1433
      %v1978 = vunpack.c.l.b16 %v1434
      %v1979 = vunpack.c.h.b16 %v1434
      %v1980 = vunpack.c.l.b16 %v1435
      %v1981 = vunpack.c.h.b16 %v1435
      %v1982 = vunpack.c.l.b16 %v1436
      %v1983 = vunpack.c.h.b16 %v1436
      %v1984 = vunpack.c.l.b16 %v1437
      %v1985 = vunpack.c.h.b16 %v1437
      %v1986 = vunpack.c.l.b16 %v1438
      %v1987 = vunpack.c.l.b16 %v1439
      %v1988 = vunpack.c.h.b16 %v1439
      %v1989 = vunpack.c.l.b16 %v1440
      %v1990 = vunpack.c.h.b16 %v1440
      %v1991 = vunpack.c.l.b16 %v1441
      %v1992 = vunpack.c.h.b16 %v1441
      %v1993 = vunpack.c.l.b16 %v1442
      %v1994 = vunpack.c.h.b16 %v1442
      %v1995 = vunpack.c.l.b16 %v1443
      %v1996 = vunpack.c.l.b16 %v1444
      %v1997 = vunpack.c.h.b16 %v1444
      %v1998 = vunpack.c.l.b16 %v1445
      %v1999 = vunpack.c.h.b16 %v1445
      %v2000 = vunpack.c.l.b16 %v1446
      %v2001 = vunpack.c.h.b16 %v1446
      %v2002 = vunpack.c.l.b16 %v1447
      %v2003 = vunpack.c.h.b16 %v1447
      %v2004 = vunpack.c.l.b16 %v1448
      %v2005 = vunpack.c.l.b16 %v1449
      %v2006 = vunpack.c.h.b16 %v1449
      %v2007 = vunpack.c.l.b16 %v1450
      %v2008 = vunpack.c.h.b16 %v1450
      %v2009 = vunpack.c.l.b16 %v1451
      %v2010 = vunpack.c.h.b16 %v1451
      %v2011 = vunpack.c.l.b16 %v1452
      %v2012 = vunpack.c.h.b16 %v1452
      %v2013 = vunpack.c.l.b16 %v1453
      %v2014 = vunpack.c.l.b16 %v1454
      %v2015 = vunpack.c.h.b16 %v1454
      %v2016 = vunpack.c.l.b16 %v1455
      %v2017 = vunpack.c.h.b16 %v1455
      %v2018 = vunpack.c.l.b16 %v1456
      %v2019 = vunpack.c.h.b16 %v1456
      %v2020 = vunpack.c.l.b16 %v1457
      %v2021 = vunpack.c.h.b16 %v1457
      %v2022 = vunpack.c.l.b16 %v1458
      %v2023 = vunpack.c.l.b16 %v1459
      %v2024 = vunpack.c.h.b16 %v1459
      %v2025 = vunpack.c.l.b16 %v1460
      %v2026 = vunpack.c.h.b16 %v1460
      %v2027 = vunpack.c.l.b16 %v1461
      %v2028 = vunpack.c.h.b16 %v1461
      %v2029 = vunpack.c.l.b16 %v1462
      %v2030 = vunpack.c.h.b16 %v1462
      %v2031 = vunpack.c.l.b16 %v1463
      %v2032 = vunpack.c.l.b16 %v1464
      %v2033 = vunpack.c.h.b16 %v1464
      %v2034 = vunpack.c.l.b16 %v1465
      %v2035 = vunpack.c.h.b16 %v1465
      %v2036 = vunpack.c.l.b16 %v1466
      %v2037 = vunpack.c.h.b16 %v1466
      %v2038 = vunpack.c.l.b16 %v1467
      %v2039 = vunpack.c.h.b16 %v1467
      %v2040 = vunpack.c.l.b16 %v1468
      %v2041 = vunpack.c.l.b16 %v1469
      %v2042 = vunpack.c.h.b16 %v1469
      %v2043 = vunpack.c.l.b16 %v1470
      %v2044 = vunpack.c.h.b16 %v1470
      %v2045 = vunpack.c.l.b16 %v1471
      %v2046 = vunpack.c.h.b16 %v1471
      %v2047 = vunpack.c.l.b16 %v1472
      %v2048 = vunpack.c.h.b16 %v1472
      %v2049 = vunpack.c.l.b16 %v1473
      %v2050 = vunpack.c.l.b16 %v1474
      %v2051 = vunpack.c.h.b16 %v1474
      %v2052 = vunpack.c.l.b16 %v1475
      %v2053 = vunpack.c.h.b16 %v1475
      %v2054 = vunpack.c.l.b16 %v1476
      %v2055 = vunpack.c.h.b16 %v1476
      %v2056 = vunpack.c.l.b16 %v1477
      %v2057 = vunpack.c.h.b16 %v1477
      %v2058 = vunpack.c.l.b16 %v1478
      %v2059 = vunpack.c.l.b16 %v1479
      %v2060 = vunpack.c.h.b16 %v1479
      %v2061 = vunpack.c.l.b16 %v1480
      %v2062 = vunpack.c.h.b16 %v1480
      %v2063 = vunpack.c.l.b16 %v1481
      %v2064 = vunpack.c.h.b16 %v1481
      %v2065 = vunpack.c.l.b16 %v1482
      %v2066 = vunpack.c.h.b16 %v1482
      %v2067 = vunpack.c.l.b16 %v1483
      %v2068 = vunpack.c.l.b16 %v1484
      %v2069 = vunpack.c.h.b16 %v1484
      %v2070 = vunpack.c.l.b16 %v1485
      %v2071 = vunpack.c.h.b16 %v1485
      %v2072 = vunpack.c.l.b16 %v1486
      %v2073 = vunpack.c.h.b16 %v1486
      %v2074 = vunpack.c.l.b16 %v1487
      %v2075 = vunpack.c.h.b16 %v1487
      %v2076 = vunpack.c.l.b16 %v1488
      %v2077 = vunpack.c.l.b16 %v1489
      %v2078 = vunpack.c.h.b16 %v1489
      %v2079 = vunpack.c.l.b16 %v1490
      %v2080 = vunpack.c.h.b16 %v1490
      %v2081 = vunpack.c.l.b16 %v1491
      %v2082 = vunpack.c.h.b16 %v1491
      %v2083 = vunpack.c.l.b16 %v1492
      %v2084 = vunpack.c.h.b16 %v1492
      %v2085 = vunpack.c.l.b16 %v1493
      %v2086 = vpack.c.b16 %v1807, %v1798
      %v2087 = vpack.c.b16 %v1808, %v1799
      %v2088 = vpack.c.b16 %v1809, %v1800
      %v2089 = vpack.c.b16 %v1810, %v1801
      %v2090 = vpack.c.b16 %v1811, %v1802
      %v2091 = vpack.c.b16 %v1812, %v1803
      %v2092 = vpack.c.b16 %v1813, %v1804
      %v2093 = vpack.c.b16 %v1814, %v1805
      %v2094 = vpack.c.b16 %v1815, %v1806
      %v2095 = vpack.c.b16 %v1825, %v1816
      %v2096 = vpack.c.b16 %v1826, %v1817
      %v2097 = vpack.c.b16 %v1827, %v1818
      %v2098 = vpack.c.b16 %v1828, %v1819
      %v2099 = vpack.c.b16 %v1829, %v1820
      %v2100 = vpack.c.b16 %v1830, %v1821
      %v2101 = vpack.c.b16 %v1831, %v1822
      %v2102 = vpack.c.b16 %v1832, %v1823
      %v2103 = vpack.c.b16 %v1833, %v1824
      %v2104 = vpack.c.b16 %v1843, %v1834
      %v2105 = vpack.c.b16 %v1844, %v1835
      %v2106 = vpack.c.b16 %v1845, %v1836
      %v2107 = vpack.c.b16 %v1846, %v1837
      %v2108 = vpack.c.b16 %v1847, %v1838
      %v2109 = vpack.c.b16 %v1848, %v1839
      %v2110 = vpack.c.b16 %v1849, %v1840
      %v2111 = vpack.c.b16 %v1850, %v1841
      %v2112 = vpack.c.b16 %v1851, %v1842
      %v2113 = vpack.c.b16 %v1861, %v1852
      %v2114 = vpack.c.b16 %v1862, %v1853
      %v2115 = vpack.c.b16 %v1863, %v1854
      %v2116 = vpack.c.b16 %v1864, %v1855
      %v2117 = vpack.c.b16 %v1865, %v1856
      %v2118 = vpack.c.b16 %v1866, %v1857
      %v2119 = vpack.c.b16 %v1867, %v1858
      %v2120 = vpack.c.b16 %v1868, %v1859
      %v2121 = vpack.c.b16 %v1869, %v1860
      %v2122 = vpack.c.b16 %v1879, %v1870
      %v2123 = vpack.c.b16 %v1880, %v1871
      %v2124 = vpack.c.b16 %v1881, %v1872
      %v2125 = vpack.c.b16 %v1882, %v1873
      %v2126 = vpack.c.b16 %v1883, %v1874
      %v2127 = vpack.c.b16 %v1884, %v1875
      %v2128 = vpack.c.b16 %v1885, %v1876
      %v2129 = vpack.c.b16 %v1886, %v1877
      %v2130 = vpack.c.b16 %v1887, %v1878
      %v2131 = vpack.c.b16 %v1897, %v1888
      %v2132 = vpack.c.b16 %v1898, %v1889
      %v2133 = vpack.c.b16 %v1899, %v1890
      %v2134 = vpack.c.b16 %v1900, %v1891
      %v2135 = vpack.c.b16 %v1901, %v1892
      %v2136 = vpack.c.b16 %v1902, %v1893
      %v2137 = vpack.c.b16 %v1903, %v1894
      %v2138 = vpack.c.b16 %v1904, %v1895
      %v2139 = vpack.c.b16 %v1905, %v1896
      %v2140 = vpack.c.b16 %v1915, %v1906
      %v2141 = vpack.c.b16 %v1916, %v1907
      %v2142 = vpack.c.b16 %v1917, %v1908
      %v2143 = vpack.c.b16 %v1918, %v1909
      %v2144 = vpack.c.b16 %v1919, %v1910
      %v2145 = vpack.c.b16 %v1920, %v1911
      %v2146 = vpack.c.b16 %v1921, %v1912
      %v2147 = vpack.c.b16 %v1922, %v1913
      %v2148 = vpack.c.b16 %v1923, %v1914
      %v2149 = vpack.c.b16 %v1933, %v1924
      %v2150 = vpack.c.b16 %v1934, %v1925
      %v2151 = vpack.c.b16 %v1935, %v1926
      %v2152 = vpack.c.b16 %v1936, %v1927
      %v2153 = vpack.c.b16 %v1937, %v1928
      %v2154 = vpack.c.b16 %v1938, %v1929
      %v2155 = vpack.c.b16 %v1939, %v1930
      %v2156 = vpack.c.b16 %v1940, %v1931
      %v2157 = vpack.c.b16 %v1941, %v1932
      %v2158 = vpack.c.b16 %v1951, %v1942
      %v2159 = vpack.c.b16 %v1952, %v1943
      %v2160 = vpack.c.b16 %v1953, %v1944
      %v2161 = vpack.c.b16 %v1954, %v1945
      %v2162 = vpack.c.b16 %v1955, %v1946
      %v2163 = vpack.c.b16 %v1956, %v1947
      %v2164 = vpack.c.b16 %v1957, %v1948
      %v2165 = vpack.c.b16 %v1958, %v1949
      %v2166 = vpack.c.b16 %v1959, %v1950
      %v2167 = vpack.c.b16 %v1969, %v1960
      %v2168 = vpack.c.b16 %v1970, %v1961
      %v2169 = vpack.c.b16 %v1971, %v1962
      %v2170 = vpack.c.b16 %v1972, %v1963
      %v2171 = vpack.c.b16 %v1973, %v1964
      %v2172 = vpack.c.b16 %v1974, %v1965
      %v2173 = vpack.c.b16 %v1975, %v1966
      %v2174 = vpack.c.b16 %v1976, %v1967
      %v2175 = vpack.c.b16 %v1977, %v1968
      %v2176 = vpack.c.b16 %v1987, %v1978
      %v2177 = vpack.c.b16 %v1988, %v1979
      %v2178 = vpack.c.b16 %v1989, %v1980
      %v2179 = vpack.c.b16 %v1990, %v1981
      %v2180 = vpack.c.b16 %v1991, %v1982
      %v2181 = vpack.c.b16 %v1992, %v1983
      %v2182 = vpack.c.b16 %v1993, %v1984
      %v2183 = vpack.c.b16 %v1994, %v1985
      %v2184 = vpack.c.b16 %v1995, %v1986
      %v2185 = vpack.c.b16 %v2005, %v1996
      %v2186 = vpack.c.b16 %v2006, %v1997
      %v2187 = vpack.c.b16 %v2007, %v1998
      %v2188 = vpack.c.b16 %v2008, %v1999
      %v2189 = vpack.c.b16 %v2009, %v2000
      %v2190 = vpack.c.b16 %v2010, %v2001
      %v2191 = vpack.c.b16 %v2011, %v2002
      %v2192 = vpack.c.b16 %v2012, %v2003
      %v2193 = vpack.c.b16 %v2013, %v2004
      %v2194 = vpack.c.b16 %v2023, %v2014
      %v2195 = vpack.c.b16 %v2024, %v2015
      %v2196 = vpack.c.b16 %v2025, %v2016
      %v2197 = vpack.c.b16 %v2026, %v2017
      %v2198 = vpack.c.b16 %v2027, %v2018
      %v2199 = vpack.c.b16 %v2028, %v2019
      %v2200 = vpack.c.b16 %v2029, %v2020
      %v2201 = vpack.c.b16 %v2030, %v2021
      %v2202 = vpack.c.b16 %v2031, %v2022
      %v2203 = vpack.c.b16 %v2041, %v2032
      %v2204 = vpack.c.b16 %v2042, %v2033
      %v2205 = vpack.c.b16 %v2043, %v2034
      %v2206 = vpack.c.b16 %v2044, %v2035
      %v2207 = vpack.c.b16 %v2045, %v2036
      %v2208 = vpack.c.b16 %v2046, %v2037
      %v2209 = vpack.c.b16 %v2047, %v2038
      %v2210 = vpack.c.b16 %v2048, %v2039
      %v2211 = vpack.c.b16 %v2049, %v2040
      %v2212 = vpack.c.b16 %v2059, %v2050
      %v2213 = vpack.c.b16 %v2060, %v2051
      %v2214 = vpack.c.b16 %v2061, %v2052
      %v2215 = vpack.c.b16 %v2062, %v2053
      %v2216 = vpack.c.b16 %v2063, %v2054
      %v2217 = vpack.c.b16 %v2064, %v2055
      %v2218 = vpack.c.b16 %v2065, %v2056
      %v2219 = vpack.c.b16 %v2066, %v2057
      %v2220 = vpack.c.b16 %v2067, %v2058
      %v2221 = vpack.c.b16 %v2077, %v2068
      %v2222 = vpack.c.b16 %v2078, %v2069
      %v2223 = vpack.c.b16 %v2079, %v2070
      %v2224 = vpack.c.b16 %v2080, %v2071
      %v2225 = vpack.c.b16 %v2081, %v2072
      %v2226 = vpack.c.b16 %v2082, %v2073
      %v2227 = vpack.c.b16 %v2083, %v2074
      %v2228 = vpack.c.b16 %v2084, %v2075
      %v2229 = vpack.c.b16 %v2085, %v2076
      %v2518 = vunpack.c.l.b16 %v1494
      %v2519 = vunpack.c.l.b16 %v1495
      %v2520 = vunpack.c.l.b16 %v1496
      %v2521 = vunpack.c.l.b16 %v1497
      %v2522 = vunpack.c.l.b16 %v1498
      %v2523 = vunpack.c.l.b16 %v1499
      %v2524 = vunpack.c.l.b16 %v1500
      %v2525 = vunpack.c.l.b16 %v1501
      %v2526 = vunpack.c.l.b16 %v1502
      %v2527 = vunpack.c.l.b16 %v1503
      %v2528 = vunpack.c.l.b16 %v1504
      %v2529 = vunpack.c.l.b16 %v1505
      %v2530 = vunpack.c.l.b16 %v1506
      %v2531 = vunpack.c.l.b16 %v1507
      %v2532 = vunpack.c.l.b16 %v1508
      %v2533 = vunpack.c.l.b16 %v1509
      %v2534 = vunpack.c.l.b16 %v1510
      %v2535 = vunpack.c.l.b16 %v1511
      %v2536 = vunpack.c.l.b16 %v1512
      %v2537 = vunpack.c.l.b16 %v1513
      %v2538 = vunpack.c.l.b16 %v1514
      %v2539 = vunpack.c.l.b16 %v1515
      %v2540 = vunpack.c.l.b16 %v1516
      %v2541 = vunpack.c.l.b16 %v1517
      %v2542 = vunpack.c.l.b16 %v1518
      %v2543 = vunpack.c.l.b16 %v1519
      %v2544 = vunpack.c.l.b16 %v1520
      %v2545 = vunpack.c.l.b16 %v1521
      %v2546 = vunpack.c.l.b16 %v1522
      %v2547 = vunpack.c.l.b16 %v1523
      %v2548 = vunpack.c.l.b16 %v1524
      %v2549 = vunpack.c.l.b16 %v1525
      %v2550 = vunpack.c.l.b16 %v1526
      %v2551 = vunpack.c.l.b16 %v1527
      %v2552 = vunpack.c.l.b16 %v1528
      %v2553 = vunpack.c.l.b16 %v1529
      %v2554 = vunpack.c.l.b16 %v1530
      %v2555 = vunpack.c.l.b16 %v1531
      %v2556 = vunpack.c.l.b16 %v1532
      %v2557 = vunpack.c.l.b16 %v1533
      %v2558 = vunpack.c.l.b16 %v1534
      %v2559 = vunpack.c.l.b16 %v1535
      %v2560 = vunpack.c.l.b16 %v1536
      %v2561 = vunpack.c.l.b16 %v1537
      %v2562 = vunpack.c.l.b16 %v1538
      %v2563 = vunpack.c.l.b16 %v1539
      %v2564 = vunpack.c.l.b16 %v1540
      %v2565 = vunpack.c.l.b16 %v1541
      %v2566 = vunpack.c.l.b16 %v1542
      %v2567 = vunpack.c.l.b16 %v1543
      %v2568 = vunpack.c.l.b16 %v1544
      %v2569 = vunpack.c.l.b16 %v1545
      %v2570 = vunpack.c.l.b16 %v1546
      %v2571 = vunpack.c.l.b16 %v1547
      %v2572 = vunpack.c.l.b16 %v1548
      %v2573 = vunpack.c.l.b16 %v1549
      %v2574 = vunpack.c.l.b16 %v1550
      %v2575 = vunpack.c.l.b16 %v1551
      %v2576 = vunpack.c.l.b16 %v1552
      %v2577 = vunpack.c.l.b16 %v1553
      %v2578 = vunpack.c.l.b16 %v1554
      %v2579 = vunpack.c.l.b16 %v1555
      %v2580 = vunpack.c.l.b16 %v1556
      %v2581 = vunpack.c.l.b16 %v1557
      %v2582 = vunpack.c.l.b16 %v1558
      %v2583 = vunpack.c.l.b16 %v1559
      %v2584 = vunpack.c.l.b16 %v1560
      %v2585 = vunpack.c.l.b16 %v1561
      %v2586 = vunpack.c.l.b16 %v1562
      %v2587 = vunpack.c.l.b16 %v1563
      %v2588 = vunpack.c.l.b16 %v1564
      %v2589 = vunpack.c.l.b16 %v1565
      %v2590 = vunpack.c.l.b16 %v1566
      %v2591 = vunpack.c.l.b16 %v1567
      %v2592 = vunpack.c.l.b16 %v1568
      %v2593 = vunpack.c.l.b16 %v1569
      %v2594 = vunpack.c.l.b16 %v1570
      %v2595 = vunpack.c.l.b16 %v1571
      %v2596 = vunpack.c.l.b16 %v1572
      %v2597 = vunpack.c.l.b16 %v1573
      %v2598 = vunpack.c.l.b16 %v1574
      %v2599 = vunpack.c.l.b16 %v1575
      %v2600 = vunpack.c.l.b16 %v1576
      %v2601 = vunpack.c.l.b16 %v1577
      %v2602 = vunpack.c.l.b16 %v1578
      %v2603 = vunpack.c.l.b16 %v1579
      %v2604 = vunpack.c.l.b16 %v1580
      %v2605 = vunpack.c.l.b16 %v1581
      %v2606 = vunpack.c.l.b16 %v1582
      %v2607 = vunpack.c.l.b16 %v1583
      %v2608 = vunpack.c.l.b16 %v1584
      %v2609 = vunpack.c.l.b16 %v1585
      %v2610 = vunpack.c.l.b16 %v1586
      %v2611 = vunpack.c.l.b16 %v1587
      %v2612 = vunpack.c.l.b16 %v1588
      %v2613 = vunpack.c.l.b16 %v1589
      %v2614 = vunpack.c.l.b16 %v1590
      %v2615 = vunpack.c.l.b16 %v1591
      %v2616 = vunpack.c.l.b16 %v1592
      %v2617 = vunpack.c.l.b16 %v1593
      %v2618 = vunpack.c.l.b16 %v1594
      %v2619 = vunpack.c.l.b16 %v1595
      %v2620 = vunpack.c.l.b16 %v1596
      %v2621 = vunpack.c.l.b16 %v1597
      %v2622 = vunpack.c.l.b16 %v1598
      %v2623 = vunpack.c.l.b16 %v1599
      %v2624 = vunpack.c.l.b16 %v1600
      %v2625 = vunpack.c.l.b16 %v1601
      %v2626 = vunpack.c.l.b16 %v1602
      %v2627 = vunpack.c.l.b16 %v1603
      %v2628 = vunpack.c.l.b16 %v1604
      %v2629 = vunpack.c.l.b16 %v1605
      %v2630 = vunpack.c.l.b16 %v1606
      %v2631 = vunpack.c.l.b16 %v1607
      %v2632 = vunpack.c.l.b16 %v1608
      %v2633 = vunpack.c.l.b16 %v1609
      %v2634 = vunpack.c.l.b16 %v1610
      %v2635 = vunpack.c.l.b16 %v1611
      %v2636 = vunpack.c.l.b16 %v1612
      %v2637 = vunpack.c.l.b16 %v1613
      %v2638 = vunpack.c.l.b16 %v1614
      %v2639 = vunpack.c.l.b16 %v1615
      %v2640 = vunpack.c.l.b16 %v1616
      %v2641 = vunpack.c.l.b16 %v1617
      %v2642 = vunpack.c.l.b16 %v1618
      %v2643 = vunpack.c.l.b16 %v1619
      %v2644 = vunpack.c.l.b16 %v1620
      %v2645 = vunpack.c.l.b16 %v1621
      %v2646 = vunpack.c.l.b16 %v1622
      %v2647 = vunpack.c.l.b16 %v1623
      %v2648 = vunpack.c.l.b16 %v1624
      %v2649 = vunpack.c.l.b16 %v1625
      %v2650 = vunpack.c.l.b16 %v1626
      %v2651 = vunpack.c.l.b16 %v1627
      %v2652 = vunpack.c.l.b16 %v1628
      %v2653 = vunpack.c.l.b16 %v1629
      %v2654 = vunpack.c.l.b16 %v1630
      %v2655 = vunpack.c.l.b16 %v1631
      %v2656 = vunpack.c.l.b16 %v1632
      %v2657 = vunpack.c.l.b16 %v1633
      %v2658 = vunpack.c.l.b16 %v1634
      %v2659 = vunpack.c.l.b16 %v1635
      %v2660 = vunpack.c.l.b16 %v1636
      %v2661 = vunpack.c.l.b16 %v1637
      %v2662 = vpack.c.b16 %v2519, %v2518
      %v2663 = vpack.c.b16 %v2521, %v2520
      %v2664 = vpack.c.b16 %v2523, %v2522
      %v2665 = vpack.c.b16 %v2525, %v2524
      %v2666 = vpack.c.b16 %v2527, %v2526
      %v2667 = vpack.c.b16 %v2529, %v2528
      %v2668 = vpack.c.b16 %v2531, %v2530
      %v2669 = vpack.c.b16 %v2533, %v2532
      %v2670 = vpack.c.b16 %v2535, %v2534
      %v2671 = vpack.c.b16 %v2537, %v2536
      %v2672 = vpack.c.b16 %v2539, %v2538
      %v2673 = vpack.c.b16 %v2541, %v2540
      %v2674 = vpack.c.b16 %v2543, %v2542
      %v2675 = vpack.c.b16 %v2545, %v2544
      %v2676 = vpack.c.b16 %v2547, %v2546
      %v2677 = vpack.c.b16 %v2549, %v2548
      %v2678 = vpack.c.b16 %v2551, %v2550
      %v2679 = vpack.c.b16 %v2553, %v2552
      %v2680 = vpack.c.b16 %v2555, %v2554
      %v2681 = vpack.c.b16 %v2557, %v2556
      %v2682 = vpack.c.b16 %v2559, %v2558
      %v2683 = vpack.c.b16 %v2561, %v2560
      %v2684 = vpack.c.b16 %v2563, %v2562
      %v2685 = vpack.c.b16 %v2565, %v2564
      %v2686 = vpack.c.b16 %v2567, %v2566
      %v2687 = vpack.c.b16 %v2569, %v2568
      %v2688 = vpack.c.b16 %v2571, %v2570
      %v2689 = vpack.c.b16 %v2573, %v2572
      %v2690 = vpack.c.b16 %v2575, %v2574
      %v2691 = vpack.c.b16 %v2577, %v2576
      %v2692 = vpack.c.b16 %v2579, %v2578
      %v2693 = vpack.c.b16 %v2581, %v2580
      %v2694 = vpack.c.b16 %v2583, %v2582
      %v2695 = vpack.c.b16 %v2585, %v2584
      %v2696 = vpack.c.b16 %v2587, %v2586
      %v2697 = vpack.c.b16 %v2589, %v2588
      %v2698 = vpack.c.b16 %v2591, %v2590
      %v2699 = vpack.c.b16 %v2593, %v2592
      %v2700 = vpack.c.b16 %v2595, %v2594
      %v2701 = vpack.c.b16 %v2597, %v2596
      %v2702 = vpack.c.b16 %v2599, %v2598
      %v2703 = vpack.c.b16 %v2601, %v2600
      %v2704 = vpack.c.b16 %v2603, %v2602
      %v2705 = vpack.c.b16 %v2605, %v2604
      %v2706 = vpack.c.b16 %v2607, %v2606
      %v2707 = vpack.c.b16 %v2609, %v2608
      %v2708 = vpack.c.b16 %v2611, %v2610
      %v2709 = vpack.c.b16 %v2613, %v2612
      %v2710 = vpack.c.b16 %v2615, %v2614
      %v2711 = vpack.c.b16 %v2617, %v2616
      %v2712 = vpack.c.b16 %v2619, %v2618
      %v2713 = vpack.c.b16 %v2621, %v2620
      %v2714 = vpack.c.b16 %v2623, %v2622
      %v2715 = vpack.c.b16 %v2625, %v2624
      %v2716 = vpack.c.b16 %v2627, %v2626
      %v2717 = vpack.c.b16 %v2629, %v2628
      %v2718 = vpack.c.b16 %v2631, %v2630
      %v2719 = vpack.c.b16 %v2633, %v2632
      %v2720 = vpack.c.b16 %v2635, %v2634
      %v2721 = vpack.c.b16 %v2637, %v2636
      %v2722 = vpack.c.b16 %v2639, %v2638
      %v2723 = vpack.c.b16 %v2641, %v2640
      %v2724 = vpack.c.b16 %v2643, %v2642
      %v2725 = vpack.c.b16 %v2645, %v2644
      %v2726 = vpack.c.b16 %v2647, %v2646
      %v2727 = vpack.c.b16 %v2649, %v2648
      %v2728 = vpack.c.b16 %v2651, %v2650
      %v2729 = vpack.c.b16 %v2653, %v2652
      %v2730 = vpack.c.b16 %v2655, %v2654
      %v2731 = vpack.c.b16 %v2657, %v2656
      %v2732 = vpack.c.b16 %v2659, %v2658
      %v2733 = vpack.c.b16 %v2661, %v2660
      %2806 = vmatprep.subr.bf16.mxu0 0
      %2807 = vmatpush1.bf16.msra.mxu0 %v2669
      %2808 = vmatprep.subr.bf16.mxu0 0
      %2809 = vmatpush1.bf16.msra.mxu0 %v2668
      %2810 = vmatprep.subr.bf16.mxu0 0
      %2811 = vmatpush1.bf16.msra.mxu0 %v2667
      %2812 = vmatprep.subr.bf16.mxu0 0
      %2813 = vmatpush1.bf16.msra.mxu0 %v2666
      %2814 = vmatprep.subr.bf16.mxu0 0
      %2815 = vmatpush1.bf16.msra.mxu0 %v2665
      %2816 = vmatprep.subr.bf16.mxu0 0
      %2817 = vmatpush1.bf16.msra.mxu0 %v2664
      %2818 = vmatprep.subr.bf16.mxu0 0
      %2819 = vmatpush1.bf16.msra.mxu0 %v2663
      %2820 = vmatprep.subr.bf16.mxu0 0
      %2821 = vmatpush1.bf16.msra.mxu0 %v2662
      %2822 = vmatprep.subr.bf16.mxu0 0
      %2823 = vmatpush2.bf16.msra.mxu0 %v2677
      %2824 = vmatprep.subr.bf16.mxu0 0
      %2825 = vmatpush2.bf16.msra.mxu0 %v2676
      %2826 = vmatprep.subr.bf16.mxu0 0
      %2827 = vmatpush2.bf16.msra.mxu0 %v2675
      %2828 = vmatprep.subr.bf16.mxu0 0
      %2829 = vmatpush2.bf16.msra.mxu0 %v2674
      %2830 = vmatprep.subr.bf16.mxu0 0
      %2831 = vmatpush2.bf16.msra.mxu0 %v2673
      %2832 = vmatprep.subr.bf16.mxu0 0
      %2833 = vmatpush2.bf16.msra.mxu0 %v2672
      %2834 = vmatprep.subr.bf16.mxu0 0
      %2835 = vmatpush2.bf16.msra.mxu0 %v2671
      %2836 = vmatprep.subr.bf16.mxu0 0
      %2837 = vmatpush2.bf16.msra.mxu0 %v2670
      %2838 = vmatprep.mubr.bf16.mxu0 %v2087
      %2839 = vmatmul.mubr.bf16.gmra.mxu0 %v2086
      %v2840 = vpop.f32.mrf.mxu0
      %v2841 = vadd.f32 0.0, %v2840
      %v2842 = vpop.f32.mrf.mxu0
      %v2843 = vpop.f32.mrf.mxu0
      %v2844 = vadd.f32 0.0, %v2843
      %v2845 = vpop.f32.mrf.mxu0
      %2846 = vmatprep.mubr.bf16.mxu0 %v2096
      %2847 = vmatmul.mubr.bf16.gmra.mxu0 %v2095
      %v2848 = vpop.f32.mrf.mxu0
      %v2849 = vadd.f32 0.0, %v2848
      %v2850 = vpop.f32.mrf.mxu0
      %v2851 = vpop.f32.mrf.mxu0
      %v2852 = vadd.f32 0.0, %v2851
      %v2853 = vpop.f32.mrf.mxu0
      %2854 = vmatprep.mubr.bf16.mxu0 %v2105
      %2855 = vmatmul.mubr.bf16.gmra.mxu0 %v2104
      %v2856 = vpop.f32.mrf.mxu0
      %v2857 = vadd.f32 0.0, %v2856
      %v2858 = vpop.f32.mrf.mxu0
      %v2859 = vpop.f32.mrf.mxu0
      %v2860 = vadd.f32 0.0, %v2859
      %v2861 = vpop.f32.mrf.mxu0
      %2862 = vmatprep.mubr.bf16.mxu0 %v2114
      %2863 = vmatmul.mubr.bf16.gmra.mxu0 %v2113
      %v2864 = vpop.f32.mrf.mxu0
      %v2865 = vadd.f32 0.0, %v2864
      %v2866 = vpop.f32.mrf.mxu0
      %v2867 = vpop.f32.mrf.mxu0
      %v2868 = vadd.f32 0.0, %v2867
      %v2869 = vpop.f32.mrf.mxu0
      %2870 = vmatprep.mubr.bf16.mxu0 %v2123
      %2871 = vmatmul.mubr.bf16.gmra.mxu0 %v2122
      %v2872 = vpop.f32.mrf.mxu0
      %v2873 = vadd.f32 0.0, %v2872
      %v2874 = vpop.f32.mrf.mxu0
      %v2875 = vpop.f32.mrf.mxu0
      %v2876 = vadd.f32 0.0, %v2875
      %v2877 = vpop.f32.mrf.mxu0
      %2878 = vmatprep.mubr.bf16.mxu0 %v2132
      %2879 = vmatmul.mubr.bf16.gmra.mxu0 %v2131
      %v2880 = vpop.f32.mrf.mxu0
      %v2881 = vadd.f32 0.0, %v2880
      %v2882 = vpop.f32.mrf.mxu0
      %v2883 = vpop.f32.mrf.mxu0
      %v2884 = vadd.f32 0.0, %v2883
      %v2885 = vpop.f32.mrf.mxu0
      %2886 = vmatprep.mubr.bf16.mxu0 %v2141
      %2887 = vmatmul.mubr.bf16.gmra.mxu0 %v2140
      %v2888 = vpop.f32.mrf.mxu0
      %v2889 = vadd.f32 0.0, %v2888
      %v2890 = vpop.f32.mrf.mxu0
      %v2891 = vpop.f32.mrf.mxu0
      %v2892 = vadd.f32 0.0, %v2891
      %v2893 = vpop.f32.mrf.mxu0
      %2894 = vmatprep.mubr.bf16.mxu0 %v2150
      %2895 = vmatmul.mubr.bf16.gmra.mxu0 %v2149
      %v2896 = vpop.f32.mrf.mxu0
      %v2897 = vadd.f32 0.0, %v2896
      %v2898 = vpop.f32.mrf.mxu0
      %v2899 = vpop.f32.mrf.mxu0
      %v2900 = vadd.f32 0.0, %v2899
      %v2901 = vpop.f32.mrf.mxu0
      %2902 = vmatprep.mubr.bf16.mxu0 %v2159
      %2903 = vmatmul.mubr.bf16.gmra.mxu0 %v2158
      %v2904 = vpop.f32.mrf.mxu0
      %v2905 = vadd.f32 0.0, %v2904
      %v2906 = vpop.f32.mrf.mxu0
      %v2907 = vpop.f32.mrf.mxu0
      %v2908 = vadd.f32 0.0, %v2907
      %v2909 = vpop.f32.mrf.mxu0
      %2910 = vmatprep.mubr.bf16.mxu0 %v2168
      %2911 = vmatmul.mubr.bf16.gmra.mxu0 %v2167
      %v2912 = vpop.f32.mrf.mxu0
      %v2913 = vadd.f32 0.0, %v2912
      %v2914 = vpop.f32.mrf.mxu0
      %v2915 = vpop.f32.mrf.mxu0
      %v2916 = vadd.f32 0.0, %v2915
      %v2917 = vpop.f32.mrf.mxu0
      %2918 = vmatprep.mubr.bf16.mxu0 %v2177
      %2919 = vmatmul.mubr.bf16.gmra.mxu0 %v2176
      %v2920 = vpop.f32.mrf.mxu0
      %v2921 = vadd.f32 0.0, %v2920
      %v2922 = vpop.f32.mrf.mxu0
      %v2923 = vpop.f32.mrf.mxu0
      %v2924 = vadd.f32 0.0, %v2923
      %v2925 = vpop.f32.mrf.mxu0
      %2926 = vmatprep.mubr.bf16.mxu0 %v2186
      %2927 = vmatmul.mubr.bf16.gmra.mxu0 %v2185
      %v2928 = vpop.f32.mrf.mxu0
      %v2929 = vadd.f32 0.0, %v2928
      %v2930 = vpop.f32.mrf.mxu0
      %v2931 = vpop.f32.mrf.mxu0
      %v2932 = vadd.f32 0.0, %v2931
      %v2933 = vpop.f32.mrf.mxu0
      %2934 = vmatprep.mubr.bf16.mxu0 %v2195
      %2935 = vmatmul.mubr.bf16.gmra.mxu0 %v2194
      %v2936 = vpop.f32.mrf.mxu0
      %v2937 = vadd.f32 0.0, %v2936
      %v2938 = vpop.f32.mrf.mxu0
      %v2939 = vpop.f32.mrf.mxu0
      %v2940 = vadd.f32 0.0, %v2939
      %v2941 = vpop.f32.mrf.mxu0
      %2942 = vmatprep.mubr.bf16.mxu0 %v2204
      %2943 = vmatmul.mubr.bf16.gmra.mxu0 %v2203
      %v2944 = vpop.f32.mrf.mxu0
      %v2945 = vadd.f32 0.0, %v2944
      %v2946 = vpop.f32.mrf.mxu0
      %v2947 = vpop.f32.mrf.mxu0
      %v2948 = vadd.f32 0.0, %v2947
      %v2949 = vpop.f32.mrf.mxu0
      %2950 = vmatprep.mubr.bf16.mxu0 %v2213
      %2951 = vmatmul.mubr.bf16.gmra.mxu0 %v2212
      %v2952 = vpop.f32.mrf.mxu0
      %v2953 = vadd.f32 0.0, %v2952
      %v2954 = vpop.f32.mrf.mxu0
      %v2955 = vpop.f32.mrf.mxu0
      %v2956 = vadd.f32 0.0, %v2955
      %v2957 = vpop.f32.mrf.mxu0
      %2958 = vmatprep.mubr.bf16.mxu0 %v2222
      %2959 = vmatmul.mubr.bf16.gmra.mxu0 %v2221
      %v2960 = vpop.f32.mrf.mxu0
      %v2961 = vadd.f32 0.0, %v2960
      %v2962 = vpop.f32.mrf.mxu0
      %v2963 = vpop.f32.mrf.mxu0
      %v2964 = vadd.f32 0.0, %v2963
      %v2965 = vpop.f32.mrf.mxu0
      %2966 = vdwg.mxu0
      %2967 = vmatprep.subr.bf16.mxu0 0
      %2968 = vmatpush1.bf16.msra.mxu0 %v2685
      %2969 = vmatprep.subr.bf16.mxu0 0
      %2970 = vmatpush1.bf16.msra.mxu0 %v2684
      %2971 = vmatprep.subr.bf16.mxu0 0
      %2972 = vmatpush1.bf16.msra.mxu0 %v2683
      %2973 = vmatprep.subr.bf16.mxu0 0
      %2974 = vmatpush1.bf16.msra.mxu0 %v2682
      %2975 = vmatprep.subr.bf16.mxu0 0
      %2976 = vmatpush1.bf16.msra.mxu0 %v2681
      %2977 = vmatprep.subr.bf16.mxu0 0
      %2978 = vmatpush1.bf16.msra.mxu0 %v2680
      %2979 = vmatprep.subr.bf16.mxu0 0
      %2980 = vmatpush1.bf16.msra.mxu0 %v2679
      %2981 = vmatprep.subr.bf16.mxu0 0
      %2982 = vmatpush1.bf16.msra.mxu0 %v2678
      %2983 = vmatprep.subr.bf16.mxu0 0
      %2984 = vmatpush2.bf16.msra.mxu0 %v2693
      %2985 = vmatprep.subr.bf16.mxu0 0
      %2986 = vmatpush2.bf16.msra.mxu0 %v2692
      %2987 = vmatprep.subr.bf16.mxu0 0
      %2988 = vmatpush2.bf16.msra.mxu0 %v2691
      %2989 = vmatprep.subr.bf16.mxu0 0
      %2990 = vmatpush2.bf16.msra.mxu0 %v2690
      %2991 = vmatprep.subr.bf16.mxu0 0
      %2992 = vmatpush2.bf16.msra.mxu0 %v2689
      %2993 = vmatprep.subr.bf16.mxu0 0
      %2994 = vmatpush2.bf16.msra.mxu0 %v2688
      %2995 = vmatprep.subr.bf16.mxu0 0
      %2996 = vmatpush2.bf16.msra.mxu0 %v2687
      %2997 = vmatprep.subr.bf16.mxu0 0
      %2998 = vmatpush2.bf16.msra.mxu0 %v2686
      %2999 = vmatprep.mubr.bf16.mxu0 %v2089
      %3000 = vmatmul.mubr.bf16.gmra.mxu0 %v2088
      %v3001 = vpop.f32.mrf.mxu0
      %v3002 = vadd.f32 %v2841, %v3001
      %v3003 = vpop.f32.mrf.mxu0
      %v3004 = vpop.f32.mrf.mxu0
      %v3005 = vadd.f32 %v2844, %v3004
      %v3006 = vpop.f32.mrf.mxu0
      %3007 = vmatprep.mubr.bf16.mxu0 %v2098
      %3008 = vmatmul.mubr.bf16.gmra.mxu0 %v2097
      %v3009 = vpop.f32.mrf.mxu0
      %v3010 = vadd.f32 %v2849, %v3009
      %v3011 = vpop.f32.mrf.mxu0
      %v3012 = vpop.f32.mrf.mxu0
      %v3013 = vadd.f32 %v2852, %v3012
      %v3014 = vpop.f32.mrf.mxu0
      %3015 = vmatprep.mubr.bf16.mxu0 %v2107
      %3016 = vmatmul.mubr.bf16.gmra.mxu0 %v2106
      %v3017 = vpop.f32.mrf.mxu0
      %v3018 = vadd.f32 %v2857, %v3017
      %v3019 = vpop.f32.mrf.mxu0
      %v3020 = vpop.f32.mrf.mxu0
      %v3021 = vadd.f32 %v2860, %v3020
      %v3022 = vpop.f32.mrf.mxu0
      %3023 = vmatprep.mubr.bf16.mxu0 %v2116
      %3024 = vmatmul.mubr.bf16.gmra.mxu0 %v2115
      %v3025 = vpop.f32.mrf.mxu0
      %v3026 = vadd.f32 %v2865, %v3025
      %v3027 = vpop.f32.mrf.mxu0
      %v3028 = vpop.f32.mrf.mxu0
      %v3029 = vadd.f32 %v2868, %v3028
      %v3030 = vpop.f32.mrf.mxu0
      %3031 = vmatprep.mubr.bf16.mxu0 %v2125
      %3032 = vmatmul.mubr.bf16.gmra.mxu0 %v2124
      %v3033 = vpop.f32.mrf.mxu0
      %v3034 = vadd.f32 %v2873, %v3033
      %v3035 = vpop.f32.mrf.mxu0
      %v3036 = vpop.f32.mrf.mxu0
      %v3037 = vadd.f32 %v2876, %v3036
      %v3038 = vpop.f32.mrf.mxu0
      %3039 = vmatprep.mubr.bf16.mxu0 %v2134
      %3040 = vmatmul.mubr.bf16.gmra.mxu0 %v2133
      %v3041 = vpop.f32.mrf.mxu0
      %v3042 = vadd.f32 %v2881, %v3041
      %v3043 = vpop.f32.mrf.mxu0
      %v3044 = vpop.f32.mrf.mxu0
      %v3045 = vadd.f32 %v2884, %v3044
      %v3046 = vpop.f32.mrf.mxu0
      %3047 = vmatprep.mubr.bf16.mxu0 %v2143
      %3048 = vmatmul.mubr.bf16.gmra.mxu0 %v2142
      %v3049 = vpop.f32.mrf.mxu0
      %v3050 = vadd.f32 %v2889, %v3049
      %v3051 = vpop.f32.mrf.mxu0
      %v3052 = vpop.f32.mrf.mxu0
      %v3053 = vadd.f32 %v2892, %v3052
      %v3054 = vpop.f32.mrf.mxu0
      %3055 = vmatprep.mubr.bf16.mxu0 %v2152
      %3056 = vmatmul.mubr.bf16.gmra.mxu0 %v2151
      %v3057 = vpop.f32.mrf.mxu0
      %v3058 = vadd.f32 %v2897, %v3057
      %v3059 = vpop.f32.mrf.mxu0
      %v3060 = vpop.f32.mrf.mxu0
      %v3061 = vadd.f32 %v2900, %v3060
      %v3062 = vpop.f32.mrf.mxu0
      %3063 = vmatprep.mubr.bf16.mxu0 %v2161
      %3064 = vmatmul.mubr.bf16.gmra.mxu0 %v2160
      %v3065 = vpop.f32.mrf.mxu0
      %v3066 = vadd.f32 %v2905, %v3065
      %v3067 = vpop.f32.mrf.mxu0
      %v3068 = vpop.f32.mrf.mxu0
      %v3069 = vadd.f32 %v2908, %v3068
      %v3070 = vpop.f32.mrf.mxu0
      %3071 = vmatprep.mubr.bf16.mxu0 %v2170
      %3072 = vmatmul.mubr.bf16.gmra.mxu0 %v2169
      %v3073 = vpop.f32.mrf.mxu0
      %v3074 = vadd.f32 %v2913, %v3073
      %v3075 = vpop.f32.mrf.mxu0
      %v3076 = vpop.f32.mrf.mxu0
      %v3077 = vadd.f32 %v2916, %v3076
      %v3078 = vpop.f32.mrf.mxu0
      %3079 = vmatprep.mubr.bf16.mxu0 %v2179
      %3080 = vmatmul.mubr.bf16.gmra.mxu0 %v2178
      %v3081 = vpop.f32.mrf.mxu0
      %v3082 = vadd.f32 %v2921, %v3081
      %v3083 = vpop.f32.mrf.mxu0
      %v3084 = vpop.f32.mrf.mxu0
      %v3085 = vadd.f32 %v2924, %v3084
      %v3086 = vpop.f32.mrf.mxu0
      %3087 = vmatprep.mubr.bf16.mxu0 %v2188
      %3088 = vmatmul.mubr.bf16.gmra.mxu0 %v2187
      %v3089 = vpop.f32.mrf.mxu0
      %v3090 = vadd.f32 %v2929, %v3089
      %v3091 = vpop.f32.mrf.mxu0
      %v3092 = vpop.f32.mrf.mxu0
      %v3093 = vadd.f32 %v2932, %v3092
      %v3094 = vpop.f32.mrf.mxu0
      %3095 = vmatprep.mubr.bf16.mxu0 %v2197
      %3096 = vmatmul.mubr.bf16.gmra.mxu0 %v2196
      %v3097 = vpop.f32.mrf.mxu0
      %v3098 = vadd.f32 %v2937, %v3097
      %v3099 = vpop.f32.mrf.mxu0
      %v3100 = vpop.f32.mrf.mxu0
      %v3101 = vadd.f32 %v2940, %v3100
      %v3102 = vpop.f32.mrf.mxu0
      %3103 = vmatprep.mubr.bf16.mxu0 %v2206
      %3104 = vmatmul.mubr.bf16.gmra.mxu0 %v2205
      %v3105 = vpop.f32.mrf.mxu0
      %v3106 = vadd.f32 %v2945, %v3105
      %v3107 = vpop.f32.mrf.mxu0
      %v3108 = vpop.f32.mrf.mxu0
      %v3109 = vadd.f32 %v2948, %v3108
      %v3110 = vpop.f32.mrf.mxu0
      %3111 = vmatprep.mubr.bf16.mxu0 %v2215
      %3112 = vmatmul.mubr.bf16.gmra.mxu0 %v2214
      %v3113 = vpop.f32.mrf.mxu0
      %v3114 = vadd.f32 %v2953, %v3113
      %v3115 = vpop.f32.mrf.mxu0
      %v3116 = vpop.f32.mrf.mxu0
      %v3117 = vadd.f32 %v2956, %v3116
      %v3118 = vpop.f32.mrf.mxu0
      %3119 = vmatprep.mubr.bf16.mxu0 %v2224
      %3120 = vmatmul.mubr.bf16.gmra.mxu0 %v2223
      %v3121 = vpop.f32.mrf.mxu0
      %v3122 = vadd.f32 %v2961, %v3121
      %v3123 = vpop.f32.mrf.mxu0
      %v3124 = vpop.f32.mrf.mxu0
      %v3125 = vadd.f32 %v2964, %v3124
      %v3126 = vpop.f32.mrf.mxu0
      %3127 = vdwg.mxu0
      %3128 = vmatprep.subr.bf16.mxu0 0
      %3129 = vmatpush1.bf16.msra.mxu0 %v2701
      %3130 = vmatprep.subr.bf16.mxu0 0
      %3131 = vmatpush1.bf16.msra.mxu0 %v2700
      %3132 = vmatprep.subr.bf16.mxu0 0
      %3133 = vmatpush1.bf16.msra.mxu0 %v2699
      %3134 = vmatprep.subr.bf16.mxu0 0
      %3135 = vmatpush1.bf16.msra.mxu0 %v2698
      %3136 = vmatprep.subr.bf16.mxu0 0
      %3137 = vmatpush1.bf16.msra.mxu0 %v2697
      %3138 = vmatprep.subr.bf16.mxu0 0
      %3139 = vmatpush1.bf16.msra.mxu0 %v2696
      %3140 = vmatprep.subr.bf16.mxu0 0
      %3141 = vmatpush1.bf16.msra.mxu0 %v2695
      %3142 = vmatprep.subr.bf16.mxu0 0
      %3143 = vmatpush1.bf16.msra.mxu0 %v2694
      %3144 = vmatprep.subr.bf16.mxu0 0
      %3145 = vmatpush2.bf16.msra.mxu0 %v2709
      %3146 = vmatprep.subr.bf16.mxu0 0
      %3147 = vmatpush2.bf16.msra.mxu0 %v2708
      %3148 = vmatprep.subr.bf16.mxu0 0
      %3149 = vmatpush2.bf16.msra.mxu0 %v2707
      %3150 = vmatprep.subr.bf16.mxu0 0
      %3151 = vmatpush2.bf16.msra.mxu0 %v2706
      %3152 = vmatprep.subr.bf16.mxu0 0
      %3153 = vmatpush2.bf16.msra.mxu0 %v2705
      %3154 = vmatprep.subr.bf16.mxu0 0
      %3155 = vmatpush2.bf16.msra.mxu0 %v2704
      %3156 = vmatprep.subr.bf16.mxu0 0
      %3157 = vmatpush2.bf16.msra.mxu0 %v2703
      %3158 = vmatprep.subr.bf16.mxu0 0
      %3159 = vmatpush2.bf16.msra.mxu0 %v2702
      %3160 = vmatprep.mubr.bf16.mxu0 %v2091
      %3161 = vmatmul.mubr.bf16.gmra.mxu0 %v2090
      %v3162 = vpop.f32.mrf.mxu0
      %v3163 = vadd.f32 %v3002, %v3162
      %v3164 = vpop.f32.mrf.mxu0
      %v3165 = vpop.f32.mrf.mxu0
      %v3166 = vadd.f32 %v3005, %v3165
      %v3167 = vpop.f32.mrf.mxu0
      %3168 = vmatprep.mubr.bf16.mxu0 %v2100
      %3169 = vmatmul.mubr.bf16.gmra.mxu0 %v2099
      %v3170 = vpop.f32.mrf.mxu0
      %v3171 = vadd.f32 %v3010, %v3170
      %v3172 = vpop.f32.mrf.mxu0
      %v3173 = vpop.f32.mrf.mxu0
      %v3174 = vadd.f32 %v3013, %v3173
      %v3175 = vpop.f32.mrf.mxu0
      %3176 = vmatprep.mubr.bf16.mxu0 %v2109
      %3177 = vmatmul.mubr.bf16.gmra.mxu0 %v2108
      %v3178 = vpop.f32.mrf.mxu0
      %v3179 = vadd.f32 %v3018, %v3178
      %v3180 = vpop.f32.mrf.mxu0
      %v3181 = vpop.f32.mrf.mxu0
      %v3182 = vadd.f32 %v3021, %v3181
      %v3183 = vpop.f32.mrf.mxu0
      %3184 = vmatprep.mubr.bf16.mxu0 %v2118
      %3185 = vmatmul.mubr.bf16.gmra.mxu0 %v2117
      %v3186 = vpop.f32.mrf.mxu0
      %v3187 = vadd.f32 %v3026, %v3186
      %v3188 = vpop.f32.mrf.mxu0
      %v3189 = vpop.f32.mrf.mxu0
      %v3190 = vadd.f32 %v3029, %v3189
      %v3191 = vpop.f32.mrf.mxu0
      %3192 = vmatprep.mubr.bf16.mxu0 %v2127
      %3193 = vmatmul.mubr.bf16.gmra.mxu0 %v2126
      %v3194 = vpop.f32.mrf.mxu0
      %v3195 = vadd.f32 %v3034, %v3194
      %v3196 = vpop.f32.mrf.mxu0
      %v3197 = vpop.f32.mrf.mxu0
      %v3198 = vadd.f32 %v3037, %v3197
      %v3199 = vpop.f32.mrf.mxu0
      %3200 = vmatprep.mubr.bf16.mxu0 %v2136
      %3201 = vmatmul.mubr.bf16.gmra.mxu0 %v2135
      %v3202 = vpop.f32.mrf.mxu0
      %v3203 = vadd.f32 %v3042, %v3202
      %v3204 = vpop.f32.mrf.mxu0
      %v3205 = vpop.f32.mrf.mxu0
      %v3206 = vadd.f32 %v3045, %v3205
      %v3207 = vpop.f32.mrf.mxu0
      %3208 = vmatprep.mubr.bf16.mxu0 %v2145
      %3209 = vmatmul.mubr.bf16.gmra.mxu0 %v2144
      %v3210 = vpop.f32.mrf.mxu0
      %v3211 = vadd.f32 %v3050, %v3210
      %v3212 = vpop.f32.mrf.mxu0
      %v3213 = vpop.f32.mrf.mxu0
      %v3214 = vadd.f32 %v3053, %v3213
      %v3215 = vpop.f32.mrf.mxu0
      %3216 = vmatprep.mubr.bf16.mxu0 %v2154
      %3217 = vmatmul.mubr.bf16.gmra.mxu0 %v2153
      %v3218 = vpop.f32.mrf.mxu0
      %v3219 = vadd.f32 %v3058, %v3218
      %v3220 = vpop.f32.mrf.mxu0
      %v3221 = vpop.f32.mrf.mxu0
      %v3222 = vadd.f32 %v3061, %v3221
      %v3223 = vpop.f32.mrf.mxu0
      %3224 = vmatprep.mubr.bf16.mxu0 %v2163
      %3225 = vmatmul.mubr.bf16.gmra.mxu0 %v2162
      %v3226 = vpop.f32.mrf.mxu0
      %v3227 = vadd.f32 %v3066, %v3226
      %v3228 = vpop.f32.mrf.mxu0
      %v3229 = vpop.f32.mrf.mxu0
      %v3230 = vadd.f32 %v3069, %v3229
      %v3231 = vpop.f32.mrf.mxu0
      %3232 = vmatprep.mubr.bf16.mxu0 %v2172
      %3233 = vmatmul.mubr.bf16.gmra.mxu0 %v2171
      %v3234 = vpop.f32.mrf.mxu0
      %v3235 = vadd.f32 %v3074, %v3234
      %v3236 = vpop.f32.mrf.mxu0
      %v3237 = vpop.f32.mrf.mxu0
      %v3238 = vadd.f32 %v3077, %v3237
      %v3239 = vpop.f32.mrf.mxu0
      %3240 = vmatprep.mubr.bf16.mxu0 %v2181
      %3241 = vmatmul.mubr.bf16.gmra.mxu0 %v2180
      %v3242 = vpop.f32.mrf.mxu0
      %v3243 = vadd.f32 %v3082, %v3242
      %v3244 = vpop.f32.mrf.mxu0
      %v3245 = vpop.f32.mrf.mxu0
      %v3246 = vadd.f32 %v3085, %v3245
      %v3247 = vpop.f32.mrf.mxu0
      %3248 = vmatprep.mubr.bf16.mxu0 %v2190
      %3249 = vmatmul.mubr.bf16.gmra.mxu0 %v2189
      %v3250 = vpop.f32.mrf.mxu0
      %v3251 = vadd.f32 %v3090, %v3250
      %v3252 = vpop.f32.mrf.mxu0
      %v3253 = vpop.f32.mrf.mxu0
      %v3254 = vadd.f32 %v3093, %v3253
      %v3255 = vpop.f32.mrf.mxu0
      %3256 = vmatprep.mubr.bf16.mxu0 %v2199
      %3257 = vmatmul.mubr.bf16.gmra.mxu0 %v2198
      %v3258 = vpop.f32.mrf.mxu0
      %v3259 = vadd.f32 %v3098, %v3258
      %v3260 = vpop.f32.mrf.mxu0
      %v3261 = vpop.f32.mrf.mxu0
      %v3262 = vadd.f32 %v3101, %v3261
      %v3263 = vpop.f32.mrf.mxu0
      %3264 = vmatprep.mubr.bf16.mxu0 %v2208
      %3265 = vmatmul.mubr.bf16.gmra.mxu0 %v2207
      %v3266 = vpop.f32.mrf.mxu0
      %v3267 = vadd.f32 %v3106, %v3266
      %v3268 = vpop.f32.mrf.mxu0
      %v3269 = vpop.f32.mrf.mxu0
      %v3270 = vadd.f32 %v3109, %v3269
      %v3271 = vpop.f32.mrf.mxu0
      %3272 = vmatprep.mubr.bf16.mxu0 %v2217
      %3273 = vmatmul.mubr.bf16.gmra.mxu0 %v2216
      %v3274 = vpop.f32.mrf.mxu0
      %v3275 = vadd.f32 %v3114, %v3274
      %v3276 = vpop.f32.mrf.mxu0
      %v3277 = vpop.f32.mrf.mxu0
      %v3278 = vadd.f32 %v3117, %v3277
      %v3279 = vpop.f32.mrf.mxu0
      %3280 = vmatprep.mubr.bf16.mxu0 %v2226
      %3281 = vmatmul.mubr.bf16.gmra.mxu0 %v2225
      %v3282 = vpop.f32.mrf.mxu0
      %v3283 = vadd.f32 %v3122, %v3282
      %v3284 = vpop.f32.mrf.mxu0
      %v3285 = vpop.f32.mrf.mxu0
      %v3286 = vadd.f32 %v3125, %v3285
      %v3287 = vpop.f32.mrf.mxu0
      %3288 = vdwg.mxu0
      %3289 = vmatprep.subr.bf16.mxu0 0
      %3290 = vmatpush1.bf16.msra.mxu0 %v2717
      %3291 = vmatprep.subr.bf16.mxu0 0
      %3292 = vmatpush1.bf16.msra.mxu0 %v2716
      %3293 = vmatprep.subr.bf16.mxu0 0
      %3294 = vmatpush1.bf16.msra.mxu0 %v2715
      %3295 = vmatprep.subr.bf16.mxu0 0
      %3296 = vmatpush1.bf16.msra.mxu0 %v2714
      %3297 = vmatprep.subr.bf16.mxu0 0
      %3298 = vmatpush1.bf16.msra.mxu0 %v2713
      %3299 = vmatprep.subr.bf16.mxu0 0
      %3300 = vmatpush1.bf16.msra.mxu0 %v2712
      %3301 = vmatprep.subr.bf16.mxu0 0
      %3302 = vmatpush1.bf16.msra.mxu0 %v2711
      %3303 = vmatprep.subr.bf16.mxu0 0
      %3304 = vmatpush1.bf16.msra.mxu0 %v2710
      %3305 = vmatprep.subr.bf16.mxu0 0
      %3306 = vmatpush2.bf16.msra.mxu0 %v2725
      %3307 = vmatprep.subr.bf16.mxu0 0
      %3308 = vmatpush2.bf16.msra.mxu0 %v2724
      %3309 = vmatprep.subr.bf16.mxu0 0
      %3310 = vmatpush2.bf16.msra.mxu0 %v2723
      %3311 = vmatprep.subr.bf16.mxu0 0
      %3312 = vmatpush2.bf16.msra.mxu0 %v2722
      %3313 = vmatprep.subr.bf16.mxu0 0
      %3314 = vmatpush2.bf16.msra.mxu0 %v2721
      %3315 = vmatprep.subr.bf16.mxu0 0
      %3316 = vmatpush2.bf16.msra.mxu0 %v2720
      %3317 = vmatprep.subr.bf16.mxu0 0
      %3318 = vmatpush2.bf16.msra.mxu0 %v2719
      %3319 = vmatprep.subr.bf16.mxu0 0
      %3320 = vmatpush2.bf16.msra.mxu0 %v2718
      %3321 = vmatprep.mubr.bf16.mxu0 %v2093
      %3322 = vmatmul.mubr.bf16.gmra.mxu0 %v2092
      %v3323 = vpop.f32.mrf.mxu0
      %v3324 = vadd.f32 %v3163, %v3323
      %v3325 = vpop.f32.mrf.mxu0
      %v3326 = vpop.f32.mrf.mxu0
      %v3327 = vadd.f32 %v3166, %v3326
      %v3328 = vpop.f32.mrf.mxu0
      %3329 = vmatprep.mubr.bf16.mxu0 %v2102
      %3330 = vmatmul.mubr.bf16.gmra.mxu0 %v2101
      %v3331 = vpop.f32.mrf.mxu0
      %v3332 = vadd.f32 %v3171, %v3331
      %v3333 = vpop.f32.mrf.mxu0
      %v3334 = vpop.f32.mrf.mxu0
      %v3335 = vadd.f32 %v3174, %v3334
      %v3336 = vpop.f32.mrf.mxu0
      %3337 = vmatprep.mubr.bf16.mxu0 %v2111
      %3338 = vmatmul.mubr.bf16.gmra.mxu0 %v2110
      %v3339 = vpop.f32.mrf.mxu0
      %v3340 = vadd.f32 %v3179, %v3339
      %v3341 = vpop.f32.mrf.mxu0
      %v3342 = vpop.f32.mrf.mxu0
      %v3343 = vadd.f32 %v3182, %v3342
      %v3344 = vpop.f32.mrf.mxu0
      %3345 = vmatprep.mubr.bf16.mxu0 %v2120
      %3346 = vmatmul.mubr.bf16.gmra.mxu0 %v2119
      %v3347 = vpop.f32.mrf.mxu0
      %v3348 = vadd.f32 %v3187, %v3347
      %v3349 = vpop.f32.mrf.mxu0
      %v3350 = vpop.f32.mrf.mxu0
      %v3351 = vadd.f32 %v3190, %v3350
      %v3352 = vpop.f32.mrf.mxu0
      %3353 = vmatprep.mubr.bf16.mxu0 %v2129
      %3354 = vmatmul.mubr.bf16.gmra.mxu0 %v2128
      %v3355 = vpop.f32.mrf.mxu0
      %v3356 = vadd.f32 %v3195, %v3355
      %v3357 = vpop.f32.mrf.mxu0
      %v3358 = vpop.f32.mrf.mxu0
      %v3359 = vadd.f32 %v3198, %v3358
      %v3360 = vpop.f32.mrf.mxu0
      %3361 = vmatprep.mubr.bf16.mxu0 %v2138
      %3362 = vmatmul.mubr.bf16.gmra.mxu0 %v2137
      %v3363 = vpop.f32.mrf.mxu0
      %v3364 = vadd.f32 %v3203, %v3363
      %v3365 = vpop.f32.mrf.mxu0
      %v3366 = vpop.f32.mrf.mxu0
      %v3367 = vadd.f32 %v3206, %v3366
      %v3368 = vpop.f32.mrf.mxu0
      %3369 = vmatprep.mubr.bf16.mxu0 %v2147
      %3370 = vmatmul.mubr.bf16.gmra.mxu0 %v2146
      %v3371 = vpop.f32.mrf.mxu0
      %v3372 = vadd.f32 %v3211, %v3371
      %v3373 = vpop.f32.mrf.mxu0
      %v3374 = vpop.f32.mrf.mxu0
      %v3375 = vadd.f32 %v3214, %v3374
      %v3376 = vpop.f32.mrf.mxu0
      %3377 = vmatprep.mubr.bf16.mxu0 %v2156
      %3378 = vmatmul.mubr.bf16.gmra.mxu0 %v2155
      %v3379 = vpop.f32.mrf.mxu0
      %v3380 = vadd.f32 %v3219, %v3379
      %v3381 = vpop.f32.mrf.mxu0
      %v3382 = vpop.f32.mrf.mxu0
      %v3383 = vadd.f32 %v3222, %v3382
      %v3384 = vpop.f32.mrf.mxu0
      %3385 = vmatprep.mubr.bf16.mxu0 %v2165
      %3386 = vmatmul.mubr.bf16.gmra.mxu0 %v2164
      %v3387 = vpop.f32.mrf.mxu0
      %v3388 = vadd.f32 %v3227, %v3387
      %v3389 = vpop.f32.mrf.mxu0
      %v3390 = vpop.f32.mrf.mxu0
      %v3391 = vadd.f32 %v3230, %v3390
      %v3392 = vpop.f32.mrf.mxu0
      %3393 = vmatprep.mubr.bf16.mxu0 %v2174
      %3394 = vmatmul.mubr.bf16.gmra.mxu0 %v2173
      %v3395 = vpop.f32.mrf.mxu0
      %v3396 = vadd.f32 %v3235, %v3395
      %v3397 = vpop.f32.mrf.mxu0
      %v3398 = vpop.f32.mrf.mxu0
      %v3399 = vadd.f32 %v3238, %v3398
      %v3400 = vpop.f32.mrf.mxu0
      %3401 = vmatprep.mubr.bf16.mxu0 %v2183
      %3402 = vmatmul.mubr.bf16.gmra.mxu0 %v2182
      %v3403 = vpop.f32.mrf.mxu0
      %v3404 = vadd.f32 %v3243, %v3403
      %v3405 = vpop.f32.mrf.mxu0
      %v3406 = vpop.f32.mrf.mxu0
      %v3407 = vadd.f32 %v3246, %v3406
      %v3408 = vpop.f32.mrf.mxu0
      %3409 = vmatprep.mubr.bf16.mxu0 %v2192
      %3410 = vmatmul.mubr.bf16.gmra.mxu0 %v2191
      %v3411 = vpop.f32.mrf.mxu0
      %v3412 = vadd.f32 %v3251, %v3411
      %v3413 = vpop.f32.mrf.mxu0
      %v3414 = vpop.f32.mrf.mxu0
      %v3415 = vadd.f32 %v3254, %v3414
      %v3416 = vpop.f32.mrf.mxu0
      %3417 = vmatprep.mubr.bf16.mxu0 %v2201
      %3418 = vmatmul.mubr.bf16.gmra.mxu0 %v2200
      %v3419 = vpop.f32.mrf.mxu0
      %v3420 = vadd.f32 %v3259, %v3419
      %v3421 = vpop.f32.mrf.mxu0
      %v3422 = vpop.f32.mrf.mxu0
      %v3423 = vadd.f32 %v3262, %v3422
      %v3424 = vpop.f32.mrf.mxu0
      %3425 = vmatprep.mubr.bf16.mxu0 %v2210
      %3426 = vmatmul.mubr.bf16.gmra.mxu0 %v2209
      %v3427 = vpop.f32.mrf.mxu0
      %v3428 = vadd.f32 %v3267, %v3427
      %v3429 = vpop.f32.mrf.mxu0
      %v3430 = vpop.f32.mrf.mxu0
      %v3431 = vadd.f32 %v3270, %v3430
      %v3432 = vpop.f32.mrf.mxu0
      %3433 = vmatprep.mubr.bf16.mxu0 %v2219
      %3434 = vmatmul.mubr.bf16.gmra.mxu0 %v2218
      %v3435 = vpop.f32.mrf.mxu0
      %v3436 = vadd.f32 %v3275, %v3435
      %v3437 = vpop.f32.mrf.mxu0
      %v3438 = vpop.f32.mrf.mxu0
      %v3439 = vadd.f32 %v3278, %v3438
      %v3440 = vpop.f32.mrf.mxu0
      %3441 = vmatprep.mubr.bf16.mxu0 %v2228
      %3442 = vmatmul.mubr.bf16.gmra.mxu0 %v2227
      %v3443 = vpop.f32.mrf.mxu0
      %v3444 = vadd.f32 %v3283, %v3443
      %v3445 = vpop.f32.mrf.mxu0
      %v3446 = vpop.f32.mrf.mxu0
      %v3447 = vadd.f32 %v3286, %v3446
      %v3448 = vpop.f32.mrf.mxu0
      %3449 = vdwg.mxu0
      %3450 = vmatprep.subr.bf16.mxu0 0
      %3451 = vmatpush1.bf16.msra.mxu0 %v2733
      %3452 = vmatprep.subr.bf16.mxu0 0
      %3453 = vmatpush1.bf16.msra.mxu0 %v2732
      %3454 = vmatprep.subr.bf16.mxu0 0
      %3455 = vmatpush1.bf16.msra.mxu0 %v2731
      %3456 = vmatprep.subr.bf16.mxu0 0
      %3457 = vmatpush1.bf16.msra.mxu0 %v2730
      %3458 = vmatprep.subr.bf16.mxu0 0
      %3459 = vmatpush1.bf16.msra.mxu0 %v2729
      %3460 = vmatprep.subr.bf16.mxu0 0
      %3461 = vmatpush1.bf16.msra.mxu0 %v2728
      %3462 = vmatprep.subr.bf16.mxu0 0
      %3463 = vmatpush1.bf16.msra.mxu0 %v2727
      %3464 = vmatprep.subr.bf16.mxu0 0
      %3465 = vmatpush1.bf16.msra.mxu0 %v2726
      %3466 = vmatprep.subr.bf16.mxu0 0
      %3467 = vmatpush2.bf16.msra.mxu0 0
      %3468 = vmatprep.subr.bf16.mxu0 0
      %3469 = vmatpush2.bf16.msra.mxu0 0
      %3470 = vmatprep.subr.bf16.mxu0 0
      %3471 = vmatpush2.bf16.msra.mxu0 0
      %3472 = vmatprep.subr.bf16.mxu0 0
      %3473 = vmatpush2.bf16.msra.mxu0 0
      %3474 = vmatprep.subr.bf16.mxu0 0
      %3475 = vmatpush2.bf16.msra.mxu0 0
      %3476 = vmatprep.subr.bf16.mxu0 0
      %3477 = vmatpush2.bf16.msra.mxu0 0
      %3478 = vmatprep.subr.bf16.mxu0 0
      %3479 = vmatpush2.bf16.msra.mxu0 0
      %3480 = vmatprep.subr.bf16.mxu0 0
      %3481 = vmatpush2.bf16.msra.mxu0 0
      %3482 = vmatprep.mubr.bf16.mxu0 0
      %3483 = vmatmul.mubr.bf16.gmra.mxu0 %v2094
      %v3484 = vpop.f32.mrf.mxu0
      %v3485 = vadd.f32 %v3324, %v3484
      %v3486 = vpop.f32.mrf.mxu0
      %v3487 = vpop.f32.mrf.mxu0
      %v3488 = vadd.f32 %v3327, %v3487
      %v3489 = vpop.f32.mrf.mxu0
      %3490 = vmatprep.mubr.bf16.mxu0 0
      %3491 = vmatmul.mubr.bf16.gmra.mxu0 %v2103
      %v3492 = vpop.f32.mrf.mxu0
      %v3493 = vadd.f32 %v3332, %v3492
      %v3494 = vpop.f32.mrf.mxu0
      %v3495 = vpop.f32.mrf.mxu0
      %v3496 = vadd.f32 %v3335, %v3495
      %v3497 = vpop.f32.mrf.mxu0
      %3498 = vmatprep.mubr.bf16.mxu0 0
      %3499 = vmatmul.mubr.bf16.gmra.mxu0 %v2112
      %v3500 = vpop.f32.mrf.mxu0
      %v3501 = vadd.f32 %v3340, %v3500
      %v3502 = vpop.f32.mrf.mxu0
      %v3503 = vpop.f32.mrf.mxu0
      %v3504 = vadd.f32 %v3343, %v3503
      %v3505 = vpop.f32.mrf.mxu0
      %3506 = vmatprep.mubr.bf16.mxu0 0
      %3507 = vmatmul.mubr.bf16.gmra.mxu0 %v2121
      %v3508 = vpop.f32.mrf.mxu0
      %v3509 = vadd.f32 %v3348, %v3508
      %v3510 = vpop.f32.mrf.mxu0
      %v3511 = vpop.f32.mrf.mxu0
      %v3512 = vadd.f32 %v3351, %v3511
      %v3513 = vpop.f32.mrf.mxu0
      %3514 = vmatprep.mubr.bf16.mxu0 0
      %3515 = vmatmul.mubr.bf16.gmra.mxu0 %v2130
      %v3516 = vpop.f32.mrf.mxu0
      %v3517 = vadd.f32 %v3356, %v3516
      %v3518 = vpop.f32.mrf.mxu0
      %v3519 = vpop.f32.mrf.mxu0
      %v3520 = vadd.f32 %v3359, %v3519
      %v3521 = vpop.f32.mrf.mxu0
      %3522 = vmatprep.mubr.bf16.mxu0 0
      %3523 = vmatmul.mubr.bf16.gmra.mxu0 %v2139
      %v3524 = vpop.f32.mrf.mxu0
      %v3525 = vadd.f32 %v3364, %v3524
      %v3526 = vpop.f32.mrf.mxu0
      %v3527 = vpop.f32.mrf.mxu0
      %v3528 = vadd.f32 %v3367, %v3527
      %v3529 = vpop.f32.mrf.mxu0
      %3530 = vmatprep.mubr.bf16.mxu0 0
      %3531 = vmatmul.mubr.bf16.gmra.mxu0 %v2148
      %v3532 = vpop.f32.mrf.mxu0
      %v3533 = vadd.f32 %v3372, %v3532
      %v3534 = vpop.f32.mrf.mxu0
      %v3535 = vpop.f32.mrf.mxu0
      %v3536 = vadd.f32 %v3375, %v3535
      %v3537 = vpop.f32.mrf.mxu0
      %3538 = vmatprep.mubr.bf16.mxu0 0
      %3539 = vmatmul.mubr.bf16.gmra.mxu0 %v2157
      %v3540 = vpop.f32.mrf.mxu0
      %v3541 = vadd.f32 %v3380, %v3540
      %v3542 = vpop.f32.mrf.mxu0
      %v3543 = vpop.f32.mrf.mxu0
      %v3544 = vadd.f32 %v3383, %v3543
      %v3545 = vpop.f32.mrf.mxu0
      %3546 = vmatprep.mubr.bf16.mxu0 0
      %3547 = vmatmul.mubr.bf16.gmra.mxu0 %v2166
      %v3548 = vpop.f32.mrf.mxu0
      %v3549 = vadd.f32 %v3388, %v3548
      %v3550 = vpop.f32.mrf.mxu0
      %v3551 = vpop.f32.mrf.mxu0
      %v3552 = vadd.f32 %v3391, %v3551
      %v3553 = vpop.f32.mrf.mxu0
      %3554 = vmatprep.mubr.bf16.mxu0 0
      %3555 = vmatmul.mubr.bf16.gmra.mxu0 %v2175
      %v3556 = vpop.f32.mrf.mxu0
      %v3557 = vadd.f32 %v3396, %v3556
      %v3558 = vpop.f32.mrf.mxu0
      %v3559 = vpop.f32.mrf.mxu0
      %v3560 = vadd.f32 %v3399, %v3559
      %v3561 = vpop.f32.mrf.mxu0
      %3562 = vmatprep.mubr.bf16.mxu0 0
      %3563 = vmatmul.mubr.bf16.gmra.mxu0 %v2184
      %v3564 = vpop.f32.mrf.mxu0
      %v3565 = vadd.f32 %v3404, %v3564
      %v3566 = vpop.f32.mrf.mxu0
      %v3567 = vpop.f32.mrf.mxu0
      %v3568 = vadd.f32 %v3407, %v3567
      %v3569 = vpop.f32.mrf.mxu0
      %3570 = vmatprep.mubr.bf16.mxu0 0
      %3571 = vmatmul.mubr.bf16.gmra.mxu0 %v2193
      %v3572 = vpop.f32.mrf.mxu0
      %v3573 = vadd.f32 %v3412, %v3572
      %v3574 = vpop.f32.mrf.mxu0
      %v3575 = vpop.f32.mrf.mxu0
      %v3576 = vadd.f32 %v3415, %v3575
      %v3577 = vpop.f32.mrf.mxu0
      %3578 = vmatprep.mubr.bf16.mxu0 0
      %3579 = vmatmul.mubr.bf16.gmra.mxu0 %v2202
      %v3580 = vpop.f32.mrf.mxu0
      %v3581 = vadd.f32 %v3420, %v3580
      %v3582 = vpop.f32.mrf.mxu0
      %v3583 = vpop.f32.mrf.mxu0
      %v3584 = vadd.f32 %v3423, %v3583
      %v3585 = vpop.f32.mrf.mxu0
      %3586 = vmatprep.mubr.bf16.mxu0 0
      %3587 = vmatmul.mubr.bf16.gmra.mxu0 %v2211
      %v3588 = vpop.f32.mrf.mxu0
      %v3589 = vadd.f32 %v3428, %v3588
      %v3590 = vpop.f32.mrf.mxu0
      %v3591 = vpop.f32.mrf.mxu0
      %v3592 = vadd.f32 %v3431, %v3591
      %v3593 = vpop.f32.mrf.mxu0
      %3594 = vmatprep.mubr.bf16.mxu0 0
      %3595 = vmatmul.mubr.bf16.gmra.mxu0 %v2220
      %v3596 = vpop.f32.mrf.mxu0
      %v3597 = vadd.f32 %v3436, %v3596
      %v3598 = vpop.f32.mrf.mxu0
      %v3599 = vpop.f32.mrf.mxu0
      %v3600 = vadd.f32 %v3439, %v3599
      %v3601 = vpop.f32.mrf.mxu0
      %3602 = vmatprep.mubr.bf16.mxu0 0
      %3603 = vmatmul.mubr.bf16.gmra.mxu0 %v2229
      %v3604 = vpop.f32.mrf.mxu0
      %v3605 = vadd.f32 %v3444, %v3604
      %v3606 = vpop.f32.mrf.mxu0
      %v3607 = vpop.f32.mrf.mxu0
      %v3608 = vadd.f32 %v3447, %v3607
      %v3609 = vpop.f32.mrf.mxu0
      %3610 = vdwg.mxu0
      %v3611 = vpack.c.bf16 %v3488, %v3485
      %v3612 = vpack.c.bf16 %v3496, %v3493
      %v3613 = vpack.c.bf16 %v3504, %v3501
      %v3614 = vpack.c.bf16 %v3512, %v3509
      %v3615 = vpack.c.bf16 %v3520, %v3517
      %v3616 = vpack.c.bf16 %v3528, %v3525
      %v3617 = vpack.c.bf16 %v3536, %v3533
      %v3618 = vpack.c.bf16 %v3544, %v3541
      %v3619 = vpack.c.bf16 %v3552, %v3549
      %v3620 = vpack.c.bf16 %v3560, %v3557
      %v3621 = vpack.c.bf16 %v3568, %v3565
      %v3622 = vpack.c.bf16 %v3576, %v3573
      %v3623 = vpack.c.bf16 %v3584, %v3581
      %v3624 = vpack.c.bf16 %v3592, %v3589
      %v3625 = vpack.c.bf16 %v3600, %v3597
      %v3626 = vpack.c.bf16 %v3608, %v3605
      %v3643 = vunpack.c.l.b16 %v3611
      %v3644 = vunpack.c.h.b16 %v3611
      %v3645 = vunpack.c.l.b16 %v3612
      %v3646 = vunpack.c.h.b16 %v3612
      %v3647 = vunpack.c.l.b16 %v3613
      %v3648 = vunpack.c.h.b16 %v3613
      %v3649 = vunpack.c.l.b16 %v3614
      %v3650 = vunpack.c.h.b16 %v3614
      %v3651 = vunpack.c.l.b16 %v3615
      %v3652 = vunpack.c.h.b16 %v3615
      %v3653 = vunpack.c.l.b16 %v3616
      %v3654 = vunpack.c.h.b16 %v3616
      %v3655 = vunpack.c.l.b16 %v3617
      %v3656 = vunpack.c.h.b16 %v3617
      %v3657 = vunpack.c.l.b16 %v3618
      %v3658 = vunpack.c.h.b16 %v3618
      %v3659 = vunpack.c.l.b16 %v3619
      %v3660 = vunpack.c.h.b16 %v3619
      %v3661 = vunpack.c.l.b16 %v3620
      %v3662 = vunpack.c.h.b16 %v3620
      %v3663 = vunpack.c.l.b16 %v3621
      %v3664 = vunpack.c.h.b16 %v3621
      %v3665 = vunpack.c.l.b16 %v3622
      %v3666 = vunpack.c.h.b16 %v3622
      %v3667 = vunpack.c.l.b16 %v3623
      %v3668 = vunpack.c.h.b16 %v3623
      %v3669 = vunpack.c.l.b16 %v3624
      %v3670 = vunpack.c.h.b16 %v3624
      %v3671 = vunpack.c.l.b16 %v3625
      %v3672 = vunpack.c.h.b16 %v3625
      %v3673 = vunpack.c.l.b16 %v3626
      %v3674 = vunpack.c.h.b16 %v3626
      %v3675 = vpack.c.b16 %v3643, %v3643
      %v3676 = vpack.c.b16 %v3644, %v3644
      %v3677 = vpack.c.b16 %v3645, %v3645
      %v3678 = vpack.c.b16 %v3646, %v3646
      %v3679 = vpack.c.b16 %v3647, %v3647
      %v3680 = vpack.c.b16 %v3648, %v3648
      %v3681 = vpack.c.b16 %v3649, %v3649
      %v3682 = vpack.c.b16 %v3650, %v3650
      %v3683 = vpack.c.b16 %v3651, %v3651
      %v3684 = vpack.c.b16 %v3652, %v3652
      %v3685 = vpack.c.b16 %v3653, %v3653
      %v3686 = vpack.c.b16 %v3654, %v3654
      %v3687 = vpack.c.b16 %v3655, %v3655
      %v3688 = vpack.c.b16 %v3656, %v3656
      %v3689 = vpack.c.b16 %v3657, %v3657
      %v3690 = vpack.c.b16 %v3658, %v3658
      %v3691 = vpack.c.b16 %v3659, %v3659
      %v3692 = vpack.c.b16 %v3660, %v3660
      %v3693 = vpack.c.b16 %v3661, %v3661
      %v3694 = vpack.c.b16 %v3662, %v3662
      %v3695 = vpack.c.b16 %v3663, %v3663
      %v3696 = vpack.c.b16 %v3664, %v3664
      %v3697 = vpack.c.b16 %v3665, %v3665
      %v3698 = vpack.c.b16 %v3666, %v3666
      %v3699 = vpack.c.b16 %v3667, %v3667
      %v3700 = vpack.c.b16 %v3668, %v3668
      %v3701 = vpack.c.b16 %v3669, %v3669
      %v3702 = vpack.c.b16 %v3670, %v3670
      %v3703 = vpack.c.b16 %v3671, %v3671
      %v3704 = vpack.c.b16 %v3672, %v3672
      %v3705 = vpack.c.b16 %v3673, %v3673
      %v3706 = vpack.c.b16 %v3674, %v3674
      %3739 = vst [vmem:[%s340] sm:$0xf] %v3675
      %3740 = vst [vmem:[%s340 + $0x4] sm:$0xf] %v3676
      %3741 = vst [vmem:[%s340 + $0x8] sm:$0xf] %v3677
      %3742 = vst [vmem:[%s340 + $0xc] sm:$0xf] %v3678
      %3743 = vst [vmem:[%s340 + $0x10] sm:$0xf] %v3679
      %3744 = vst [vmem:[%s340 + $0x14] sm:$0xf] %v3680
      %3745 = vst [vmem:[%s340 + $0x18] sm:$0xf] %v3681
      %3746 = vst [vmem:[%s340 + $0x1c] sm:$0xf] %v3682
      %3747 = vst [vmem:[%s340 + $0x20] sm:$0xf] %v3683
      %3748 = vst [vmem:[%s340 + $0x24] sm:$0xf] %v3684
      %3749 = vst [vmem:[%s340 + $0x28] sm:$0xf] %v3685
      %3750 = vst [vmem:[%s340 + $0x2c] sm:$0xf] %v3686
      %3751 = vst [vmem:[%s340 + $0x30] sm:$0xf] %v3687
      %3752 = vst [vmem:[%s340 + $0x34] sm:$0xf] %v3688
      %3753 = vst [vmem:[%s340 + $0x38] sm:$0xf] %v3689
      %3754 = vst [vmem:[%s340 + $0x3c] sm:$0xf] %v3690
      %3755 = vst [vmem:[%s340 + $0x40] sm:$0xf] %v3691
      %3756 = vst [vmem:[%s340 + $0x44] sm:$0xf] %v3692
      %3757 = vst [vmem:[%s340 + $0x48] sm:$0xf] %v3693
      %3758 = vst [vmem:[%s340 + $0x4c] sm:$0xf] %v3694
      %3759 = vst [vmem:[%s340 + $0x50] sm:$0xf] %v3695
      %3760 = vst [vmem:[%s340 + $0x54] sm:$0xf] %v3696
      %3761 = vst [vmem:[%s340 + $0x58] sm:$0xf] %v3697
      %3762 = vst [vmem:[%s340 + $0x5c] sm:$0xf] %v3698
      %3763 = vst [vmem:[%s340 + $0x60] sm:$0xf] %v3699
      %3764 = vst [vmem:[%s340 + $0x64] sm:$0xf] %v3700
      %3765 = vst [vmem:[%s340 + $0x68] sm:$0xf] %v3701
      %3766 = vst [vmem:[%s340 + $0x6c] sm:$0xf] %v3702
      %3767 = vst [vmem:[%s340 + $0x70] sm:$0xf] %v3703
      %3768 = vst [vmem:[%s340 + $0x74] sm:$0xf] %v3704
      %3769 = vst [vmem:[%s340 + $0x78] sm:$0xf] %v3705
      %3770 = vst [vmem:[%s340 + $0x7c] sm:$0xf] %v3706
      %v3771 = vadd.f32 %v3485, %v3488
      %v3772 = vadd.f32 %v3771, %v3493
      %v3773 = vadd.f32 %v3772, %v3496
      %v3774 = vadd.f32 %v3773, %v3501
      %v3775 = vadd.f32 %v3774, %v3504
      %v3776 = vadd.f32 %v3775, %v3509
      %v3777 = vadd.f32 %v3776, %v3512
      %v3778 = vadd.f32 %v3777, %v3517
      %v3779 = vadd.f32 %v3778, %v3520
      %v3780 = vadd.f32 %v3779, %v3525
      %v3781 = vadd.f32 %v3780, %v3528
      %v3782 = vadd.f32 %v3781, %v3533
      %v3783 = vadd.f32 %v3782, %v3536
      %v3784 = vadd.f32 %v3783, %v3541
      %v3785 = vadd.f32 %v3784, %v3544
      %v3786 = vadd.f32 %v3785, %v3549
      %v3787 = vadd.f32 %v3786, %v3552
      %v3788 = vadd.f32 %v3787, %v3557
      %v3789 = vadd.f32 %v3788, %v3560
      %v3790 = vadd.f32 %v3789, %v3565
      %v3791 = vadd.f32 %v3790, %v3568
      %v3792 = vadd.f32 %v3791, %v3573
      %v3793 = vadd.f32 %v3792, %v3576
      %v3794 = vadd.f32 %v3793, %v3581
      %v3795 = vadd.f32 %v3794, %v3584
      %v3796 = vadd.f32 %v3795, %v3589
      %v3797 = vadd.f32 %v3796, %v3592
      %v3798 = vadd.f32 %v3797, %v3597
      %v3799 = vadd.f32 %v3798, %v3600
      %v3800 = vadd.f32 %v3799, %v3605
      %v3801 = vadd.f32 %v3800, %v3608
      %v3802 = vrot.slane %v3801, 4
      %v3803 = vadd.f32 %v3801, %v3802
      %v3804 = vrot.slane %v3803, 2
      %v3805 = vadd.f32 %v3803, %v3804
      %v3806 = vrot.slane %v3805, 1
      %v3807 = vadd.f32 %v3805, %v3806
      %v3808 = vmul.f32 %v3485, %v3485
      %v3809 = vmul.f32 %v3488, %v3488
      %v3810 = vmul.f32 %v3493, %v3493
      %v3811 = vmul.f32 %v3496, %v3496
      %v3812 = vmul.f32 %v3501, %v3501
      %v3813 = vmul.f32 %v3504, %v3504
      %v3814 = vmul.f32 %v3509, %v3509
      %v3815 = vmul.f32 %v3512, %v3512
      %v3816 = vmul.f32 %v3517, %v3517
      %v3817 = vmul.f32 %v3520, %v3520
      %v3818 = vmul.f32 %v3525, %v3525
      %v3819 = vmul.f32 %v3528, %v3528
      %v3820 = vmul.f32 %v3533, %v3533
      %v3821 = vmul.f32 %v3536, %v3536
      %v3822 = vmul.f32 %v3541, %v3541
      %v3823 = vmul.f32 %v3544, %v3544
      %v3824 = vmul.f32 %v3549, %v3549
      %v3825 = vmul.f32 %v3552, %v3552
      %v3826 = vmul.f32 %v3557, %v3557
      %v3827 = vmul.f32 %v3560, %v3560
      %v3828 = vmul.f32 %v3565, %v3565
      %v3829 = vmul.f32 %v3568, %v3568
      %v3830 = vmul.f32 %v3573, %v3573
      %v3831 = vmul.f32 %v3576, %v3576
      %v3832 = vmul.f32 %v3581, %v3581
      %v3833 = vmul.f32 %v3584, %v3584
      %v3834 = vmul.f32 %v3589, %v3589
      %v3835 = vmul.f32 %v3592, %v3592
      %v3836 = vmul.f32 %v3597, %v3597
      %v3837 = vmul.f32 %v3600, %v3600
      %v3838 = vmul.f32 %v3605, %v3605
      %v3839 = vmul.f32 %v3608, %v3608
      %v3840 = vadd.f32 %v3808, %v3809
      %v3841 = vadd.f32 %v3840, %v3810
      %v3842 = vadd.f32 %v3841, %v3811
      %v3843 = vadd.f32 %v3842, %v3812
      %v3844 = vadd.f32 %v3843, %v3813
      %v3845 = vadd.f32 %v3844, %v3814
      %v3846 = vadd.f32 %v3845, %v3815
      %v3847 = vadd.f32 %v3846, %v3816
      %v3848 = vadd.f32 %v3847, %v3817
      %v3849 = vadd.f32 %v3848, %v3818
      %v3850 = vadd.f32 %v3849, %v3819
      %v3851 = vadd.f32 %v3850, %v3820
      %v3852 = vadd.f32 %v3851, %v3821
      %v3853 = vadd.f32 %v3852, %v3822
      %v3854 = vadd.f32 %v3853, %v3823
      %v3855 = vadd.f32 %v3854, %v3824
      %v3856 = vadd.f32 %v3855, %v3825
      %v3857 = vadd.f32 %v3856, %v3826
      %v3858 = vadd.f32 %v3857, %v3827
      %v3859 = vadd.f32 %v3858, %v3828
      %v3860 = vadd.f32 %v3859, %v3829
      %v3861 = vadd.f32 %v3860, %v3830
      %v3862 = vadd.f32 %v3861, %v3831
      %v3863 = vadd.f32 %v3862, %v3832
      %v3864 = vadd.f32 %v3863, %v3833
      %v3865 = vadd.f32 %v3864, %v3834
      %v3866 = vadd.f32 %v3865, %v3835
      %v3867 = vadd.f32 %v3866, %v3836
      %v3868 = vadd.f32 %v3867, %v3837
      %v3869 = vadd.f32 %v3868, %v3838
      %v3870 = vadd.f32 %v3869, %v3839
      %v3871 = vrot.slane %v3870, 4
      %v3872 = vadd.f32 %v3870, %v3871
      %v3873 = vrot.slane %v3872, 2
      %v3874 = vadd.f32 %v3872, %v3873
      %v3875 = vrot.slane %v3874, 1
      %v3876 = vadd.f32 %v3874, %v3875
      %vm3877 = vcmask 1040384
      %v3878 = vsel %vm3877, %v3807, %v3876
      %3879 = vst [vmem:[%s347] sm:$0x3] %v3878
      %v3880 = vld [vmem:[%s332] sm:$0xf]
      %v3881 = vld [vmem:[%s332 + $0x4] sm:$0xf]
      %v3882 = vld [vmem:[%s332 + $0x8] sm:$0xf]
      %v3883 = vld [vmem:[%s332 + $0xc] sm:$0xf]
      %v3884 = vld [vmem:[%s332 + $0x10] sm:$0xf]
      %v3885 = vld [vmem:[%s332 + $0x14] sm:$0xf]
      %v3886 = vld [vmem:[%s332 + $0x18] sm:$0xf]
      %v3887 = vld [vmem:[%s332 + $0x1c] sm:$0xf]
      %v3888 = vld [vmem:[%s332 + $0x20] sm:$0xf]
      %v3889 = vld [vmem:[%s332 + $0x24] sm:$0xf]
      %v3890 = vld [vmem:[%s332 + $0x28] sm:$0xf]
      %v3891 = vld [vmem:[%s332 + $0x2c] sm:$0xf]
      %v3892 = vld [vmem:[%s332 + $0x30] sm:$0xf]
      %v3893 = vld [vmem:[%s332 + $0x34] sm:$0xf]
      %v3894 = vld [vmem:[%s332 + $0x38] sm:$0xf]
      %v3895 = vld [vmem:[%s332 + $0x3c] sm:$0xf]
      %v3912 = vunpack.c.l.b16 %v3880
      %v3913 = vunpack.c.l.b16 %v3881
      %v3914 = vunpack.c.l.b16 %v3882
      %v3915 = vunpack.c.l.b16 %v3883
      %v3916 = vunpack.c.l.b16 %v3884
      %v3917 = vunpack.c.l.b16 %v3885
      %v3918 = vunpack.c.l.b16 %v3886
      %v3919 = vunpack.c.l.b16 %v3887
      %v3920 = vunpack.c.l.b16 %v3888
      %v3921 = vunpack.c.l.b16 %v3889
      %v3922 = vunpack.c.l.b16 %v3890
      %v3923 = vunpack.c.l.b16 %v3891
      %v3924 = vunpack.c.l.b16 %v3892
      %v3925 = vunpack.c.l.b16 %v3893
      %v3926 = vunpack.c.l.b16 %v3894
      %v3927 = vunpack.c.l.b16 %v3895
      %v3928 = vpack.c.b16 %v3913, %v3912
      %v3929 = vpack.c.b16 %v3915, %v3914
      %v3930 = vpack.c.b16 %v3917, %v3916
      %v3931 = vpack.c.b16 %v3919, %v3918
      %v3932 = vpack.c.b16 %v3921, %v3920
      %v3933 = vpack.c.b16 %v3923, %v3922
      %v3934 = vpack.c.b16 %v3925, %v3924
      %v3935 = vpack.c.b16 %v3927, %v3926
      %3944 = vmatprep.subr.bf16.mxu0 0
      %3945 = vmatpush1.bf16.msra.mxu0 %v3935
      %3946 = vmatprep.subr.bf16.mxu0 0
      %3947 = vmatpush1.bf16.msra.mxu0 %v3934
      %3948 = vmatprep.subr.bf16.mxu0 0
      %3949 = vmatpush1.bf16.msra.mxu0 %v3933
      %3950 = vmatprep.subr.bf16.mxu0 0
      %3951 = vmatpush1.bf16.msra.mxu0 %v3932
      %3952 = vmatprep.subr.bf16.mxu0 0
      %3953 = vmatpush1.bf16.msra.mxu0 %v3931
      %3954 = vmatprep.subr.bf16.mxu0 0
      %3955 = vmatpush1.bf16.msra.mxu0 %v3930
      %3956 = vmatprep.subr.bf16.mxu0 0
      %3957 = vmatpush1.bf16.msra.mxu0 %v3929
      %3958 = vmatprep.subr.bf16.mxu0 0
      %3959 = vmatpush1.bf16.msra.mxu0 %v3928
      %3960 = vmatprep.subr.bf16.mxu0 0
      %3961 = vmatpush2.bf16.msra.mxu0 0
      %3962 = vmatprep.subr.bf16.mxu0 0
      %3963 = vmatpush2.bf16.msra.mxu0 0
      %3964 = vmatprep.subr.bf16.mxu0 0
      %3965 = vmatpush2.bf16.msra.mxu0 0
      %3966 = vmatprep.subr.bf16.mxu0 0
      %3967 = vmatpush2.bf16.msra.mxu0 0
      %3968 = vmatprep.subr.bf16.mxu0 0
      %3969 = vmatpush2.bf16.msra.mxu0 0
      %3970 = vmatprep.subr.bf16.mxu0 0
      %3971 = vmatpush2.bf16.msra.mxu0 0
      %3972 = vmatprep.subr.bf16.mxu0 0
      %3973 = vmatpush2.bf16.msra.mxu0 0
      %3974 = vmatprep.subr.bf16.mxu0 0
      %3975 = vmatpush2.bf16.msra.mxu0 0
      %3976 = vmatprep.mubr.bf16.mxu0 0
      %3977 = vmatmul.mubr.bf16.gmra.mxu0 %v2090
      %v3978 = vpop.f32.mrf.mxu0
      %v3979 = vadd.f32 0.0, %v3978
      %v3980 = vpop.f32.mrf.mxu0
      %v3981 = vpop.f32.mrf.mxu0
      %v3982 = vadd.f32 0.0, %v3981
      %v3983 = vpop.f32.mrf.mxu0
      %3984 = vmatprep.mubr.bf16.mxu0 0
      %3985 = vmatmul.mubr.bf16.gmra.mxu0 %v2099
      %v3986 = vpop.f32.mrf.mxu0
      %v3987 = vadd.f32 0.0, %v3986
      %v3988 = vpop.f32.mrf.mxu0
      %v3989 = vpop.f32.mrf.mxu0
      %v3990 = vadd.f32 0.0, %v3989
      %v3991 = vpop.f32.mrf.mxu0
      %3992 = vmatprep.mubr.bf16.mxu0 0
      %3993 = vmatmul.mubr.bf16.gmra.mxu0 %v2108
      %v3994 = vpop.f32.mrf.mxu0
      %v3995 = vadd.f32 0.0, %v3994
      %v3996 = vpop.f32.mrf.mxu0
      %v3997 = vpop.f32.mrf.mxu0
      %v3998 = vadd.f32 0.0, %v3997
      %v3999 = vpop.f32.mrf.mxu0
      %4000 = vmatprep.mubr.bf16.mxu0 0
      %4001 = vmatmul.mubr.bf16.gmra.mxu0 %v2117
      %v4002 = vpop.f32.mrf.mxu0
      %v4003 = vadd.f32 0.0, %v4002
      %v4004 = vpop.f32.mrf.mxu0
      %v4005 = vpop.f32.mrf.mxu0
      %v4006 = vadd.f32 0.0, %v4005
      %v4007 = vpop.f32.mrf.mxu0
      %4008 = vmatprep.mubr.bf16.mxu0 0
      %4009 = vmatmul.mubr.bf16.gmra.mxu0 %v2126
      %v4010 = vpop.f32.mrf.mxu0
      %v4011 = vadd.f32 0.0, %v4010
      %v4012 = vpop.f32.mrf.mxu0
      %v4013 = vpop.f32.mrf.mxu0
      %v4014 = vadd.f32 0.0, %v4013
      %v4015 = vpop.f32.mrf.mxu0
      %4016 = vmatprep.mubr.bf16.mxu0 0
      %4017 = vmatmul.mubr.bf16.gmra.mxu0 %v2135
      %v4018 = vpop.f32.mrf.mxu0
      %v4019 = vadd.f32 0.0, %v4018
      %v4020 = vpop.f32.mrf.mxu0
      %v4021 = vpop.f32.mrf.mxu0
      %v4022 = vadd.f32 0.0, %v4021
      %v4023 = vpop.f32.mrf.mxu0
      %4024 = vmatprep.mubr.bf16.mxu0 0
      %4025 = vmatmul.mubr.bf16.gmra.mxu0 %v2144
      %v4026 = vpop.f32.mrf.mxu0
      %v4027 = vadd.f32 0.0, %v4026
      %v4028 = vpop.f32.mrf.mxu0
      %v4029 = vpop.f32.mrf.mxu0
      %v4030 = vadd.f32 0.0, %v4029
      %v4031 = vpop.f32.mrf.mxu0
      %4032 = vmatprep.mubr.bf16.mxu0 0
      %4033 = vmatmul.mubr.bf16.gmra.mxu0 %v2153
      %v4034 = vpop.f32.mrf.mxu0
      %v4035 = vadd.f32 0.0, %v4034
      %v4036 = vpop.f32.mrf.mxu0
      %v4037 = vpop.f32.mrf.mxu0
      %v4038 = vadd.f32 0.0, %v4037
      %v4039 = vpop.f32.mrf.mxu0
      %4040 = vmatprep.mubr.bf16.mxu0 0
      %4041 = vmatmul.mubr.bf16.gmra.mxu0 %v2162
      %v4042 = vpop.f32.mrf.mxu0
      %v4043 = vadd.f32 0.0, %v4042
      %v4044 = vpop.f32.mrf.mxu0
      %v4045 = vpop.f32.mrf.mxu0
      %v4046 = vadd.f32 0.0, %v4045
      %v4047 = vpop.f32.mrf.mxu0
      %4048 = vmatprep.mubr.bf16.mxu0 0
      %4049 = vmatmul.mubr.bf16.gmra.mxu0 %v2171
      %v4050 = vpop.f32.mrf.mxu0
      %v4051 = vadd.f32 0.0, %v4050
      %v4052 = vpop.f32.mrf.mxu0
      %v4053 = vpop.f32.mrf.mxu0
      %v4054 = vadd.f32 0.0, %v4053
      %v4055 = vpop.f32.mrf.mxu0
      %4056 = vmatprep.mubr.bf16.mxu0 0
      %4057 = vmatmul.mubr.bf16.gmra.mxu0 %v2180
      %v4058 = vpop.f32.mrf.mxu0
      %v4059 = vadd.f32 0.0, %v4058
      %v4060 = vpop.f32.mrf.mxu0
      %v4061 = vpop.f32.mrf.mxu0
      %v4062 = vadd.f32 0.0, %v4061
      %v4063 = vpop.f32.mrf.mxu0
      %4064 = vmatprep.mubr.bf16.mxu0 0
      %4065 = vmatmul.mubr.bf16.gmra.mxu0 %v2189
      %v4066 = vpop.f32.mrf.mxu0
      %v4067 = vadd.f32 0.0, %v4066
      %v4068 = vpop.f32.mrf.mxu0
      %v4069 = vpop.f32.mrf.mxu0
      %v4070 = vadd.f32 0.0, %v4069
      %v4071 = vpop.f32.mrf.mxu0
      %4072 = vmatprep.mubr.bf16.mxu0 0
      %4073 = vmatmul.mubr.bf16.gmra.mxu0 %v2198
      %v4074 = vpop.f32.mrf.mxu0
      %v4075 = vadd.f32 0.0, %v4074
      %v4076 = vpop.f32.mrf.mxu0
      %v4077 = vpop.f32.mrf.mxu0
      %v4078 = vadd.f32 0.0, %v4077
      %v4079 = vpop.f32.mrf.mxu0
      %4080 = vmatprep.mubr.bf16.mxu0 0
      %4081 = vmatmul.mubr.bf16.gmra.mxu0 %v2207
      %v4082 = vpop.f32.mrf.mxu0
      %v4083 = vadd.f32 0.0, %v4082
      %v4084 = vpop.f32.mrf.mxu0
      %v4085 = vpop.f32.mrf.mxu0
      %v4086 = vadd.f32 0.0, %v4085
      %v4087 = vpop.f32.mrf.mxu0
      %4088 = vmatprep.mubr.bf16.mxu0 0
      %4089 = vmatmul.mubr.bf16.gmra.mxu0 %v2216
      %v4090 = vpop.f32.mrf.mxu0
      %v4091 = vadd.f32 0.0, %v4090
      %v4092 = vpop.f32.mrf.mxu0
      %v4093 = vpop.f32.mrf.mxu0
      %v4094 = vadd.f32 0.0, %v4093
      %v4095 = vpop.f32.mrf.mxu0
      %4096 = vmatprep.mubr.bf16.mxu0 0
      %4097 = vmatmul.mubr.bf16.gmra.mxu0 %v2225
      %v4098 = vpop.f32.mrf.mxu0
      %v4099 = vadd.f32 0.0, %v4098
      %v4100 = vpop.f32.mrf.mxu0
      %v4101 = vpop.f32.mrf.mxu0
      %v4102 = vadd.f32 0.0, %v4101
      %v4103 = vpop.f32.mrf.mxu0
      %4104 = vdwg.mxu0
      %v4105 = vpack.c.bf16 %v3982, %v3979
      %v4106 = vpack.c.bf16 %v3990, %v3987
      %v4107 = vpack.c.bf16 %v3998, %v3995
      %v4108 = vpack.c.bf16 %v4006, %v4003
      %v4109 = vpack.c.bf16 %v4014, %v4011
      %v4110 = vpack.c.bf16 %v4022, %v4019
      %v4111 = vpack.c.bf16 %v4030, %v4027
      %v4112 = vpack.c.bf16 %v4038, %v4035
      %v4113 = vpack.c.bf16 %v4046, %v4043
      %v4114 = vpack.c.bf16 %v4054, %v4051
      %v4115 = vpack.c.bf16 %v4062, %v4059
      %v4116 = vpack.c.bf16 %v4070, %v4067
      %v4117 = vpack.c.bf16 %v4078, %v4075
      %v4118 = vpack.c.bf16 %v4086, %v4083
      %v4119 = vpack.c.bf16 %v4094, %v4091
      %v4120 = vpack.c.bf16 %v4102, %v4099
      %v4137 = vunpack.c.l.b16 %v4105
      %v4138 = vunpack.c.h.b16 %v4105
      %v4139 = vunpack.c.l.b16 %v4106
      %v4140 = vunpack.c.h.b16 %v4106
      %v4141 = vunpack.c.l.b16 %v4107
      %v4142 = vunpack.c.h.b16 %v4107
      %v4143 = vunpack.c.l.b16 %v4108
      %v4144 = vunpack.c.h.b16 %v4108
      %v4145 = vunpack.c.l.b16 %v4109
      %v4146 = vunpack.c.h.b16 %v4109
      %v4147 = vunpack.c.l.b16 %v4110
      %v4148 = vunpack.c.h.b16 %v4110
      %v4149 = vunpack.c.l.b16 %v4111
      %v4150 = vunpack.c.h.b16 %v4111
      %v4151 = vunpack.c.l.b16 %v4112
      %v4152 = vunpack.c.h.b16 %v4112
      %v4153 = vunpack.c.l.b16 %v4113
      %v4154 = vunpack.c.h.b16 %v4113
      %v4155 = vunpack.c.l.b16 %v4114
      %v4156 = vunpack.c.h.b16 %v4114
      %v4157 = vunpack.c.l.b16 %v4115
      %v4158 = vunpack.c.h.b16 %v4115
      %v4159 = vunpack.c.l.b16 %v4116
      %v4160 = vunpack.c.h.b16 %v4116
      %v4161 = vunpack.c.l.b16 %v4117
      %v4162 = vunpack.c.h.b16 %v4117
      %v4163 = vunpack.c.l.b16 %v4118
      %v4164 = vunpack.c.h.b16 %v4118
      %v4165 = vunpack.c.l.b16 %v4119
      %v4166 = vunpack.c.h.b16 %v4119
      %v4167 = vunpack.c.l.b16 %v4120
      %v4168 = vunpack.c.h.b16 %v4120
      %v4169 = vpack.c.b16 %v4137, %v4137
      %v4170 = vpack.c.b16 %v4138, %v4138
      %v4171 = vpack.c.b16 %v4139, %v4139
      %v4172 = vpack.c.b16 %v4140, %v4140
      %v4173 = vpack.c.b16 %v4141, %v4141
      %v4174 = vpack.c.b16 %v4142, %v4142
      %v4175 = vpack.c.b16 %v4143, %v4143
      %v4176 = vpack.c.b16 %v4144, %v4144
      %v4177 = vpack.c.b16 %v4145, %v4145
      %v4178 = vpack.c.b16 %v4146, %v4146
      %v4179 = vpack.c.b16 %v4147, %v4147
      %v4180 = vpack.c.b16 %v4148, %v4148
      %v4181 = vpack.c.b16 %v4149, %v4149
      %v4182 = vpack.c.b16 %v4150, %v4150
      %v4183 = vpack.c.b16 %v4151, %v4151
      %v4184 = vpack.c.b16 %v4152, %v4152
      %v4185 = vpack.c.b16 %v4153, %v4153
      %v4186 = vpack.c.b16 %v4154, %v4154
      %v4187 = vpack.c.b16 %v4155, %v4155
      %v4188 = vpack.c.b16 %v4156, %v4156
      %v4189 = vpack.c.b16 %v4157, %v4157
      %v4190 = vpack.c.b16 %v4158, %v4158
      %v4191 = vpack.c.b16 %v4159, %v4159
      %v4192 = vpack.c.b16 %v4160, %v4160
      %v4193 = vpack.c.b16 %v4161, %v4161
      %v4194 = vpack.c.b16 %v4162, %v4162
      %v4195 = vpack.c.b16 %v4163, %v4163
      %v4196 = vpack.c.b16 %v4164, %v4164
      %v4197 = vpack.c.b16 %v4165, %v4165
      %v4198 = vpack.c.b16 %v4166, %v4166
      %v4199 = vpack.c.b16 %v4167, %v4167
      %v4200 = vpack.c.b16 %v4168, %v4168
      %4233 = vst [vmem:[%s355] sm:$0xf] %v4169
      %4234 = vst [vmem:[%s355 + $0x4] sm:$0xf] %v4170
      %4235 = vst [vmem:[%s355 + $0x8] sm:$0xf] %v4171
      %4236 = vst [vmem:[%s355 + $0xc] sm:$0xf] %v4172
      %4237 = vst [vmem:[%s355 + $0x10] sm:$0xf] %v4173
      %4238 = vst [vmem:[%s355 + $0x14] sm:$0xf] %v4174
      %4239 = vst [vmem:[%s355 + $0x18] sm:$0xf] %v4175
      %4240 = vst [vmem:[%s355 + $0x1c] sm:$0xf] %v4176
      %4241 = vst [vmem:[%s355 + $0x20] sm:$0xf] %v4177
      %4242 = vst [vmem:[%s355 + $0x24] sm:$0xf] %v4178
      %4243 = vst [vmem:[%s355 + $0x28] sm:$0xf] %v4179
      %4244 = vst [vmem:[%s355 + $0x2c] sm:$0xf] %v4180
      %4245 = vst [vmem:[%s355 + $0x30] sm:$0xf] %v4181
      %4246 = vst [vmem:[%s355 + $0x34] sm:$0xf] %v4182
      %4247 = vst [vmem:[%s355 + $0x38] sm:$0xf] %v4183
      %4248 = vst [vmem:[%s355 + $0x3c] sm:$0xf] %v4184
      %4249 = vst [vmem:[%s355 + $0x40] sm:$0xf] %v4185
      %4250 = vst [vmem:[%s355 + $0x44] sm:$0xf] %v4186
      %4251 = vst [vmem:[%s355 + $0x48] sm:$0xf] %v4187
      %4252 = vst [vmem:[%s355 + $0x4c] sm:$0xf] %v4188
      %4253 = vst [vmem:[%s355 + $0x50] sm:$0xf] %v4189
      %4254 = vst [vmem:[%s355 + $0x54] sm:$0xf] %v4190
      %4255 = vst [vmem:[%s355 + $0x58] sm:$0xf] %v4191
      %4256 = vst [vmem:[%s355 + $0x5c] sm:$0xf] %v4192
      %4257 = vst [vmem:[%s355 + $0x60] sm:$0xf] %v4193
      %4258 = vst [vmem:[%s355 + $0x64] sm:$0xf] %v4194
      %4259 = vst [vmem:[%s355 + $0x68] sm:$0xf] %v4195
      %4260 = vst [vmem:[%s355 + $0x6c] sm:$0xf] %v4196
      %4261 = vst [vmem:[%s355 + $0x70] sm:$0xf] %v4197
      %4262 = vst [vmem:[%s355 + $0x74] sm:$0xf] %v4198
      %4263 = vst [vmem:[%s355 + $0x78] sm:$0xf] %v4199
      %4264 = vst [vmem:[%s355 + $0x7c] sm:$0xf] %v4200
      %v4265 = vadd.f32 %v3979, %v3982
      %v4266 = vadd.f32 %v4265, %v3987
      %v4267 = vadd.f32 %v4266, %v3990
      %v4268 = vadd.f32 %v4267, %v3995
      %v4269 = vadd.f32 %v4268, %v3998
      %v4270 = vadd.f32 %v4269, %v4003
      %v4271 = vadd.f32 %v4270, %v4006
      %v4272 = vadd.f32 %v4271, %v4011
      %v4273 = vadd.f32 %v4272, %v4014
      %v4274 = vadd.f32 %v4273, %v4019
      %v4275 = vadd.f32 %v4274, %v4022
      %v4276 = vadd.f32 %v4275, %v4027
      %v4277 = vadd.f32 %v4276, %v4030
      %v4278 = vadd.f32 %v4277, %v4035
      %v4279 = vadd.f32 %v4278, %v4038
      %v4280 = vadd.f32 %v4279, %v4043
      %v4281 = vadd.f32 %v4280, %v4046
      %v4282 = vadd.f32 %v4281, %v4051
      %v4283 = vadd.f32 %v4282, %v4054
      %v4284 = vadd.f32 %v4283, %v4059
      %v4285 = vadd.f32 %v4284, %v4062
      %v4286 = vadd.f32 %v4285, %v4067
      %v4287 = vadd.f32 %v4286, %v4070
      %v4288 = vadd.f32 %v4287, %v4075
      %v4289 = vadd.f32 %v4288, %v4078
      %v4290 = vadd.f32 %v4289, %v4083
      %v4291 = vadd.f32 %v4290, %v4086
      %v4292 = vadd.f32 %v4291, %v4091
      %v4293 = vadd.f32 %v4292, %v4094
      %v4294 = vadd.f32 %v4293, %v4099
      %v4295 = vadd.f32 %v4294, %v4102
      %v4296 = vrot.slane %v4295, 4
      %v4297 = vadd.f32 %v4295, %v4296
      %v4298 = vrot.slane %v4297, 2
      %v4299 = vadd.f32 %v4297, %v4298
      %v4300 = vrot.slane %v4299, 1
      %v4301 = vadd.f32 %v4299, %v4300
      %v4302 = vmul.f32 %v3979, %v3979
      %v4303 = vmul.f32 %v3982, %v3982
      %v4304 = vmul.f32 %v3987, %v3987
      %v4305 = vmul.f32 %v3990, %v3990
      %v4306 = vmul.f32 %v3995, %v3995
      %v4307 = vmul.f32 %v3998, %v3998
      %v4308 = vmul.f32 %v4003, %v4003
      %v4309 = vmul.f32 %v4006, %v4006
      %v4310 = vmul.f32 %v4011, %v4011
      %v4311 = vmul.f32 %v4014, %v4014
      %v4312 = vmul.f32 %v4019, %v4019
      %v4313 = vmul.f32 %v4022, %v4022
      %v4314 = vmul.f32 %v4027, %v4027
      %v4315 = vmul.f32 %v4030, %v4030
      %v4316 = vmul.f32 %v4035, %v4035
      %v4317 = vmul.f32 %v4038, %v4038
      %v4318 = vmul.f32 %v4043, %v4043
      %v4319 = vmul.f32 %v4046, %v4046
      %v4320 = vmul.f32 %v4051, %v4051
      %v4321 = vmul.f32 %v4054, %v4054
      %v4322 = vmul.f32 %v4059, %v4059
      %v4323 = vmul.f32 %v4062, %v4062
      %v4324 = vmul.f32 %v4067, %v4067
      %v4325 = vmul.f32 %v4070, %v4070
      %v4326 = vmul.f32 %v4075, %v4075
      %v4327 = vmul.f32 %v4078, %v4078
      %v4328 = vmul.f32 %v4083, %v4083
      %v4329 = vmul.f32 %v4086, %v4086
      %v4330 = vmul.f32 %v4091, %v4091
      %v4331 = vmul.f32 %v4094, %v4094
      %v4332 = vmul.f32 %v4099, %v4099
      %v4333 = vmul.f32 %v4102, %v4102
      %v4334 = vadd.f32 %v4302, %v4303
      %v4335 = vadd.f32 %v4334, %v4304
      %v4336 = vadd.f32 %v4335, %v4305
      %v4337 = vadd.f32 %v4336, %v4306
      %v4338 = vadd.f32 %v4337, %v4307
      %v4339 = vadd.f32 %v4338, %v4308
      %v4340 = vadd.f32 %v4339, %v4309
      %v4341 = vadd.f32 %v4340, %v4310
      %v4342 = vadd.f32 %v4341, %v4311
      %v4343 = vadd.f32 %v4342, %v4312
      %v4344 = vadd.f32 %v4343, %v4313
      %v4345 = vadd.f32 %v4344, %v4314
      %v4346 = vadd.f32 %v4345, %v4315
      %v4347 = vadd.f32 %v4346, %v4316
      %v4348 = vadd.f32 %v4347, %v4317
      %v4349 = vadd.f32 %v4348, %v4318
      %v4350 = vadd.f32 %v4349, %v4319
      %v4351 = vadd.f32 %v4350, %v4320
      %v4352 = vadd.f32 %v4351, %v4321
      %v4353 = vadd.f32 %v4352, %v4322
      %v4354 = vadd.f32 %v4353, %v4323
      %v4355 = vadd.f32 %v4354, %v4324
      %v4356 = vadd.f32 %v4355, %v4325
      %v4357 = vadd.f32 %v4356, %v4326
      %v4358 = vadd.f32 %v4357, %v4327
      %v4359 = vadd.f32 %v4358, %v4328
      %v4360 = vadd.f32 %v4359, %v4329
      %v4361 = vadd.f32 %v4360, %v4330
      %v4362 = vadd.f32 %v4361, %v4331
      %v4363 = vadd.f32 %v4362, %v4332
      %v4364 = vadd.f32 %v4363, %v4333
      %v4365 = vrot.slane %v4364, 4
      %v4366 = vadd.f32 %v4364, %v4365
      %v4367 = vrot.slane %v4366, 2
      %v4368 = vadd.f32 %v4366, %v4367
      %v4369 = vrot.slane %v4368, 1
      %v4370 = vadd.f32 %v4368, %v4369
      %v4371 = vsel %vm3877, %v4301, %v4370
      %4372 = vst [vmem:[%s362] sm:$0x3] %v4371
      %p4373 = scmp.lt.s32.totalorder %s22, 1
      %s4374 = scalar_select %p4373, %s22, 1
      %p4375 = scmp.lt.s32.totalorder %s23, 0
      %s4376 = scalar_select %p4375, %s23, 0
      %s4377 = smul.addr %s4374, 32
      %s4378 = sadd.s32 %s4376, %s4377
      %s4379 = smul.addr %s4378, 4
      %s4380 = scalar_lea.vmem %s3, %s4379
      %p4381 = scmp.lt.s32.totalorder %s22, 1
      %s4382 = scalar_select %p4381, %s22, 1
      %p4383 = scmp.lt.s32.totalorder %s23, 0
      %s4384 = scalar_select %p4383, %s23, 0
      %s4385 = sadd.s32 %s4384, %s4382
      %s4386 = smul.addr %s4385, 2
      %s4387 = scalar_lea.vmem %s4, %s4386
      %p4388 = scmp.lt.s32.totalorder %s22, 1
      %s4389 = scalar_select %p4388, %s22, 1
      %p4390 = scmp.lt.s32.totalorder %s23, 0
      %s4391 = scalar_select %p4390, %s23, 0
      %s4392 = smul.addr %s4389, 32
      %s4393 = sadd.s32 %s4391, %s4392
      %s4394 = smul.addr %s4393, 4
      %s4395 = scalar_lea.vmem %s5, %s4394
      %p4396 = scmp.lt.s32.totalorder %s22, 1
      %s4397 = scalar_select %p4396, %s22, 1
      %p4398 = scmp.lt.s32.totalorder %s23, 0
      %s4399 = scalar_select %p4398, %s23, 0
      %s4400 = sadd.s32 %s4399, %s4397
      %s4401 = smul.addr %s4400, 2
      %s4402 = scalar_lea.vmem %s6, %s4401
      // Predicated region
      $region37: #{_forward_impl.3} parent=31 // pred_check
        %p4403 = pneg %p128
      $region38: #{_forward_impl.3} parent=31 // pred_check_branch
        %4405 = sbr.rel (%p4403) target = $region40
      $region39: #{_forward_impl.3} parent=31 // pred_region
        _
      $region40: #{_forward_impl.3} parent=31 // pred_fallthru
        _
      // Predicated region
      $region41: #{_forward_impl.3} parent=31 // pred_check
        %p4406 = pneg %p156
      $region42: #{_forward_impl.3} parent=31 // pred_check_branch
        %4408 = sbr.rel (%p4406) target = $region44
      $region43: #{_forward_impl.3} parent=31 // pred_region
        _
      $region44: #{_forward_impl.3} parent=31 // pred_fallthru
        _
      // Predicated region
      $region45: #{_forward_impl.3} parent=31 // pred_check
        %p4409 = pneg %p184
      $region46: #{_forward_impl.3} parent=31 // pred_check_branch
        %4411 = sbr.rel (%p4409) target = $region48
      $region47: #{_forward_impl.3} parent=31 // pred_region
        _
      $region48: #{_forward_impl.3} parent=31 // pred_fallthru
        _
      // Predicated region
      $region49: #{_forward_impl.3} parent=31 // pred_check
        %p4412 = pneg %p212
      $region50: #{_forward_impl.3} parent=31 // pred_check_branch
        %4414 = sbr.rel (%p4412) target = $region52
      $region51: #{_forward_impl.3} parent=31 // pred_region
        _
      $region52: #{_forward_impl.3} parent=31 // pred_fallthru
        _
    $region32: #{_forward_impl.3} parent=5 // pred_fallthru
      _
    %p4415 = scmp.le.s32.totalorder 2, %s13
    // Predicated region
    $region53: #{_forward_impl.3} parent=5 // pred_check
      %p4416 = pneg %p4415
    $region54: #{_forward_impl.3} parent=5 // pred_check_branch
      %4418 = sbr.rel (%p4416) target = $region56
    $region55: #{_forward_impl.3} parent=5 // pred_region
      %s4419 = ssub.s32 %s13, 2
      // Predicated region
      $region57: #{_forward_impl.3} parent=55 // pred_check
        %p4420 = pneg %p134
      $region58: #{_forward_impl.3} parent=55 // pred_check_branch
        %4422 = sbr.rel (%p4420) target = $region60
      $region59: #{_forward_impl.3} parent=55 // pred_region
        %p4423 = scmp.lt.s32.totalorder %s24, 1
        %s4424 = scalar_select %p4423, %s24, 1
        %p4425 = scmp.lt.s32.totalorder %s25, 0
        %s4426 = scalar_select %p4425, %s25, 0
        %s4427 = smul.addr %s4424, 32
        %s4428 = sadd.s32 %s4426, %s4427
        %s4429 = smul.addr %s4428, 4
        %s4430 = scalar_lea.vmem %s3, %s4429
      $region60: #{_forward_impl.3} parent=55 // pred_fallthru
        _
      // Predicated region
      $region61: #{_forward_impl.3} parent=55 // pred_check
        %p4431 = pneg %p162
      $region62: #{_forward_impl.3} parent=55 // pred_check_branch
        %4433 = sbr.rel (%p4431) target = $region64
      $region63: #{_forward_impl.3} parent=55 // pred_region
        %p4434 = scmp.lt.s32.totalorder %s24, 1
        %s4435 = scalar_select %p4434, %s24, 1
        %p4436 = scmp.lt.s32.totalorder %s25, 0
        %s4437 = scalar_select %p4436, %s25, 0
        %s4438 = sadd.s32 %s4437, %s4435
        %s4439 = smul.addr %s4438, 2
        %s4440 = scalar_lea.vmem %s4, %s4439
      $region64: #{_forward_impl.3} parent=55 // pred_fallthru
        _
      // Predicated region
      $region65: #{_forward_impl.3} parent=55 // pred_check
        %p4441 = pneg %p190
      $region66: #{_forward_impl.3} parent=55 // pred_check_branch
        %4443 = sbr.rel (%p4441) target = $region68
      $region67: #{_forward_impl.3} parent=55 // pred_region
        %p4444 = scmp.lt.s32.totalorder %s24, 1
        %s4445 = scalar_select %p4444, %s24, 1
        %p4446 = scmp.lt.s32.totalorder %s25, 0
        %s4447 = scalar_select %p4446, %s25, 0
        %s4448 = smul.addr %s4445, 32
        %s4449 = sadd.s32 %s4447, %s4448
        %s4450 = smul.addr %s4449, 4
        %s4451 = scalar_lea.vmem %s5, %s4450
      $region68: #{_forward_impl.3} parent=55 // pred_fallthru
        _
      // Predicated region
      $region69: #{_forward_impl.3} parent=55 // pred_check
        %p4452 = pneg %p218
      $region70: #{_forward_impl.3} parent=55 // pred_check_branch
        %4454 = sbr.rel (%p4452) target = $region72
      $region71: #{_forward_impl.3} parent=55 // pred_region
        %p4455 = scmp.lt.s32.totalorder %s24, 1
        %s4456 = scalar_select %p4455, %s24, 1
        %p4457 = scmp.lt.s32.totalorder %s25, 0
        %s4458 = scalar_select %p4457, %s25, 0
        %s4459 = sadd.s32 %s4458, %s4456
        %s4460 = smul.addr %s4459, 2
        %s4461 = scalar_lea.vmem %s6, %s4460
      $region72: #{_forward_impl.3} parent=55 // pred_fallthru
        _
    $region56: #{_forward_impl.3} parent=5 // pred_fallthru
      _
  $region6: #{_forward_impl.3} parent=0 // loop_footer
    %s17 = sadd.s32 1, %s13
  $region7: #{_forward_impl.3} parent=0 // loop_footer_branch
    %12 = sbr.rel target = $region3
  $region8: #{_forward_impl.3} parent=0 // loop_exit
    _

</llo_original>
